<compile_context>
chip_gen: v5e
topology: v5e:2x2
jax: 0.10.0
libtpu: 0.0.40
codegen_flags: <defaults>
</compile_context>

<pallas_src>
import functools

import jax
import jax.numpy as jnp
from jax import lax
from jax.experimental import pallas as pl
from jax.experimental.pallas import tpu as pltpu

N_EMBD = 384
BLOCK_SIZE = 64
N_HEAD = 8
HEAD_SIZE = N_EMBD // N_HEAD          # 48
LN_EPS = 1e-5
NEG_INF = -1e30


def _layernorm(x, gamma, beta):
    mu = jnp.mean(x, axis=-1, keepdims=True)
    var = jnp.mean((x - mu) ** 2, axis=-1, keepdims=True)
    return (x - mu) * jax.lax.rsqrt(var + LN_EPS) * gamma + beta


def block_kernel(
    x_ref,              # (Bb, T, C) f32
    mask_ref,           # (T, T)  f32 additive causal mask (0 / -1e30)
    ln1_w, ln1_b,       # (1, C)  f32
    wqkv_t,             # (3C, C) bf16, rows = [q|k|v] outputs head-major; q rows pre-scaled
    wo,                 # (C, C)  bf16  (in head-major, out)
    bo,                 # (1, C)  f32
    ln2_w, ln2_b,       # (1, C)  f32
    w1, b1,             # (C, 4C) bf16, (1, 4C) f32
    w2, b2,             # (4C, C) bf16, (1, C)  f32
    o_ref,              # (Bb, T, C)
):
    Bb, T, C = x_ref.shape
    M = Bb * T
    H, D = N_HEAD, HEAD_SIZE

    x = x_ref[...].astype(jnp.float32).reshape(M, C)       # fold batch into rows (free)

    # ---- LayerNorm 1 (f32) ----
    xn = _layernorm(x, ln1_w[...], ln1_b[...]).astype(jnp.bfloat16)   # (M, C)

    # ---- fused QKV projection: (3C, C) x (M, C)^T -> (3C, M), f32 acc ----
    qkv_t = lax.dot_general(
        wqkv_t[...], xn,
        dimension_numbers=(((1,), (1,)), ((), ())),
        preferred_element_type=jnp.float32)                 # (3C, M)
    qkv_t = qkv_t.astype(jnp.bfloat16)

    mask = mask_ref[...]                                    # (T, T)

    # ---- attention, per batch element (no cross-batch scores) ----
    att_parts = []
    for b in range(Bb):                                     # Bb is small & static
        qkv_b = qkv_t[:, b * T:(b + 1) * T].reshape(3, H, D, T)   # sublane split (free)
        q_t, k_t, v_t = qkv_b[0], qkv_b[1], qkv_b[2]        # (H, D, T) bf16
        q = jnp.swapaxes(q_t, 1, 2)                         # (H, T, D) bf16 (tiny transpose)

        # scores: per-head (T, D) @ (D, T)  -> (H, T, T); scale folded into wqkv_t
        s = lax.dot_general(
            q, k_t,
            dimension_numbers=(((2,), (1,)), ((0,), (0,))),
            preferred_element_type=jnp.float32)
        s = s + mask[None, :, :]
        s = s - jnp.max(s, axis=-1, keepdims=True)
        p = jnp.exp(s)
        p = p * pl.reciprocal(jnp.sum(p, axis=-1, keepdims=True), approx=True)
        p = p.astype(jnp.bfloat16)

        # att^T: per-head (D, Tk) @ (Tq, Tk)^T -> (H, D, Tq)
        att_t = lax.dot_general(
            v_t, p,
            dimension_numbers=(((2,), (2,)), ((0,), (0,))),
            preferred_element_type=jnp.float32)
        att_t = att_t.astype(jnp.bfloat16).reshape(C, T)    # head-major rows (free)
        att_parts.append(att_t.T)                           # (T, C) bf16, small transpose

    att = att_parts[0] if Bb == 1 else jnp.concatenate(att_parts, axis=0)   # (M, C) bf16

    # ---- output projection: ONE full-K=384 matmul (no per-head loop) ----
    sa = jnp.dot(att, wo[...], preferred_element_type=jnp.float32)          # (M, C)
    x = x + sa + bo[...]                                    # residual 1

    # ---- LayerNorm 2 + FeedForward (no hidden chunking) ----
    xn2 = _layernorm(x, ln2_w[...], ln2_b[...]).astype(jnp.bfloat16)
    h1 = jnp.dot(xn2, w1[...], preferred_element_type=jnp.float32) + b1[...]
    h1 = jnp.maximum(h1, 0.0).astype(jnp.bfloat16)          # ReLU
    ff = jnp.dot(h1, w2[...], preferred_element_type=jnp.float32) + b2[...]
    # TODO(synk): dropout omitted (eval-mode identity).
    x = x + ff                                              # residual 2

    o_ref[...] = x.reshape(Bb, T, C).astype(o_ref.dtype)


def _prep_weights(params):
    """Re-layout raw (PyTorch-style) weights; cast MXU operands to bf16.

    The softmax scale  head_size * C**(-0.5)  is folded into the Q rows of the
    fused QKV weight (done in f32 before the bf16 cast).
    """
    (ln1_w, ln1_b, wq, wk, wv, wo, bo, ln2_w, ln2_b, w1, b1, w2, b2) = params
    C = N_EMBD
    scale = jnp.float32(HEAD_SIZE * C ** (-0.5))
    wqkv_t = jnp.concatenate([wq.T * scale, wk.T, wv.T], axis=0).astype(jnp.bfloat16)  # (3C, C)
    return (ln1_w, ln1_b, wqkv_t, wo.astype(jnp.bfloat16), bo, ln2_w, ln2_b,
            w1.astype(jnp.bfloat16), b1, w2.astype(jnp.bfloat16), b2)


@functools.partial(jax.jit, static_argnames=("batch_block",))
def block_forward(x, params, *, batch_block=None):
    B, T, C = x.shape
    assert C == N_EMBD and T <= BLOCK_SIZE

    # Choose the per-step batch block:
    #  * target M = Bb*T ~ 256 rows for the dense matmuls (v5e-safe; pass a
    #    larger batch_block explicitly on v6e for M ~ 512),
    #  * but prefer a grid of length >= 2 so both v7x TensorCores get work.
    if batch_block is None:
        cap = max(1, 256 // T)
        divisors = [d for d in range(1, min(B, cap) + 1) if B % d == 0]
        pref = [d for d in divisors if B // d >= 2]
        batch_block = max(pref) if pref else max(divisors)
    Bb = batch_block
    assert B % Bb == 0

    kparams = _prep_weights(params)

    # Tiny (T, T) additive causal mask, replicated across the grid.
    mask = jnp.where(jnp.tril(jnp.ones((T, T), dtype=bool)),
                     0.0, NEG_INF).astype(jnp.float32)

    def rep(a):  # replicated (whole-array) block, constant across the grid
        nd = a.ndim
        return pl.BlockSpec(a.shape, lambda b, _nd=nd: (0,) * _nd)

    in_specs = ([pl.BlockSpec((Bb, T, C), lambda b: (b, 0, 0)), rep(mask)]
                + [rep(a) for a in kparams])
    out_spec = pl.BlockSpec((Bb, T, C), lambda b: (b, 0, 0))

    # Advisory cost estimate for XLA's scheduler.
    Mtot, C4 = B * T, 4 * C
    flops = int(2 * Mtot * C * (3 * C)                 # fused QKV
                + 4 * B * N_HEAD * T * T * HEAD_SIZE   # QK^T and PV
                + 2 * Mtot * C * C                     # output projection
                + 4 * Mtot * C * C4)                   # FFN (two matmuls)
    transcendentals = int(B * N_HEAD * T * T)          # softmax exp
    bytes_accessed = int(8 * Mtot * C                  # x in + out (f32)
                         + 2 * (3 * C * C + C * C + 2 * C * C4)   # bf16 weights
                         + 4 * (6 * C + C4))           # f32 LN params + biases

    return pl.pallas_call(
        block_kernel,
        out_shape=jax.ShapeDtypeStruct((B, T, C), x.dtype),
        grid_spec=pltpu.PrefetchScalarGridSpec(
            num_scalar_prefetch=0,
            grid=(B // Bb,),
            in_specs=in_specs,
            out_specs=out_spec,
        ),
        compiler_params=pltpu.CompilerParams(
            dimension_semantics=("parallel",),
            vmem_limit_bytes=32 << 20,     # kernel needs ~10-13 MiB; safe on v5e/v6e/v7x
        ),
        cost_estimate=pl.CostEstimate(
            flops=flops,
            transcendentals=transcendentals,
            bytes_accessed=bytes_accessed),
    )(x, mask, *kparams)


def init_params(key):
    C, H4 = N_EMBD, 4 * N_EMBD
    ks = jax.random.split(key, 10)
    s = 0.02
    # Per-head q/k/v Linear(C, head_size, bias=False), concatenated -> (C, C).
    wq = jax.random.normal(ks[0], (C, C), jnp.float32) * s
    wk = jax.random.normal(ks[1], (C, C), jnp.float32) * s
    wv = jax.random.normal(ks[2], (C, C), jnp.float32) * s
    wo = jax.random.normal(ks[3], (C, C), jnp.float32) * s
    bo = jax.random.normal(ks[4], (1, C), jnp.float32) * s
    w1 = jax.random.normal(ks[5], (C, H4), jnp.float32) * s
    b1 = jax.random.normal(ks[6], (1, H4), jnp.float32) * s
    w2 = jax.random.normal(ks[7], (H4, C), jnp.float32) * s
    b2 = jax.random.normal(ks[8], (1, C), jnp.float32) * s
    ln1_w = jnp.ones((1, C), jnp.float32)
    ln1_b = jnp.zeros((1, C), jnp.float32)
    ln2_w = jnp.ones((1, C), jnp.float32)
    ln2_b = jnp.zeros((1, C), jnp.float32)
    return (ln1_w, ln1_b, wq, wk, wv, wo, bo, ln2_w, ln2_b, w1, b1, w2, b2)


def block_forward_ref(x, params):
    """Pure-JAX f32 reference mirroring the PyTorch forward (eval mode)."""
    (ln1_w, ln1_b, wq, wk, wv, wo, bo, ln2_w, ln2_b, w1, b1, w2, b2) = params
    B, T, C = x.shape
    xn = _layernorm(x, ln1_w[0], ln1_b[0])
    q = xn @ wq
    k = xn @ wk
    v = xn @ wv
    scale = HEAD_SIZE * C ** (-0.5)
    mask = jnp.tril(jnp.ones((T, T), bool))
    outs = []
    for h in range(N_HEAD):
        sl = slice(h * HEAD_SIZE, (h + 1) * HEAD_SIZE)
        wei = jnp.einsum("btd,bsd->bts", q[..., sl], k[..., sl]) * scale
        wei = jnp.where(mask, wei, -jnp.inf)
        wei = jax.nn.softmax(wei, axis=-1)
        outs.append(jnp.einsum("bts,bsd->btd", wei, v[..., sl]))
    att = jnp.concatenate(outs, axis=-1)
    x = x + (att @ wo + bo[0])
    xn2 = _layernorm(x, ln2_w[0], ln2_b[0])
    ff = jnp.maximum(xn2 @ w1 + b1[0], 0.0) @ w2 + b2[0]
    return x + ff


if __name__ == "__main__":
    key = jax.random.PRNGKey(0)
    kparam, kx = jax.random.split(key)
    params = init_params(kparam)

    B, T = 2, BLOCK_SIZE  # (2, 64, 384)
    x = jax.random.normal(kx, (B, T, N_EMBD), jnp.float32)

    out = jax.block_until_ready(block_forward(x, params))
    ref = block_forward_ref(x, params)

    assert out.shape == (B, T, N_EMBD)
    max_err = float(jnp.max(jnp.abs(out - ref)))
    # bf16 MXU operands (f32 accumulation) -> loosened tolerance vs f32 reference.
    assert jnp.allclose(out, ref, atol=3e-2, rtol=3e-2), max_err
    print("KERNEL_OK")
</pallas_src>

<mosaic_0001>
module attributes {stable_mosaic.version = 11 : i64} {
  func.func @block_kernel(%arg0: i32, %arg1: memref<1x64x384xf32, #tpu.memory_space<vmem>>, %arg2: memref<64x64xf32, #tpu.memory_space<vmem>>, %arg3: memref<1x384xf32, #tpu.memory_space<vmem>>, %arg4: memref<1x384xf32, #tpu.memory_space<vmem>>, %arg5: memref<1152x384xbf16, #tpu.memory_space<vmem>>, %arg6: memref<384x384xbf16, #tpu.memory_space<vmem>>, %arg7: memref<1x384xf32, #tpu.memory_space<vmem>>, %arg8: memref<1x384xf32, #tpu.memory_space<vmem>>, %arg9: memref<1x384xf32, #tpu.memory_space<vmem>>, %arg10: memref<384x1536xbf16, #tpu.memory_space<vmem>>, %arg11: memref<1x1536xf32, #tpu.memory_space<vmem>>, %arg12: memref<1536x384xbf16, #tpu.memory_space<vmem>>, %arg13: memref<1x384xf32, #tpu.memory_space<vmem>>, %arg14: memref<1x64x384xf32, #tpu.memory_space<vmem>>) attributes {dimension_semantics = [#tpu.dimension_semantics<parallel>], iteration_bounds = array<i64: 2>, scalar_prefetch = 0 : i64, scratch_operands = 0 : i64, tpu.core_type = #tpu.core_type<tc>, window_params = [{transform_indices = @transform_0, window_bounds = array<i64: 1, 64, 384>}, {pipeline_mode = #tpu.pipeline_mode<synchronous>, transform_indices = @transform_1, window_bounds = array<i64: 64, 64>}, {pipeline_mode = #tpu.pipeline_mode<synchronous>, transform_indices = @transform_2, window_bounds = array<i64: 1, 384>}, {pipeline_mode = #tpu.pipeline_mode<synchronous>, transform_indices = @transform_3, window_bounds = array<i64: 1, 384>}, {pipeline_mode = #tpu.pipeline_mode<synchronous>, transform_indices = @transform_4, window_bounds = array<i64: 1152, 384>}, {pipeline_mode = #tpu.pipeline_mode<synchronous>, transform_indices = @transform_5, window_bounds = array<i64: 384, 384>}, {pipeline_mode = #tpu.pipeline_mode<synchronous>, transform_indices = @transform_6, window_bounds = array<i64: 1, 384>}, {pipeline_mode = #tpu.pipeline_mode<synchronous>, transform_indices = @transform_7, window_bounds = array<i64: 1, 384>}, {pipeline_mode = #tpu.pipeline_mode<synchronous>, transform_indices = @transform_8, window_bounds = array<i64: 1, 384>}, {pipeline_mode = #tpu.pipeline_mode<synchronous>, transform_indices = @transform_9, window_bounds = array<i64: 384, 1536>}, {pipeline_mode = #tpu.pipeline_mode<synchronous>, transform_indices = @transform_10, window_bounds = array<i64: 1, 1536>}, {pipeline_mode = #tpu.pipeline_mode<synchronous>, transform_indices = @transform_11, window_bounds = array<i64: 1536, 384>}, {pipeline_mode = #tpu.pipeline_mode<synchronous>, transform_indices = @transform_12, window_bounds = array<i64: 1, 384>}, {transform_indices = @transform_13, window_bounds = array<i64: 1, 64, 384>}]} {
    %c0 = arith.constant 0 : index
    %c0_0 = arith.constant 0 : index
    %c0_1 = arith.constant 0 : index
    %0 = vector.load %arg1[%c0, %c0_0, %c0_1] : memref<1x64x384xf32, #tpu.memory_space<vmem>>, vector<1x64x384xf32>
    %1 = vector.shape_cast %0 : vector<1x64x384xf32> to vector<64x384xf32>
    %c0_2 = arith.constant 0 : index
    %c0_3 = arith.constant 0 : index
    %2 = vector.load %arg3[%c0_2, %c0_3] : memref<1x384xf32, #tpu.memory_space<vmem>>, vector<1x384xf32>
    %c0_4 = arith.constant 0 : index
    %c0_5 = arith.constant 0 : index
    %3 = vector.load %arg4[%c0_4, %c0_5] : memref<1x384xf32, #tpu.memory_space<vmem>>, vector<1x384xf32>
    %cst = arith.constant dense<0.000000e+00> : vector<64xf32>
    %4 = vector.multi_reduction <add>, %1, %cst [1] : vector<64x384xf32> to vector<64xf32>
    %5 = vector.shape_cast %4 : vector<64xf32> to vector<64x1xf32>
    %cst_6 = arith.constant 3.840000e+02 : f32
    %6 = vector.broadcast %cst_6 : f32 to vector<64x1xf32>
    %7 = arith.divf %5, %6 : vector<64x1xf32>
    %8 = vector.broadcast %7 : vector<64x1xf32> to vector<64x384xf32>
    %9 = arith.subf %1, %8 : vector<64x384xf32>
    %10 = arith.mulf %9, %9 : vector<64x384xf32>
    %cst_7 = arith.constant dense<0.000000e+00> : vector<64xf32>
    %11 = vector.multi_reduction <add>, %10, %cst_7 [1] : vector<64x384xf32> to vector<64xf32>
    %12 = vector.shape_cast %11 : vector<64xf32> to vector<64x1xf32>
    %cst_8 = arith.constant 3.840000e+02 : f32
    %13 = vector.broadcast %cst_8 : f32 to vector<64x1xf32>
    %14 = arith.divf %12, %13 : vector<64x1xf32>
    %15 = vector.broadcast %7 : vector<64x1xf32> to vector<64x384xf32>
    %16 = arith.subf %1, %15 : vector<64x384xf32>
    %cst_9 = arith.constant 9.99999974E-6 : f32
    %17 = vector.broadcast %cst_9 : f32 to vector<64x1xf32>
    %18 = arith.addf %14, %17 : vector<64x1xf32>
    %19 = math.rsqrt %18 : vector<64x1xf32>
    %20 = vector.broadcast %19 : vector<64x1xf32> to vector<64x384xf32>
    %21 = arith.mulf %16, %20 : vector<64x384xf32>
    %22 = vector.broadcast %2 : vector<1x384xf32> to vector<64x384xf32>
    %23 = arith.mulf %21, %22 : vector<64x384xf32>
    %24 = vector.broadcast %3 : vector<1x384xf32> to vector<64x384xf32>
    %25 = arith.addf %23, %24 : vector<64x384xf32>
    %26 = arith.truncf %25 : vector<64x384xf32> to vector<64x384xbf16>
    %c0_10 = arith.constant 0 : index
    %c0_11 = arith.constant 0 : index
    %27 = vector.load %arg5[%c0_10, %c0_11] : memref<1152x384xbf16, #tpu.memory_space<vmem>>, vector<1152x384xbf16>
    %cst_12 = arith.constant dense<0.000000e+00> : vector<1152x64xf32>
    %28 = tpu.matmul %27, %26, %cst_12 {dimension_numbers = #tpu.dot_dimension_numbers<[1], [1], [0], [0], [0, 0, 1, 0], [], []>} : vector<1152x384xbf16>, vector<64x384xbf16>, vector<1152x64xf32> -> vector<1152x64xf32>
    %29 = arith.truncf %28 : vector<1152x64xf32> to vector<1152x64xbf16>
    %c0_13 = arith.constant 0 : index
    %c0_14 = arith.constant 0 : index
    %30 = vector.load %arg2[%c0_13, %c0_14] : memref<64x64xf32, #tpu.memory_space<vmem>>, vector<64x64xf32>
    %31 = vector.shape_cast %29 : vector<1152x64xbf16> to vector<3x8x48x64xbf16>
    %32 = vector.extract_strided_slice %31 {offsets = [0, 0, 0, 0], sizes = [1, 8, 48, 64], strides = [1, 1, 1, 1]} : vector<3x8x48x64xbf16> to vector<1x8x48x64xbf16>
    %33 = vector.shape_cast %32 : vector<1x8x48x64xbf16> to vector<8x48x64xbf16>
    %34 = vector.extract_strided_slice %31 {offsets = [1, 0, 0, 0], sizes = [1, 8, 48, 64], strides = [1, 1, 1, 1]} : vector<3x8x48x64xbf16> to vector<1x8x48x64xbf16>
    %35 = vector.shape_cast %34 : vector<1x8x48x64xbf16> to vector<8x48x64xbf16>
    %36 = vector.extract_strided_slice %31 {offsets = [2, 0, 0, 0], sizes = [1, 8, 48, 64], strides = [1, 1, 1, 1]} : vector<3x8x48x64xbf16> to vector<1x8x48x64xbf16>
    %37 = vector.shape_cast %36 : vector<1x8x48x64xbf16> to vector<8x48x64xbf16>
    %38 = tpu.transpose %33, [0, 2, 1] : vector<8x48x64xbf16> -> vector<8x64x48xbf16>
    %cst_15 = arith.constant dense<0.000000e+00> : vector<8x64x64xf32>
    %39 = tpu.matmul %38, %35, %cst_15 {dimension_numbers = #tpu.dot_dimension_numbers<[2], [1], [1], [2], [0, 0, 0, 1, 1, 2], [0], [0]>} : vector<8x64x48xbf16>, vector<8x48x64xbf16>, vector<8x64x64xf32> -> vector<8x64x64xf32>
    %40 = vector.shape_cast %30 : vector<64x64xf32> to vector<1x64x64xf32>
    %41 = vector.broadcast %40 : vector<1x64x64xf32> to vector<8x64x64xf32>
    %42 = arith.addf %39, %41 : vector<8x64x64xf32>
    %cst_16 = arith.constant dense<0xFF800000> : vector<8x64xf32>
    %43 = vector.multi_reduction <maximumf>, %42, %cst_16 [2] : vector<8x64x64xf32> to vector<8x64xf32>
    %44 = vector.shape_cast %43 : vector<8x64xf32> to vector<8x64x1xf32>
    %45 = vector.broadcast %44 : vector<8x64x1xf32> to vector<8x64x64xf32>
    %46 = arith.subf %42, %45 : vector<8x64x64xf32>
    %47 = math.exp %46 : vector<8x64x64xf32>
    %cst_17 = arith.constant dense<0.000000e+00> : vector<8x64xf32>
    %48 = vector.multi_reduction <add>, %47, %cst_17 [2] : vector<8x64x64xf32> to vector<8x64xf32>
    %49 = vector.shape_cast %48 : vector<8x64xf32> to vector<8x64x1xf32>
    %50 = tpu.reciprocal %49 {approx = true} : vector<8x64x1xf32> -> vector<8x64x1xf32>
    %51 = vector.broadcast %50 : vector<8x64x1xf32> to vector<8x64x64xf32>
    %52 = arith.mulf %47, %51 : vector<8x64x64xf32>
    %53 = arith.truncf %52 : vector<8x64x64xf32> to vector<8x64x64xbf16>
    %cst_18 = arith.constant dense<0.000000e+00> : vector<8x48x64xf32>
    %54 = tpu.matmul %37, %53, %cst_18 {dimension_numbers = #tpu.dot_dimension_numbers<[2], [2], [1], [1], [0, 0, 0, 1, 1, 1], [0], [0]>} : vector<8x48x64xbf16>, vector<8x64x64xbf16>, vector<8x48x64xf32> -> vector<8x48x64xf32>
    %55 = arith.truncf %54 : vector<8x48x64xf32> to vector<8x48x64xbf16>
    %56 = vector.shape_cast %55 : vector<8x48x64xbf16> to vector<384x64xbf16>
    %57 = tpu.transpose %56, [1, 0] : vector<384x64xbf16> -> vector<64x384xbf16>
    %c0_19 = arith.constant 0 : index
    %c0_20 = arith.constant 0 : index
    %58 = vector.load %arg6[%c0_19, %c0_20] : memref<384x384xbf16, #tpu.memory_space<vmem>>, vector<384x384xbf16>
    %cst_21 = arith.constant dense<0.000000e+00> : vector<64x384xf32>
    %59 = tpu.matmul %57, %58, %cst_21 {dimension_numbers = #tpu.dot_dimension_numbers<[1], [0], [0], [1], [0, 0, 1, 1], [], []>} : vector<64x384xbf16>, vector<384x384xbf16>, vector<64x384xf32> -> vector<64x384xf32>
    %60 = arith.addf %1, %59 : vector<64x384xf32>
    %c0_22 = arith.constant 0 : index
    %c0_23 = arith.constant 0 : index
    %61 = vector.load %arg7[%c0_22, %c0_23] : memref<1x384xf32, #tpu.memory_space<vmem>>, vector<1x384xf32>
    %62 = vector.broadcast %61 : vector<1x384xf32> to vector<64x384xf32>
    %63 = arith.addf %60, %62 : vector<64x384xf32>
    %c0_24 = arith.constant 0 : index
    %c0_25 = arith.constant 0 : index
    %64 = vector.load %arg8[%c0_24, %c0_25] : memref<1x384xf32, #tpu.memory_space<vmem>>, vector<1x384xf32>
    %c0_26 = arith.constant 0 : index
    %c0_27 = arith.constant 0 : index
    %65 = vector.load %arg9[%c0_26, %c0_27] : memref<1x384xf32, #tpu.memory_space<vmem>>, vector<1x384xf32>
    %cst_28 = arith.constant dense<0.000000e+00> : vector<64xf32>
    %66 = vector.multi_reduction <add>, %63, %cst_28 [1] : vector<64x384xf32> to vector<64xf32>
    %67 = vector.shape_cast %66 : vector<64xf32> to vector<64x1xf32>
    %cst_29 = arith.constant 3.840000e+02 : f32
    %68 = vector.broadcast %cst_29 : f32 to vector<64x1xf32>
    %69 = arith.divf %67, %68 : vector<64x1xf32>
    %70 = vector.broadcast %69 : vector<64x1xf32> to vector<64x384xf32>
    %71 = arith.subf %63, %70 : vector<64x384xf32>
    %72 = arith.mulf %71, %71 : vector<64x384xf32>
    %cst_30 = arith.constant dense<0.000000e+00> : vector<64xf32>
    %73 = vector.multi_reduction <add>, %72, %cst_30 [1] : vector<64x384xf32> to vector<64xf32>
    %74 = vector.shape_cast %73 : vector<64xf32> to vector<64x1xf32>
    %cst_31 = arith.constant 3.840000e+02 : f32
    %75 = vector.broadcast %cst_31 : f32 to vector<64x1xf32>
    %76 = arith.divf %74, %75 : vector<64x1xf32>
    %77 = vector.broadcast %69 : vector<64x1xf32> to vector<64x384xf32>
    %78 = arith.subf %63, %77 : vector<64x384xf32>
    %cst_32 = arith.constant 9.99999974E-6 : f32
    %79 = vector.broadcast %cst_32 : f32 to vector<64x1xf32>
    %80 = arith.addf %76, %79 : vector<64x1xf32>
    %81 = math.rsqrt %80 : vector<64x1xf32>
    %82 = vector.broadcast %81 : vector<64x1xf32> to vector<64x384xf32>
    %83 = arith.mulf %78, %82 : vector<64x384xf32>
    %84 = vector.broadcast %64 : vector<1x384xf32> to vector<64x384xf32>
    %85 = arith.mulf %83, %84 : vector<64x384xf32>
    %86 = vector.broadcast %65 : vector<1x384xf32> to vector<64x384xf32>
    %87 = arith.addf %85, %86 : vector<64x384xf32>
    %88 = arith.truncf %87 : vector<64x384xf32> to vector<64x384xbf16>
    %c0_33 = arith.constant 0 : index
    %c0_34 = arith.constant 0 : index
    %89 = vector.load %arg10[%c0_33, %c0_34] : memref<384x1536xbf16, #tpu.memory_space<vmem>>, vector<384x1536xbf16>
    %cst_35 = arith.constant dense<0.000000e+00> : vector<64x1536xf32>
    %90 = tpu.matmul %88, %89, %cst_35 {dimension_numbers = #tpu.dot_dimension_numbers<[1], [0], [0], [1], [0, 0, 1, 1], [], []>} : vector<64x384xbf16>, vector<384x1536xbf16>, vector<64x1536xf32> -> vector<64x1536xf32>
    %c0_36 = arith.constant 0 : index
    %c0_37 = arith.constant 0 : index
    %91 = vector.load %arg11[%c0_36, %c0_37] : memref<1x1536xf32, #tpu.memory_space<vmem>>, vector<1x1536xf32>
    %92 = vector.broadcast %91 : vector<1x1536xf32> to vector<64x1536xf32>
    %93 = arith.addf %90, %92 : vector<64x1536xf32>
    %cst_38 = arith.constant 0.000000e+00 : f32
    %94 = vector.broadcast %cst_38 : f32 to vector<64x1536xf32>
    %95 = arith.maximumf %93, %94 : vector<64x1536xf32>
    %96 = arith.truncf %95 : vector<64x1536xf32> to vector<64x1536xbf16>
    %c0_39 = arith.constant 0 : index
    %c0_40 = arith.constant 0 : index
    %97 = vector.load %arg12[%c0_39, %c0_40] : memref<1536x384xbf16, #tpu.memory_space<vmem>>, vector<1536x384xbf16>
    %cst_41 = arith.constant dense<0.000000e+00> : vector<64x384xf32>
    %98 = tpu.matmul %96, %97, %cst_41 {dimension_numbers = #tpu.dot_dimension_numbers<[1], [0], [0], [1], [0, 0, 1, 1], [], []>} : vector<64x1536xbf16>, vector<1536x384xbf16>, vector<64x384xf32> -> vector<64x384xf32>
    %c0_42 = arith.constant 0 : index
    %c0_43 = arith.constant 0 : index
    %99 = vector.load %arg13[%c0_42, %c0_43] : memref<1x384xf32, #tpu.memory_space<vmem>>, vector<1x384xf32>
    %100 = vector.broadcast %99 : vector<1x384xf32> to vector<64x384xf32>
    %101 = arith.addf %98, %100 : vector<64x384xf32>
    %102 = arith.addf %63, %101 : vector<64x384xf32>
    %103 = vector.shape_cast %102 : vector<64x384xf32> to vector<1x64x384xf32>
    %c0_44 = arith.constant 0 : index
    %c0_45 = arith.constant 0 : index
    %c0_46 = arith.constant 0 : index
    %104 = vector.load %arg14[%c0_44, %c0_45, %c0_46] : memref<1x64x384xf32, #tpu.memory_space<vmem>>, vector<1x64x384xf32>
    tpu.vector_store %arg14[%c0_44, %c0_45, %c0_46], %103 {strides = array<i32>} : memref<1x64x384xf32, #tpu.memory_space<vmem>>, vector<1x64x384xf32>,
    return
  }
  func.func @transform_0(%arg0: i32) -> (i32, i32, i32) {
    %c0_i32 = arith.constant 0 : i32
    %c0_i32_0 = arith.constant 0 : i32
    %c0_i32_1 = arith.constant 0 : i32
    return %arg0, %c0_i32, %c0_i32_0 : i32, i32, i32
  }
  func.func @transform_1(%arg0: i32) -> (i32, i32) {
    %c0_i32 = arith.constant 0 : i32
    %c0_i32_0 = arith.constant 0 : i32
    %c0_i32_1 = arith.constant 0 : i32
    return %c0_i32, %c0_i32_0 : i32, i32
  }
  func.func @transform_2(%arg0: i32) -> (i32, i32) {
    %c0_i32 = arith.constant 0 : i32
    %c0_i32_0 = arith.constant 0 : i32
    %c0_i32_1 = arith.constant 0 : i32
    return %c0_i32, %c0_i32_0 : i32, i32
  }
  func.func @transform_3(%arg0: i32) -> (i32, i32) {
    %c0_i32 = arith.constant 0 : i32
    %c0_i32_0 = arith.constant 0 : i32
    %c0_i32_1 = arith.constant 0 : i32
    return %c0_i32, %c0_i32_0 : i32, i32
  }
  func.func @transform_4(%arg0: i32) -> (i32, i32) {
    %c0_i32 = arith.constant 0 : i32
    %c0_i32_0 = arith.constant 0 : i32
    %c0_i32_1 = arith.constant 0 : i32
    return %c0_i32, %c0_i32_0 : i32, i32
  }
  func.func @transform_5(%arg0: i32) -> (i32, i32) {
    %c0_i32 = arith.constant 0 : i32
    %c0_i32_0 = arith.constant 0 : i32
    %c0_i32_1 = arith.constant 0 : i32
    return %c0_i32, %c0_i32_0 : i32, i32
  }
  func.func @transform_6(%arg0: i32) -> (i32, i32) {
    %c0_i32 = arith.constant 0 : i32
    %c0_i32_0 = arith.constant 0 : i32
    %c0_i32_1 = arith.constant 0 : i32
    return %c0_i32, %c0_i32_0 : i32, i32
  }
  func.func @transform_7(%arg0: i32) -> (i32, i32) {
    %c0_i32 = arith.constant 0 : i32
    %c0_i32_0 = arith.constant 0 : i32
    %c0_i32_1 = arith.constant 0 : i32
    return %c0_i32, %c0_i32_0 : i32, i32
  }
  func.func @transform_8(%arg0: i32) -> (i32, i32) {
    %c0_i32 = arith.constant 0 : i32
    %c0_i32_0 = arith.constant 0 : i32
    %c0_i32_1 = arith.constant 0 : i32
    return %c0_i32, %c0_i32_0 : i32, i32
  }
  func.func @transform_9(%arg0: i32) -> (i32, i32) {
    %c0_i32 = arith.constant 0 : i32
    %c0_i32_0 = arith.constant 0 : i32
    %c0_i32_1 = arith.constant 0 : i32
    return %c0_i32, %c0_i32_0 : i32, i32
  }
  func.func @transform_10(%arg0: i32) -> (i32, i32) {
    %c0_i32 = arith.constant 0 : i32
    %c0_i32_0 = arith.constant 0 : i32
    %c0_i32_1 = arith.constant 0 : i32
    return %c0_i32, %c0_i32_0 : i32, i32
  }
  func.func @transform_11(%arg0: i32) -> (i32, i32) {
    %c0_i32 = arith.constant 0 : i32
    %c0_i32_0 = arith.constant 0 : i32
    %c0_i32_1 = arith.constant 0 : i32
    return %c0_i32, %c0_i32_0 : i32, i32
  }
  func.func @transform_12(%arg0: i32) -> (i32, i32) {
    %c0_i32 = arith.constant 0 : i32
    %c0_i32_0 = arith.constant 0 : i32
    %c0_i32_1 = arith.constant 0 : i32
    return %c0_i32, %c0_i32_0 : i32, i32
  }
  func.func @transform_13(%arg0: i32) -> (i32, i32, i32) {
    %c0_i32 = arith.constant 0 : i32
    %c0_i32_0 = arith.constant 0 : i32
    %c0_i32_1 = arith.constant 0 : i32
    return %arg0, %c0_i32, %c0_i32_0 : i32, i32, i32
  }
}

</mosaic_0001>

<llo_original>
// kernel: block_forward.1
$region0: #{block_forward.1}
  #allocation0 [shape = 'u32[]', space=smem, size = 0x4, offset = 0x4, fixed_abs, tag = 'smem constant byte address 0x4 - core index']
  #allocation1 [shape = 'u32[72,128]{1,0:T(1,128)}', space=vmem, size = 0x9000, scoped, tag = 'internal scratch']
  %s0 = inlined_call_operand.vmem [shape: f32[2,64,384], index: 0, kind: input, shape index: {}]
  %s1 = inlined_call_operand.vmem [shape: f32[64,64], index: 1, kind: input, shape index: {}]
  %s2 = inlined_call_operand.vmem [shape: f32[1,384], index: 2, kind: input, shape index: {}]
  %s3 = inlined_call_operand.vmem [shape: f32[1,384], index: 3, kind: input, shape index: {}]
  %s4 = inlined_call_operand.vmem [shape: bf16[1152,384], index: 4, kind: input, shape index: {}]
  %s5 = inlined_call_operand.vmem [shape: bf16[384,384], index: 5, kind: input, shape index: {}]
  %s6 = inlined_call_operand.vmem [shape: f32[1,384], index: 6, kind: input, shape index: {}]
  %s7 = inlined_call_operand.vmem [shape: f32[1,384], index: 7, kind: input, shape index: {}]
  %s8 = inlined_call_operand.vmem [shape: f32[1,384], index: 8, kind: input, shape index: {}]
  %s9 = inlined_call_operand.vmem [shape: bf16[384,1536], index: 9, kind: input, shape index: {}]
  %s10 = inlined_call_operand.vmem [shape: f32[1,1536], index: 10, kind: input, shape index: {}]
  %s11 = inlined_call_operand.vmem [shape: bf16[1536,384], index: 11, kind: input, shape index: {}]
  %s12 = inlined_call_operand.vmem [shape: f32[1,384], index: 12, kind: input, shape index: {}]
  %s13 = inlined_call_operand.hbm [shape: f32[2,64,384], index: 13, kind: output, shape index: {}]
  %s14 = sld [smem:[#allocation0]]
  $region85: #{block_forward.1} parent=0
    _
  %s16 = ssub.s32 1, %s14
  %s17 = scalar_select 0, %s16, %s14
  $region1: #{block_forward.1} parent=0
    #allocation2 [shape = 'u8[196608]{0}', space=vmem, size = 0x30000, scoped, tag = 'output window, operand 0']
    #allocation3 [shape = 's32[2]{0}', space=sflag, size = 0x8, scoped, tag = 'scoped memory for block_forward.1']
    %18 = vsyncpa [#allocation3], 0
    %s19 = scalar_lea.sflag [#allocation3], 1
    %20 = vsyncpa %s19, 0
    loop: start=0, step=1, limit=4
    $region2: #{block_forward.1} parent=1 // loop_pre_header
      _
    $region3: #{block_forward.1} parent=1 // loop_header
      %s22 = sphi 0, %s26
      %p23 = scmp.ge.s32.totalorder %s22, 4
      %s32 = sphi 0, %s34
      %s35 = sphi 0, %s32
      %s36 = sphi 0, %s35
      %s52 = sphi 0, %s36
      %s56 = sphi 0, %s56
      %s58 = sphi 0, %s56
      %s59 = sphi 0, %s58
      %s73 = sphi 0, %s59
      %s77 = sphi 0, %s77
      %s79 = sphi 0, %s77
      %s80 = sphi 0, %s79
      %s94 = sphi 0, %s80
      %s98 = sphi 0, %s98
      %s100 = sphi 0, %s98
      %s101 = sphi 0, %s100
      %s115 = sphi 0, %s101
      %s119 = sphi 0, %s119
      %s121 = sphi 0, %s119
      %s122 = sphi 0, %s121
      %s136 = sphi 0, %s122
      %s140 = sphi 0, %s140
      %s142 = sphi 0, %s140
      %s143 = sphi 0, %s142
      %s157 = sphi 0, %s143
      %s161 = sphi 0, %s161
      %s163 = sphi 0, %s161
      %s164 = sphi 0, %s163
      %s178 = sphi 0, %s164
      %s182 = sphi 0, %s182
      %s184 = sphi 0, %s182
      %s185 = sphi 0, %s184
      %s199 = sphi 0, %s185
      %s203 = sphi 0, %s203
      %s205 = sphi 0, %s203
      %s206 = sphi 0, %s205
      %s220 = sphi 0, %s206
      %s224 = sphi 0, %s224
      %s226 = sphi 0, %s224
      %s227 = sphi 0, %s226
      %s241 = sphi 0, %s227
      %s245 = sphi 0, %s245
      %s247 = sphi 0, %s245
      %s248 = sphi 0, %s247
      %s262 = sphi 0, %s248
      %s266 = sphi 0, %s266
      %s268 = sphi 0, %s266
      %s269 = sphi 0, %s268
      %s283 = sphi 0, %s269
      %s287 = sphi 0, %s287
      %s289 = sphi 0, %s287
      %s290 = sphi 0, %s289
      %s304 = sphi 0, %s290
      %s310 = sphi 0, %s312
      %s313 = sphi 0, %s310
      %s314 = sphi 0, %s313
      %s330 = sphi 0, %s314
    $region4: #{block_forward.1} parent=1 // loop_header_branch
      %25 = sbr.rel (%p23) target = $region8
    $region5: #{block_forward.1} parent=1 // loop_body
      %s27 = ssub.s32 %s22, 1
      %s28 = ssub.s32 %s22, 2
      %s29 = sadd.s32 %s22, 1
      %s30 = ssub.s32 %s22, %s29
      %p31 = scmp.eq.s32.totalorder %s30, 0
      %s33 = sadd.s32 %s32, 1
      %s34 = scalar_select %p31, %s32, %s33
      %p37 = pneg %p31
      %p38 = scmp.eq.s32.totalorder %s22, 1
      %p39 = por %p37, %p38
      %p40 = scmp.ne.s32.totalorder %s32, %s35
      %p41 = scmp.eq.s32.totalorder %s22, 0
      %p42 = por %p40, %p41
      %p43 = scmp.ne.s32.totalorder %s32, %s35
      %p44 = scmp.eq.s32.totalorder %s27, 1
      %p45 = por %p43, %p44
      %p46 = scmp.ne.s32.totalorder %s35, %s36
      %p47 = scmp.eq.s32.totalorder %s27, 0
      %p48 = por %p46, %p47
      %p49 = scmp.ne.s32.totalorder %s35, %s36
      %p50 = scmp.eq.s32.totalorder %s28, 1
      %p51 = por %p49, %p50
      %p53 = scmp.ne.s32.totalorder %s36, %s52
      %p54 = scmp.eq.s32.totalorder %s28, 0
      %p55 = por %p53, %p54
      %s57 = sadd.s32 %s56, 1
      %p60 = scmp.eq.s32.totalorder %s22, 1
      %p61 = scmp.ne.s32.totalorder %s56, %s58
      %p62 = scmp.eq.s32.totalorder %s22, 0
      %p63 = por %p61, %p62
      %p64 = scmp.ne.s32.totalorder %s56, %s58
      %p65 = scmp.eq.s32.totalorder %s27, 1
      %p66 = por %p64, %p65
      %p67 = scmp.ne.s32.totalorder %s58, %s59
      %p68 = scmp.eq.s32.totalorder %s27, 0
      %p69 = por %p67, %p68
      %p70 = scmp.ne.s32.totalorder %s58, %s59
      %p71 = scmp.eq.s32.totalorder %s28, 1
      %p72 = por %p70, %p71
      %p74 = scmp.ne.s32.totalorder %s59, %s73
      %p75 = scmp.eq.s32.totalorder %s28, 0
      %p76 = por %p74, %p75
      %s78 = sadd.s32 %s77, 1
      %p81 = scmp.eq.s32.totalorder %s22, 1
      %p82 = scmp.ne.s32.totalorder %s77, %s79
      %p83 = scmp.eq.s32.totalorder %s22, 0
      %p84 = por %p82, %p83
      %p85 = scmp.ne.s32.totalorder %s77, %s79
      %p86 = scmp.eq.s32.totalorder %s27, 1
      %p87 = por %p85, %p86
      %p88 = scmp.ne.s32.totalorder %s79, %s80
      %p89 = scmp.eq.s32.totalorder %s27, 0
      %p90 = por %p88, %p89
      %p91 = scmp.ne.s32.totalorder %s79, %s80
      %p92 = scmp.eq.s32.totalorder %s28, 1
      %p93 = por %p91, %p92
      %p95 = scmp.ne.s32.totalorder %s80, %s94
      %p96 = scmp.eq.s32.totalorder %s28, 0
      %p97 = por %p95, %p96
      %s99 = sadd.s32 %s98, 1
      %p102 = scmp.eq.s32.totalorder %s22, 1
      %p103 = scmp.ne.s32.totalorder %s98, %s100
      %p104 = scmp.eq.s32.totalorder %s22, 0
      %p105 = por %p103, %p104
      %p106 = scmp.ne.s32.totalorder %s98, %s100
      %p107 = scmp.eq.s32.totalorder %s27, 1
      %p108 = por %p106, %p107
      %p109 = scmp.ne.s32.totalorder %s100, %s101
      %p110 = scmp.eq.s32.totalorder %s27, 0
      %p111 = por %p109, %p110
      %p112 = scmp.ne.s32.totalorder %s100, %s101
      %p113 = scmp.eq.s32.totalorder %s28, 1
      %p114 = por %p112, %p113
      %p116 = scmp.ne.s32.totalorder %s101, %s115
      %p117 = scmp.eq.s32.totalorder %s28, 0
      %p118 = por %p116, %p117
      %s120 = sadd.s32 %s119, 1
      %p123 = scmp.eq.s32.totalorder %s22, 1
      %p124 = scmp.ne.s32.totalorder %s119, %s121
      %p125 = scmp.eq.s32.totalorder %s22, 0
      %p126 = por %p124, %p125
      %p127 = scmp.ne.s32.totalorder %s119, %s121
      %p128 = scmp.eq.s32.totalorder %s27, 1
      %p129 = por %p127, %p128
      %p130 = scmp.ne.s32.totalorder %s121, %s122
      %p131 = scmp.eq.s32.totalorder %s27, 0
      %p132 = por %p130, %p131
      %p133 = scmp.ne.s32.totalorder %s121, %s122
      %p134 = scmp.eq.s32.totalorder %s28, 1
      %p135 = por %p133, %p134
      %p137 = scmp.ne.s32.totalorder %s122, %s136
      %p138 = scmp.eq.s32.totalorder %s28, 0
      %p139 = por %p137, %p138
      %s141 = sadd.s32 %s140, 1
      %p144 = scmp.eq.s32.totalorder %s22, 1
      %p145 = scmp.ne.s32.totalorder %s140, %s142
      %p146 = scmp.eq.s32.totalorder %s22, 0
      %p147 = por %p145, %p146
      %p148 = scmp.ne.s32.totalorder %s140, %s142
      %p149 = scmp.eq.s32.totalorder %s27, 1
      %p150 = por %p148, %p149
      %p151 = scmp.ne.s32.totalorder %s142, %s143
      %p152 = scmp.eq.s32.totalorder %s27, 0
      %p153 = por %p151, %p152
      %p154 = scmp.ne.s32.totalorder %s142, %s143
      %p155 = scmp.eq.s32.totalorder %s28, 1
      %p156 = por %p154, %p155
      %p158 = scmp.ne.s32.totalorder %s143, %s157
      %p159 = scmp.eq.s32.totalorder %s28, 0
      %p160 = por %p158, %p159
      %s162 = sadd.s32 %s161, 1
      %p165 = scmp.eq.s32.totalorder %s22, 1
      %p166 = scmp.ne.s32.totalorder %s161, %s163
      %p167 = scmp.eq.s32.totalorder %s22, 0
      %p168 = por %p166, %p167
      %p169 = scmp.ne.s32.totalorder %s161, %s163
      %p170 = scmp.eq.s32.totalorder %s27, 1
      %p171 = por %p169, %p170
      %p172 = scmp.ne.s32.totalorder %s163, %s164
      %p173 = scmp.eq.s32.totalorder %s27, 0
      %p174 = por %p172, %p173
      %p175 = scmp.ne.s32.totalorder %s163, %s164
      %p176 = scmp.eq.s32.totalorder %s28, 1
      %p177 = por %p175, %p176
      %p179 = scmp.ne.s32.totalorder %s164, %s178
      %p180 = scmp.eq.s32.totalorder %s28, 0
      %p181 = por %p179, %p180
      %s183 = sadd.s32 %s182, 1
      %p186 = scmp.eq.s32.totalorder %s22, 1
      %p187 = scmp.ne.s32.totalorder %s182, %s184
      %p188 = scmp.eq.s32.totalorder %s22, 0
      %p189 = por %p187, %p188
      %p190 = scmp.ne.s32.totalorder %s182, %s184
      %p191 = scmp.eq.s32.totalorder %s27, 1
      %p192 = por %p190, %p191
      %p193 = scmp.ne.s32.totalorder %s184, %s185
      %p194 = scmp.eq.s32.totalorder %s27, 0
      %p195 = por %p193, %p194
      %p196 = scmp.ne.s32.totalorder %s184, %s185
      %p197 = scmp.eq.s32.totalorder %s28, 1
      %p198 = por %p196, %p197
      %p200 = scmp.ne.s32.totalorder %s185, %s199
      %p201 = scmp.eq.s32.totalorder %s28, 0
      %p202 = por %p200, %p201
      %s204 = sadd.s32 %s203, 1
      %p207 = scmp.eq.s32.totalorder %s22, 1
      %p208 = scmp.ne.s32.totalorder %s203, %s205
      %p209 = scmp.eq.s32.totalorder %s22, 0
      %p210 = por %p208, %p209
      %p211 = scmp.ne.s32.totalorder %s203, %s205
      %p212 = scmp.eq.s32.totalorder %s27, 1
      %p213 = por %p211, %p212
      %p214 = scmp.ne.s32.totalorder %s205, %s206
      %p215 = scmp.eq.s32.totalorder %s27, 0
      %p216 = por %p214, %p215
      %p217 = scmp.ne.s32.totalorder %s205, %s206
      %p218 = scmp.eq.s32.totalorder %s28, 1
      %p219 = por %p217, %p218
      %p221 = scmp.ne.s32.totalorder %s206, %s220
      %p222 = scmp.eq.s32.totalorder %s28, 0
      %p223 = por %p221, %p222
      %s225 = sadd.s32 %s224, 1
      %p228 = scmp.eq.s32.totalorder %s22, 1
      %p229 = scmp.ne.s32.totalorder %s224, %s226
      %p230 = scmp.eq.s32.totalorder %s22, 0
      %p231 = por %p229, %p230
      %p232 = scmp.ne.s32.totalorder %s224, %s226
      %p233 = scmp.eq.s32.totalorder %s27, 1
      %p234 = por %p232, %p233
      %p235 = scmp.ne.s32.totalorder %s226, %s227
      %p236 = scmp.eq.s32.totalorder %s27, 0
      %p237 = por %p235, %p236
      %p238 = scmp.ne.s32.totalorder %s226, %s227
      %p239 = scmp.eq.s32.totalorder %s28, 1
      %p240 = por %p238, %p239
      %p242 = scmp.ne.s32.totalorder %s227, %s241
      %p243 = scmp.eq.s32.totalorder %s28, 0
      %p244 = por %p242, %p243
      %s246 = sadd.s32 %s245, 1
      %p249 = scmp.eq.s32.totalorder %s22, 1
      %p250 = scmp.ne.s32.totalorder %s245, %s247
      %p251 = scmp.eq.s32.totalorder %s22, 0
      %p252 = por %p250, %p251
      %p253 = scmp.ne.s32.totalorder %s245, %s247
      %p254 = scmp.eq.s32.totalorder %s27, 1
      %p255 = por %p253, %p254
      %p256 = scmp.ne.s32.totalorder %s247, %s248
      %p257 = scmp.eq.s32.totalorder %s27, 0
      %p258 = por %p256, %p257
      %p259 = scmp.ne.s32.totalorder %s247, %s248
      %p260 = scmp.eq.s32.totalorder %s28, 1
      %p261 = por %p259, %p260
      %p263 = scmp.ne.s32.totalorder %s248, %s262
      %p264 = scmp.eq.s32.totalorder %s28, 0
      %p265 = por %p263, %p264
      %s267 = sadd.s32 %s266, 1
      %p270 = scmp.eq.s32.totalorder %s22, 1
      %p271 = scmp.ne.s32.totalorder %s266, %s268
      %p272 = scmp.eq.s32.totalorder %s22, 0
      %p273 = por %p271, %p272
      %p274 = scmp.ne.s32.totalorder %s266, %s268
      %p275 = scmp.eq.s32.totalorder %s27, 1
      %p276 = por %p274, %p275
      %p277 = scmp.ne.s32.totalorder %s268, %s269
      %p278 = scmp.eq.s32.totalorder %s27, 0
      %p279 = por %p277, %p278
      %p280 = scmp.ne.s32.totalorder %s268, %s269
      %p281 = scmp.eq.s32.totalorder %s28, 1
      %p282 = por %p280, %p281
      %p284 = scmp.ne.s32.totalorder %s269, %s283
      %p285 = scmp.eq.s32.totalorder %s28, 0
      %p286 = por %p284, %p285
      %s288 = sadd.s32 %s287, 1
      %p291 = scmp.eq.s32.totalorder %s22, 1
      %p292 = scmp.ne.s32.totalorder %s287, %s289
      %p293 = scmp.eq.s32.totalorder %s22, 0
      %p294 = por %p292, %p293
      %p295 = scmp.ne.s32.totalorder %s287, %s289
      %p296 = scmp.eq.s32.totalorder %s27, 1
      %p297 = por %p295, %p296
      %p298 = scmp.ne.s32.totalorder %s289, %s290
      %p299 = scmp.eq.s32.totalorder %s27, 0
      %p300 = por %p298, %p299
      %p301 = scmp.ne.s32.totalorder %s289, %s290
      %p302 = scmp.eq.s32.totalorder %s28, 1
      %p303 = por %p301, %p302
      %p305 = scmp.ne.s32.totalorder %s290, %s304
      %p306 = scmp.eq.s32.totalorder %s28, 0
      %p307 = por %p305, %p306
      %s308 = ssub.s32 %s22, %s29
      %p309 = scmp.eq.s32.totalorder %s308, 0
      %s311 = sadd.s32 %s310, 1
      %s312 = scalar_select %p309, %s310, %s311
      %p315 = pneg %p309
      %p316 = scmp.eq.s32.totalorder %s22, 1
      %p317 = por %p315, %p316
      %p318 = scmp.ne.s32.totalorder %s310, %s313
      %p319 = scmp.eq.s32.totalorder %s22, 0
      %p320 = por %p318, %p319
      %p321 = scmp.ne.s32.totalorder %s310, %s313
      %p322 = scmp.eq.s32.totalorder %s27, 1
      %p323 = por %p321, %p322
      %p324 = scmp.ne.s32.totalorder %s313, %s314
      %p325 = scmp.eq.s32.totalorder %s27, 0
      %p326 = por %p324, %p325
      %p327 = scmp.ne.s32.totalorder %s313, %s314
      %p328 = scmp.eq.s32.totalorder %s28, 1
      %p329 = por %p327, %p328
      %p331 = scmp.ne.s32.totalorder %s314, %s330
      %p332 = scmp.eq.s32.totalorder %s28, 0
      %p333 = por %p331, %p332
      %p334 = scmp.le.s32.totalorder 1, %s22
      %p335 = scmp.lt.s32.totalorder %s22, 3
      %p336 = pnand %p334, %p335
      %p337 = pneg %p336
      // Predicated region
      $region9: #{block_forward.1} parent=5 // pred_check
        _
      $region10: #{block_forward.1} parent=5 // pred_check_branch
        %339 = sbr.rel (%p336) target = $region12
      $region11: #{block_forward.1} parent=5 // pred_region
        %s340 = ssub.s32 %s22, 1
        // Predicated region
        $region13: #{block_forward.1} parent=11 // pred_check
          %p341 = pneg %p69
        $region14: #{block_forward.1} parent=11 // pred_check_branch
          %343 = sbr.rel (%p341) target = $region16
        $region15: #{block_forward.1} parent=11 // pred_region
          _
        $region16: #{block_forward.1} parent=11 // pred_fallthru
          _
        // Predicated region
        $region17: #{block_forward.1} parent=11 // pred_check
          %p344 = pneg %p90
        $region18: #{block_forward.1} parent=11 // pred_check_branch
          %346 = sbr.rel (%p344) target = $region20
        $region19: #{block_forward.1} parent=11 // pred_region
          _
        $region20: #{block_forward.1} parent=11 // pred_fallthru
          _
        // Predicated region
        $region21: #{block_forward.1} parent=11 // pred_check
          %p347 = pneg %p111
        $region22: #{block_forward.1} parent=11 // pred_check_branch
          %349 = sbr.rel (%p347) target = $region24
        $region23: #{block_forward.1} parent=11 // pred_region
          _
        $region24: #{block_forward.1} parent=11 // pred_fallthru
          _
        // Predicated region
        $region25: #{block_forward.1} parent=11 // pred_check
          %p350 = pneg %p132
        $region26: #{block_forward.1} parent=11 // pred_check_branch
          %352 = sbr.rel (%p350) target = $region28
        $region27: #{block_forward.1} parent=11 // pred_region
          _
        $region28: #{block_forward.1} parent=11 // pred_fallthru
          _
        // Predicated region
        $region29: #{block_forward.1} parent=11 // pred_check
          %p353 = pneg %p153
        $region30: #{block_forward.1} parent=11 // pred_check_branch
          %355 = sbr.rel (%p353) target = $region32
        $region31: #{block_forward.1} parent=11 // pred_region
          _
        $region32: #{block_forward.1} parent=11 // pred_fallthru
          _
        // Predicated region
        $region33: #{block_forward.1} parent=11 // pred_check
          %p356 = pneg %p174
        $region34: #{block_forward.1} parent=11 // pred_check_branch
          %358 = sbr.rel (%p356) target = $region36
        $region35: #{block_forward.1} parent=11 // pred_region
          _
        $region36: #{block_forward.1} parent=11 // pred_fallthru
          _
        // Predicated region
        $region37: #{block_forward.1} parent=11 // pred_check
          %p359 = pneg %p195
        $region38: #{block_forward.1} parent=11 // pred_check_branch
          %361 = sbr.rel (%p359) target = $region40
        $region39: #{block_forward.1} parent=11 // pred_region
          _
        $region40: #{block_forward.1} parent=11 // pred_fallthru
          _
        // Predicated region
        $region41: #{block_forward.1} parent=11 // pred_check
          %p362 = pneg %p216
        $region42: #{block_forward.1} parent=11 // pred_check_branch
          %364 = sbr.rel (%p362) target = $region44
        $region43: #{block_forward.1} parent=11 // pred_region
          _
        $region44: #{block_forward.1} parent=11 // pred_fallthru
          _
        // Predicated region
        $region45: #{block_forward.1} parent=11 // pred_check
          %p365 = pneg %p237
        $region46: #{block_forward.1} parent=11 // pred_check_branch
          %367 = sbr.rel (%p365) target = $region48
        $region47: #{block_forward.1} parent=11 // pred_region
          _
        $region48: #{block_forward.1} parent=11 // pred_fallthru
          _
        // Predicated region
        $region49: #{block_forward.1} parent=11 // pred_check
          %p368 = pneg %p258
        $region50: #{block_forward.1} parent=11 // pred_check_branch
          %370 = sbr.rel (%p368) target = $region52
        $region51: #{block_forward.1} parent=11 // pred_region
          _
        $region52: #{block_forward.1} parent=11 // pred_fallthru
          _
        // Predicated region
        $region53: #{block_forward.1} parent=11 // pred_check
          %p371 = pneg %p279
        $region54: #{block_forward.1} parent=11 // pred_check_branch
          %373 = sbr.rel (%p371) target = $region56
        $region55: #{block_forward.1} parent=11 // pred_region
          _
        $region56: #{block_forward.1} parent=11 // pred_fallthru
          _
        // Predicated region
        $region57: #{block_forward.1} parent=11 // pred_check
          %p374 = pneg %p300
        $region58: #{block_forward.1} parent=11 // pred_check_branch
          %376 = sbr.rel (%p374) target = $region60
        $region59: #{block_forward.1} parent=11 // pred_region
          _
        $region60: #{block_forward.1} parent=11 // pred_fallthru
          _
      $region12: #{block_forward.1} parent=5 // pred_fallthru
        _
      %p377 = scmp.lt.s32.totalorder %s22, 2
      // Predicated region
      $region61: #{block_forward.1} parent=5 // pred_check
        %p378 = pneg %p377
      $region62: #{block_forward.1} parent=5 // pred_check_branch
        %380 = sbr.rel (%p378) target = $region64
      $region63: #{block_forward.1} parent=5 // pred_region
        // Predicated region
        $region65: #{block_forward.1} parent=63 // pred_check
          %p381 = pneg %p42
        $region66: #{block_forward.1} parent=63 // pred_check_branch
          %383 = sbr.rel (%p381) target = $region68
        $region67: #{block_forward.1} parent=63 // pred_region
          %p384 = scmp.lt.s32.totalorder %s22, 1
          %s385 = scalar_select %p384, %s22, 1
          %s386 = smul.addr %s385, 24
          %s387 = smul.addr %s386, 8
          %s388 = scalar_lea.vmem %s0, %s387
        $region68: #{block_forward.1} parent=63 // pred_fallthru
          _
      $region64: #{block_forward.1} parent=5 // pred_fallthru
        _
      %p389 = scmp.le.s32.totalorder 1, %s22
      %p390 = scmp.lt.s32.totalorder %s22, 3
      %p391 = pnand %p389, %p390
      %p392 = pneg %p391
      // Predicated region
      $region69: #{block_forward.1} parent=5 // pred_check
        _
      $region70: #{block_forward.1} parent=5 // pred_check_branch
        %394 = sbr.rel (%p391) target = $region72
      $region71: #{block_forward.1} parent=5 // pred_region
        %s395 = ssub.s32 %s22, 1
        %p396 = scmp.lt.s32.totalorder %s27, 1
        %s397 = scalar_select %p396, %s27, 1
        %s398 = smul.addr %s397, 24
        %s399 = smul.addr %s398, 8
        %s400 = scalar_lea.vmem %s0, %s399
        %p401 = pneg %p48
        %p402 = pneg %p45
        %p403 = pneg %p69
        %p404 = pneg %p66
        %p405 = pneg %p90
        %p406 = pneg %p87
        %p407 = pneg %p111
        %p408 = pneg %p108
        %p409 = pneg %p132
        %p410 = pneg %p129
        %p411 = pneg %p153
        %p412 = pneg %p150
        %p413 = pneg %p174
        %p414 = pneg %p171
        %p415 = pneg %p195
        %p416 = pneg %p192
        %p417 = pneg %p216
        %p418 = pneg %p213
        %p419 = pneg %p237
        %p420 = pneg %p234
        %p421 = pneg %p258
        %p422 = pneg %p255
        %p423 = pneg %p279
        %p424 = pneg %p276
        %p425 = pneg %p300
        %p426 = pneg %p297
        %p427 = pneg %p326
        %p428 = pneg %p323
        %s429 = sand.u32 %s313, 1
        %s430 = scalar_lea.sflag [#allocation3], %s429
        %s431 = sand.u32 %s313, 1
        %s432 = smul.addr %s431, 192
        %s433 = scalar_lea.vmem [#allocation2], %s432
        %p434 = scmp.lt.s32.totalorder %s27, 1
        %s435 = scalar_select %p434, %s27, 1
        %s436 = smul.addr %s435, 24
        %s437 = smul.addr %s436, 8
        %s438 = scalar_lea.vmem %s0, %s437
        %v440 = vld [vmem:[%s438] sm:$0xff]
        %v441 = vld [vmem:[%s438 + $0x8] sm:$0xff]
        %v442 = vld [vmem:[%s438 + $0x10] sm:$0xff]
        %v443 = vld [vmem:[%s438 + $0x18] sm:$0xff]
        %v444 = vld [vmem:[%s438 + $0x20] sm:$0xff]
        %v445 = vld [vmem:[%s438 + $0x28] sm:$0xff]
        %v446 = vld [vmem:[%s438 + $0x30] sm:$0xff]
        %v447 = vld [vmem:[%s438 + $0x38] sm:$0xff]
        %v448 = vld [vmem:[%s438 + $0x40] sm:$0xff]
        %v449 = vld [vmem:[%s438 + $0x48] sm:$0xff]
        %v450 = vld [vmem:[%s438 + $0x50] sm:$0xff]
        %v451 = vld [vmem:[%s438 + $0x58] sm:$0xff]
        %v452 = vld [vmem:[%s438 + $0x60] sm:$0xff]
        %v453 = vld [vmem:[%s438 + $0x68] sm:$0xff]
        %v454 = vld [vmem:[%s438 + $0x70] sm:$0xff]
        %v455 = vld [vmem:[%s438 + $0x78] sm:$0xff]
        %v456 = vld [vmem:[%s438 + $0x80] sm:$0xff]
        %v457 = vld [vmem:[%s438 + $0x88] sm:$0xff]
        %v458 = vld [vmem:[%s438 + $0x90] sm:$0xff]
        %v459 = vld [vmem:[%s438 + $0x98] sm:$0xff]
        %v460 = vld [vmem:[%s438 + $0xa0] sm:$0xff]
        %v461 = vld [vmem:[%s438 + $0xa8] sm:$0xff]
        %v462 = vld [vmem:[%s438 + $0xb0] sm:$0xff]
        %v463 = vld [vmem:[%s438 + $0xb8] sm:$0xff]
        %v464 = vld [vmem:[%s2] sm:$0x7]
        %v465 = vld [vmem:[%s3] sm:$0x7]
        %v466 = vadd.f32 %v440, %v441
        %v467 = vadd.f32 %v466, %v442
        %468 = vadd.xlane.f32.xlu0 %v467
        %v469 = vpop.xlane.xlu0 %468
        %v470 = vadd.f32 %v443, %v444
        %v471 = vadd.f32 %v470, %v445
        %472 = vadd.xlane.f32.xlu0 %v471
        %v473 = vpop.xlane.xlu0 %472
        %v474 = vadd.f32 %v446, %v447
        %v475 = vadd.f32 %v474, %v448
        %476 = vadd.xlane.f32.xlu0 %v475
        %v477 = vpop.xlane.xlu0 %476
        %v478 = vadd.f32 %v449, %v450
        %v479 = vadd.f32 %v478, %v451
        %480 = vadd.xlane.f32.xlu0 %v479
        %v481 = vpop.xlane.xlu0 %480
        %v482 = vadd.f32 %v452, %v453
        %v483 = vadd.f32 %v482, %v454
        %484 = vadd.xlane.f32.xlu0 %v483
        %v485 = vpop.xlane.xlu0 %484
        %v486 = vadd.f32 %v455, %v456
        %v487 = vadd.f32 %v486, %v457
        %488 = vadd.xlane.f32.xlu0 %v487
        %v489 = vpop.xlane.xlu0 %488
        %v490 = vadd.f32 %v458, %v459
        %v491 = vadd.f32 %v490, %v460
        %492 = vadd.xlane.f32.xlu0 %v491
        %v493 = vpop.xlane.xlu0 %492
        %v494 = vadd.f32 %v461, %v462
        %v495 = vadd.f32 %v494, %v463
        %496 = vadd.xlane.f32.xlu0 %v495
        %v497 = vpop.xlane.xlu0 %496
        %v498 = vrcp.pop 384.0
        %v499 = vmul.f32 384.0, %v498
        %v500 = vsub.f32 1.0, %v499
        %v501 = vmul.f32 %v498, %v500
        %v502 = vadd.f32 %v498, %v501
        %vm503 = vweird.f32 %v498
        %v504 = vsel %vm503, %v498, %v502
        %v505 = vmul.f32 %v469, %v504
        %v506 = vmul.f32 %v473, %v504
        %v507 = vmul.f32 %v477, %v504
        %v508 = vmul.f32 %v481, %v504
        %v509 = vmul.f32 %v485, %v504
        %v510 = vmul.f32 %v489, %v504
        %v511 = vmul.f32 %v493, %v504
        %v512 = vmul.f32 %v497, %v504
        %v513 = vsub.f32 %v440, %v505
        %v514 = vsub.f32 %v441, %v505
        %v515 = vsub.f32 %v442, %v505
        %v516 = vsub.f32 %v443, %v506
        %v517 = vsub.f32 %v444, %v506
        %v518 = vsub.f32 %v445, %v506
        %v519 = vsub.f32 %v446, %v507
        %v520 = vsub.f32 %v447, %v507
        %v521 = vsub.f32 %v448, %v507
        %v522 = vsub.f32 %v449, %v508
        %v523 = vsub.f32 %v450, %v508
        %v524 = vsub.f32 %v451, %v508
        %v525 = vsub.f32 %v452, %v509
        %v526 = vsub.f32 %v453, %v509
        %v527 = vsub.f32 %v454, %v509
        %v528 = vsub.f32 %v455, %v510
        %v529 = vsub.f32 %v456, %v510
        %v530 = vsub.f32 %v457, %v510
        %v531 = vsub.f32 %v458, %v511
        %v532 = vsub.f32 %v459, %v511
        %v533 = vsub.f32 %v460, %v511
        %v534 = vsub.f32 %v461, %v512
        %v535 = vsub.f32 %v462, %v512
        %v536 = vsub.f32 %v463, %v512
        %v537 = vmul.f32 %v513, %v513
        %v538 = vmul.f32 %v514, %v514
        %v539 = vmul.f32 %v515, %v515
        %v540 = vmul.f32 %v516, %v516
        %v541 = vmul.f32 %v517, %v517
        %v542 = vmul.f32 %v518, %v518
        %v543 = vmul.f32 %v519, %v519
        %v544 = vmul.f32 %v520, %v520
        %v545 = vmul.f32 %v521, %v521
        %v546 = vmul.f32 %v522, %v522
        %v547 = vmul.f32 %v523, %v523
        %v548 = vmul.f32 %v524, %v524
        %v549 = vmul.f32 %v525, %v525
        %v550 = vmul.f32 %v526, %v526
        %v551 = vmul.f32 %v527, %v527
        %v552 = vmul.f32 %v528, %v528
        %v553 = vmul.f32 %v529, %v529
        %v554 = vmul.f32 %v530, %v530
        %v555 = vmul.f32 %v531, %v531
        %v556 = vmul.f32 %v532, %v532
        %v557 = vmul.f32 %v533, %v533
        %v558 = vmul.f32 %v534, %v534
        %v559 = vmul.f32 %v535, %v535
        %v560 = vmul.f32 %v536, %v536
        %v561 = vadd.f32 %v537, %v538
        %v562 = vadd.f32 %v561, %v539
        %563 = vadd.xlane.f32.xlu0 %v562
        %v564 = vpop.xlane.xlu0 %563
        %v565 = vadd.f32 %v540, %v541
        %v566 = vadd.f32 %v565, %v542
        %567 = vadd.xlane.f32.xlu0 %v566
        %v568 = vpop.xlane.xlu0 %567
        %v569 = vadd.f32 %v543, %v544
        %v570 = vadd.f32 %v569, %v545
        %571 = vadd.xlane.f32.xlu0 %v570
        %v572 = vpop.xlane.xlu0 %571
        %v573 = vadd.f32 %v546, %v547
        %v574 = vadd.f32 %v573, %v548
        %575 = vadd.xlane.f32.xlu0 %v574
        %v576 = vpop.xlane.xlu0 %575
        %v577 = vadd.f32 %v549, %v550
        %v578 = vadd.f32 %v577, %v551
        %579 = vadd.xlane.f32.xlu0 %v578
        %v580 = vpop.xlane.xlu0 %579
        %v581 = vadd.f32 %v552, %v553
        %v582 = vadd.f32 %v581, %v554
        %583 = vadd.xlane.f32.xlu0 %v582
        %v584 = vpop.xlane.xlu0 %583
        %v585 = vadd.f32 %v555, %v556
        %v586 = vadd.f32 %v585, %v557
        %587 = vadd.xlane.f32.xlu0 %v586
        %v588 = vpop.xlane.xlu0 %587
        %v589 = vadd.f32 %v558, %v559
        %v590 = vadd.f32 %v589, %v560
        %591 = vadd.xlane.f32.xlu0 %v590
        %v592 = vpop.xlane.xlu0 %591
        %v593 = vmul.f32 %v564, %v504
        %v594 = vmul.f32 %v568, %v504
        %v595 = vmul.f32 %v572, %v504
        %v596 = vmul.f32 %v576, %v504
        %v597 = vmul.f32 %v580, %v504
        %v598 = vmul.f32 %v584, %v504
        %v599 = vmul.f32 %v588, %v504
        %v600 = vmul.f32 %v592, %v504
        %v601 = vadd.f32 %v593, 1e-05
        %v602 = vadd.f32 %v594, 1e-05
        %v603 = vadd.f32 %v595, 1e-05
        %v604 = vadd.f32 %v596, 1e-05
        %v605 = vadd.f32 %v597, 1e-05
        %v606 = vadd.f32 %v598, 1e-05
        %v607 = vadd.f32 %v599, 1e-05
        %v608 = vadd.f32 %v600, 1e-05
        %v609 = vrsqrt.pop %v601
        %v610 = vmul.f32 %v609, %v601
        %v611 = vmul.f32 %v610, %v609
        %v612 = vmul.f32 0.5, %v611
        %v613 = vsub.f32 1.5, %v612
        %v614 = vmul.f32 %v609, %v613
        %vm615 = vweird.f32 %v601
        %vm616 = vweird.f32 %v609
        %vm617 = vmor %vm615, %vm616
        %v618 = vsel %vm617, %v609, %v614
        %v619 = vrsqrt.pop %v602
        %v620 = vmul.f32 %v619, %v602
        %v621 = vmul.f32 %v620, %v619
        %v622 = vmul.f32 0.5, %v621
        %v623 = vsub.f32 1.5, %v622
        %v624 = vmul.f32 %v619, %v623
        %vm625 = vweird.f32 %v602
        %vm626 = vweird.f32 %v619
        %vm627 = vmor %vm625, %vm626
        %v628 = vsel %vm627, %v619, %v624
        %v629 = vrsqrt.pop %v603
        %v630 = vmul.f32 %v629, %v603
        %v631 = vmul.f32 %v630, %v629
        %v632 = vmul.f32 0.5, %v631
        %v633 = vsub.f32 1.5, %v632
        %v634 = vmul.f32 %v629, %v633
        %vm635 = vweird.f32 %v603
        %vm636 = vweird.f32 %v629
        %vm637 = vmor %vm635, %vm636
        %v638 = vsel %vm637, %v629, %v634
        %v639 = vrsqrt.pop %v604
        %v640 = vmul.f32 %v639, %v604
        %v641 = vmul.f32 %v640, %v639
        %v642 = vmul.f32 0.5, %v641
        %v643 = vsub.f32 1.5, %v642
        %v644 = vmul.f32 %v639, %v643
        %vm645 = vweird.f32 %v604
        %vm646 = vweird.f32 %v639
        %vm647 = vmor %vm645, %vm646
        %v648 = vsel %vm647, %v639, %v644
        %v649 = vrsqrt.pop %v605
        %v650 = vmul.f32 %v649, %v605
        %v651 = vmul.f32 %v650, %v649
        %v652 = vmul.f32 0.5, %v651
        %v653 = vsub.f32 1.5, %v652
        %v654 = vmul.f32 %v649, %v653
        %vm655 = vweird.f32 %v605
        %vm656 = vweird.f32 %v649
        %vm657 = vmor %vm655, %vm656
        %v658 = vsel %vm657, %v649, %v654
        %v659 = vrsqrt.pop %v606
        %v660 = vmul.f32 %v659, %v606
        %v661 = vmul.f32 %v660, %v659
        %v662 = vmul.f32 0.5, %v661
        %v663 = vsub.f32 1.5, %v662
        %v664 = vmul.f32 %v659, %v663
        %vm665 = vweird.f32 %v606
        %vm666 = vweird.f32 %v659
        %vm667 = vmor %vm665, %vm666
        %v668 = vsel %vm667, %v659, %v664
        %v669 = vrsqrt.pop %v607
        %v670 = vmul.f32 %v669, %v607
        %v671 = vmul.f32 %v670, %v669
        %v672 = vmul.f32 0.5, %v671
        %v673 = vsub.f32 1.5, %v672
        %v674 = vmul.f32 %v669, %v673
        %vm675 = vweird.f32 %v607
        %vm676 = vweird.f32 %v669
        %vm677 = vmor %vm675, %vm676
        %v678 = vsel %vm677, %v669, %v674
        %v679 = vrsqrt.pop %v608
        %v680 = vmul.f32 %v679, %v608
        %v681 = vmul.f32 %v680, %v679
        %v682 = vmul.f32 0.5, %v681
        %v683 = vsub.f32 1.5, %v682
        %v684 = vmul.f32 %v679, %v683
        %vm685 = vweird.f32 %v608
        %vm686 = vweird.f32 %v679
        %vm687 = vmor %vm685, %vm686
        %v688 = vsel %vm687, %v679, %v684
        %v689 = vmul.f32 %v513, %v618
        %v690 = vmul.f32 %v514, %v618
        %v691 = vmul.f32 %v515, %v618
        %v692 = vmul.f32 %v516, %v628
        %v693 = vmul.f32 %v517, %v628
        %v694 = vmul.f32 %v518, %v628
        %v695 = vmul.f32 %v519, %v638
        %v696 = vmul.f32 %v520, %v638
        %v697 = vmul.f32 %v521, %v638
        %v698 = vmul.f32 %v522, %v648
        %v699 = vmul.f32 %v523, %v648
        %v700 = vmul.f32 %v524, %v648
        %v701 = vmul.f32 %v525, %v658
        %v702 = vmul.f32 %v526, %v658
        %v703 = vmul.f32 %v527, %v658
        %v704 = vmul.f32 %v528, %v668
        %v705 = vmul.f32 %v529, %v668
        %v706 = vmul.f32 %v530, %v668
        %v707 = vmul.f32 %v531, %v678
        %v708 = vmul.f32 %v532, %v678
        %v709 = vmul.f32 %v533, %v678
        %v710 = vmul.f32 %v534, %v688
        %v711 = vmul.f32 %v535, %v688
        %v712 = vmul.f32 %v536, %v688
        %v714 = vperm.slane %v464, 0
        %v715 = vperm.slane %v464, 1
        %v716 = vperm.slane %v464, 2
        %v720 = vmul.f32 %v689, %v714
        %v721 = vmul.f32 %v690, %v715
        %v722 = vmul.f32 %v691, %v716
        %v723 = vmul.f32 %v692, %v714
        %v724 = vmul.f32 %v693, %v715
        %v725 = vmul.f32 %v694, %v716
        %v726 = vmul.f32 %v695, %v714
        %v727 = vmul.f32 %v696, %v715
        %v728 = vmul.f32 %v697, %v716
        %v729 = vmul.f32 %v698, %v714
        %v730 = vmul.f32 %v699, %v715
        %v731 = vmul.f32 %v700, %v716
        %v732 = vmul.f32 %v701, %v714
        %v733 = vmul.f32 %v702, %v715
        %v734 = vmul.f32 %v703, %v716
        %v735 = vmul.f32 %v704, %v714
        %v736 = vmul.f32 %v705, %v715
        %v737 = vmul.f32 %v706, %v716
        %v738 = vmul.f32 %v707, %v714
        %v739 = vmul.f32 %v708, %v715
        %v740 = vmul.f32 %v709, %v716
        %v741 = vmul.f32 %v710, %v714
        %v742 = vmul.f32 %v711, %v715
        %v743 = vmul.f32 %v712, %v716
        %v745 = vperm.slane %v465, 0
        %v746 = vperm.slane %v465, 1
        %v747 = vperm.slane %v465, 2
        %v751 = vadd.f32 %v720, %v745
        %v752 = vadd.f32 %v721, %v746
        %v753 = vadd.f32 %v722, %v747
        %v754 = vadd.f32 %v723, %v745
        %v755 = vadd.f32 %v724, %v746
        %v756 = vadd.f32 %v725, %v747
        %v757 = vadd.f32 %v726, %v745
        %v758 = vadd.f32 %v727, %v746
        %v759 = vadd.f32 %v728, %v747
        %v760 = vadd.f32 %v729, %v745
        %v761 = vadd.f32 %v730, %v746
        %v762 = vadd.f32 %v731, %v747
        %v763 = vadd.f32 %v732, %v745
        %v764 = vadd.f32 %v733, %v746
        %v765 = vadd.f32 %v734, %v747
        %v766 = vadd.f32 %v735, %v745
        %v767 = vadd.f32 %v736, %v746
        %v768 = vadd.f32 %v737, %v747
        %v769 = vadd.f32 %v738, %v745
        %v770 = vadd.f32 %v739, %v746
        %v771 = vadd.f32 %v740, %v747
        %v772 = vadd.f32 %v741, %v745
        %v773 = vadd.f32 %v742, %v746
        %v774 = vadd.f32 %v743, %v747
        %v775 = vpack.c.bf16 %v754, %v751
        %v776 = vpack.c.bf16 %v755, %v752
        %v777 = vpack.c.bf16 %v756, %v753
        %v778 = vpack.c.bf16 %v760, %v757
        %v779 = vpack.c.bf16 %v761, %v758
        %v780 = vpack.c.bf16 %v762, %v759
        %v781 = vpack.c.bf16 %v766, %v763
        %v782 = vpack.c.bf16 %v767, %v764
        %v783 = vpack.c.bf16 %v768, %v765
        %v784 = vpack.c.bf16 %v772, %v769
        %v785 = vpack.c.bf16 %v773, %v770
        %v786 = vpack.c.bf16 %v774, %v771
        %v787 = vld [vmem:[%s4] sm:$0xff]
        %v788 = vld [vmem:[%s4 + $0x8] sm:$0xf]
        %v789 = vld [vmem:[%s4 + $0xc] sm:$0xff]
        %v790 = vld [vmem:[%s4 + $0x14] sm:$0xf]
        %v791 = vld [vmem:[%s4 + $0x18] sm:$0xff]
        %v792 = vld [vmem:[%s4 + $0x20] sm:$0xf]
        %v793 = vld [vmem:[%s4 + $0x24] sm:$0xff]
        %v794 = vld [vmem:[%s4 + $0x2c] sm:$0xf]
        %v795 = vld [vmem:[%s4 + $0x30] sm:$0xff]
        %v796 = vld [vmem:[%s4 + $0x38] sm:$0xf]
        %v797 = vld [vmem:[%s4 + $0x3c] sm:$0xff]
        %v798 = vld [vmem:[%s4 + $0x44] sm:$0xf]
        %v799 = vld [vmem:[%s4 + $0x48] sm:$0xff]
        %v800 = vld [vmem:[%s4 + $0x50] sm:$0xf]
        %v801 = vld [vmem:[%s4 + $0x54] sm:$0xff]
        %v802 = vld [vmem:[%s4 + $0x5c] sm:$0xf]
        %v803 = vld [vmem:[%s4 + $0x60] sm:$0xff]
        %v804 = vld [vmem:[%s4 + $0x68] sm:$0xf]
        %v805 = vld [vmem:[%s4 + $0x6c] sm:$0xff]
        %v806 = vld [vmem:[%s4 + $0x74] sm:$0xf]
        %v807 = vld [vmem:[%s4 + $0x78] sm:$0xff]
        %v808 = vld [vmem:[%s4 + $0x80] sm:$0xf]
        %v809 = vld [vmem:[%s4 + $0x84] sm:$0xff]
        %v810 = vld [vmem:[%s4 + $0x8c] sm:$0xf]
        %v811 = vld [vmem:[%s4 + $0x90] sm:$0xff]
        %v812 = vld [vmem:[%s4 + $0x98] sm:$0xf]
        %v813 = vld [vmem:[%s4 + $0x9c] sm:$0xff]
        %v814 = vld [vmem:[%s4 + $0xa4] sm:$0xf]
        %v815 = vld [vmem:[%s4 + $0xa8] sm:$0xff]
        %v816 = vld [vmem:[%s4 + $0xb0] sm:$0xf]
        %v817 = vld [vmem:[%s4 + $0xb4] sm:$0xff]
        %v818 = vld [vmem:[%s4 + $0xbc] sm:$0xf]
        %v819 = vld [vmem:[%s4 + $0xc0] sm:$0xff]
        %v820 = vld [vmem:[%s4 + $0xc8] sm:$0xf]
        %v821 = vld [vmem:[%s4 + $0xcc] sm:$0xff]
        %v822 = vld [vmem:[%s4 + $0xd4] sm:$0xf]
        %v823 = vld [vmem:[%s4 + $0xd8] sm:$0xff]
        %v824 = vld [vmem:[%s4 + $0xe0] sm:$0xf]
        %v825 = vld [vmem:[%s4 + $0xe4] sm:$0xff]
        %v826 = vld [vmem:[%s4 + $0xec] sm:$0xf]
        %v827 = vld [vmem:[%s4 + $0xf0] sm:$0xff]
        %v828 = vld [vmem:[%s4 + $0xf8] sm:$0xf]
        %v829 = vld [vmem:[%s4 + $0xfc] sm:$0xff]
        %v830 = vld [vmem:[%s4 + $0x104] sm:$0xf]
        %v831 = vld [vmem:[%s4 + $0x108] sm:$0xff]
        %v832 = vld [vmem:[%s4 + $0x110] sm:$0xf]
        %v833 = vld [vmem:[%s4 + $0x114] sm:$0xff]
        %v834 = vld [vmem:[%s4 + $0x11c] sm:$0xf]
        %v835 = vld [vmem:[%s4 + $0x120] sm:$0xff]
        %v836 = vld [vmem:[%s4 + $0x128] sm:$0xf]
        %v837 = vld [vmem:[%s4 + $0x12c] sm:$0xff]
        %v838 = vld [vmem:[%s4 + $0x134] sm:$0xf]
        %v839 = vld [vmem:[%s4 + $0x138] sm:$0xff]
        %v840 = vld [vmem:[%s4 + $0x140] sm:$0xf]
        %v841 = vld [vmem:[%s4 + $0x144] sm:$0xff]
        %v842 = vld [vmem:[%s4 + $0x14c] sm:$0xf]
        %v843 = vld [vmem:[%s4 + $0x150] sm:$0xff]
        %v844 = vld [vmem:[%s4 + $0x158] sm:$0xf]
        %v845 = vld [vmem:[%s4 + $0x15c] sm:$0xff]
        %v846 = vld [vmem:[%s4 + $0x164] sm:$0xf]
        %v847 = vld [vmem:[%s4 + $0x168] sm:$0xff]
        %v848 = vld [vmem:[%s4 + $0x170] sm:$0xf]
        %v849 = vld [vmem:[%s4 + $0x174] sm:$0xff]
        %v850 = vld [vmem:[%s4 + $0x17c] sm:$0xf]
        %v851 = vld [vmem:[%s4 + $0x180] sm:$0xff]
        %v852 = vld [vmem:[%s4 + $0x188] sm:$0xf]
        %v853 = vld [vmem:[%s4 + $0x18c] sm:$0xff]
        %v854 = vld [vmem:[%s4 + $0x194] sm:$0xf]
        %v855 = vld [vmem:[%s4 + $0x198] sm:$0xff]
        %v856 = vld [vmem:[%s4 + $0x1a0] sm:$0xf]
        %v857 = vld [vmem:[%s4 + $0x1a4] sm:$0xff]
        %v858 = vld [vmem:[%s4 + $0x1ac] sm:$0xf]
        %v859 = vld [vmem:[%s4 + $0x1b0] sm:$0xff]
        %v860 = vld [vmem:[%s4 + $0x1b8] sm:$0xf]
        %v861 = vld [vmem:[%s4 + $0x1bc] sm:$0xff]
        %v862 = vld [vmem:[%s4 + $0x1c4] sm:$0xf]
        %v863 = vld [vmem:[%s4 + $0x1c8] sm:$0xff]
        %v864 = vld [vmem:[%s4 + $0x1d0] sm:$0xf]
        %v865 = vld [vmem:[%s4 + $0x1d4] sm:$0xff]
        %v866 = vld [vmem:[%s4 + $0x1dc] sm:$0xf]
        %v867 = vld [vmem:[%s4 + $0x1e0] sm:$0xff]
        %v868 = vld [vmem:[%s4 + $0x1e8] sm:$0xf]
        %v869 = vld [vmem:[%s4 + $0x1ec] sm:$0xff]
        %v870 = vld [vmem:[%s4 + $0x1f4] sm:$0xf]
        %v871 = vld [vmem:[%s4 + $0x1f8] sm:$0xff]
        %v872 = vld [vmem:[%s4 + $0x200] sm:$0xf]
        %v873 = vld [vmem:[%s4 + $0x204] sm:$0xff]
        %v874 = vld [vmem:[%s4 + $0x20c] sm:$0xf]
        %v875 = vld [vmem:[%s4 + $0x210] sm:$0xff]
        %v876 = vld [vmem:[%s4 + $0x218] sm:$0xf]
        %v877 = vld [vmem:[%s4 + $0x21c] sm:$0xff]
        %v878 = vld [vmem:[%s4 + $0x224] sm:$0xf]
        %v879 = vld [vmem:[%s4 + $0x228] sm:$0xff]
        %v880 = vld [vmem:[%s4 + $0x230] sm:$0xf]
        %v881 = vld [vmem:[%s4 + $0x234] sm:$0xff]
        %v882 = vld [vmem:[%s4 + $0x23c] sm:$0xf]
        %v883 = vld [vmem:[%s4 + $0x240] sm:$0xff]
        %v884 = vld [vmem:[%s4 + $0x248] sm:$0xf]
        %v885 = vld [vmem:[%s4 + $0x24c] sm:$0xff]
        %v886 = vld [vmem:[%s4 + $0x254] sm:$0xf]
        %v887 = vld [vmem:[%s4 + $0x258] sm:$0xff]
        %v888 = vld [vmem:[%s4 + $0x260] sm:$0xf]
        %v889 = vld [vmem:[%s4 + $0x264] sm:$0xff]
        %v890 = vld [vmem:[%s4 + $0x26c] sm:$0xf]
        %v891 = vld [vmem:[%s4 + $0x270] sm:$0xff]
        %v892 = vld [vmem:[%s4 + $0x278] sm:$0xf]
        %v893 = vld [vmem:[%s4 + $0x27c] sm:$0xff]
        %v894 = vld [vmem:[%s4 + $0x284] sm:$0xf]
        %v895 = vld [vmem:[%s4 + $0x288] sm:$0xff]
        %v896 = vld [vmem:[%s4 + $0x290] sm:$0xf]
        %v897 = vld [vmem:[%s4 + $0x294] sm:$0xff]
        %v898 = vld [vmem:[%s4 + $0x29c] sm:$0xf]
        %v899 = vld [vmem:[%s4 + $0x2a0] sm:$0xff]
        %v900 = vld [vmem:[%s4 + $0x2a8] sm:$0xf]
        %v901 = vld [vmem:[%s4 + $0x2ac] sm:$0xff]
        %v902 = vld [vmem:[%s4 + $0x2b4] sm:$0xf]
        %v903 = vld [vmem:[%s4 + $0x2b8] sm:$0xff]
        %v904 = vld [vmem:[%s4 + $0x2c0] sm:$0xf]
        %v905 = vld [vmem:[%s4 + $0x2c4] sm:$0xff]
        %v906 = vld [vmem:[%s4 + $0x2cc] sm:$0xf]
        %v907 = vld [vmem:[%s4 + $0x2d0] sm:$0xff]
        %v908 = vld [vmem:[%s4 + $0x2d8] sm:$0xf]
        %v909 = vld [vmem:[%s4 + $0x2dc] sm:$0xff]
        %v910 = vld [vmem:[%s4 + $0x2e4] sm:$0xf]
        %v911 = vld [vmem:[%s4 + $0x2e8] sm:$0xff]
        %v912 = vld [vmem:[%s4 + $0x2f0] sm:$0xf]
        %v913 = vld [vmem:[%s4 + $0x2f4] sm:$0xff]
        %v914 = vld [vmem:[%s4 + $0x2fc] sm:$0xf]
        %v915 = vld [vmem:[%s4 + $0x300] sm:$0xff]
        %v916 = vld [vmem:[%s4 + $0x308] sm:$0xf]
        %v917 = vld [vmem:[%s4 + $0x30c] sm:$0xff]
        %v918 = vld [vmem:[%s4 + $0x314] sm:$0xf]
        %v919 = vld [vmem:[%s4 + $0x318] sm:$0xff]
        %v920 = vld [vmem:[%s4 + $0x320] sm:$0xf]
        %v921 = vld [vmem:[%s4 + $0x324] sm:$0xff]
        %v922 = vld [vmem:[%s4 + $0x32c] sm:$0xf]
        %v923 = vld [vmem:[%s4 + $0x330] sm:$0xff]
        %v924 = vld [vmem:[%s4 + $0x338] sm:$0xf]
        %v925 = vld [vmem:[%s4 + $0x33c] sm:$0xff]
        %v926 = vld [vmem:[%s4 + $0x344] sm:$0xf]
        %v927 = vld [vmem:[%s4 + $0x348] sm:$0xff]
        %v928 = vld [vmem:[%s4 + $0x350] sm:$0xf]
        %v929 = vld [vmem:[%s4 + $0x354] sm:$0xff]
        %v930 = vld [vmem:[%s4 + $0x35c] sm:$0xf]
        %v931 = vld [vmem:[%s4 + $0x360] sm:$0xff]
        %v932 = vld [vmem:[%s4 + $0x368] sm:$0xf]
        %v933 = vld [vmem:[%s4 + $0x36c] sm:$0xff]
        %v934 = vld [vmem:[%s4 + $0x374] sm:$0xf]
        %v935 = vld [vmem:[%s4 + $0x378] sm:$0xff]
        %v936 = vld [vmem:[%s4 + $0x380] sm:$0xf]
        %v937 = vld [vmem:[%s4 + $0x384] sm:$0xff]
        %v938 = vld [vmem:[%s4 + $0x38c] sm:$0xf]
        %v939 = vld [vmem:[%s4 + $0x390] sm:$0xff]
        %v940 = vld [vmem:[%s4 + $0x398] sm:$0xf]
        %v941 = vld [vmem:[%s4 + $0x39c] sm:$0xff]
        %v942 = vld [vmem:[%s4 + $0x3a4] sm:$0xf]
        %v943 = vld [vmem:[%s4 + $0x3a8] sm:$0xff]
        %v944 = vld [vmem:[%s4 + $0x3b0] sm:$0xf]
        %v945 = vld [vmem:[%s4 + $0x3b4] sm:$0xff]
        %v946 = vld [vmem:[%s4 + $0x3bc] sm:$0xf]
        %v947 = vld [vmem:[%s4 + $0x3c0] sm:$0xff]
        %v948 = vld [vmem:[%s4 + $0x3c8] sm:$0xf]
        %v949 = vld [vmem:[%s4 + $0x3cc] sm:$0xff]
        %v950 = vld [vmem:[%s4 + $0x3d4] sm:$0xf]
        %v951 = vld [vmem:[%s4 + $0x3d8] sm:$0xff]
        %v952 = vld [vmem:[%s4 + $0x3e0] sm:$0xf]
        %v953 = vld [vmem:[%s4 + $0x3e4] sm:$0xff]
        %v954 = vld [vmem:[%s4 + $0x3ec] sm:$0xf]
        %v955 = vld [vmem:[%s4 + $0x3f0] sm:$0xff]
        %v956 = vld [vmem:[%s4 + $0x3f8] sm:$0xf]
        %v957 = vld [vmem:[%s4 + $0x3fc] sm:$0xff]
        %v958 = vld [vmem:[%s4 + $0x404] sm:$0xf]
        %v959 = vld [vmem:[%s4 + $0x408] sm:$0xff]
        %v960 = vld [vmem:[%s4 + $0x410] sm:$0xf]
        %v961 = vld [vmem:[%s4 + $0x414] sm:$0xff]
        %v962 = vld [vmem:[%s4 + $0x41c] sm:$0xf]
        %v963 = vld [vmem:[%s4 + $0x420] sm:$0xff]
        %v964 = vld [vmem:[%s4 + $0x428] sm:$0xf]
        %v965 = vld [vmem:[%s4 + $0x42c] sm:$0xff]
        %v966 = vld [vmem:[%s4 + $0x434] sm:$0xf]
        %v967 = vld [vmem:[%s4 + $0x438] sm:$0xff]
        %v968 = vld [vmem:[%s4 + $0x440] sm:$0xf]
        %v969 = vld [vmem:[%s4 + $0x444] sm:$0xff]
        %v970 = vld [vmem:[%s4 + $0x44c] sm:$0xf]
        %v971 = vld [vmem:[%s4 + $0x450] sm:$0xff]
        %v972 = vld [vmem:[%s4 + $0x458] sm:$0xf]
        %v973 = vld [vmem:[%s4 + $0x45c] sm:$0xff]
        %v974 = vld [vmem:[%s4 + $0x464] sm:$0xf]
        %v975 = vld [vmem:[%s4 + $0x468] sm:$0xff]
        %v976 = vld [vmem:[%s4 + $0x470] sm:$0xf]
        %v977 = vld [vmem:[%s4 + $0x474] sm:$0xff]
        %v978 = vld [vmem:[%s4 + $0x47c] sm:$0xf]
        %v979 = vld [vmem:[%s4 + $0x480] sm:$0xff]
        %v980 = vld [vmem:[%s4 + $0x488] sm:$0xf]
        %v981 = vld [vmem:[%s4 + $0x48c] sm:$0xff]
        %v982 = vld [vmem:[%s4 + $0x494] sm:$0xf]
        %v983 = vld [vmem:[%s4 + $0x498] sm:$0xff]
        %v984 = vld [vmem:[%s4 + $0x4a0] sm:$0xf]
        %v985 = vld [vmem:[%s4 + $0x4a4] sm:$0xff]
        %v986 = vld [vmem:[%s4 + $0x4ac] sm:$0xf]
        %v987 = vld [vmem:[%s4 + $0x4b0] sm:$0xff]
        %v988 = vld [vmem:[%s4 + $0x4b8] sm:$0xf]
        %v989 = vld [vmem:[%s4 + $0x4bc] sm:$0xff]
        %v990 = vld [vmem:[%s4 + $0x4c4] sm:$0xf]
        %v991 = vld [vmem:[%s4 + $0x4c8] sm:$0xff]
        %v992 = vld [vmem:[%s4 + $0x4d0] sm:$0xf]
        %v993 = vld [vmem:[%s4 + $0x4d4] sm:$0xff]
        %v994 = vld [vmem:[%s4 + $0x4dc] sm:$0xf]
        %v995 = vld [vmem:[%s4 + $0x4e0] sm:$0xff]
        %v996 = vld [vmem:[%s4 + $0x4e8] sm:$0xf]
        %v997 = vld [vmem:[%s4 + $0x4ec] sm:$0xff]
        %v998 = vld [vmem:[%s4 + $0x4f4] sm:$0xf]
        %v999 = vld [vmem:[%s4 + $0x4f8] sm:$0xff]
        %v1000 = vld [vmem:[%s4 + $0x500] sm:$0xf]
        %v1001 = vld [vmem:[%s4 + $0x504] sm:$0xff]
        %v1002 = vld [vmem:[%s4 + $0x50c] sm:$0xf]
        %v1003 = vld [vmem:[%s4 + $0x510] sm:$0xff]
        %v1004 = vld [vmem:[%s4 + $0x518] sm:$0xf]
        %v1005 = vld [vmem:[%s4 + $0x51c] sm:$0xff]
        %v1006 = vld [vmem:[%s4 + $0x524] sm:$0xf]
        %v1007 = vld [vmem:[%s4 + $0x528] sm:$0xff]
        %v1008 = vld [vmem:[%s4 + $0x530] sm:$0xf]
        %v1009 = vld [vmem:[%s4 + $0x534] sm:$0xff]
        %v1010 = vld [vmem:[%s4 + $0x53c] sm:$0xf]
        %v1011 = vld [vmem:[%s4 + $0x540] sm:$0xff]
        %v1012 = vld [vmem:[%s4 + $0x548] sm:$0xf]
        %v1013 = vld [vmem:[%s4 + $0x54c] sm:$0xff]
        %v1014 = vld [vmem:[%s4 + $0x554] sm:$0xf]
        %v1015 = vld [vmem:[%s4 + $0x558] sm:$0xff]
        %v1016 = vld [vmem:[%s4 + $0x560] sm:$0xf]
        %v1017 = vld [vmem:[%s4 + $0x564] sm:$0xff]
        %v1018 = vld [vmem:[%s4 + $0x56c] sm:$0xf]
        %v1019 = vld [vmem:[%s4 + $0x570] sm:$0xff]
        %v1020 = vld [vmem:[%s4 + $0x578] sm:$0xf]
        %v1021 = vld [vmem:[%s4 + $0x57c] sm:$0xff]
        %v1022 = vld [vmem:[%s4 + $0x584] sm:$0xf]
        %v1023 = vld [vmem:[%s4 + $0x588] sm:$0xff]
        %v1024 = vld [vmem:[%s4 + $0x590] sm:$0xf]
        %v1025 = vld [vmem:[%s4 + $0x594] sm:$0xff]
        %v1026 = vld [vmem:[%s4 + $0x59c] sm:$0xf]
        %v1027 = vld [vmem:[%s4 + $0x5a0] sm:$0xff]
        %v1028 = vld [vmem:[%s4 + $0x5a8] sm:$0xf]
        %v1029 = vld [vmem:[%s4 + $0x5ac] sm:$0xff]
        %v1030 = vld [vmem:[%s4 + $0x5b4] sm:$0xf]
        %v1031 = vld [vmem:[%s4 + $0x5b8] sm:$0xff]
        %v1032 = vld [vmem:[%s4 + $0x5c0] sm:$0xf]
        %v1033 = vld [vmem:[%s4 + $0x5c4] sm:$0xff]
        %v1034 = vld [vmem:[%s4 + $0x5cc] sm:$0xf]
        %v1035 = vld [vmem:[%s4 + $0x5d0] sm:$0xff]
        %v1036 = vld [vmem:[%s4 + $0x5d8] sm:$0xf]
        %v1037 = vld [vmem:[%s4 + $0x5dc] sm:$0xff]
        %v1038 = vld [vmem:[%s4 + $0x5e4] sm:$0xf]
        %v1039 = vld [vmem:[%s4 + $0x5e8] sm:$0xff]
        %v1040 = vld [vmem:[%s4 + $0x5f0] sm:$0xf]
        %v1041 = vld [vmem:[%s4 + $0x5f4] sm:$0xff]
        %v1042 = vld [vmem:[%s4 + $0x5fc] sm:$0xf]
        %v1043 = vld [vmem:[%s4 + $0x600] sm:$0xff]
        %v1044 = vld [vmem:[%s4 + $0x608] sm:$0xf]
        %v1045 = vld [vmem:[%s4 + $0x60c] sm:$0xff]
        %v1046 = vld [vmem:[%s4 + $0x614] sm:$0xf]
        %v1047 = vld [vmem:[%s4 + $0x618] sm:$0xff]
        %v1048 = vld [vmem:[%s4 + $0x620] sm:$0xf]
        %v1049 = vld [vmem:[%s4 + $0x624] sm:$0xff]
        %v1050 = vld [vmem:[%s4 + $0x62c] sm:$0xf]
        %v1051 = vld [vmem:[%s4 + $0x630] sm:$0xff]
        %v1052 = vld [vmem:[%s4 + $0x638] sm:$0xf]
        %v1053 = vld [vmem:[%s4 + $0x63c] sm:$0xff]
        %v1054 = vld [vmem:[%s4 + $0x644] sm:$0xf]
        %v1055 = vld [vmem:[%s4 + $0x648] sm:$0xff]
        %v1056 = vld [vmem:[%s4 + $0x650] sm:$0xf]
        %v1057 = vld [vmem:[%s4 + $0x654] sm:$0xff]
        %v1058 = vld [vmem:[%s4 + $0x65c] sm:$0xf]
        %v1059 = vld [vmem:[%s4 + $0x660] sm:$0xff]
        %v1060 = vld [vmem:[%s4 + $0x668] sm:$0xf]
        %v1061 = vld [vmem:[%s4 + $0x66c] sm:$0xff]
        %v1062 = vld [vmem:[%s4 + $0x674] sm:$0xf]
        %v1063 = vld [vmem:[%s4 + $0x678] sm:$0xff]
        %v1064 = vld [vmem:[%s4 + $0x680] sm:$0xf]
        %v1065 = vld [vmem:[%s4 + $0x684] sm:$0xff]
        %v1066 = vld [vmem:[%s4 + $0x68c] sm:$0xf]
        %v1067 = vld [vmem:[%s4 + $0x690] sm:$0xff]
        %v1068 = vld [vmem:[%s4 + $0x698] sm:$0xf]
        %v1069 = vld [vmem:[%s4 + $0x69c] sm:$0xff]
        %v1070 = vld [vmem:[%s4 + $0x6a4] sm:$0xf]
        %v1071 = vld [vmem:[%s4 + $0x6a8] sm:$0xff]
        %v1072 = vld [vmem:[%s4 + $0x6b0] sm:$0xf]
        %v1073 = vld [vmem:[%s4 + $0x6b4] sm:$0xff]
        %v1074 = vld [vmem:[%s4 + $0x6bc] sm:$0xf]
        %v1363 = vunpack.c.l.b16 %v787
        %v1364 = vunpack.c.h.b16 %v787
        %v1365 = vunpack.c.l.b16 %v788
        %v1366 = vunpack.c.l.b16 %v789
        %v1367 = vunpack.c.h.b16 %v789
        %v1368 = vunpack.c.l.b16 %v790
        %v1369 = vunpack.c.l.b16 %v791
        %v1370 = vunpack.c.h.b16 %v791
        %v1371 = vunpack.c.l.b16 %v792
        %v1372 = vunpack.c.l.b16 %v793
        %v1373 = vunpack.c.h.b16 %v793
        %v1374 = vunpack.c.l.b16 %v794
        %v1375 = vunpack.c.l.b16 %v795
        %v1376 = vunpack.c.h.b16 %v795
        %v1377 = vunpack.c.l.b16 %v796
        %v1378 = vunpack.c.l.b16 %v797
        %v1379 = vunpack.c.h.b16 %v797
        %v1380 = vunpack.c.l.b16 %v798
        %v1381 = vunpack.c.l.b16 %v799
        %v1382 = vunpack.c.h.b16 %v799
        %v1383 = vunpack.c.l.b16 %v800
        %v1384 = vunpack.c.l.b16 %v801
        %v1385 = vunpack.c.h.b16 %v801
        %v1386 = vunpack.c.l.b16 %v802
        %v1387 = vunpack.c.l.b16 %v803
        %v1388 = vunpack.c.h.b16 %v803
        %v1389 = vunpack.c.l.b16 %v804
        %v1390 = vunpack.c.l.b16 %v805
        %v1391 = vunpack.c.h.b16 %v805
        %v1392 = vunpack.c.l.b16 %v806
        %v1393 = vunpack.c.l.b16 %v807
        %v1394 = vunpack.c.h.b16 %v807
        %v1395 = vunpack.c.l.b16 %v808
        %v1396 = vunpack.c.l.b16 %v809
        %v1397 = vunpack.c.h.b16 %v809
        %v1398 = vunpack.c.l.b16 %v810
        %v1399 = vunpack.c.l.b16 %v811
        %v1400 = vunpack.c.h.b16 %v811
        %v1401 = vunpack.c.l.b16 %v812
        %v1402 = vunpack.c.l.b16 %v813
        %v1403 = vunpack.c.h.b16 %v813
        %v1404 = vunpack.c.l.b16 %v814
        %v1405 = vunpack.c.l.b16 %v815
        %v1406 = vunpack.c.h.b16 %v815
        %v1407 = vunpack.c.l.b16 %v816
        %v1408 = vunpack.c.l.b16 %v817
        %v1409 = vunpack.c.h.b16 %v817
        %v1410 = vunpack.c.l.b16 %v818
        %v1411 = vunpack.c.l.b16 %v819
        %v1412 = vunpack.c.h.b16 %v819
        %v1413 = vunpack.c.l.b16 %v820
        %v1414 = vunpack.c.l.b16 %v821
        %v1415 = vunpack.c.h.b16 %v821
        %v1416 = vunpack.c.l.b16 %v822
        %v1417 = vunpack.c.l.b16 %v823
        %v1418 = vunpack.c.h.b16 %v823
        %v1419 = vunpack.c.l.b16 %v824
        %v1420 = vunpack.c.l.b16 %v825
        %v1421 = vunpack.c.h.b16 %v825
        %v1422 = vunpack.c.l.b16 %v826
        %v1423 = vunpack.c.l.b16 %v827
        %v1424 = vunpack.c.h.b16 %v827
        %v1425 = vunpack.c.l.b16 %v828
        %v1426 = vunpack.c.l.b16 %v829
        %v1427 = vunpack.c.h.b16 %v829
        %v1428 = vunpack.c.l.b16 %v830
        %v1429 = vunpack.c.l.b16 %v831
        %v1430 = vunpack.c.h.b16 %v831
        %v1431 = vunpack.c.l.b16 %v832
        %v1432 = vunpack.c.l.b16 %v833
        %v1433 = vunpack.c.h.b16 %v833
        %v1434 = vunpack.c.l.b16 %v834
        %v1435 = vunpack.c.l.b16 %v835
        %v1436 = vunpack.c.h.b16 %v835
        %v1437 = vunpack.c.l.b16 %v836
        %v1438 = vunpack.c.l.b16 %v837
        %v1439 = vunpack.c.h.b16 %v837
        %v1440 = vunpack.c.l.b16 %v838
        %v1441 = vunpack.c.l.b16 %v839
        %v1442 = vunpack.c.h.b16 %v839
        %v1443 = vunpack.c.l.b16 %v840
        %v1444 = vunpack.c.l.b16 %v841
        %v1445 = vunpack.c.h.b16 %v841
        %v1446 = vunpack.c.l.b16 %v842
        %v1447 = vunpack.c.l.b16 %v843
        %v1448 = vunpack.c.h.b16 %v843
        %v1449 = vunpack.c.l.b16 %v844
        %v1450 = vunpack.c.l.b16 %v845
        %v1451 = vunpack.c.h.b16 %v845
        %v1452 = vunpack.c.l.b16 %v846
        %v1453 = vunpack.c.l.b16 %v847
        %v1454 = vunpack.c.h.b16 %v847
        %v1455 = vunpack.c.l.b16 %v848
        %v1456 = vunpack.c.l.b16 %v849
        %v1457 = vunpack.c.h.b16 %v849
        %v1458 = vunpack.c.l.b16 %v850
        %v1459 = vunpack.c.l.b16 %v851
        %v1460 = vunpack.c.h.b16 %v851
        %v1461 = vunpack.c.l.b16 %v852
        %v1462 = vunpack.c.l.b16 %v853
        %v1463 = vunpack.c.h.b16 %v853
        %v1464 = vunpack.c.l.b16 %v854
        %v1465 = vunpack.c.l.b16 %v855
        %v1466 = vunpack.c.h.b16 %v855
        %v1467 = vunpack.c.l.b16 %v856
        %v1468 = vunpack.c.l.b16 %v857
        %v1469 = vunpack.c.h.b16 %v857
        %v1470 = vunpack.c.l.b16 %v858
        %v1471 = vunpack.c.l.b16 %v859
        %v1472 = vunpack.c.h.b16 %v859
        %v1473 = vunpack.c.l.b16 %v860
        %v1474 = vunpack.c.l.b16 %v861
        %v1475 = vunpack.c.h.b16 %v861
        %v1476 = vunpack.c.l.b16 %v862
        %v1477 = vunpack.c.l.b16 %v863
        %v1478 = vunpack.c.h.b16 %v863
        %v1479 = vunpack.c.l.b16 %v864
        %v1480 = vunpack.c.l.b16 %v865
        %v1481 = vunpack.c.h.b16 %v865
        %v1482 = vunpack.c.l.b16 %v866
        %v1483 = vunpack.c.l.b16 %v867
        %v1484 = vunpack.c.h.b16 %v867
        %v1485 = vunpack.c.l.b16 %v868
        %v1486 = vunpack.c.l.b16 %v869
        %v1487 = vunpack.c.h.b16 %v869
        %v1488 = vunpack.c.l.b16 %v870
        %v1489 = vunpack.c.l.b16 %v871
        %v1490 = vunpack.c.h.b16 %v871
        %v1491 = vunpack.c.l.b16 %v872
        %v1492 = vunpack.c.l.b16 %v873
        %v1493 = vunpack.c.h.b16 %v873
        %v1494 = vunpack.c.l.b16 %v874
        %v1495 = vunpack.c.l.b16 %v875
        %v1496 = vunpack.c.h.b16 %v875
        %v1497 = vunpack.c.l.b16 %v876
        %v1498 = vunpack.c.l.b16 %v877
        %v1499 = vunpack.c.h.b16 %v877
        %v1500 = vunpack.c.l.b16 %v878
        %v1501 = vunpack.c.l.b16 %v879
        %v1502 = vunpack.c.h.b16 %v879
        %v1503 = vunpack.c.l.b16 %v880
        %v1504 = vunpack.c.l.b16 %v881
        %v1505 = vunpack.c.h.b16 %v881
        %v1506 = vunpack.c.l.b16 %v882
        %v1507 = vunpack.c.l.b16 %v883
        %v1508 = vunpack.c.h.b16 %v883
        %v1509 = vunpack.c.l.b16 %v884
        %v1510 = vunpack.c.l.b16 %v885
        %v1511 = vunpack.c.h.b16 %v885
        %v1512 = vunpack.c.l.b16 %v886
        %v1513 = vunpack.c.l.b16 %v887
        %v1514 = vunpack.c.h.b16 %v887
        %v1515 = vunpack.c.l.b16 %v888
        %v1516 = vunpack.c.l.b16 %v889
        %v1517 = vunpack.c.h.b16 %v889
        %v1518 = vunpack.c.l.b16 %v890
        %v1519 = vunpack.c.l.b16 %v891
        %v1520 = vunpack.c.h.b16 %v891
        %v1521 = vunpack.c.l.b16 %v892
        %v1522 = vunpack.c.l.b16 %v893
        %v1523 = vunpack.c.h.b16 %v893
        %v1524 = vunpack.c.l.b16 %v894
        %v1525 = vunpack.c.l.b16 %v895
        %v1526 = vunpack.c.h.b16 %v895
        %v1527 = vunpack.c.l.b16 %v896
        %v1528 = vunpack.c.l.b16 %v897
        %v1529 = vunpack.c.h.b16 %v897
        %v1530 = vunpack.c.l.b16 %v898
        %v1531 = vunpack.c.l.b16 %v899
        %v1532 = vunpack.c.h.b16 %v899
        %v1533 = vunpack.c.l.b16 %v900
        %v1534 = vunpack.c.l.b16 %v901
        %v1535 = vunpack.c.h.b16 %v901
        %v1536 = vunpack.c.l.b16 %v902
        %v1537 = vunpack.c.l.b16 %v903
        %v1538 = vunpack.c.h.b16 %v903
        %v1539 = vunpack.c.l.b16 %v904
        %v1540 = vunpack.c.l.b16 %v905
        %v1541 = vunpack.c.h.b16 %v905
        %v1542 = vunpack.c.l.b16 %v906
        %v1543 = vunpack.c.l.b16 %v907
        %v1544 = vunpack.c.h.b16 %v907
        %v1545 = vunpack.c.l.b16 %v908
        %v1546 = vunpack.c.l.b16 %v909
        %v1547 = vunpack.c.h.b16 %v909
        %v1548 = vunpack.c.l.b16 %v910
        %v1549 = vunpack.c.l.b16 %v911
        %v1550 = vunpack.c.h.b16 %v911
        %v1551 = vunpack.c.l.b16 %v912
        %v1552 = vunpack.c.l.b16 %v913
        %v1553 = vunpack.c.h.b16 %v913
        %v1554 = vunpack.c.l.b16 %v914
        %v1555 = vunpack.c.l.b16 %v915
        %v1556 = vunpack.c.h.b16 %v915
        %v1557 = vunpack.c.l.b16 %v916
        %v1558 = vunpack.c.l.b16 %v917
        %v1559 = vunpack.c.h.b16 %v917
        %v1560 = vunpack.c.l.b16 %v918
        %v1561 = vunpack.c.l.b16 %v919
        %v1562 = vunpack.c.h.b16 %v919
        %v1563 = vunpack.c.l.b16 %v920
        %v1564 = vunpack.c.l.b16 %v921
        %v1565 = vunpack.c.h.b16 %v921
        %v1566 = vunpack.c.l.b16 %v922
        %v1567 = vunpack.c.l.b16 %v923
        %v1568 = vunpack.c.h.b16 %v923
        %v1569 = vunpack.c.l.b16 %v924
        %v1570 = vunpack.c.l.b16 %v925
        %v1571 = vunpack.c.h.b16 %v925
        %v1572 = vunpack.c.l.b16 %v926
        %v1573 = vunpack.c.l.b16 %v927
        %v1574 = vunpack.c.h.b16 %v927
        %v1575 = vunpack.c.l.b16 %v928
        %v1576 = vunpack.c.l.b16 %v929
        %v1577 = vunpack.c.h.b16 %v929
        %v1578 = vunpack.c.l.b16 %v930
        %v1579 = vunpack.c.l.b16 %v931
        %v1580 = vunpack.c.h.b16 %v931
        %v1581 = vunpack.c.l.b16 %v932
        %v1582 = vunpack.c.l.b16 %v933
        %v1583 = vunpack.c.h.b16 %v933
        %v1584 = vunpack.c.l.b16 %v934
        %v1585 = vunpack.c.l.b16 %v935
        %v1586 = vunpack.c.h.b16 %v935
        %v1587 = vunpack.c.l.b16 %v936
        %v1588 = vunpack.c.l.b16 %v937
        %v1589 = vunpack.c.h.b16 %v937
        %v1590 = vunpack.c.l.b16 %v938
        %v1591 = vunpack.c.l.b16 %v939
        %v1592 = vunpack.c.h.b16 %v939
        %v1593 = vunpack.c.l.b16 %v940
        %v1594 = vunpack.c.l.b16 %v941
        %v1595 = vunpack.c.h.b16 %v941
        %v1596 = vunpack.c.l.b16 %v942
        %v1597 = vunpack.c.l.b16 %v943
        %v1598 = vunpack.c.h.b16 %v943
        %v1599 = vunpack.c.l.b16 %v944
        %v1600 = vunpack.c.l.b16 %v945
        %v1601 = vunpack.c.h.b16 %v945
        %v1602 = vunpack.c.l.b16 %v946
        %v1603 = vunpack.c.l.b16 %v947
        %v1604 = vunpack.c.h.b16 %v947
        %v1605 = vunpack.c.l.b16 %v948
        %v1606 = vunpack.c.l.b16 %v949
        %v1607 = vunpack.c.h.b16 %v949
        %v1608 = vunpack.c.l.b16 %v950
        %v1609 = vunpack.c.l.b16 %v951
        %v1610 = vunpack.c.h.b16 %v951
        %v1611 = vunpack.c.l.b16 %v952
        %v1612 = vunpack.c.l.b16 %v953
        %v1613 = vunpack.c.h.b16 %v953
        %v1614 = vunpack.c.l.b16 %v954
        %v1615 = vunpack.c.l.b16 %v955
        %v1616 = vunpack.c.h.b16 %v955
        %v1617 = vunpack.c.l.b16 %v956
        %v1618 = vunpack.c.l.b16 %v957
        %v1619 = vunpack.c.h.b16 %v957
        %v1620 = vunpack.c.l.b16 %v958
        %v1621 = vunpack.c.l.b16 %v959
        %v1622 = vunpack.c.h.b16 %v959
        %v1623 = vunpack.c.l.b16 %v960
        %v1624 = vunpack.c.l.b16 %v961
        %v1625 = vunpack.c.h.b16 %v961
        %v1626 = vunpack.c.l.b16 %v962
        %v1627 = vunpack.c.l.b16 %v963
        %v1628 = vunpack.c.h.b16 %v963
        %v1629 = vunpack.c.l.b16 %v964
        %v1630 = vunpack.c.l.b16 %v965
        %v1631 = vunpack.c.h.b16 %v965
        %v1632 = vunpack.c.l.b16 %v966
        %v1633 = vunpack.c.l.b16 %v967
        %v1634 = vunpack.c.h.b16 %v967
        %v1635 = vunpack.c.l.b16 %v968
        %v1636 = vunpack.c.l.b16 %v969
        %v1637 = vunpack.c.h.b16 %v969
        %v1638 = vunpack.c.l.b16 %v970
        %v1639 = vunpack.c.l.b16 %v971
        %v1640 = vunpack.c.h.b16 %v971
        %v1641 = vunpack.c.l.b16 %v972
        %v1642 = vunpack.c.l.b16 %v973
        %v1643 = vunpack.c.h.b16 %v973
        %v1644 = vunpack.c.l.b16 %v974
        %v1645 = vunpack.c.l.b16 %v975
        %v1646 = vunpack.c.h.b16 %v975
        %v1647 = vunpack.c.l.b16 %v976
        %v1648 = vunpack.c.l.b16 %v977
        %v1649 = vunpack.c.h.b16 %v977
        %v1650 = vunpack.c.l.b16 %v978
        %v1651 = vunpack.c.l.b16 %v979
        %v1652 = vunpack.c.h.b16 %v979
        %v1653 = vunpack.c.l.b16 %v980
        %v1654 = vunpack.c.l.b16 %v981
        %v1655 = vunpack.c.h.b16 %v981
        %v1656 = vunpack.c.l.b16 %v982
        %v1657 = vunpack.c.l.b16 %v983
        %v1658 = vunpack.c.h.b16 %v983
        %v1659 = vunpack.c.l.b16 %v984
        %v1660 = vunpack.c.l.b16 %v985
        %v1661 = vunpack.c.h.b16 %v985
        %v1662 = vunpack.c.l.b16 %v986
        %v1663 = vunpack.c.l.b16 %v987
        %v1664 = vunpack.c.h.b16 %v987
        %v1665 = vunpack.c.l.b16 %v988
        %v1666 = vunpack.c.l.b16 %v989
        %v1667 = vunpack.c.h.b16 %v989
        %v1668 = vunpack.c.l.b16 %v990
        %v1669 = vunpack.c.l.b16 %v991
        %v1670 = vunpack.c.h.b16 %v991
        %v1671 = vunpack.c.l.b16 %v992
        %v1672 = vunpack.c.l.b16 %v993
        %v1673 = vunpack.c.h.b16 %v993
        %v1674 = vunpack.c.l.b16 %v994
        %v1675 = vunpack.c.l.b16 %v995
        %v1676 = vunpack.c.h.b16 %v995
        %v1677 = vunpack.c.l.b16 %v996
        %v1678 = vunpack.c.l.b16 %v997
        %v1679 = vunpack.c.h.b16 %v997
        %v1680 = vunpack.c.l.b16 %v998
        %v1681 = vunpack.c.l.b16 %v999
        %v1682 = vunpack.c.h.b16 %v999
        %v1683 = vunpack.c.l.b16 %v1000
        %v1684 = vunpack.c.l.b16 %v1001
        %v1685 = vunpack.c.h.b16 %v1001
        %v1686 = vunpack.c.l.b16 %v1002
        %v1687 = vunpack.c.l.b16 %v1003
        %v1688 = vunpack.c.h.b16 %v1003
        %v1689 = vunpack.c.l.b16 %v1004
        %v1690 = vunpack.c.l.b16 %v1005
        %v1691 = vunpack.c.h.b16 %v1005
        %v1692 = vunpack.c.l.b16 %v1006
        %v1693 = vunpack.c.l.b16 %v1007
        %v1694 = vunpack.c.h.b16 %v1007
        %v1695 = vunpack.c.l.b16 %v1008
        %v1696 = vunpack.c.l.b16 %v1009
        %v1697 = vunpack.c.h.b16 %v1009
        %v1698 = vunpack.c.l.b16 %v1010
        %v1699 = vunpack.c.l.b16 %v1011
        %v1700 = vunpack.c.h.b16 %v1011
        %v1701 = vunpack.c.l.b16 %v1012
        %v1702 = vunpack.c.l.b16 %v1013
        %v1703 = vunpack.c.h.b16 %v1013
        %v1704 = vunpack.c.l.b16 %v1014
        %v1705 = vunpack.c.l.b16 %v1015
        %v1706 = vunpack.c.h.b16 %v1015
        %v1707 = vunpack.c.l.b16 %v1016
        %v1708 = vunpack.c.l.b16 %v1017
        %v1709 = vunpack.c.h.b16 %v1017
        %v1710 = vunpack.c.l.b16 %v1018
        %v1711 = vunpack.c.l.b16 %v1019
        %v1712 = vunpack.c.h.b16 %v1019
        %v1713 = vunpack.c.l.b16 %v1020
        %v1714 = vunpack.c.l.b16 %v1021
        %v1715 = vunpack.c.h.b16 %v1021
        %v1716 = vunpack.c.l.b16 %v1022
        %v1717 = vunpack.c.l.b16 %v1023
        %v1718 = vunpack.c.h.b16 %v1023
        %v1719 = vunpack.c.l.b16 %v1024
        %v1720 = vunpack.c.l.b16 %v1025
        %v1721 = vunpack.c.h.b16 %v1025
        %v1722 = vunpack.c.l.b16 %v1026
        %v1723 = vunpack.c.l.b16 %v1027
        %v1724 = vunpack.c.h.b16 %v1027
        %v1725 = vunpack.c.l.b16 %v1028
        %v1726 = vunpack.c.l.b16 %v1029
        %v1727 = vunpack.c.h.b16 %v1029
        %v1728 = vunpack.c.l.b16 %v1030
        %v1729 = vunpack.c.l.b16 %v1031
        %v1730 = vunpack.c.h.b16 %v1031
        %v1731 = vunpack.c.l.b16 %v1032
        %v1732 = vunpack.c.l.b16 %v1033
        %v1733 = vunpack.c.h.b16 %v1033
        %v1734 = vunpack.c.l.b16 %v1034
        %v1735 = vunpack.c.l.b16 %v1035
        %v1736 = vunpack.c.h.b16 %v1035
        %v1737 = vunpack.c.l.b16 %v1036
        %v1738 = vunpack.c.l.b16 %v1037
        %v1739 = vunpack.c.h.b16 %v1037
        %v1740 = vunpack.c.l.b16 %v1038
        %v1741 = vunpack.c.l.b16 %v1039
        %v1742 = vunpack.c.h.b16 %v1039
        %v1743 = vunpack.c.l.b16 %v1040
        %v1744 = vunpack.c.l.b16 %v1041
        %v1745 = vunpack.c.h.b16 %v1041
        %v1746 = vunpack.c.l.b16 %v1042
        %v1747 = vunpack.c.l.b16 %v1043
        %v1748 = vunpack.c.h.b16 %v1043
        %v1749 = vunpack.c.l.b16 %v1044
        %v1750 = vunpack.c.l.b16 %v1045
        %v1751 = vunpack.c.h.b16 %v1045
        %v1752 = vunpack.c.l.b16 %v1046
        %v1753 = vunpack.c.l.b16 %v1047
        %v1754 = vunpack.c.h.b16 %v1047
        %v1755 = vunpack.c.l.b16 %v1048
        %v1756 = vunpack.c.l.b16 %v1049
        %v1757 = vunpack.c.h.b16 %v1049
        %v1758 = vunpack.c.l.b16 %v1050
        %v1759 = vunpack.c.l.b16 %v1051
        %v1760 = vunpack.c.h.b16 %v1051
        %v1761 = vunpack.c.l.b16 %v1052
        %v1762 = vunpack.c.l.b16 %v1053
        %v1763 = vunpack.c.h.b16 %v1053
        %v1764 = vunpack.c.l.b16 %v1054
        %v1765 = vunpack.c.l.b16 %v1055
        %v1766 = vunpack.c.h.b16 %v1055
        %v1767 = vunpack.c.l.b16 %v1056
        %v1768 = vunpack.c.l.b16 %v1057
        %v1769 = vunpack.c.h.b16 %v1057
        %v1770 = vunpack.c.l.b16 %v1058
        %v1771 = vunpack.c.l.b16 %v1059
        %v1772 = vunpack.c.h.b16 %v1059
        %v1773 = vunpack.c.l.b16 %v1060
        %v1774 = vunpack.c.l.b16 %v1061
        %v1775 = vunpack.c.h.b16 %v1061
        %v1776 = vunpack.c.l.b16 %v1062
        %v1777 = vunpack.c.l.b16 %v1063
        %v1778 = vunpack.c.h.b16 %v1063
        %v1779 = vunpack.c.l.b16 %v1064
        %v1780 = vunpack.c.l.b16 %v1065
        %v1781 = vunpack.c.h.b16 %v1065
        %v1782 = vunpack.c.l.b16 %v1066
        %v1783 = vunpack.c.l.b16 %v1067
        %v1784 = vunpack.c.h.b16 %v1067
        %v1785 = vunpack.c.l.b16 %v1068
        %v1786 = vunpack.c.l.b16 %v1069
        %v1787 = vunpack.c.h.b16 %v1069
        %v1788 = vunpack.c.l.b16 %v1070
        %v1789 = vunpack.c.l.b16 %v1071
        %v1790 = vunpack.c.h.b16 %v1071
        %v1791 = vunpack.c.l.b16 %v1072
        %v1792 = vunpack.c.l.b16 %v1073
        %v1793 = vunpack.c.h.b16 %v1073
        %v1794 = vunpack.c.l.b16 %v1074
        %v1795 = vpack.c.b16 %v1366, %v1363
        %v1796 = vpack.c.b16 %v1367, %v1364
        %v1797 = vpack.c.b16 %v1368, %v1365
        %v1798 = vpack.c.b16 %v1372, %v1369
        %v1799 = vpack.c.b16 %v1373, %v1370
        %v1800 = vpack.c.b16 %v1374, %v1371
        %v1801 = vpack.c.b16 %v1378, %v1375
        %v1802 = vpack.c.b16 %v1379, %v1376
        %v1803 = vpack.c.b16 %v1380, %v1377
        %v1804 = vpack.c.b16 %v1384, %v1381
        %v1805 = vpack.c.b16 %v1385, %v1382
        %v1806 = vpack.c.b16 %v1386, %v1383
        %v1807 = vpack.c.b16 %v1390, %v1387
        %v1808 = vpack.c.b16 %v1391, %v1388
        %v1809 = vpack.c.b16 %v1392, %v1389
        %v1810 = vpack.c.b16 %v1396, %v1393
        %v1811 = vpack.c.b16 %v1397, %v1394
        %v1812 = vpack.c.b16 %v1398, %v1395
        %v1813 = vpack.c.b16 %v1402, %v1399
        %v1814 = vpack.c.b16 %v1403, %v1400
        %v1815 = vpack.c.b16 %v1404, %v1401
        %v1816 = vpack.c.b16 %v1408, %v1405
        %v1817 = vpack.c.b16 %v1409, %v1406
        %v1818 = vpack.c.b16 %v1410, %v1407
        %v1819 = vpack.c.b16 %v1414, %v1411
        %v1820 = vpack.c.b16 %v1415, %v1412
        %v1821 = vpack.c.b16 %v1416, %v1413
        %v1822 = vpack.c.b16 %v1420, %v1417
        %v1823 = vpack.c.b16 %v1421, %v1418
        %v1824 = vpack.c.b16 %v1422, %v1419
        %v1825 = vpack.c.b16 %v1426, %v1423
        %v1826 = vpack.c.b16 %v1427, %v1424
        %v1827 = vpack.c.b16 %v1428, %v1425
        %v1828 = vpack.c.b16 %v1432, %v1429
        %v1829 = vpack.c.b16 %v1433, %v1430
        %v1830 = vpack.c.b16 %v1434, %v1431
        %v1831 = vpack.c.b16 %v1438, %v1435
        %v1832 = vpack.c.b16 %v1439, %v1436
        %v1833 = vpack.c.b16 %v1440, %v1437
        %v1834 = vpack.c.b16 %v1444, %v1441
        %v1835 = vpack.c.b16 %v1445, %v1442
        %v1836 = vpack.c.b16 %v1446, %v1443
        %v1837 = vpack.c.b16 %v1450, %v1447
        %v1838 = vpack.c.b16 %v1451, %v1448
        %v1839 = vpack.c.b16 %v1452, %v1449
        %v1840 = vpack.c.b16 %v1456, %v1453
        %v1841 = vpack.c.b16 %v1457, %v1454
        %v1842 = vpack.c.b16 %v1458, %v1455
        %v1843 = vpack.c.b16 %v1462, %v1459
        %v1844 = vpack.c.b16 %v1463, %v1460
        %v1845 = vpack.c.b16 %v1464, %v1461
        %v1846 = vpack.c.b16 %v1468, %v1465
        %v1847 = vpack.c.b16 %v1469, %v1466
        %v1848 = vpack.c.b16 %v1470, %v1467
        %v1849 = vpack.c.b16 %v1474, %v1471
        %v1850 = vpack.c.b16 %v1475, %v1472
        %v1851 = vpack.c.b16 %v1476, %v1473
        %v1852 = vpack.c.b16 %v1480, %v1477
        %v1853 = vpack.c.b16 %v1481, %v1478
        %v1854 = vpack.c.b16 %v1482, %v1479
        %v1855 = vpack.c.b16 %v1486, %v1483
        %v1856 = vpack.c.b16 %v1487, %v1484
        %v1857 = vpack.c.b16 %v1488, %v1485
        %v1858 = vpack.c.b16 %v1492, %v1489
        %v1859 = vpack.c.b16 %v1493, %v1490
        %v1860 = vpack.c.b16 %v1494, %v1491
        %v1861 = vpack.c.b16 %v1498, %v1495
        %v1862 = vpack.c.b16 %v1499, %v1496
        %v1863 = vpack.c.b16 %v1500, %v1497
        %v1864 = vpack.c.b16 %v1504, %v1501
        %v1865 = vpack.c.b16 %v1505, %v1502
        %v1866 = vpack.c.b16 %v1506, %v1503
        %v1867 = vpack.c.b16 %v1510, %v1507
        %v1868 = vpack.c.b16 %v1511, %v1508
        %v1869 = vpack.c.b16 %v1512, %v1509
        %v1870 = vpack.c.b16 %v1516, %v1513
        %v1871 = vpack.c.b16 %v1517, %v1514
        %v1872 = vpack.c.b16 %v1518, %v1515
        %v1873 = vpack.c.b16 %v1522, %v1519
        %v1874 = vpack.c.b16 %v1523, %v1520
        %v1875 = vpack.c.b16 %v1524, %v1521
        %v1876 = vpack.c.b16 %v1528, %v1525
        %v1877 = vpack.c.b16 %v1529, %v1526
        %v1878 = vpack.c.b16 %v1530, %v1527
        %v1879 = vpack.c.b16 %v1534, %v1531
        %v1880 = vpack.c.b16 %v1535, %v1532
        %v1881 = vpack.c.b16 %v1536, %v1533
        %v1882 = vpack.c.b16 %v1540, %v1537
        %v1883 = vpack.c.b16 %v1541, %v1538
        %v1884 = vpack.c.b16 %v1542, %v1539
        %v1885 = vpack.c.b16 %v1546, %v1543
        %v1886 = vpack.c.b16 %v1547, %v1544
        %v1887 = vpack.c.b16 %v1548, %v1545
        %v1888 = vpack.c.b16 %v1552, %v1549
        %v1889 = vpack.c.b16 %v1553, %v1550
        %v1890 = vpack.c.b16 %v1554, %v1551
        %v1891 = vpack.c.b16 %v1558, %v1555
        %v1892 = vpack.c.b16 %v1559, %v1556
        %v1893 = vpack.c.b16 %v1560, %v1557
        %v1894 = vpack.c.b16 %v1564, %v1561
        %v1895 = vpack.c.b16 %v1565, %v1562
        %v1896 = vpack.c.b16 %v1566, %v1563
        %v1897 = vpack.c.b16 %v1570, %v1567
        %v1898 = vpack.c.b16 %v1571, %v1568
        %v1899 = vpack.c.b16 %v1572, %v1569
        %v1900 = vpack.c.b16 %v1576, %v1573
        %v1901 = vpack.c.b16 %v1577, %v1574
        %v1902 = vpack.c.b16 %v1578, %v1575
        %v1903 = vpack.c.b16 %v1582, %v1579
        %v1904 = vpack.c.b16 %v1583, %v1580
        %v1905 = vpack.c.b16 %v1584, %v1581
        %v1906 = vpack.c.b16 %v1588, %v1585
        %v1907 = vpack.c.b16 %v1589, %v1586
        %v1908 = vpack.c.b16 %v1590, %v1587
        %v1909 = vpack.c.b16 %v1594, %v1591
        %v1910 = vpack.c.b16 %v1595, %v1592
        %v1911 = vpack.c.b16 %v1596, %v1593
        %v1912 = vpack.c.b16 %v1600, %v1597
        %v1913 = vpack.c.b16 %v1601, %v1598
        %v1914 = vpack.c.b16 %v1602, %v1599
        %v1915 = vpack.c.b16 %v1606, %v1603
        %v1916 = vpack.c.b16 %v1607, %v1604
        %v1917 = vpack.c.b16 %v1608, %v1605
        %v1918 = vpack.c.b16 %v1612, %v1609
        %v1919 = vpack.c.b16 %v1613, %v1610
        %v1920 = vpack.c.b16 %v1614, %v1611
        %v1921 = vpack.c.b16 %v1618, %v1615
        %v1922 = vpack.c.b16 %v1619, %v1616
        %v1923 = vpack.c.b16 %v1620, %v1617
        %v1924 = vpack.c.b16 %v1624, %v1621
        %v1925 = vpack.c.b16 %v1625, %v1622
        %v1926 = vpack.c.b16 %v1626, %v1623
        %v1927 = vpack.c.b16 %v1630, %v1627
        %v1928 = vpack.c.b16 %v1631, %v1628
        %v1929 = vpack.c.b16 %v1632, %v1629
        %v1930 = vpack.c.b16 %v1636, %v1633
        %v1931 = vpack.c.b16 %v1637, %v1634
        %v1932 = vpack.c.b16 %v1638, %v1635
        %v1933 = vpack.c.b16 %v1642, %v1639
        %v1934 = vpack.c.b16 %v1643, %v1640
        %v1935 = vpack.c.b16 %v1644, %v1641
        %v1936 = vpack.c.b16 %v1648, %v1645
        %v1937 = vpack.c.b16 %v1649, %v1646
        %v1938 = vpack.c.b16 %v1650, %v1647
        %v1939 = vpack.c.b16 %v1654, %v1651
        %v1940 = vpack.c.b16 %v1655, %v1652
        %v1941 = vpack.c.b16 %v1656, %v1653
        %v1942 = vpack.c.b16 %v1660, %v1657
        %v1943 = vpack.c.b16 %v1661, %v1658
        %v1944 = vpack.c.b16 %v1662, %v1659
        %v1945 = vpack.c.b16 %v1666, %v1663
        %v1946 = vpack.c.b16 %v1667, %v1664
        %v1947 = vpack.c.b16 %v1668, %v1665
        %v1948 = vpack.c.b16 %v1672, %v1669
        %v1949 = vpack.c.b16 %v1673, %v1670
        %v1950 = vpack.c.b16 %v1674, %v1671
        %v1951 = vpack.c.b16 %v1678, %v1675
        %v1952 = vpack.c.b16 %v1679, %v1676
        %v1953 = vpack.c.b16 %v1680, %v1677
        %v1954 = vpack.c.b16 %v1684, %v1681
        %v1955 = vpack.c.b16 %v1685, %v1682
        %v1956 = vpack.c.b16 %v1686, %v1683
        %v1957 = vpack.c.b16 %v1690, %v1687
        %v1958 = vpack.c.b16 %v1691, %v1688
        %v1959 = vpack.c.b16 %v1692, %v1689
        %v1960 = vpack.c.b16 %v1696, %v1693
        %v1961 = vpack.c.b16 %v1697, %v1694
        %v1962 = vpack.c.b16 %v1698, %v1695
        %v1963 = vpack.c.b16 %v1702, %v1699
        %v1964 = vpack.c.b16 %v1703, %v1700
        %v1965 = vpack.c.b16 %v1704, %v1701
        %v1966 = vpack.c.b16 %v1708, %v1705
        %v1967 = vpack.c.b16 %v1709, %v1706
        %v1968 = vpack.c.b16 %v1710, %v1707
        %v1969 = vpack.c.b16 %v1714, %v1711
        %v1970 = vpack.c.b16 %v1715, %v1712
        %v1971 = vpack.c.b16 %v1716, %v1713
        %v1972 = vpack.c.b16 %v1720, %v1717
        %v1973 = vpack.c.b16 %v1721, %v1718
        %v1974 = vpack.c.b16 %v1722, %v1719
        %v1975 = vpack.c.b16 %v1726, %v1723
        %v1976 = vpack.c.b16 %v1727, %v1724
        %v1977 = vpack.c.b16 %v1728, %v1725
        %v1978 = vpack.c.b16 %v1732, %v1729
        %v1979 = vpack.c.b16 %v1733, %v1730
        %v1980 = vpack.c.b16 %v1734, %v1731
        %v1981 = vpack.c.b16 %v1738, %v1735
        %v1982 = vpack.c.b16 %v1739, %v1736
        %v1983 = vpack.c.b16 %v1740, %v1737
        %v1984 = vpack.c.b16 %v1744, %v1741
        %v1985 = vpack.c.b16 %v1745, %v1742
        %v1986 = vpack.c.b16 %v1746, %v1743
        %v1987 = vpack.c.b16 %v1750, %v1747
        %v1988 = vpack.c.b16 %v1751, %v1748
        %v1989 = vpack.c.b16 %v1752, %v1749
        %v1990 = vpack.c.b16 %v1756, %v1753
        %v1991 = vpack.c.b16 %v1757, %v1754
        %v1992 = vpack.c.b16 %v1758, %v1755
        %v1993 = vpack.c.b16 %v1762, %v1759
        %v1994 = vpack.c.b16 %v1763, %v1760
        %v1995 = vpack.c.b16 %v1764, %v1761
        %v1996 = vpack.c.b16 %v1768, %v1765
        %v1997 = vpack.c.b16 %v1769, %v1766
        %v1998 = vpack.c.b16 %v1770, %v1767
        %v1999 = vpack.c.b16 %v1774, %v1771
        %v2000 = vpack.c.b16 %v1775, %v1772
        %v2001 = vpack.c.b16 %v1776, %v1773
        %v2002 = vpack.c.b16 %v1780, %v1777
        %v2003 = vpack.c.b16 %v1781, %v1778
        %v2004 = vpack.c.b16 %v1782, %v1779
        %v2005 = vpack.c.b16 %v1786, %v1783
        %v2006 = vpack.c.b16 %v1787, %v1784
        %v2007 = vpack.c.b16 %v1788, %v1785
        %v2008 = vpack.c.b16 %v1792, %v1789
        %v2009 = vpack.c.b16 %v1793, %v1790
        %v2010 = vpack.c.b16 %v1794, %v1791
        %2227 = vmatpush.bf16.xpose.msra.mxu0 0
        %2228 = vmatpush.bf16.xpose.msra.mxu0 0
        %2229 = vmatpush.bf16.xpose.msra.mxu0 0
        %2230 = vmatpush.bf16.xpose.msra.mxu0 0
        %2231 = vmatpush.bf16.xpose.msra.mxu0 %v784
        %2232 = vmatpush.bf16.xpose.msra.mxu0 %v781
        %2233 = vmatpush.bf16.xpose.msra.mxu0 %v778
        %2234 = vmatpush.bf16.xpose.msra.mxu0 %v775
        %2235 = vmatmul.bf16.gmra.mxu0 %v1795
        %v2236 = vpop.f32.mrf.mxu0
        %v2237 = vadd.f32 0.0, %v2236
        %v2238 = vpop.f32.mrf.mxu0
        %v2239 = vadd.f32 0.0, %v2238
        %2240 = vmatmul.bf16.gmra.mxu0 %v1798
        %v2241 = vpop.f32.mrf.mxu0
        %v2242 = vadd.f32 0.0, %v2241
        %v2243 = vpop.f32.mrf.mxu0
        %v2244 = vadd.f32 0.0, %v2243
        %2245 = vmatmul.bf16.gmra.mxu0 %v1801
        %v2246 = vpop.f32.mrf.mxu0
        %v2247 = vadd.f32 0.0, %v2246
        %v2248 = vpop.f32.mrf.mxu0
        %v2249 = vadd.f32 0.0, %v2248
        %2250 = vmatmul.bf16.gmra.mxu0 %v1804
        %v2251 = vpop.f32.mrf.mxu0
        %v2252 = vadd.f32 0.0, %v2251
        %v2253 = vpop.f32.mrf.mxu0
        %v2254 = vadd.f32 0.0, %v2253
        %2255 = vmatmul.bf16.gmra.mxu0 %v1807
        %v2256 = vpop.f32.mrf.mxu0
        %v2257 = vadd.f32 0.0, %v2256
        %v2258 = vpop.f32.mrf.mxu0
        %v2259 = vadd.f32 0.0, %v2258
        %2260 = vmatmul.bf16.gmra.mxu0 %v1810
        %v2261 = vpop.f32.mrf.mxu0
        %v2262 = vadd.f32 0.0, %v2261
        %v2263 = vpop.f32.mrf.mxu0
        %v2264 = vadd.f32 0.0, %v2263
        %2265 = vmatmul.bf16.gmra.mxu0 %v1813
        %v2266 = vpop.f32.mrf.mxu0
        %v2267 = vadd.f32 0.0, %v2266
        %v2268 = vpop.f32.mrf.mxu0
        %v2269 = vadd.f32 0.0, %v2268
        %2270 = vmatmul.bf16.gmra.mxu0 %v1816
        %v2271 = vpop.f32.mrf.mxu0
        %v2272 = vadd.f32 0.0, %v2271
        %v2273 = vpop.f32.mrf.mxu0
        %v2274 = vadd.f32 0.0, %v2273
        %2275 = vmatmul.bf16.gmra.mxu0 %v1819
        %v2276 = vpop.f32.mrf.mxu0
        %v2277 = vadd.f32 0.0, %v2276
        %v2278 = vpop.f32.mrf.mxu0
        %v2279 = vadd.f32 0.0, %v2278
        %2280 = vmatmul.bf16.gmra.mxu0 %v1822
        %v2281 = vpop.f32.mrf.mxu0
        %v2282 = vadd.f32 0.0, %v2281
        %v2283 = vpop.f32.mrf.mxu0
        %v2284 = vadd.f32 0.0, %v2283
        %2285 = vmatmul.bf16.gmra.mxu0 %v1825
        %v2286 = vpop.f32.mrf.mxu0
        %v2287 = vadd.f32 0.0, %v2286
        %v2288 = vpop.f32.mrf.mxu0
        %v2289 = vadd.f32 0.0, %v2288
        %2290 = vmatmul.bf16.gmra.mxu0 %v1828
        %v2291 = vpop.f32.mrf.mxu0
        %v2292 = vadd.f32 0.0, %v2291
        %v2293 = vpop.f32.mrf.mxu0
        %v2294 = vadd.f32 0.0, %v2293
        %2295 = vmatmul.bf16.gmra.mxu0 %v1831
        %v2296 = vpop.f32.mrf.mxu0
        %v2297 = vadd.f32 0.0, %v2296
        %v2298 = vpop.f32.mrf.mxu0
        %v2299 = vadd.f32 0.0, %v2298
        %2300 = vmatmul.bf16.gmra.mxu0 %v1834
        %v2301 = vpop.f32.mrf.mxu0
        %v2302 = vadd.f32 0.0, %v2301
        %v2303 = vpop.f32.mrf.mxu0
        %v2304 = vadd.f32 0.0, %v2303
        %2305 = vmatmul.bf16.gmra.mxu0 %v1837
        %v2306 = vpop.f32.mrf.mxu0
        %v2307 = vadd.f32 0.0, %v2306
        %v2308 = vpop.f32.mrf.mxu0
        %v2309 = vadd.f32 0.0, %v2308
        %2310 = vmatmul.bf16.gmra.mxu0 %v1840
        %v2311 = vpop.f32.mrf.mxu0
        %v2312 = vadd.f32 0.0, %v2311
        %v2313 = vpop.f32.mrf.mxu0
        %v2314 = vadd.f32 0.0, %v2313
        %2315 = vmatmul.bf16.gmra.mxu0 %v1843
        %v2316 = vpop.f32.mrf.mxu0
        %v2317 = vadd.f32 0.0, %v2316
        %v2318 = vpop.f32.mrf.mxu0
        %v2319 = vadd.f32 0.0, %v2318
        %2320 = vmatmul.bf16.gmra.mxu0 %v1846
        %v2321 = vpop.f32.mrf.mxu0
        %v2322 = vadd.f32 0.0, %v2321
        %v2323 = vpop.f32.mrf.mxu0
        %v2324 = vadd.f32 0.0, %v2323
        %2325 = vmatmul.bf16.gmra.mxu0 %v1849
        %v2326 = vpop.f32.mrf.mxu0
        %v2327 = vadd.f32 0.0, %v2326
        %v2328 = vpop.f32.mrf.mxu0
        %v2329 = vadd.f32 0.0, %v2328
        %2330 = vmatmul.bf16.gmra.mxu0 %v1852
        %v2331 = vpop.f32.mrf.mxu0
        %v2332 = vadd.f32 0.0, %v2331
        %v2333 = vpop.f32.mrf.mxu0
        %v2334 = vadd.f32 0.0, %v2333
        %2335 = vmatmul.bf16.gmra.mxu0 %v1855
        %v2336 = vpop.f32.mrf.mxu0
        %v2337 = vadd.f32 0.0, %v2336
        %v2338 = vpop.f32.mrf.mxu0
        %v2339 = vadd.f32 0.0, %v2338
        %2340 = vmatmul.bf16.gmra.mxu0 %v1858
        %v2341 = vpop.f32.mrf.mxu0
        %v2342 = vadd.f32 0.0, %v2341
        %v2343 = vpop.f32.mrf.mxu0
        %v2344 = vadd.f32 0.0, %v2343
        %2345 = vmatmul.bf16.gmra.mxu0 %v1861
        %v2346 = vpop.f32.mrf.mxu0
        %v2347 = vadd.f32 0.0, %v2346
        %v2348 = vpop.f32.mrf.mxu0
        %v2349 = vadd.f32 0.0, %v2348
        %2350 = vmatmul.bf16.gmra.mxu0 %v1864
        %v2351 = vpop.f32.mrf.mxu0
        %v2352 = vadd.f32 0.0, %v2351
        %v2353 = vpop.f32.mrf.mxu0
        %v2354 = vadd.f32 0.0, %v2353
        %2355 = vmatmul.bf16.gmra.mxu0 %v1867
        %v2356 = vpop.f32.mrf.mxu0
        %v2357 = vadd.f32 0.0, %v2356
        %v2358 = vpop.f32.mrf.mxu0
        %v2359 = vadd.f32 0.0, %v2358
        %2360 = vmatmul.bf16.gmra.mxu0 %v1870
        %v2361 = vpop.f32.mrf.mxu0
        %v2362 = vadd.f32 0.0, %v2361
        %v2363 = vpop.f32.mrf.mxu0
        %v2364 = vadd.f32 0.0, %v2363
        %2365 = vmatmul.bf16.gmra.mxu0 %v1873
        %v2366 = vpop.f32.mrf.mxu0
        %v2367 = vadd.f32 0.0, %v2366
        %v2368 = vpop.f32.mrf.mxu0
        %v2369 = vadd.f32 0.0, %v2368
        %2370 = vmatmul.bf16.gmra.mxu0 %v1876
        %v2371 = vpop.f32.mrf.mxu0
        %v2372 = vadd.f32 0.0, %v2371
        %v2373 = vpop.f32.mrf.mxu0
        %v2374 = vadd.f32 0.0, %v2373
        %2375 = vmatmul.bf16.gmra.mxu0 %v1879
        %v2376 = vpop.f32.mrf.mxu0
        %v2377 = vadd.f32 0.0, %v2376
        %v2378 = vpop.f32.mrf.mxu0
        %v2379 = vadd.f32 0.0, %v2378
        %2380 = vmatmul.bf16.gmra.mxu0 %v1882
        %v2381 = vpop.f32.mrf.mxu0
        %v2382 = vadd.f32 0.0, %v2381
        %v2383 = vpop.f32.mrf.mxu0
        %v2384 = vadd.f32 0.0, %v2383
        %2385 = vmatmul.bf16.gmra.mxu0 %v1885
        %v2386 = vpop.f32.mrf.mxu0
        %v2387 = vadd.f32 0.0, %v2386
        %v2388 = vpop.f32.mrf.mxu0
        %v2389 = vadd.f32 0.0, %v2388
        %2390 = vmatmul.bf16.gmra.mxu0 %v1888
        %v2391 = vpop.f32.mrf.mxu0
        %v2392 = vadd.f32 0.0, %v2391
        %v2393 = vpop.f32.mrf.mxu0
        %v2394 = vadd.f32 0.0, %v2393
        %2395 = vmatmul.bf16.gmra.mxu0 %v1891
        %v2396 = vpop.f32.mrf.mxu0
        %v2397 = vadd.f32 0.0, %v2396
        %v2398 = vpop.f32.mrf.mxu0
        %v2399 = vadd.f32 0.0, %v2398
        %2400 = vmatmul.bf16.gmra.mxu0 %v1894
        %v2401 = vpop.f32.mrf.mxu0
        %v2402 = vadd.f32 0.0, %v2401
        %v2403 = vpop.f32.mrf.mxu0
        %v2404 = vadd.f32 0.0, %v2403
        %2405 = vmatmul.bf16.gmra.mxu0 %v1897
        %v2406 = vpop.f32.mrf.mxu0
        %v2407 = vadd.f32 0.0, %v2406
        %v2408 = vpop.f32.mrf.mxu0
        %v2409 = vadd.f32 0.0, %v2408
        %2410 = vmatmul.bf16.gmra.mxu0 %v1900
        %v2411 = vpop.f32.mrf.mxu0
        %v2412 = vadd.f32 0.0, %v2411
        %v2413 = vpop.f32.mrf.mxu0
        %v2414 = vadd.f32 0.0, %v2413
        %2415 = vmatmul.bf16.gmra.mxu0 %v1903
        %v2416 = vpop.f32.mrf.mxu0
        %v2417 = vadd.f32 0.0, %v2416
        %v2418 = vpop.f32.mrf.mxu0
        %v2419 = vadd.f32 0.0, %v2418
        %2420 = vmatmul.bf16.gmra.mxu0 %v1906
        %v2421 = vpop.f32.mrf.mxu0
        %v2422 = vadd.f32 0.0, %v2421
        %v2423 = vpop.f32.mrf.mxu0
        %v2424 = vadd.f32 0.0, %v2423
        %2425 = vmatmul.bf16.gmra.mxu0 %v1909
        %v2426 = vpop.f32.mrf.mxu0
        %v2427 = vadd.f32 0.0, %v2426
        %v2428 = vpop.f32.mrf.mxu0
        %v2429 = vadd.f32 0.0, %v2428
        %2430 = vmatmul.bf16.gmra.mxu0 %v1912
        %v2431 = vpop.f32.mrf.mxu0
        %v2432 = vadd.f32 0.0, %v2431
        %v2433 = vpop.f32.mrf.mxu0
        %v2434 = vadd.f32 0.0, %v2433
        %2435 = vmatmul.bf16.gmra.mxu0 %v1915
        %v2436 = vpop.f32.mrf.mxu0
        %v2437 = vadd.f32 0.0, %v2436
        %v2438 = vpop.f32.mrf.mxu0
        %v2439 = vadd.f32 0.0, %v2438
        %2440 = vmatmul.bf16.gmra.mxu0 %v1918
        %v2441 = vpop.f32.mrf.mxu0
        %v2442 = vadd.f32 0.0, %v2441
        %v2443 = vpop.f32.mrf.mxu0
        %v2444 = vadd.f32 0.0, %v2443
        %2445 = vmatmul.bf16.gmra.mxu0 %v1921
        %v2446 = vpop.f32.mrf.mxu0
        %v2447 = vadd.f32 0.0, %v2446
        %v2448 = vpop.f32.mrf.mxu0
        %v2449 = vadd.f32 0.0, %v2448
        %2450 = vmatmul.bf16.gmra.mxu0 %v1924
        %v2451 = vpop.f32.mrf.mxu0
        %v2452 = vadd.f32 0.0, %v2451
        %v2453 = vpop.f32.mrf.mxu0
        %v2454 = vadd.f32 0.0, %v2453
        %2455 = vmatmul.bf16.gmra.mxu0 %v1927
        %v2456 = vpop.f32.mrf.mxu0
        %v2457 = vadd.f32 0.0, %v2456
        %v2458 = vpop.f32.mrf.mxu0
        %v2459 = vadd.f32 0.0, %v2458
        %2460 = vmatmul.bf16.gmra.mxu0 %v1930
        %v2461 = vpop.f32.mrf.mxu0
        %v2462 = vadd.f32 0.0, %v2461
        %v2463 = vpop.f32.mrf.mxu0
        %v2464 = vadd.f32 0.0, %v2463
        %2465 = vmatmul.bf16.gmra.mxu0 %v1933
        %v2466 = vpop.f32.mrf.mxu0
        %v2467 = vadd.f32 0.0, %v2466
        %v2468 = vpop.f32.mrf.mxu0
        %v2469 = vadd.f32 0.0, %v2468
        %2470 = vmatmul.bf16.gmra.mxu0 %v1936
        %v2471 = vpop.f32.mrf.mxu0
        %v2472 = vadd.f32 0.0, %v2471
        %v2473 = vpop.f32.mrf.mxu0
        %v2474 = vadd.f32 0.0, %v2473
        %2475 = vmatmul.bf16.gmra.mxu0 %v1939
        %v2476 = vpop.f32.mrf.mxu0
        %v2477 = vadd.f32 0.0, %v2476
        %v2478 = vpop.f32.mrf.mxu0
        %v2479 = vadd.f32 0.0, %v2478
        %2480 = vmatmul.bf16.gmra.mxu0 %v1942
        %v2481 = vpop.f32.mrf.mxu0
        %v2482 = vadd.f32 0.0, %v2481
        %v2483 = vpop.f32.mrf.mxu0
        %v2484 = vadd.f32 0.0, %v2483
        %2485 = vmatmul.bf16.gmra.mxu0 %v1945
        %v2486 = vpop.f32.mrf.mxu0
        %v2487 = vadd.f32 0.0, %v2486
        %v2488 = vpop.f32.mrf.mxu0
        %v2489 = vadd.f32 0.0, %v2488
        %2490 = vmatmul.bf16.gmra.mxu0 %v1948
        %v2491 = vpop.f32.mrf.mxu0
        %v2492 = vadd.f32 0.0, %v2491
        %v2493 = vpop.f32.mrf.mxu0
        %v2494 = vadd.f32 0.0, %v2493
        %2495 = vmatmul.bf16.gmra.mxu0 %v1951
        %v2496 = vpop.f32.mrf.mxu0
        %v2497 = vadd.f32 0.0, %v2496
        %v2498 = vpop.f32.mrf.mxu0
        %v2499 = vadd.f32 0.0, %v2498
        %2500 = vmatmul.bf16.gmra.mxu0 %v1954
        %v2501 = vpop.f32.mrf.mxu0
        %v2502 = vadd.f32 0.0, %v2501
        %v2503 = vpop.f32.mrf.mxu0
        %v2504 = vadd.f32 0.0, %v2503
        %2505 = vmatmul.bf16.gmra.mxu0 %v1957
        %v2506 = vpop.f32.mrf.mxu0
        %v2507 = vadd.f32 0.0, %v2506
        %v2508 = vpop.f32.mrf.mxu0
        %v2509 = vadd.f32 0.0, %v2508
        %2510 = vmatmul.bf16.gmra.mxu0 %v1960
        %v2511 = vpop.f32.mrf.mxu0
        %v2512 = vadd.f32 0.0, %v2511
        %v2513 = vpop.f32.mrf.mxu0
        %v2514 = vadd.f32 0.0, %v2513
        %2515 = vmatmul.bf16.gmra.mxu0 %v1963
        %v2516 = vpop.f32.mrf.mxu0
        %v2517 = vadd.f32 0.0, %v2516
        %v2518 = vpop.f32.mrf.mxu0
        %v2519 = vadd.f32 0.0, %v2518
        %2520 = vmatmul.bf16.gmra.mxu0 %v1966
        %v2521 = vpop.f32.mrf.mxu0
        %v2522 = vadd.f32 0.0, %v2521
        %v2523 = vpop.f32.mrf.mxu0
        %v2524 = vadd.f32 0.0, %v2523
        %2525 = vmatmul.bf16.gmra.mxu0 %v1969
        %v2526 = vpop.f32.mrf.mxu0
        %v2527 = vadd.f32 0.0, %v2526
        %v2528 = vpop.f32.mrf.mxu0
        %v2529 = vadd.f32 0.0, %v2528
        %2530 = vmatmul.bf16.gmra.mxu0 %v1972
        %v2531 = vpop.f32.mrf.mxu0
        %v2532 = vadd.f32 0.0, %v2531
        %v2533 = vpop.f32.mrf.mxu0
        %v2534 = vadd.f32 0.0, %v2533
        %2535 = vmatmul.bf16.gmra.mxu0 %v1975
        %v2536 = vpop.f32.mrf.mxu0
        %v2537 = vadd.f32 0.0, %v2536
        %v2538 = vpop.f32.mrf.mxu0
        %v2539 = vadd.f32 0.0, %v2538
        %2540 = vmatmul.bf16.gmra.mxu0 %v1978
        %v2541 = vpop.f32.mrf.mxu0
        %v2542 = vadd.f32 0.0, %v2541
        %v2543 = vpop.f32.mrf.mxu0
        %v2544 = vadd.f32 0.0, %v2543
        %2545 = vmatmul.bf16.gmra.mxu0 %v1981
        %v2546 = vpop.f32.mrf.mxu0
        %v2547 = vadd.f32 0.0, %v2546
        %v2548 = vpop.f32.mrf.mxu0
        %v2549 = vadd.f32 0.0, %v2548
        %2550 = vmatmul.bf16.gmra.mxu0 %v1984
        %v2551 = vpop.f32.mrf.mxu0
        %v2552 = vadd.f32 0.0, %v2551
        %v2553 = vpop.f32.mrf.mxu0
        %v2554 = vadd.f32 0.0, %v2553
        %2555 = vmatmul.bf16.gmra.mxu0 %v1987
        %v2556 = vpop.f32.mrf.mxu0
        %v2557 = vadd.f32 0.0, %v2556
        %v2558 = vpop.f32.mrf.mxu0
        %v2559 = vadd.f32 0.0, %v2558
        %2560 = vmatmul.bf16.gmra.mxu0 %v1990
        %v2561 = vpop.f32.mrf.mxu0
        %v2562 = vadd.f32 0.0, %v2561
        %v2563 = vpop.f32.mrf.mxu0
        %v2564 = vadd.f32 0.0, %v2563
        %2565 = vmatmul.bf16.gmra.mxu0 %v1993
        %v2566 = vpop.f32.mrf.mxu0
        %v2567 = vadd.f32 0.0, %v2566
        %v2568 = vpop.f32.mrf.mxu0
        %v2569 = vadd.f32 0.0, %v2568
        %2570 = vmatmul.bf16.gmra.mxu0 %v1996
        %v2571 = vpop.f32.mrf.mxu0
        %v2572 = vadd.f32 0.0, %v2571
        %v2573 = vpop.f32.mrf.mxu0
        %v2574 = vadd.f32 0.0, %v2573
        %2575 = vmatmul.bf16.gmra.mxu0 %v1999
        %v2576 = vpop.f32.mrf.mxu0
        %v2577 = vadd.f32 0.0, %v2576
        %v2578 = vpop.f32.mrf.mxu0
        %v2579 = vadd.f32 0.0, %v2578
        %2580 = vmatmul.bf16.gmra.mxu0 %v2002
        %v2581 = vpop.f32.mrf.mxu0
        %v2582 = vadd.f32 0.0, %v2581
        %v2583 = vpop.f32.mrf.mxu0
        %v2584 = vadd.f32 0.0, %v2583
        %2585 = vmatmul.bf16.gmra.mxu0 %v2005
        %v2586 = vpop.f32.mrf.mxu0
        %v2587 = vadd.f32 0.0, %v2586
        %v2588 = vpop.f32.mrf.mxu0
        %v2589 = vadd.f32 0.0, %v2588
        %2590 = vmatmul.bf16.gmra.mxu0 %v2008
        %v2591 = vpop.f32.mrf.mxu0
        %v2592 = vadd.f32 0.0, %v2591
        %v2593 = vpop.f32.mrf.mxu0
        %v2594 = vadd.f32 0.0, %v2593
        %2595 = vdwg.mxu0
        %2596 = vmatpush.bf16.xpose.msra.mxu0 0
        %2597 = vmatpush.bf16.xpose.msra.mxu0 0
        %2598 = vmatpush.bf16.xpose.msra.mxu0 0
        %2599 = vmatpush.bf16.xpose.msra.mxu0 0
        %2600 = vmatpush.bf16.xpose.msra.mxu0 %v785
        %2601 = vmatpush.bf16.xpose.msra.mxu0 %v782
        %2602 = vmatpush.bf16.xpose.msra.mxu0 %v779
        %2603 = vmatpush.bf16.xpose.msra.mxu0 %v776
        %2604 = vmatmul.bf16.gmra.mxu0 %v1796
        %v2605 = vpop.f32.mrf.mxu0
        %v2606 = vadd.f32 %v2237, %v2605
        %v2607 = vpop.f32.mrf.mxu0
        %v2608 = vadd.f32 %v2239, %v2607
        %2609 = vmatmul.bf16.gmra.mxu0 %v1799
        %v2610 = vpop.f32.mrf.mxu0
        %v2611 = vadd.f32 %v2242, %v2610
        %v2612 = vpop.f32.mrf.mxu0
        %v2613 = vadd.f32 %v2244, %v2612
        %2614 = vmatmul.bf16.gmra.mxu0 %v1802
        %v2615 = vpop.f32.mrf.mxu0
        %v2616 = vadd.f32 %v2247, %v2615
        %v2617 = vpop.f32.mrf.mxu0
        %v2618 = vadd.f32 %v2249, %v2617
        %2619 = vmatmul.bf16.gmra.mxu0 %v1805
        %v2620 = vpop.f32.mrf.mxu0
        %v2621 = vadd.f32 %v2252, %v2620
        %v2622 = vpop.f32.mrf.mxu0
        %v2623 = vadd.f32 %v2254, %v2622
        %2624 = vmatmul.bf16.gmra.mxu0 %v1808
        %v2625 = vpop.f32.mrf.mxu0
        %v2626 = vadd.f32 %v2257, %v2625
        %v2627 = vpop.f32.mrf.mxu0
        %v2628 = vadd.f32 %v2259, %v2627
        %2629 = vmatmul.bf16.gmra.mxu0 %v1811
        %v2630 = vpop.f32.mrf.mxu0
        %v2631 = vadd.f32 %v2262, %v2630
        %v2632 = vpop.f32.mrf.mxu0
        %v2633 = vadd.f32 %v2264, %v2632
        %2634 = vmatmul.bf16.gmra.mxu0 %v1814
        %v2635 = vpop.f32.mrf.mxu0
        %v2636 = vadd.f32 %v2267, %v2635
        %v2637 = vpop.f32.mrf.mxu0
        %v2638 = vadd.f32 %v2269, %v2637
        %2639 = vmatmul.bf16.gmra.mxu0 %v1817
        %v2640 = vpop.f32.mrf.mxu0
        %v2641 = vadd.f32 %v2272, %v2640
        %v2642 = vpop.f32.mrf.mxu0
        %v2643 = vadd.f32 %v2274, %v2642
        %2644 = vmatmul.bf16.gmra.mxu0 %v1820
        %v2645 = vpop.f32.mrf.mxu0
        %v2646 = vadd.f32 %v2277, %v2645
        %v2647 = vpop.f32.mrf.mxu0
        %v2648 = vadd.f32 %v2279, %v2647
        %2649 = vmatmul.bf16.gmra.mxu0 %v1823
        %v2650 = vpop.f32.mrf.mxu0
        %v2651 = vadd.f32 %v2282, %v2650
        %v2652 = vpop.f32.mrf.mxu0
        %v2653 = vadd.f32 %v2284, %v2652
        %2654 = vmatmul.bf16.gmra.mxu0 %v1826
        %v2655 = vpop.f32.mrf.mxu0
        %v2656 = vadd.f32 %v2287, %v2655
        %v2657 = vpop.f32.mrf.mxu0
        %v2658 = vadd.f32 %v2289, %v2657
        %2659 = vmatmul.bf16.gmra.mxu0 %v1829
        %v2660 = vpop.f32.mrf.mxu0
        %v2661 = vadd.f32 %v2292, %v2660
        %v2662 = vpop.f32.mrf.mxu0
        %v2663 = vadd.f32 %v2294, %v2662
        %2664 = vmatmul.bf16.gmra.mxu0 %v1832
        %v2665 = vpop.f32.mrf.mxu0
        %v2666 = vadd.f32 %v2297, %v2665
        %v2667 = vpop.f32.mrf.mxu0
        %v2668 = vadd.f32 %v2299, %v2667
        %2669 = vmatmul.bf16.gmra.mxu0 %v1835
        %v2670 = vpop.f32.mrf.mxu0
        %v2671 = vadd.f32 %v2302, %v2670
        %v2672 = vpop.f32.mrf.mxu0
        %v2673 = vadd.f32 %v2304, %v2672
        %2674 = vmatmul.bf16.gmra.mxu0 %v1838
        %v2675 = vpop.f32.mrf.mxu0
        %v2676 = vadd.f32 %v2307, %v2675
        %v2677 = vpop.f32.mrf.mxu0
        %v2678 = vadd.f32 %v2309, %v2677
        %2679 = vmatmul.bf16.gmra.mxu0 %v1841
        %v2680 = vpop.f32.mrf.mxu0
        %v2681 = vadd.f32 %v2312, %v2680
        %v2682 = vpop.f32.mrf.mxu0
        %v2683 = vadd.f32 %v2314, %v2682
        %2684 = vmatmul.bf16.gmra.mxu0 %v1844
        %v2685 = vpop.f32.mrf.mxu0
        %v2686 = vadd.f32 %v2317, %v2685
        %v2687 = vpop.f32.mrf.mxu0
        %v2688 = vadd.f32 %v2319, %v2687
        %2689 = vmatmul.bf16.gmra.mxu0 %v1847
        %v2690 = vpop.f32.mrf.mxu0
        %v2691 = vadd.f32 %v2322, %v2690
        %v2692 = vpop.f32.mrf.mxu0
        %v2693 = vadd.f32 %v2324, %v2692
        %2694 = vmatmul.bf16.gmra.mxu0 %v1850
        %v2695 = vpop.f32.mrf.mxu0
        %v2696 = vadd.f32 %v2327, %v2695
        %v2697 = vpop.f32.mrf.mxu0
        %v2698 = vadd.f32 %v2329, %v2697
        %2699 = vmatmul.bf16.gmra.mxu0 %v1853
        %v2700 = vpop.f32.mrf.mxu0
        %v2701 = vadd.f32 %v2332, %v2700
        %v2702 = vpop.f32.mrf.mxu0
        %v2703 = vadd.f32 %v2334, %v2702
        %2704 = vmatmul.bf16.gmra.mxu0 %v1856
        %v2705 = vpop.f32.mrf.mxu0
        %v2706 = vadd.f32 %v2337, %v2705
        %v2707 = vpop.f32.mrf.mxu0
        %v2708 = vadd.f32 %v2339, %v2707
        %2709 = vmatmul.bf16.gmra.mxu0 %v1859
        %v2710 = vpop.f32.mrf.mxu0
        %v2711 = vadd.f32 %v2342, %v2710
        %v2712 = vpop.f32.mrf.mxu0
        %v2713 = vadd.f32 %v2344, %v2712
        %2714 = vmatmul.bf16.gmra.mxu0 %v1862
        %v2715 = vpop.f32.mrf.mxu0
        %v2716 = vadd.f32 %v2347, %v2715
        %v2717 = vpop.f32.mrf.mxu0
        %v2718 = vadd.f32 %v2349, %v2717
        %2719 = vmatmul.bf16.gmra.mxu0 %v1865
        %v2720 = vpop.f32.mrf.mxu0
        %v2721 = vadd.f32 %v2352, %v2720
        %v2722 = vpop.f32.mrf.mxu0
        %v2723 = vadd.f32 %v2354, %v2722
        %2724 = vmatmul.bf16.gmra.mxu0 %v1868
        %v2725 = vpop.f32.mrf.mxu0
        %v2726 = vadd.f32 %v2357, %v2725
        %v2727 = vpop.f32.mrf.mxu0
        %v2728 = vadd.f32 %v2359, %v2727
        %2729 = vmatmul.bf16.gmra.mxu0 %v1871
        %v2730 = vpop.f32.mrf.mxu0
        %v2731 = vadd.f32 %v2362, %v2730
        %v2732 = vpop.f32.mrf.mxu0
        %v2733 = vadd.f32 %v2364, %v2732
        %2734 = vmatmul.bf16.gmra.mxu0 %v1874
        %v2735 = vpop.f32.mrf.mxu0
        %v2736 = vadd.f32 %v2367, %v2735
        %v2737 = vpop.f32.mrf.mxu0
        %v2738 = vadd.f32 %v2369, %v2737
        %2739 = vmatmul.bf16.gmra.mxu0 %v1877
        %v2740 = vpop.f32.mrf.mxu0
        %v2741 = vadd.f32 %v2372, %v2740
        %v2742 = vpop.f32.mrf.mxu0
        %v2743 = vadd.f32 %v2374, %v2742
        %2744 = vmatmul.bf16.gmra.mxu0 %v1880
        %v2745 = vpop.f32.mrf.mxu0
        %v2746 = vadd.f32 %v2377, %v2745
        %v2747 = vpop.f32.mrf.mxu0
        %v2748 = vadd.f32 %v2379, %v2747
        %2749 = vmatmul.bf16.gmra.mxu0 %v1883
        %v2750 = vpop.f32.mrf.mxu0
        %v2751 = vadd.f32 %v2382, %v2750
        %v2752 = vpop.f32.mrf.mxu0
        %v2753 = vadd.f32 %v2384, %v2752
        %2754 = vmatmul.bf16.gmra.mxu0 %v1886
        %v2755 = vpop.f32.mrf.mxu0
        %v2756 = vadd.f32 %v2387, %v2755
        %v2757 = vpop.f32.mrf.mxu0
        %v2758 = vadd.f32 %v2389, %v2757
        %2759 = vmatmul.bf16.gmra.mxu0 %v1889
        %v2760 = vpop.f32.mrf.mxu0
        %v2761 = vadd.f32 %v2392, %v2760
        %v2762 = vpop.f32.mrf.mxu0
        %v2763 = vadd.f32 %v2394, %v2762
        %2764 = vmatmul.bf16.gmra.mxu0 %v1892
        %v2765 = vpop.f32.mrf.mxu0
        %v2766 = vadd.f32 %v2397, %v2765
        %v2767 = vpop.f32.mrf.mxu0
        %v2768 = vadd.f32 %v2399, %v2767
        %2769 = vmatmul.bf16.gmra.mxu0 %v1895
        %v2770 = vpop.f32.mrf.mxu0
        %v2771 = vadd.f32 %v2402, %v2770
        %v2772 = vpop.f32.mrf.mxu0
        %v2773 = vadd.f32 %v2404, %v2772
        %2774 = vmatmul.bf16.gmra.mxu0 %v1898
        %v2775 = vpop.f32.mrf.mxu0
        %v2776 = vadd.f32 %v2407, %v2775
        %v2777 = vpop.f32.mrf.mxu0
        %v2778 = vadd.f32 %v2409, %v2777
        %2779 = vmatmul.bf16.gmra.mxu0 %v1901
        %v2780 = vpop.f32.mrf.mxu0
        %v2781 = vadd.f32 %v2412, %v2780
        %v2782 = vpop.f32.mrf.mxu0
        %v2783 = vadd.f32 %v2414, %v2782
        %2784 = vmatmul.bf16.gmra.mxu0 %v1904
        %v2785 = vpop.f32.mrf.mxu0
        %v2786 = vadd.f32 %v2417, %v2785
        %v2787 = vpop.f32.mrf.mxu0
        %v2788 = vadd.f32 %v2419, %v2787
        %2789 = vmatmul.bf16.gmra.mxu0 %v1907
        %v2790 = vpop.f32.mrf.mxu0
        %v2791 = vadd.f32 %v2422, %v2790
        %v2792 = vpop.f32.mrf.mxu0
        %v2793 = vadd.f32 %v2424, %v2792
        %2794 = vmatmul.bf16.gmra.mxu0 %v1910
        %v2795 = vpop.f32.mrf.mxu0
        %v2796 = vadd.f32 %v2427, %v2795
        %v2797 = vpop.f32.mrf.mxu0
        %v2798 = vadd.f32 %v2429, %v2797
        %2799 = vmatmul.bf16.gmra.mxu0 %v1913
        %v2800 = vpop.f32.mrf.mxu0
        %v2801 = vadd.f32 %v2432, %v2800
        %v2802 = vpop.f32.mrf.mxu0
        %v2803 = vadd.f32 %v2434, %v2802
        %2804 = vmatmul.bf16.gmra.mxu0 %v1916
        %v2805 = vpop.f32.mrf.mxu0
        %v2806 = vadd.f32 %v2437, %v2805
        %v2807 = vpop.f32.mrf.mxu0
        %v2808 = vadd.f32 %v2439, %v2807
        %2809 = vmatmul.bf16.gmra.mxu0 %v1919
        %v2810 = vpop.f32.mrf.mxu0
        %v2811 = vadd.f32 %v2442, %v2810
        %v2812 = vpop.f32.mrf.mxu0
        %v2813 = vadd.f32 %v2444, %v2812
        %2814 = vmatmul.bf16.gmra.mxu0 %v1922
        %v2815 = vpop.f32.mrf.mxu0
        %v2816 = vadd.f32 %v2447, %v2815
        %v2817 = vpop.f32.mrf.mxu0
        %v2818 = vadd.f32 %v2449, %v2817
        %2819 = vmatmul.bf16.gmra.mxu0 %v1925
        %v2820 = vpop.f32.mrf.mxu0
        %v2821 = vadd.f32 %v2452, %v2820
        %v2822 = vpop.f32.mrf.mxu0
        %v2823 = vadd.f32 %v2454, %v2822
        %2824 = vmatmul.bf16.gmra.mxu0 %v1928
        %v2825 = vpop.f32.mrf.mxu0
        %v2826 = vadd.f32 %v2457, %v2825
        %v2827 = vpop.f32.mrf.mxu0
        %v2828 = vadd.f32 %v2459, %v2827
        %2829 = vmatmul.bf16.gmra.mxu0 %v1931
        %v2830 = vpop.f32.mrf.mxu0
        %v2831 = vadd.f32 %v2462, %v2830
        %v2832 = vpop.f32.mrf.mxu0
        %v2833 = vadd.f32 %v2464, %v2832
        %2834 = vmatmul.bf16.gmra.mxu0 %v1934
        %v2835 = vpop.f32.mrf.mxu0
        %v2836 = vadd.f32 %v2467, %v2835
        %v2837 = vpop.f32.mrf.mxu0
        %v2838 = vadd.f32 %v2469, %v2837
        %2839 = vmatmul.bf16.gmra.mxu0 %v1937
        %v2840 = vpop.f32.mrf.mxu0
        %v2841 = vadd.f32 %v2472, %v2840
        %v2842 = vpop.f32.mrf.mxu0
        %v2843 = vadd.f32 %v2474, %v2842
        %2844 = vmatmul.bf16.gmra.mxu0 %v1940
        %v2845 = vpop.f32.mrf.mxu0
        %v2846 = vadd.f32 %v2477, %v2845
        %v2847 = vpop.f32.mrf.mxu0
        %v2848 = vadd.f32 %v2479, %v2847
        %2849 = vmatmul.bf16.gmra.mxu0 %v1943
        %v2850 = vpop.f32.mrf.mxu0
        %v2851 = vadd.f32 %v2482, %v2850
        %v2852 = vpop.f32.mrf.mxu0
        %v2853 = vadd.f32 %v2484, %v2852
        %2854 = vmatmul.bf16.gmra.mxu0 %v1946
        %v2855 = vpop.f32.mrf.mxu0
        %v2856 = vadd.f32 %v2487, %v2855
        %v2857 = vpop.f32.mrf.mxu0
        %v2858 = vadd.f32 %v2489, %v2857
        %2859 = vmatmul.bf16.gmra.mxu0 %v1949
        %v2860 = vpop.f32.mrf.mxu0
        %v2861 = vadd.f32 %v2492, %v2860
        %v2862 = vpop.f32.mrf.mxu0
        %v2863 = vadd.f32 %v2494, %v2862
        %2864 = vmatmul.bf16.gmra.mxu0 %v1952
        %v2865 = vpop.f32.mrf.mxu0
        %v2866 = vadd.f32 %v2497, %v2865
        %v2867 = vpop.f32.mrf.mxu0
        %v2868 = vadd.f32 %v2499, %v2867
        %2869 = vmatmul.bf16.gmra.mxu0 %v1955
        %v2870 = vpop.f32.mrf.mxu0
        %v2871 = vadd.f32 %v2502, %v2870
        %v2872 = vpop.f32.mrf.mxu0
        %v2873 = vadd.f32 %v2504, %v2872
        %2874 = vmatmul.bf16.gmra.mxu0 %v1958
        %v2875 = vpop.f32.mrf.mxu0
        %v2876 = vadd.f32 %v2507, %v2875
        %v2877 = vpop.f32.mrf.mxu0
        %v2878 = vadd.f32 %v2509, %v2877
        %2879 = vmatmul.bf16.gmra.mxu0 %v1961
        %v2880 = vpop.f32.mrf.mxu0
        %v2881 = vadd.f32 %v2512, %v2880
        %v2882 = vpop.f32.mrf.mxu0
        %v2883 = vadd.f32 %v2514, %v2882
        %2884 = vmatmul.bf16.gmra.mxu0 %v1964
        %v2885 = vpop.f32.mrf.mxu0
        %v2886 = vadd.f32 %v2517, %v2885
        %v2887 = vpop.f32.mrf.mxu0
        %v2888 = vadd.f32 %v2519, %v2887
        %2889 = vmatmul.bf16.gmra.mxu0 %v1967
        %v2890 = vpop.f32.mrf.mxu0
        %v2891 = vadd.f32 %v2522, %v2890
        %v2892 = vpop.f32.mrf.mxu0
        %v2893 = vadd.f32 %v2524, %v2892
        %2894 = vmatmul.bf16.gmra.mxu0 %v1970
        %v2895 = vpop.f32.mrf.mxu0
        %v2896 = vadd.f32 %v2527, %v2895
        %v2897 = vpop.f32.mrf.mxu0
        %v2898 = vadd.f32 %v2529, %v2897
        %2899 = vmatmul.bf16.gmra.mxu0 %v1973
        %v2900 = vpop.f32.mrf.mxu0
        %v2901 = vadd.f32 %v2532, %v2900
        %v2902 = vpop.f32.mrf.mxu0
        %v2903 = vadd.f32 %v2534, %v2902
        %2904 = vmatmul.bf16.gmra.mxu0 %v1976
        %v2905 = vpop.f32.mrf.mxu0
        %v2906 = vadd.f32 %v2537, %v2905
        %v2907 = vpop.f32.mrf.mxu0
        %v2908 = vadd.f32 %v2539, %v2907
        %2909 = vmatmul.bf16.gmra.mxu0 %v1979
        %v2910 = vpop.f32.mrf.mxu0
        %v2911 = vadd.f32 %v2542, %v2910
        %v2912 = vpop.f32.mrf.mxu0
        %v2913 = vadd.f32 %v2544, %v2912
        %2914 = vmatmul.bf16.gmra.mxu0 %v1982
        %v2915 = vpop.f32.mrf.mxu0
        %v2916 = vadd.f32 %v2547, %v2915
        %v2917 = vpop.f32.mrf.mxu0
        %v2918 = vadd.f32 %v2549, %v2917
        %2919 = vmatmul.bf16.gmra.mxu0 %v1985
        %v2920 = vpop.f32.mrf.mxu0
        %v2921 = vadd.f32 %v2552, %v2920
        %v2922 = vpop.f32.mrf.mxu0
        %v2923 = vadd.f32 %v2554, %v2922
        %2924 = vmatmul.bf16.gmra.mxu0 %v1988
        %v2925 = vpop.f32.mrf.mxu0
        %v2926 = vadd.f32 %v2557, %v2925
        %v2927 = vpop.f32.mrf.mxu0
        %v2928 = vadd.f32 %v2559, %v2927
        %2929 = vmatmul.bf16.gmra.mxu0 %v1991
        %v2930 = vpop.f32.mrf.mxu0
        %v2931 = vadd.f32 %v2562, %v2930
        %v2932 = vpop.f32.mrf.mxu0
        %v2933 = vadd.f32 %v2564, %v2932
        %2934 = vmatmul.bf16.gmra.mxu0 %v1994
        %v2935 = vpop.f32.mrf.mxu0
        %v2936 = vadd.f32 %v2567, %v2935
        %v2937 = vpop.f32.mrf.mxu0
        %v2938 = vadd.f32 %v2569, %v2937
        %2939 = vmatmul.bf16.gmra.mxu0 %v1997
        %v2940 = vpop.f32.mrf.mxu0
        %v2941 = vadd.f32 %v2572, %v2940
        %v2942 = vpop.f32.mrf.mxu0
        %v2943 = vadd.f32 %v2574, %v2942
        %2944 = vmatmul.bf16.gmra.mxu0 %v2000
        %v2945 = vpop.f32.mrf.mxu0
        %v2946 = vadd.f32 %v2577, %v2945
        %v2947 = vpop.f32.mrf.mxu0
        %v2948 = vadd.f32 %v2579, %v2947
        %2949 = vmatmul.bf16.gmra.mxu0 %v2003
        %v2950 = vpop.f32.mrf.mxu0
        %v2951 = vadd.f32 %v2582, %v2950
        %v2952 = vpop.f32.mrf.mxu0
        %v2953 = vadd.f32 %v2584, %v2952
        %2954 = vmatmul.bf16.gmra.mxu0 %v2006
        %v2955 = vpop.f32.mrf.mxu0
        %v2956 = vadd.f32 %v2587, %v2955
        %v2957 = vpop.f32.mrf.mxu0
        %v2958 = vadd.f32 %v2589, %v2957
        %2959 = vmatmul.bf16.gmra.mxu0 %v2009
        %v2960 = vpop.f32.mrf.mxu0
        %v2961 = vadd.f32 %v2592, %v2960
        %v2962 = vpop.f32.mrf.mxu0
        %v2963 = vadd.f32 %v2594, %v2962
        %2964 = vdwg.mxu0
        %2965 = vmatpush.bf16.xpose.msra.mxu0 0
        %2966 = vmatpush.bf16.xpose.msra.mxu0 0
        %2967 = vmatpush.bf16.xpose.msra.mxu0 0
        %2968 = vmatpush.bf16.xpose.msra.mxu0 0
        %2969 = vmatpush.bf16.xpose.msra.mxu0 %v786
        %2970 = vmatpush.bf16.xpose.msra.mxu0 %v783
        %2971 = vmatpush.bf16.xpose.msra.mxu0 %v780
        %2972 = vmatpush.bf16.xpose.msra.mxu0 %v777
        %2973 = vmatmul.bf16.gmra.mxu0 %v1797
        %v2974 = vpop.f32.mrf.mxu0
        %v2975 = vadd.f32 %v2606, %v2974
        %v2976 = vpop.f32.mrf.mxu0
        %v2977 = vadd.f32 %v2608, %v2976
        %2978 = vmatmul.bf16.gmra.mxu0 %v1800
        %v2979 = vpop.f32.mrf.mxu0
        %v2980 = vadd.f32 %v2611, %v2979
        %v2981 = vpop.f32.mrf.mxu0
        %v2982 = vadd.f32 %v2613, %v2981
        %2983 = vmatmul.bf16.gmra.mxu0 %v1803
        %v2984 = vpop.f32.mrf.mxu0
        %v2985 = vadd.f32 %v2616, %v2984
        %v2986 = vpop.f32.mrf.mxu0
        %v2987 = vadd.f32 %v2618, %v2986
        %2988 = vmatmul.bf16.gmra.mxu0 %v1806
        %v2989 = vpop.f32.mrf.mxu0
        %v2990 = vadd.f32 %v2621, %v2989
        %v2991 = vpop.f32.mrf.mxu0
        %v2992 = vadd.f32 %v2623, %v2991
        %2993 = vmatmul.bf16.gmra.mxu0 %v1809
        %v2994 = vpop.f32.mrf.mxu0
        %v2995 = vadd.f32 %v2626, %v2994
        %v2996 = vpop.f32.mrf.mxu0
        %v2997 = vadd.f32 %v2628, %v2996
        %2998 = vmatmul.bf16.gmra.mxu0 %v1812
        %v2999 = vpop.f32.mrf.mxu0
        %v3000 = vadd.f32 %v2631, %v2999
        %v3001 = vpop.f32.mrf.mxu0
        %v3002 = vadd.f32 %v2633, %v3001
        %3003 = vmatmul.bf16.gmra.mxu0 %v1815
        %v3004 = vpop.f32.mrf.mxu0
        %v3005 = vadd.f32 %v2636, %v3004
        %v3006 = vpop.f32.mrf.mxu0
        %v3007 = vadd.f32 %v2638, %v3006
        %3008 = vmatmul.bf16.gmra.mxu0 %v1818
        %v3009 = vpop.f32.mrf.mxu0
        %v3010 = vadd.f32 %v2641, %v3009
        %v3011 = vpop.f32.mrf.mxu0
        %v3012 = vadd.f32 %v2643, %v3011
        %3013 = vmatmul.bf16.gmra.mxu0 %v1821
        %v3014 = vpop.f32.mrf.mxu0
        %v3015 = vadd.f32 %v2646, %v3014
        %v3016 = vpop.f32.mrf.mxu0
        %v3017 = vadd.f32 %v2648, %v3016
        %3018 = vmatmul.bf16.gmra.mxu0 %v1824
        %v3019 = vpop.f32.mrf.mxu0
        %v3020 = vadd.f32 %v2651, %v3019
        %v3021 = vpop.f32.mrf.mxu0
        %v3022 = vadd.f32 %v2653, %v3021
        %3023 = vmatmul.bf16.gmra.mxu0 %v1827
        %v3024 = vpop.f32.mrf.mxu0
        %v3025 = vadd.f32 %v2656, %v3024
        %v3026 = vpop.f32.mrf.mxu0
        %v3027 = vadd.f32 %v2658, %v3026
        %3028 = vmatmul.bf16.gmra.mxu0 %v1830
        %v3029 = vpop.f32.mrf.mxu0
        %v3030 = vadd.f32 %v2661, %v3029
        %v3031 = vpop.f32.mrf.mxu0
        %v3032 = vadd.f32 %v2663, %v3031
        %3033 = vmatmul.bf16.gmra.mxu0 %v1833
        %v3034 = vpop.f32.mrf.mxu0
        %v3035 = vadd.f32 %v2666, %v3034
        %v3036 = vpop.f32.mrf.mxu0
        %v3037 = vadd.f32 %v2668, %v3036
        %3038 = vmatmul.bf16.gmra.mxu0 %v1836
        %v3039 = vpop.f32.mrf.mxu0
        %v3040 = vadd.f32 %v2671, %v3039
        %v3041 = vpop.f32.mrf.mxu0
        %v3042 = vadd.f32 %v2673, %v3041
        %3043 = vmatmul.bf16.gmra.mxu0 %v1839
        %v3044 = vpop.f32.mrf.mxu0
        %v3045 = vadd.f32 %v2676, %v3044
        %v3046 = vpop.f32.mrf.mxu0
        %v3047 = vadd.f32 %v2678, %v3046
        %3048 = vmatmul.bf16.gmra.mxu0 %v1842
        %v3049 = vpop.f32.mrf.mxu0
        %v3050 = vadd.f32 %v2681, %v3049
        %v3051 = vpop.f32.mrf.mxu0
        %v3052 = vadd.f32 %v2683, %v3051
        %3053 = vmatmul.bf16.gmra.mxu0 %v1845
        %v3054 = vpop.f32.mrf.mxu0
        %v3055 = vadd.f32 %v2686, %v3054
        %v3056 = vpop.f32.mrf.mxu0
        %v3057 = vadd.f32 %v2688, %v3056
        %3058 = vmatmul.bf16.gmra.mxu0 %v1848
        %v3059 = vpop.f32.mrf.mxu0
        %v3060 = vadd.f32 %v2691, %v3059
        %v3061 = vpop.f32.mrf.mxu0
        %v3062 = vadd.f32 %v2693, %v3061
        %3063 = vmatmul.bf16.gmra.mxu0 %v1851
        %v3064 = vpop.f32.mrf.mxu0
        %v3065 = vadd.f32 %v2696, %v3064
        %v3066 = vpop.f32.mrf.mxu0
        %v3067 = vadd.f32 %v2698, %v3066
        %3068 = vmatmul.bf16.gmra.mxu0 %v1854
        %v3069 = vpop.f32.mrf.mxu0
        %v3070 = vadd.f32 %v2701, %v3069
        %v3071 = vpop.f32.mrf.mxu0
        %v3072 = vadd.f32 %v2703, %v3071
        %3073 = vmatmul.bf16.gmra.mxu0 %v1857
        %v3074 = vpop.f32.mrf.mxu0
        %v3075 = vadd.f32 %v2706, %v3074
        %v3076 = vpop.f32.mrf.mxu0
        %v3077 = vadd.f32 %v2708, %v3076
        %3078 = vmatmul.bf16.gmra.mxu0 %v1860
        %v3079 = vpop.f32.mrf.mxu0
        %v3080 = vadd.f32 %v2711, %v3079
        %v3081 = vpop.f32.mrf.mxu0
        %v3082 = vadd.f32 %v2713, %v3081
        %3083 = vmatmul.bf16.gmra.mxu0 %v1863
        %v3084 = vpop.f32.mrf.mxu0
        %v3085 = vadd.f32 %v2716, %v3084
        %v3086 = vpop.f32.mrf.mxu0
        %v3087 = vadd.f32 %v2718, %v3086
        %3088 = vmatmul.bf16.gmra.mxu0 %v1866
        %v3089 = vpop.f32.mrf.mxu0
        %v3090 = vadd.f32 %v2721, %v3089
        %v3091 = vpop.f32.mrf.mxu0
        %v3092 = vadd.f32 %v2723, %v3091
        %3093 = vmatmul.bf16.gmra.mxu0 %v1869
        %v3094 = vpop.f32.mrf.mxu0
        %v3095 = vadd.f32 %v2726, %v3094
        %v3096 = vpop.f32.mrf.mxu0
        %v3097 = vadd.f32 %v2728, %v3096
        %3098 = vmatmul.bf16.gmra.mxu0 %v1872
        %v3099 = vpop.f32.mrf.mxu0
        %v3100 = vadd.f32 %v2731, %v3099
        %v3101 = vpop.f32.mrf.mxu0
        %v3102 = vadd.f32 %v2733, %v3101
        %3103 = vmatmul.bf16.gmra.mxu0 %v1875
        %v3104 = vpop.f32.mrf.mxu0
        %v3105 = vadd.f32 %v2736, %v3104
        %v3106 = vpop.f32.mrf.mxu0
        %v3107 = vadd.f32 %v2738, %v3106
        %3108 = vmatmul.bf16.gmra.mxu0 %v1878
        %v3109 = vpop.f32.mrf.mxu0
        %v3110 = vadd.f32 %v2741, %v3109
        %v3111 = vpop.f32.mrf.mxu0
        %v3112 = vadd.f32 %v2743, %v3111
        %3113 = vmatmul.bf16.gmra.mxu0 %v1881
        %v3114 = vpop.f32.mrf.mxu0
        %v3115 = vadd.f32 %v2746, %v3114
        %v3116 = vpop.f32.mrf.mxu0
        %v3117 = vadd.f32 %v2748, %v3116
        %3118 = vmatmul.bf16.gmra.mxu0 %v1884
        %v3119 = vpop.f32.mrf.mxu0
        %v3120 = vadd.f32 %v2751, %v3119
        %v3121 = vpop.f32.mrf.mxu0
        %v3122 = vadd.f32 %v2753, %v3121
        %3123 = vmatmul.bf16.gmra.mxu0 %v1887
        %v3124 = vpop.f32.mrf.mxu0
        %v3125 = vadd.f32 %v2756, %v3124
        %v3126 = vpop.f32.mrf.mxu0
        %v3127 = vadd.f32 %v2758, %v3126
        %3128 = vmatmul.bf16.gmra.mxu0 %v1890
        %v3129 = vpop.f32.mrf.mxu0
        %v3130 = vadd.f32 %v2761, %v3129
        %v3131 = vpop.f32.mrf.mxu0
        %v3132 = vadd.f32 %v2763, %v3131
        %3133 = vmatmul.bf16.gmra.mxu0 %v1893
        %v3134 = vpop.f32.mrf.mxu0
        %v3135 = vadd.f32 %v2766, %v3134
        %v3136 = vpop.f32.mrf.mxu0
        %v3137 = vadd.f32 %v2768, %v3136
        %3138 = vmatmul.bf16.gmra.mxu0 %v1896
        %v3139 = vpop.f32.mrf.mxu0
        %v3140 = vadd.f32 %v2771, %v3139
        %v3141 = vpop.f32.mrf.mxu0
        %v3142 = vadd.f32 %v2773, %v3141
        %3143 = vmatmul.bf16.gmra.mxu0 %v1899
        %v3144 = vpop.f32.mrf.mxu0
        %v3145 = vadd.f32 %v2776, %v3144
        %v3146 = vpop.f32.mrf.mxu0
        %v3147 = vadd.f32 %v2778, %v3146
        %3148 = vmatmul.bf16.gmra.mxu0 %v1902
        %v3149 = vpop.f32.mrf.mxu0
        %v3150 = vadd.f32 %v2781, %v3149
        %v3151 = vpop.f32.mrf.mxu0
        %v3152 = vadd.f32 %v2783, %v3151
        %3153 = vmatmul.bf16.gmra.mxu0 %v1905
        %v3154 = vpop.f32.mrf.mxu0
        %v3155 = vadd.f32 %v2786, %v3154
        %v3156 = vpop.f32.mrf.mxu0
        %v3157 = vadd.f32 %v2788, %v3156
        %3158 = vmatmul.bf16.gmra.mxu0 %v1908
        %v3159 = vpop.f32.mrf.mxu0
        %v3160 = vadd.f32 %v2791, %v3159
        %v3161 = vpop.f32.mrf.mxu0
        %v3162 = vadd.f32 %v2793, %v3161
        %3163 = vmatmul.bf16.gmra.mxu0 %v1911
        %v3164 = vpop.f32.mrf.mxu0
        %v3165 = vadd.f32 %v2796, %v3164
        %v3166 = vpop.f32.mrf.mxu0
        %v3167 = vadd.f32 %v2798, %v3166
        %3168 = vmatmul.bf16.gmra.mxu0 %v1914
        %v3169 = vpop.f32.mrf.mxu0
        %v3170 = vadd.f32 %v2801, %v3169
        %v3171 = vpop.f32.mrf.mxu0
        %v3172 = vadd.f32 %v2803, %v3171
        %3173 = vmatmul.bf16.gmra.mxu0 %v1917
        %v3174 = vpop.f32.mrf.mxu0
        %v3175 = vadd.f32 %v2806, %v3174
        %v3176 = vpop.f32.mrf.mxu0
        %v3177 = vadd.f32 %v2808, %v3176
        %3178 = vmatmul.bf16.gmra.mxu0 %v1920
        %v3179 = vpop.f32.mrf.mxu0
        %v3180 = vadd.f32 %v2811, %v3179
        %v3181 = vpop.f32.mrf.mxu0
        %v3182 = vadd.f32 %v2813, %v3181
        %3183 = vmatmul.bf16.gmra.mxu0 %v1923
        %v3184 = vpop.f32.mrf.mxu0
        %v3185 = vadd.f32 %v2816, %v3184
        %v3186 = vpop.f32.mrf.mxu0
        %v3187 = vadd.f32 %v2818, %v3186
        %3188 = vmatmul.bf16.gmra.mxu0 %v1926
        %v3189 = vpop.f32.mrf.mxu0
        %v3190 = vadd.f32 %v2821, %v3189
        %v3191 = vpop.f32.mrf.mxu0
        %v3192 = vadd.f32 %v2823, %v3191
        %3193 = vmatmul.bf16.gmra.mxu0 %v1929
        %v3194 = vpop.f32.mrf.mxu0
        %v3195 = vadd.f32 %v2826, %v3194
        %v3196 = vpop.f32.mrf.mxu0
        %v3197 = vadd.f32 %v2828, %v3196
        %3198 = vmatmul.bf16.gmra.mxu0 %v1932
        %v3199 = vpop.f32.mrf.mxu0
        %v3200 = vadd.f32 %v2831, %v3199
        %v3201 = vpop.f32.mrf.mxu0
        %v3202 = vadd.f32 %v2833, %v3201
        %3203 = vmatmul.bf16.gmra.mxu0 %v1935
        %v3204 = vpop.f32.mrf.mxu0
        %v3205 = vadd.f32 %v2836, %v3204
        %v3206 = vpop.f32.mrf.mxu0
        %v3207 = vadd.f32 %v2838, %v3206
        %3208 = vmatmul.bf16.gmra.mxu0 %v1938
        %v3209 = vpop.f32.mrf.mxu0
        %v3210 = vadd.f32 %v2841, %v3209
        %v3211 = vpop.f32.mrf.mxu0
        %v3212 = vadd.f32 %v2843, %v3211
        %3213 = vmatmul.bf16.gmra.mxu0 %v1941
        %v3214 = vpop.f32.mrf.mxu0
        %v3215 = vadd.f32 %v2846, %v3214
        %v3216 = vpop.f32.mrf.mxu0
        %v3217 = vadd.f32 %v2848, %v3216
        %3218 = vmatmul.bf16.gmra.mxu0 %v1944
        %v3219 = vpop.f32.mrf.mxu0
        %v3220 = vadd.f32 %v2851, %v3219
        %v3221 = vpop.f32.mrf.mxu0
        %v3222 = vadd.f32 %v2853, %v3221
        %3223 = vmatmul.bf16.gmra.mxu0 %v1947
        %v3224 = vpop.f32.mrf.mxu0
        %v3225 = vadd.f32 %v2856, %v3224
        %v3226 = vpop.f32.mrf.mxu0
        %v3227 = vadd.f32 %v2858, %v3226
        %3228 = vmatmul.bf16.gmra.mxu0 %v1950
        %v3229 = vpop.f32.mrf.mxu0
        %v3230 = vadd.f32 %v2861, %v3229
        %v3231 = vpop.f32.mrf.mxu0
        %v3232 = vadd.f32 %v2863, %v3231
        %3233 = vmatmul.bf16.gmra.mxu0 %v1953
        %v3234 = vpop.f32.mrf.mxu0
        %v3235 = vadd.f32 %v2866, %v3234
        %v3236 = vpop.f32.mrf.mxu0
        %v3237 = vadd.f32 %v2868, %v3236
        %3238 = vmatmul.bf16.gmra.mxu0 %v1956
        %v3239 = vpop.f32.mrf.mxu0
        %v3240 = vadd.f32 %v2871, %v3239
        %v3241 = vpop.f32.mrf.mxu0
        %v3242 = vadd.f32 %v2873, %v3241
        %3243 = vmatmul.bf16.gmra.mxu0 %v1959
        %v3244 = vpop.f32.mrf.mxu0
        %v3245 = vadd.f32 %v2876, %v3244
        %v3246 = vpop.f32.mrf.mxu0
        %v3247 = vadd.f32 %v2878, %v3246
        %3248 = vmatmul.bf16.gmra.mxu0 %v1962
        %v3249 = vpop.f32.mrf.mxu0
        %v3250 = vadd.f32 %v2881, %v3249
        %v3251 = vpop.f32.mrf.mxu0
        %v3252 = vadd.f32 %v2883, %v3251
        %3253 = vmatmul.bf16.gmra.mxu0 %v1965
        %v3254 = vpop.f32.mrf.mxu0
        %v3255 = vadd.f32 %v2886, %v3254
        %v3256 = vpop.f32.mrf.mxu0
        %v3257 = vadd.f32 %v2888, %v3256
        %3258 = vmatmul.bf16.gmra.mxu0 %v1968
        %v3259 = vpop.f32.mrf.mxu0
        %v3260 = vadd.f32 %v2891, %v3259
        %v3261 = vpop.f32.mrf.mxu0
        %v3262 = vadd.f32 %v2893, %v3261
        %3263 = vmatmul.bf16.gmra.mxu0 %v1971
        %v3264 = vpop.f32.mrf.mxu0
        %v3265 = vadd.f32 %v2896, %v3264
        %v3266 = vpop.f32.mrf.mxu0
        %v3267 = vadd.f32 %v2898, %v3266
        %3268 = vmatmul.bf16.gmra.mxu0 %v1974
        %v3269 = vpop.f32.mrf.mxu0
        %v3270 = vadd.f32 %v2901, %v3269
        %v3271 = vpop.f32.mrf.mxu0
        %v3272 = vadd.f32 %v2903, %v3271
        %3273 = vmatmul.bf16.gmra.mxu0 %v1977
        %v3274 = vpop.f32.mrf.mxu0
        %v3275 = vadd.f32 %v2906, %v3274
        %v3276 = vpop.f32.mrf.mxu0
        %v3277 = vadd.f32 %v2908, %v3276
        %3278 = vmatmul.bf16.gmra.mxu0 %v1980
        %v3279 = vpop.f32.mrf.mxu0
        %v3280 = vadd.f32 %v2911, %v3279
        %v3281 = vpop.f32.mrf.mxu0
        %v3282 = vadd.f32 %v2913, %v3281
        %3283 = vmatmul.bf16.gmra.mxu0 %v1983
        %v3284 = vpop.f32.mrf.mxu0
        %v3285 = vadd.f32 %v2916, %v3284
        %v3286 = vpop.f32.mrf.mxu0
        %v3287 = vadd.f32 %v2918, %v3286
        %3288 = vmatmul.bf16.gmra.mxu0 %v1986
        %v3289 = vpop.f32.mrf.mxu0
        %v3290 = vadd.f32 %v2921, %v3289
        %v3291 = vpop.f32.mrf.mxu0
        %v3292 = vadd.f32 %v2923, %v3291
        %3293 = vmatmul.bf16.gmra.mxu0 %v1989
        %v3294 = vpop.f32.mrf.mxu0
        %v3295 = vadd.f32 %v2926, %v3294
        %v3296 = vpop.f32.mrf.mxu0
        %v3297 = vadd.f32 %v2928, %v3296
        %3298 = vmatmul.bf16.gmra.mxu0 %v1992
        %v3299 = vpop.f32.mrf.mxu0
        %v3300 = vadd.f32 %v2931, %v3299
        %v3301 = vpop.f32.mrf.mxu0
        %v3302 = vadd.f32 %v2933, %v3301
        %3303 = vmatmul.bf16.gmra.mxu0 %v1995
        %v3304 = vpop.f32.mrf.mxu0
        %v3305 = vadd.f32 %v2936, %v3304
        %v3306 = vpop.f32.mrf.mxu0
        %v3307 = vadd.f32 %v2938, %v3306
        %3308 = vmatmul.bf16.gmra.mxu0 %v1998
        %v3309 = vpop.f32.mrf.mxu0
        %v3310 = vadd.f32 %v2941, %v3309
        %v3311 = vpop.f32.mrf.mxu0
        %v3312 = vadd.f32 %v2943, %v3311
        %3313 = vmatmul.bf16.gmra.mxu0 %v2001
        %v3314 = vpop.f32.mrf.mxu0
        %v3315 = vadd.f32 %v2946, %v3314
        %v3316 = vpop.f32.mrf.mxu0
        %v3317 = vadd.f32 %v2948, %v3316
        %3318 = vmatmul.bf16.gmra.mxu0 %v2004
        %v3319 = vpop.f32.mrf.mxu0
        %v3320 = vadd.f32 %v2951, %v3319
        %v3321 = vpop.f32.mrf.mxu0
        %v3322 = vadd.f32 %v2953, %v3321
        %3323 = vmatmul.bf16.gmra.mxu0 %v2007
        %v3324 = vpop.f32.mrf.mxu0
        %v3325 = vadd.f32 %v2956, %v3324
        %v3326 = vpop.f32.mrf.mxu0
        %v3327 = vadd.f32 %v2958, %v3326
        %3328 = vmatmul.bf16.gmra.mxu0 %v2010
        %v3329 = vpop.f32.mrf.mxu0
        %v3330 = vadd.f32 %v2961, %v3329
        %v3331 = vpop.f32.mrf.mxu0
        %v3332 = vadd.f32 %v2963, %v3331
        %3333 = vdwg.mxu0
        %v3334 = vpack.c.bf16 %v2975, %v2975
        %v3335 = vpack.c.bf16 %v2977, %v2977
        %v3336 = vpack.c.bf16 %v2980, %v2980
        %v3337 = vpack.c.bf16 %v2982, %v2982
        %v3338 = vpack.c.bf16 %v2985, %v2985
        %v3339 = vpack.c.bf16 %v2987, %v2987
        %v3340 = vpack.c.bf16 %v2990, %v2990
        %v3341 = vpack.c.bf16 %v2992, %v2992
        %v3342 = vpack.c.bf16 %v2995, %v2995
        %v3343 = vpack.c.bf16 %v2997, %v2997
        %v3344 = vpack.c.bf16 %v3000, %v3000
        %v3345 = vpack.c.bf16 %v3002, %v3002
        %v3346 = vpack.c.bf16 %v3005, %v3005
        %v3347 = vpack.c.bf16 %v3007, %v3007
        %v3348 = vpack.c.bf16 %v3010, %v3010
        %v3349 = vpack.c.bf16 %v3012, %v3012
        %v3350 = vpack.c.bf16 %v3015, %v3015
        %v3351 = vpack.c.bf16 %v3017, %v3017
        %v3352 = vpack.c.bf16 %v3020, %v3020
        %v3353 = vpack.c.bf16 %v3022, %v3022
        %v3354 = vpack.c.bf16 %v3025, %v3025
        %v3355 = vpack.c.bf16 %v3027, %v3027
        %v3356 = vpack.c.bf16 %v3030, %v3030
        %v3357 = vpack.c.bf16 %v3032, %v3032
        %v3358 = vpack.c.bf16 %v3035, %v3035
        %v3359 = vpack.c.bf16 %v3037, %v3037
        %v3360 = vpack.c.bf16 %v3040, %v3040
        %v3361 = vpack.c.bf16 %v3042, %v3042
        %v3362 = vpack.c.bf16 %v3045, %v3045
        %v3363 = vpack.c.bf16 %v3047, %v3047
        %v3364 = vpack.c.bf16 %v3050, %v3050
        %v3365 = vpack.c.bf16 %v3052, %v3052
        %v3366 = vpack.c.bf16 %v3055, %v3055
        %v3367 = vpack.c.bf16 %v3057, %v3057
        %v3368 = vpack.c.bf16 %v3060, %v3060
        %v3369 = vpack.c.bf16 %v3062, %v3062
        %v3370 = vpack.c.bf16 %v3065, %v3065
        %v3371 = vpack.c.bf16 %v3067, %v3067
        %v3372 = vpack.c.bf16 %v3070, %v3070
        %v3373 = vpack.c.bf16 %v3072, %v3072
        %v3374 = vpack.c.bf16 %v3075, %v3075
        %v3375 = vpack.c.bf16 %v3077, %v3077
        %v3376 = vpack.c.bf16 %v3080, %v3080
        %v3377 = vpack.c.bf16 %v3082, %v3082
        %v3378 = vpack.c.bf16 %v3085, %v3085
        %v3379 = vpack.c.bf16 %v3087, %v3087
        %v3380 = vpack.c.bf16 %v3090, %v3090
        %v3381 = vpack.c.bf16 %v3092, %v3092
        %v3382 = vpack.c.bf16 %v3095, %v3095
        %v3383 = vpack.c.bf16 %v3097, %v3097
        %v3384 = vpack.c.bf16 %v3100, %v3100
        %v3385 = vpack.c.bf16 %v3102, %v3102
        %v3386 = vpack.c.bf16 %v3105, %v3105
        %v3387 = vpack.c.bf16 %v3107, %v3107
        %v3388 = vpack.c.bf16 %v3110, %v3110
        %v3389 = vpack.c.bf16 %v3112, %v3112
        %v3390 = vpack.c.bf16 %v3115, %v3115
        %v3391 = vpack.c.bf16 %v3117, %v3117
        %v3392 = vpack.c.bf16 %v3120, %v3120
        %v3393 = vpack.c.bf16 %v3122, %v3122
        %v3394 = vpack.c.bf16 %v3125, %v3125
        %v3395 = vpack.c.bf16 %v3127, %v3127
        %v3396 = vpack.c.bf16 %v3130, %v3130
        %v3397 = vpack.c.bf16 %v3132, %v3132
        %v3398 = vpack.c.bf16 %v3135, %v3135
        %v3399 = vpack.c.bf16 %v3137, %v3137
        %v3400 = vpack.c.bf16 %v3140, %v3140
        %v3401 = vpack.c.bf16 %v3142, %v3142
        %v3402 = vpack.c.bf16 %v3145, %v3145
        %v3403 = vpack.c.bf16 %v3147, %v3147
        %v3404 = vpack.c.bf16 %v3150, %v3150
        %v3405 = vpack.c.bf16 %v3152, %v3152
        %v3406 = vpack.c.bf16 %v3155, %v3155
        %v3407 = vpack.c.bf16 %v3157, %v3157
        %v3408 = vpack.c.bf16 %v3160, %v3160
        %v3409 = vpack.c.bf16 %v3162, %v3162
        %v3410 = vpack.c.bf16 %v3165, %v3165
        %v3411 = vpack.c.bf16 %v3167, %v3167
        %v3412 = vpack.c.bf16 %v3170, %v3170
        %v3413 = vpack.c.bf16 %v3172, %v3172
        %v3414 = vpack.c.bf16 %v3175, %v3175
        %v3415 = vpack.c.bf16 %v3177, %v3177
        %v3416 = vpack.c.bf16 %v3180, %v3180
        %v3417 = vpack.c.bf16 %v3182, %v3182
        %v3418 = vpack.c.bf16 %v3185, %v3185
        %v3419 = vpack.c.bf16 %v3187, %v3187
        %v3420 = vpack.c.bf16 %v3190, %v3190
        %v3421 = vpack.c.bf16 %v3192, %v3192
        %v3422 = vpack.c.bf16 %v3195, %v3195
        %v3423 = vpack.c.bf16 %v3197, %v3197
        %v3424 = vpack.c.bf16 %v3200, %v3200
        %v3425 = vpack.c.bf16 %v3202, %v3202
        %v3426 = vpack.c.bf16 %v3205, %v3205
        %v3427 = vpack.c.bf16 %v3207, %v3207
        %v3428 = vpack.c.bf16 %v3210, %v3210
        %v3429 = vpack.c.bf16 %v3212, %v3212
        %v3430 = vpack.c.bf16 %v3215, %v3215
        %v3431 = vpack.c.bf16 %v3217, %v3217
        %v3432 = vpack.c.bf16 %v3220, %v3220
        %v3433 = vpack.c.bf16 %v3222, %v3222
        %v3434 = vpack.c.bf16 %v3225, %v3225
        %v3435 = vpack.c.bf16 %v3227, %v3227
        %v3436 = vpack.c.bf16 %v3230, %v3230
        %v3437 = vpack.c.bf16 %v3232, %v3232
        %v3438 = vpack.c.bf16 %v3235, %v3235
        %v3439 = vpack.c.bf16 %v3237, %v3237
        %v3440 = vpack.c.bf16 %v3240, %v3240
        %v3441 = vpack.c.bf16 %v3242, %v3242
        %v3442 = vpack.c.bf16 %v3245, %v3245
        %v3443 = vpack.c.bf16 %v3247, %v3247
        %v3444 = vpack.c.bf16 %v3250, %v3250
        %v3445 = vpack.c.bf16 %v3252, %v3252
        %v3446 = vpack.c.bf16 %v3255, %v3255
        %v3447 = vpack.c.bf16 %v3257, %v3257
        %v3448 = vpack.c.bf16 %v3260, %v3260
        %v3449 = vpack.c.bf16 %v3262, %v3262
        %v3450 = vpack.c.bf16 %v3265, %v3265
        %v3451 = vpack.c.bf16 %v3267, %v3267
        %v3452 = vpack.c.bf16 %v3270, %v3270
        %v3453 = vpack.c.bf16 %v3272, %v3272
        %v3454 = vpack.c.bf16 %v3275, %v3275
        %v3455 = vpack.c.bf16 %v3277, %v3277
        %v3456 = vpack.c.bf16 %v3280, %v3280
        %v3457 = vpack.c.bf16 %v3282, %v3282
        %v3458 = vpack.c.bf16 %v3285, %v3285
        %v3459 = vpack.c.bf16 %v3287, %v3287
        %v3460 = vpack.c.bf16 %v3290, %v3290
        %v3461 = vpack.c.bf16 %v3292, %v3292
        %v3462 = vpack.c.bf16 %v3295, %v3295
        %v3463 = vpack.c.bf16 %v3297, %v3297
        %v3464 = vpack.c.bf16 %v3300, %v3300
        %v3465 = vpack.c.bf16 %v3302, %v3302
        %v3466 = vpack.c.bf16 %v3305, %v3305
        %v3467 = vpack.c.bf16 %v3307, %v3307
        %v3468 = vpack.c.bf16 %v3310, %v3310
        %v3469 = vpack.c.bf16 %v3312, %v3312
        %v3470 = vpack.c.bf16 %v3315, %v3315
        %v3471 = vpack.c.bf16 %v3317, %v3317
        %v3472 = vpack.c.bf16 %v3320, %v3320
        %v3473 = vpack.c.bf16 %v3322, %v3322
        %v3474 = vpack.c.bf16 %v3325, %v3325
        %v3475 = vpack.c.bf16 %v3327, %v3327
        %v3476 = vpack.c.bf16 %v3330, %v3330
        %v3477 = vpack.c.bf16 %v3332, %v3332
        %v3478 = vld [vmem:[%s1] sm:$0xff]
        %v3479 = vld [vmem:[%s1 + $0x8] sm:$0xff]
        %v3480 = vld [vmem:[%s1 + $0x10] sm:$0xff]
        %v3481 = vld [vmem:[%s1 + $0x18] sm:$0xff]
        %v3482 = vld [vmem:[%s1 + $0x20] sm:$0xff]
        %v3483 = vld [vmem:[%s1 + $0x28] sm:$0xff]
        %v3484 = vld [vmem:[%s1 + $0x30] sm:$0xff]
        %v3485 = vld [vmem:[%s1 + $0x38] sm:$0xff]
        %v3534 = vunpack.c.l.b16 %v3334
        %v3535 = vunpack.c.l.b16 %v3335
        %v3536 = vunpack.c.l.b16 %v3336
        %v3537 = vunpack.c.l.b16 %v3337
        %v3538 = vunpack.c.l.b16 %v3338
        %v3539 = vunpack.c.l.b16 %v3339
        %v3540 = vunpack.c.l.b16 %v3340
        %v3541 = vunpack.c.l.b16 %v3341
        %v3542 = vunpack.c.l.b16 %v3342
        %v3543 = vunpack.c.l.b16 %v3343
        %v3544 = vunpack.c.l.b16 %v3344
        %v3545 = vunpack.c.l.b16 %v3345
        %v3546 = vunpack.c.l.b16 %v3346
        %v3547 = vunpack.c.l.b16 %v3347
        %v3548 = vunpack.c.l.b16 %v3348
        %v3549 = vunpack.c.l.b16 %v3349
        %v3550 = vunpack.c.l.b16 %v3350
        %v3551 = vunpack.c.l.b16 %v3351
        %v3552 = vunpack.c.l.b16 %v3352
        %v3553 = vunpack.c.l.b16 %v3353
        %v3554 = vunpack.c.l.b16 %v3354
        %v3555 = vunpack.c.l.b16 %v3355
        %v3556 = vunpack.c.l.b16 %v3356
        %v3557 = vunpack.c.l.b16 %v3357
        %v3558 = vunpack.c.l.b16 %v3358
        %v3559 = vunpack.c.l.b16 %v3359
        %v3560 = vunpack.c.l.b16 %v3360
        %v3561 = vunpack.c.l.b16 %v3361
        %v3562 = vunpack.c.l.b16 %v3362
        %v3563 = vunpack.c.l.b16 %v3363
        %v3564 = vunpack.c.l.b16 %v3364
        %v3565 = vunpack.c.l.b16 %v3365
        %v3566 = vunpack.c.l.b16 %v3366
        %v3567 = vunpack.c.l.b16 %v3367
        %v3568 = vunpack.c.l.b16 %v3368
        %v3569 = vunpack.c.l.b16 %v3369
        %v3570 = vunpack.c.l.b16 %v3370
        %v3571 = vunpack.c.l.b16 %v3371
        %v3572 = vunpack.c.l.b16 %v3372
        %v3573 = vunpack.c.l.b16 %v3373
        %v3574 = vunpack.c.l.b16 %v3374
        %v3575 = vunpack.c.l.b16 %v3375
        %v3576 = vunpack.c.l.b16 %v3376
        %v3577 = vunpack.c.l.b16 %v3377
        %v3578 = vunpack.c.l.b16 %v3378
        %v3579 = vunpack.c.l.b16 %v3379
        %v3580 = vunpack.c.l.b16 %v3380
        %v3581 = vunpack.c.l.b16 %v3381
        %v3582 = vpack.c.b16 %v3535, %v3534
        %v3583 = vpack.c.b16 %v3537, %v3536
        %v3584 = vpack.c.b16 %v3539, %v3538
        %v3585 = vpack.c.b16 %v3541, %v3540
        %v3586 = vpack.c.b16 %v3543, %v3542
        %v3587 = vpack.c.b16 %v3545, %v3544
        %v3588 = vpack.c.b16 %v3547, %v3546
        %v3589 = vpack.c.b16 %v3549, %v3548
        %v3590 = vpack.c.b16 %v3551, %v3550
        %v3591 = vpack.c.b16 %v3553, %v3552
        %v3592 = vpack.c.b16 %v3555, %v3554
        %v3593 = vpack.c.b16 %v3557, %v3556
        %v3594 = vpack.c.b16 %v3559, %v3558
        %v3595 = vpack.c.b16 %v3561, %v3560
        %v3596 = vpack.c.b16 %v3563, %v3562
        %v3597 = vpack.c.b16 %v3565, %v3564
        %v3598 = vpack.c.b16 %v3567, %v3566
        %v3599 = vpack.c.b16 %v3569, %v3568
        %v3600 = vpack.c.b16 %v3571, %v3570
        %v3601 = vpack.c.b16 %v3573, %v3572
        %v3602 = vpack.c.b16 %v3575, %v3574
        %v3603 = vpack.c.b16 %v3577, %v3576
        %v3604 = vpack.c.b16 %v3579, %v3578
        %v3605 = vpack.c.b16 %v3581, %v3580
        %3630 = vxpose.xlu0.c.b16.start [1/8] %v3582, 128
        %3631 = vxpose.xlu0.c.b16.cont [2/8] %v3583, 128
        %3632 = vxpose.xlu0.c.b16.cont [3/8] %v3584, 128
        %3633 = vxpose.xlu0.c.b16.cont [4/8] 0, 128
        %3634 = vxpose.xlu0.c.b16.cont [5/8] 0, 128
        %3635 = vxpose.xlu0.c.b16.cont [6/8] 0, 128
        %3636 = vxpose.xlu0.c.b16.cont [7/8] 0, 128
        %3637 = vxpose.xlu0.c.b16.end [8/8] 0, 128
        %v3638 = vpop.trf.xlu0
        %v3639 = vpop.trf.xlu0
        %v3640 = vpop.trf.xlu0
        %v3641 = vpop.trf.xlu0
        %v3642 = vpop.trf.xlu0
        %v3643 = vpop.trf.xlu0
        %v3644 = vpop.trf.xlu0
        %v3645 = vpop.trf.xlu0
        %3646 = vxpose.xlu0.c.b16.start [1/8] %v3585, 128
        %3647 = vxpose.xlu0.c.b16.cont [2/8] %v3586, 128
        %3648 = vxpose.xlu0.c.b16.cont [3/8] %v3587, 128
        %3649 = vxpose.xlu0.c.b16.cont [4/8] 0, 128
        %3650 = vxpose.xlu0.c.b16.cont [5/8] 0, 128
        %3651 = vxpose.xlu0.c.b16.cont [6/8] 0, 128
        %3652 = vxpose.xlu0.c.b16.cont [7/8] 0, 128
        %3653 = vxpose.xlu0.c.b16.end [8/8] 0, 128
        %v3654 = vpop.trf.xlu0
        %v3655 = vpop.trf.xlu0
        %v3656 = vpop.trf.xlu0
        %v3657 = vpop.trf.xlu0
        %v3658 = vpop.trf.xlu0
        %v3659 = vpop.trf.xlu0
        %v3660 = vpop.trf.xlu0
        %v3661 = vpop.trf.xlu0
        %3662 = vxpose.xlu0.c.b16.start [1/8] %v3588, 128
        %3663 = vxpose.xlu0.c.b16.cont [2/8] %v3589, 128
        %3664 = vxpose.xlu0.c.b16.cont [3/8] %v3590, 128
        %3665 = vxpose.xlu0.c.b16.cont [4/8] 0, 128
        %3666 = vxpose.xlu0.c.b16.cont [5/8] 0, 128
        %3667 = vxpose.xlu0.c.b16.cont [6/8] 0, 128
        %3668 = vxpose.xlu0.c.b16.cont [7/8] 0, 128
        %3669 = vxpose.xlu0.c.b16.end [8/8] 0, 128
        %v3670 = vpop.trf.xlu0
        %v3671 = vpop.trf.xlu0
        %v3672 = vpop.trf.xlu0
        %v3673 = vpop.trf.xlu0
        %v3674 = vpop.trf.xlu0
        %v3675 = vpop.trf.xlu0
        %v3676 = vpop.trf.xlu0
        %v3677 = vpop.trf.xlu0
        %3678 = vxpose.xlu0.c.b16.start [1/8] %v3591, 128
        %3679 = vxpose.xlu0.c.b16.cont [2/8] %v3592, 128
        %3680 = vxpose.xlu0.c.b16.cont [3/8] %v3593, 128
        %3681 = vxpose.xlu0.c.b16.cont [4/8] 0, 128
        %3682 = vxpose.xlu0.c.b16.cont [5/8] 0, 128
        %3683 = vxpose.xlu0.c.b16.cont [6/8] 0, 128
        %3684 = vxpose.xlu0.c.b16.cont [7/8] 0, 128
        %3685 = vxpose.xlu0.c.b16.end [8/8] 0, 128
        %v3686 = vpop.trf.xlu0
        %v3687 = vpop.trf.xlu0
        %v3688 = vpop.trf.xlu0
        %v3689 = vpop.trf.xlu0
        %v3690 = vpop.trf.xlu0
        %v3691 = vpop.trf.xlu0
        %v3692 = vpop.trf.xlu0
        %v3693 = vpop.trf.xlu0
        %3694 = vxpose.xlu0.c.b16.start [1/8] %v3594, 128
        %3695 = vxpose.xlu0.c.b16.cont [2/8] %v3595, 128
        %3696 = vxpose.xlu0.c.b16.cont [3/8] %v3596, 128
        %3697 = vxpose.xlu0.c.b16.cont [4/8] 0, 128
        %3698 = vxpose.xlu0.c.b16.cont [5/8] 0, 128
        %3699 = vxpose.xlu0.c.b16.cont [6/8] 0, 128
        %3700 = vxpose.xlu0.c.b16.cont [7/8] 0, 128
        %3701 = vxpose.xlu0.c.b16.end [8/8] 0, 128
        %v3702 = vpop.trf.xlu0
        %v3703 = vpop.trf.xlu0
        %v3704 = vpop.trf.xlu0
        %v3705 = vpop.trf.xlu0
        %v3706 = vpop.trf.xlu0
        %v3707 = vpop.trf.xlu0
        %v3708 = vpop.trf.xlu0
        %v3709 = vpop.trf.xlu0
        %3710 = vxpose.xlu0.c.b16.start [1/8] %v3597, 128
        %3711 = vxpose.xlu0.c.b16.cont [2/8] %v3598, 128
        %3712 = vxpose.xlu0.c.b16.cont [3/8] %v3599, 128
        %3713 = vxpose.xlu0.c.b16.cont [4/8] 0, 128
        %3714 = vxpose.xlu0.c.b16.cont [5/8] 0, 128
        %3715 = vxpose.xlu0.c.b16.cont [6/8] 0, 128
        %3716 = vxpose.xlu0.c.b16.cont [7/8] 0, 128
        %3717 = vxpose.xlu0.c.b16.end [8/8] 0, 128
        %v3718 = vpop.trf.xlu0
        %v3719 = vpop.trf.xlu0
        %v3720 = vpop.trf.xlu0
        %v3721 = vpop.trf.xlu0
        %v3722 = vpop.trf.xlu0
        %v3723 = vpop.trf.xlu0
        %v3724 = vpop.trf.xlu0
        %v3725 = vpop.trf.xlu0
        %3726 = vxpose.xlu0.c.b16.start [1/8] %v3600, 128
        %3727 = vxpose.xlu0.c.b16.cont [2/8] %v3601, 128
        %3728 = vxpose.xlu0.c.b16.cont [3/8] %v3602, 128
        %3729 = vxpose.xlu0.c.b16.cont [4/8] 0, 128
        %3730 = vxpose.xlu0.c.b16.cont [5/8] 0, 128
        %3731 = vxpose.xlu0.c.b16.cont [6/8] 0, 128
        %3732 = vxpose.xlu0.c.b16.cont [7/8] 0, 128
        %3733 = vxpose.xlu0.c.b16.end [8/8] 0, 128
        %v3734 = vpop.trf.xlu0
        %v3735 = vpop.trf.xlu0
        %v3736 = vpop.trf.xlu0
        %v3737 = vpop.trf.xlu0
        %v3738 = vpop.trf.xlu0
        %v3739 = vpop.trf.xlu0
        %v3740 = vpop.trf.xlu0
        %v3741 = vpop.trf.xlu0
        %3742 = vxpose.xlu0.c.b16.start [1/8] %v3603, 128
        %3743 = vxpose.xlu0.c.b16.cont [2/8] %v3604, 128
        %3744 = vxpose.xlu0.c.b16.cont [3/8] %v3605, 128
        %3745 = vxpose.xlu0.c.b16.cont [4/8] 0, 128
        %3746 = vxpose.xlu0.c.b16.cont [5/8] 0, 128
        %3747 = vxpose.xlu0.c.b16.cont [6/8] 0, 128
        %3748 = vxpose.xlu0.c.b16.cont [7/8] 0, 128
        %3749 = vxpose.xlu0.c.b16.end [8/8] 0, 128
        %v3750 = vpop.trf.xlu0
        %v3751 = vpop.trf.xlu0
        %v3752 = vpop.trf.xlu0
        %v3753 = vpop.trf.xlu0
        %v3754 = vpop.trf.xlu0
        %v3755 = vpop.trf.xlu0
        %v3756 = vpop.trf.xlu0
        %v3757 = vpop.trf.xlu0
        %v3764 = vunpack.c.l.b16 %v3382
        %v3765 = vunpack.c.l.b16 %v3383
        %v3766 = vunpack.c.l.b16 %v3384
        %v3767 = vunpack.c.l.b16 %v3385
        %v3768 = vunpack.c.l.b16 %v3386
        %v3769 = vunpack.c.l.b16 %v3387
        %v3770 = vpack.c.b16 %v3765, %v3764
        %v3771 = vpack.c.b16 %v3767, %v3766
        %v3772 = vpack.c.b16 %v3769, %v3768
        %vm3776 = vcmask 392192
        %v3778 = vsel %vm3776, %v3638, 0
        %v3781 = vsel %vm3776, %v3639, 0
        %v3784 = vsel %vm3776, %v3640, 0
        %v3787 = vsel %vm3776, %v3641, 0
        %3789 = vmatpush.bf16.msra.mxu0 0
        %3790 = vmatpush.bf16.msra.mxu0 0
        %3791 = vmatpush.bf16.msra.mxu0 0
        %3792 = vmatpush.bf16.msra.mxu0 0
        %3793 = vmatpush.bf16.msra.mxu0 0
        %3794 = vmatpush.bf16.msra.mxu0 %v3772
        %3795 = vmatpush.bf16.msra.mxu0 %v3771
        %3796 = vmatpush.bf16.msra.mxu0 %v3770
        %3797 = vmatmul.bf16.gmra.mxu0 %v3778
        %v3798 = vpop.f32.mrf.mxu0
        %v3799 = vadd.f32 %v3478, %v3798
        %v3800 = vpop.f32.mrf.mxu0
        %v3801 = vadd.f32 %v3479, %v3800
        %3802 = vmatmul.bf16.gmra.mxu0 %v3781
        %v3803 = vpop.f32.mrf.mxu0
        %v3804 = vadd.f32 %v3480, %v3803
        %v3805 = vpop.f32.mrf.mxu0
        %v3806 = vadd.f32 %v3481, %v3805
        %3807 = vmatmul.bf16.gmra.mxu0 %v3784
        %v3808 = vpop.f32.mrf.mxu0
        %v3809 = vadd.f32 %v3482, %v3808
        %v3810 = vpop.f32.mrf.mxu0
        %v3811 = vadd.f32 %v3483, %v3810
        %3812 = vmatmul.bf16.gmra.mxu0 %v3787
        %v3813 = vpop.f32.mrf.mxu0
        %v3814 = vadd.f32 %v3484, %v3813
        %v3815 = vpop.f32.mrf.mxu0
        %v3816 = vadd.f32 %v3485, %v3815
        %3817 = vdwg.mxu0
        %v3824 = vunpack.c.l.b16 %v3388
        %v3825 = vunpack.c.l.b16 %v3389
        %v3826 = vunpack.c.l.b16 %v3390
        %v3827 = vunpack.c.l.b16 %v3391
        %v3828 = vunpack.c.l.b16 %v3392
        %v3829 = vunpack.c.l.b16 %v3393
        %v3830 = vpack.c.b16 %v3825, %v3824
        %v3831 = vpack.c.b16 %v3827, %v3826
        %v3832 = vpack.c.b16 %v3829, %v3828
        %v3837 = vsel %vm3776, %v3654, 0
        %v3840 = vsel %vm3776, %v3655, 0
        %v3843 = vsel %vm3776, %v3656, 0
        %v3846 = vsel %vm3776, %v3657, 0
        %3848 = vmatpush.bf16.msra.mxu0 0
        %3849 = vmatpush.bf16.msra.mxu0 0
        %3850 = vmatpush.bf16.msra.mxu0 0
        %3851 = vmatpush.bf16.msra.mxu0 0
        %3852 = vmatpush.bf16.msra.mxu0 0
        %3853 = vmatpush.bf16.msra.mxu0 %v3832
        %3854 = vmatpush.bf16.msra.mxu0 %v3831
        %3855 = vmatpush.bf16.msra.mxu0 %v3830
        %3856 = vmatmul.bf16.gmra.mxu0 %v3837
        %v3857 = vpop.f32.mrf.mxu0
        %v3858 = vadd.f32 %v3478, %v3857
        %v3859 = vpop.f32.mrf.mxu0
        %v3860 = vadd.f32 %v3479, %v3859
        %3861 = vmatmul.bf16.gmra.mxu0 %v3840
        %v3862 = vpop.f32.mrf.mxu0
        %v3863 = vadd.f32 %v3480, %v3862
        %v3864 = vpop.f32.mrf.mxu0
        %v3865 = vadd.f32 %v3481, %v3864
        %3866 = vmatmul.bf16.gmra.mxu0 %v3843
        %v3867 = vpop.f32.mrf.mxu0
        %v3868 = vadd.f32 %v3482, %v3867
        %v3869 = vpop.f32.mrf.mxu0
        %v3870 = vadd.f32 %v3483, %v3869
        %3871 = vmatmul.bf16.gmra.mxu0 %v3846
        %v3872 = vpop.f32.mrf.mxu0
        %v3873 = vadd.f32 %v3484, %v3872
        %v3874 = vpop.f32.mrf.mxu0
        %v3875 = vadd.f32 %v3485, %v3874
        %3876 = vdwg.mxu0
        %v3883 = vunpack.c.l.b16 %v3394
        %v3884 = vunpack.c.l.b16 %v3395
        %v3885 = vunpack.c.l.b16 %v3396
        %v3886 = vunpack.c.l.b16 %v3397
        %v3887 = vunpack.c.l.b16 %v3398
        %v3888 = vunpack.c.l.b16 %v3399
        %v3889 = vpack.c.b16 %v3884, %v3883
        %v3890 = vpack.c.b16 %v3886, %v3885
        %v3891 = vpack.c.b16 %v3888, %v3887
        %v3896 = vsel %vm3776, %v3670, 0
        %v3899 = vsel %vm3776, %v3671, 0
        %v3902 = vsel %vm3776, %v3672, 0
        %v3905 = vsel %vm3776, %v3673, 0
        %3907 = vmatpush.bf16.msra.mxu0 0
        %3908 = vmatpush.bf16.msra.mxu0 0
        %3909 = vmatpush.bf16.msra.mxu0 0
        %3910 = vmatpush.bf16.msra.mxu0 0
        %3911 = vmatpush.bf16.msra.mxu0 0
        %3912 = vmatpush.bf16.msra.mxu0 %v3891
        %3913 = vmatpush.bf16.msra.mxu0 %v3890
        %3914 = vmatpush.bf16.msra.mxu0 %v3889
        %3915 = vmatmul.bf16.gmra.mxu0 %v3896
        %v3916 = vpop.f32.mrf.mxu0
        %v3917 = vadd.f32 %v3478, %v3916
        %v3918 = vpop.f32.mrf.mxu0
        %v3919 = vadd.f32 %v3479, %v3918
        %3920 = vmatmul.bf16.gmra.mxu0 %v3899
        %v3921 = vpop.f32.mrf.mxu0
        %v3922 = vadd.f32 %v3480, %v3921
        %v3923 = vpop.f32.mrf.mxu0
        %v3924 = vadd.f32 %v3481, %v3923
        %3925 = vmatmul.bf16.gmra.mxu0 %v3902
        %v3926 = vpop.f32.mrf.mxu0
        %v3927 = vadd.f32 %v3482, %v3926
        %v3928 = vpop.f32.mrf.mxu0
        %v3929 = vadd.f32 %v3483, %v3928
        %3930 = vmatmul.bf16.gmra.mxu0 %v3905
        %v3931 = vpop.f32.mrf.mxu0
        %v3932 = vadd.f32 %v3484, %v3931
        %v3933 = vpop.f32.mrf.mxu0
        %v3934 = vadd.f32 %v3485, %v3933
        %3935 = vdwg.mxu0
        %v3942 = vunpack.c.l.b16 %v3400
        %v3943 = vunpack.c.l.b16 %v3401
        %v3944 = vunpack.c.l.b16 %v3402
        %v3945 = vunpack.c.l.b16 %v3403
        %v3946 = vunpack.c.l.b16 %v3404
        %v3947 = vunpack.c.l.b16 %v3405
        %v3948 = vpack.c.b16 %v3943, %v3942
        %v3949 = vpack.c.b16 %v3945, %v3944
        %v3950 = vpack.c.b16 %v3947, %v3946
        %v3955 = vsel %vm3776, %v3686, 0
        %v3958 = vsel %vm3776, %v3687, 0
        %v3961 = vsel %vm3776, %v3688, 0
        %v3964 = vsel %vm3776, %v3689, 0
        %3966 = vmatpush.bf16.msra.mxu0 0
        %3967 = vmatpush.bf16.msra.mxu0 0
        %3968 = vmatpush.bf16.msra.mxu0 0
        %3969 = vmatpush.bf16.msra.mxu0 0
        %3970 = vmatpush.bf16.msra.mxu0 0
        %3971 = vmatpush.bf16.msra.mxu0 %v3950
        %3972 = vmatpush.bf16.msra.mxu0 %v3949
        %3973 = vmatpush.bf16.msra.mxu0 %v3948
        %3974 = vmatmul.bf16.gmra.mxu0 %v3955
        %v3975 = vpop.f32.mrf.mxu0
        %v3976 = vadd.f32 %v3478, %v3975
        %v3977 = vpop.f32.mrf.mxu0
        %v3978 = vadd.f32 %v3479, %v3977
        %3979 = vmatmul.bf16.gmra.mxu0 %v3958
        %v3980 = vpop.f32.mrf.mxu0
        %v3981 = vadd.f32 %v3480, %v3980
        %v3982 = vpop.f32.mrf.mxu0
        %v3983 = vadd.f32 %v3481, %v3982
        %3984 = vmatmul.bf16.gmra.mxu0 %v3961
        %v3985 = vpop.f32.mrf.mxu0
        %v3986 = vadd.f32 %v3482, %v3985
        %v3987 = vpop.f32.mrf.mxu0
        %v3988 = vadd.f32 %v3483, %v3987
        %3989 = vmatmul.bf16.gmra.mxu0 %v3964
        %v3990 = vpop.f32.mrf.mxu0
        %v3991 = vadd.f32 %v3484, %v3990
        %v3992 = vpop.f32.mrf.mxu0
        %v3993 = vadd.f32 %v3485, %v3992
        %3994 = vdwg.mxu0
        %v4001 = vunpack.c.l.b16 %v3406
        %v4002 = vunpack.c.l.b16 %v3407
        %v4003 = vunpack.c.l.b16 %v3408
        %v4004 = vunpack.c.l.b16 %v3409
        %v4005 = vunpack.c.l.b16 %v3410
        %v4006 = vunpack.c.l.b16 %v3411
        %v4007 = vpack.c.b16 %v4002, %v4001
        %v4008 = vpack.c.b16 %v4004, %v4003
        %v4009 = vpack.c.b16 %v4006, %v4005
        %v4014 = vsel %vm3776, %v3702, 0
        %v4017 = vsel %vm3776, %v3703, 0
        %v4020 = vsel %vm3776, %v3704, 0
        %v4023 = vsel %vm3776, %v3705, 0
        %4025 = vmatpush.bf16.msra.mxu0 0
        %4026 = vmatpush.bf16.msra.mxu0 0
        %4027 = vmatpush.bf16.msra.mxu0 0
        %4028 = vmatpush.bf16.msra.mxu0 0
        %4029 = vmatpush.bf16.msra.mxu0 0
        %4030 = vmatpush.bf16.msra.mxu0 %v4009
        %4031 = vmatpush.bf16.msra.mxu0 %v4008
        %4032 = vmatpush.bf16.msra.mxu0 %v4007
        %4033 = vmatmul.bf16.gmra.mxu0 %v4014
        %v4034 = vpop.f32.mrf.mxu0
        %v4035 = vadd.f32 %v3478, %v4034
        %v4036 = vpop.f32.mrf.mxu0
        %v4037 = vadd.f32 %v3479, %v4036
        %4038 = vmatmul.bf16.gmra.mxu0 %v4017
        %v4039 = vpop.f32.mrf.mxu0
        %v4040 = vadd.f32 %v3480, %v4039
        %v4041 = vpop.f32.mrf.mxu0
        %v4042 = vadd.f32 %v3481, %v4041
        %4043 = vmatmul.bf16.gmra.mxu0 %v4020
        %v4044 = vpop.f32.mrf.mxu0
        %v4045 = vadd.f32 %v3482, %v4044
        %v4046 = vpop.f32.mrf.mxu0
        %v4047 = vadd.f32 %v3483, %v4046
        %4048 = vmatmul.bf16.gmra.mxu0 %v4023
        %v4049 = vpop.f32.mrf.mxu0
        %v4050 = vadd.f32 %v3484, %v4049
        %v4051 = vpop.f32.mrf.mxu0
        %v4052 = vadd.f32 %v3485, %v4051
        %4053 = vdwg.mxu0
        %v4060 = vunpack.c.l.b16 %v3412
        %v4061 = vunpack.c.l.b16 %v3413
        %v4062 = vunpack.c.l.b16 %v3414
        %v4063 = vunpack.c.l.b16 %v3415
        %v4064 = vunpack.c.l.b16 %v3416
        %v4065 = vunpack.c.l.b16 %v3417
        %v4066 = vpack.c.b16 %v4061, %v4060
        %v4067 = vpack.c.b16 %v4063, %v4062
        %v4068 = vpack.c.b16 %v4065, %v4064
        %v4073 = vsel %vm3776, %v3718, 0
        %v4076 = vsel %vm3776, %v3719, 0
        %v4079 = vsel %vm3776, %v3720, 0
        %v4082 = vsel %vm3776, %v3721, 0
        %4084 = vmatpush.bf16.msra.mxu0 0
        %4085 = vmatpush.bf16.msra.mxu0 0
        %4086 = vmatpush.bf16.msra.mxu0 0
        %4087 = vmatpush.bf16.msra.mxu0 0
        %4088 = vmatpush.bf16.msra.mxu0 0
        %4089 = vmatpush.bf16.msra.mxu0 %v4068
        %4090 = vmatpush.bf16.msra.mxu0 %v4067
        %4091 = vmatpush.bf16.msra.mxu0 %v4066
        %4092 = vmatmul.bf16.gmra.mxu0 %v4073
        %v4093 = vpop.f32.mrf.mxu0
        %v4094 = vadd.f32 %v3478, %v4093
        %v4095 = vpop.f32.mrf.mxu0
        %v4096 = vadd.f32 %v3479, %v4095
        %4097 = vmatmul.bf16.gmra.mxu0 %v4076
        %v4098 = vpop.f32.mrf.mxu0
        %v4099 = vadd.f32 %v3480, %v4098
        %v4100 = vpop.f32.mrf.mxu0
        %v4101 = vadd.f32 %v3481, %v4100
        %4102 = vmatmul.bf16.gmra.mxu0 %v4079
        %v4103 = vpop.f32.mrf.mxu0
        %v4104 = vadd.f32 %v3482, %v4103
        %v4105 = vpop.f32.mrf.mxu0
        %v4106 = vadd.f32 %v3483, %v4105
        %4107 = vmatmul.bf16.gmra.mxu0 %v4082
        %v4108 = vpop.f32.mrf.mxu0
        %v4109 = vadd.f32 %v3484, %v4108
        %v4110 = vpop.f32.mrf.mxu0
        %v4111 = vadd.f32 %v3485, %v4110
        %4112 = vdwg.mxu0
        %v4119 = vunpack.c.l.b16 %v3418
        %v4120 = vunpack.c.l.b16 %v3419
        %v4121 = vunpack.c.l.b16 %v3420
        %v4122 = vunpack.c.l.b16 %v3421
        %v4123 = vunpack.c.l.b16 %v3422
        %v4124 = vunpack.c.l.b16 %v3423
        %v4125 = vpack.c.b16 %v4120, %v4119
        %v4126 = vpack.c.b16 %v4122, %v4121
        %v4127 = vpack.c.b16 %v4124, %v4123
        %v4132 = vsel %vm3776, %v3734, 0
        %v4135 = vsel %vm3776, %v3735, 0
        %v4138 = vsel %vm3776, %v3736, 0
        %v4141 = vsel %vm3776, %v3737, 0
        %4143 = vmatpush.bf16.msra.mxu0 0
        %4144 = vmatpush.bf16.msra.mxu0 0
        %4145 = vmatpush.bf16.msra.mxu0 0
        %4146 = vmatpush.bf16.msra.mxu0 0
        %4147 = vmatpush.bf16.msra.mxu0 0
        %4148 = vmatpush.bf16.msra.mxu0 %v4127
        %4149 = vmatpush.bf16.msra.mxu0 %v4126
        %4150 = vmatpush.bf16.msra.mxu0 %v4125
        %4151 = vmatmul.bf16.gmra.mxu0 %v4132
        %v4152 = vpop.f32.mrf.mxu0
        %v4153 = vadd.f32 %v3478, %v4152
        %v4154 = vpop.f32.mrf.mxu0
        %v4155 = vadd.f32 %v3479, %v4154
        %4156 = vmatmul.bf16.gmra.mxu0 %v4135
        %v4157 = vpop.f32.mrf.mxu0
        %v4158 = vadd.f32 %v3480, %v4157
        %v4159 = vpop.f32.mrf.mxu0
        %v4160 = vadd.f32 %v3481, %v4159
        %4161 = vmatmul.bf16.gmra.mxu0 %v4138
        %v4162 = vpop.f32.mrf.mxu0
        %v4163 = vadd.f32 %v3482, %v4162
        %v4164 = vpop.f32.mrf.mxu0
        %v4165 = vadd.f32 %v3483, %v4164
        %4166 = vmatmul.bf16.gmra.mxu0 %v4141
        %v4167 = vpop.f32.mrf.mxu0
        %v4168 = vadd.f32 %v3484, %v4167
        %v4169 = vpop.f32.mrf.mxu0
        %v4170 = vadd.f32 %v3485, %v4169
        %4171 = vdwg.mxu0
        %v4178 = vunpack.c.l.b16 %v3424
        %v4179 = vunpack.c.l.b16 %v3425
        %v4180 = vunpack.c.l.b16 %v3426
        %v4181 = vunpack.c.l.b16 %v3427
        %v4182 = vunpack.c.l.b16 %v3428
        %v4183 = vunpack.c.l.b16 %v3429
        %v4184 = vpack.c.b16 %v4179, %v4178
        %v4185 = vpack.c.b16 %v4181, %v4180
        %v4186 = vpack.c.b16 %v4183, %v4182
        %v4191 = vsel %vm3776, %v3750, 0
        %v4194 = vsel %vm3776, %v3751, 0
        %v4197 = vsel %vm3776, %v3752, 0
        %v4200 = vsel %vm3776, %v3753, 0
        %4202 = vmatpush.bf16.msra.mxu0 0
        %4203 = vmatpush.bf16.msra.mxu0 0
        %4204 = vmatpush.bf16.msra.mxu0 0
        %4205 = vmatpush.bf16.msra.mxu0 0
        %4206 = vmatpush.bf16.msra.mxu0 0
        %4207 = vmatpush.bf16.msra.mxu0 %v4186
        %4208 = vmatpush.bf16.msra.mxu0 %v4185
        %4209 = vmatpush.bf16.msra.mxu0 %v4184
        %4210 = vmatmul.bf16.gmra.mxu0 %v4191
        %v4211 = vpop.f32.mrf.mxu0
        %v4212 = vadd.f32 %v3478, %v4211
        %v4213 = vpop.f32.mrf.mxu0
        %v4214 = vadd.f32 %v3479, %v4213
        %4215 = vmatmul.bf16.gmra.mxu0 %v4194
        %v4216 = vpop.f32.mrf.mxu0
        %v4217 = vadd.f32 %v3480, %v4216
        %v4218 = vpop.f32.mrf.mxu0
        %v4219 = vadd.f32 %v3481, %v4218
        %4220 = vmatmul.bf16.gmra.mxu0 %v4197
        %v4221 = vpop.f32.mrf.mxu0
        %v4222 = vadd.f32 %v3482, %v4221
        %v4223 = vpop.f32.mrf.mxu0
        %v4224 = vadd.f32 %v3483, %v4223
        %4225 = vmatmul.bf16.gmra.mxu0 %v4200
        %v4226 = vpop.f32.mrf.mxu0
        %v4227 = vadd.f32 %v3484, %v4226
        %v4228 = vpop.f32.mrf.mxu0
        %v4229 = vadd.f32 %v3485, %v4228
        %4230 = vdwg.mxu0
        %vm4231 = vcmask 523264
        %v4232 = vsel %vm4231, %v3799, -inf
        %4233 = vmax.xlane.f32.xlu0 %v4232
        %v4234 = vpop.xlane.xlu0 %4233
        %v4235 = vsel %vm4231, %v3801, -inf
        %4236 = vmax.xlane.f32.xlu0 %v4235
        %v4237 = vpop.xlane.xlu0 %4236
        %v4238 = vsel %vm4231, %v3804, -inf
        %4239 = vmax.xlane.f32.xlu0 %v4238
        %v4240 = vpop.xlane.xlu0 %4239
        %v4241 = vsel %vm4231, %v3806, -inf
        %4242 = vmax.xlane.f32.xlu0 %v4241
        %v4243 = vpop.xlane.xlu0 %4242
        %v4244 = vsel %vm4231, %v3809, -inf
        %4245 = vmax.xlane.f32.xlu0 %v4244
        %v4246 = vpop.xlane.xlu0 %4245
        %v4247 = vsel %vm4231, %v3811, -inf
        %4248 = vmax.xlane.f32.xlu0 %v4247
        %v4249 = vpop.xlane.xlu0 %4248
        %v4250 = vsel %vm4231, %v3814, -inf
        %4251 = vmax.xlane.f32.xlu0 %v4250
        %v4252 = vpop.xlane.xlu0 %4251
        %v4253 = vsel %vm4231, %v3816, -inf
        %4254 = vmax.xlane.f32.xlu0 %v4253
        %v4255 = vpop.xlane.xlu0 %4254
        %v4256 = vsel %vm4231, %v3858, -inf
        %4257 = vmax.xlane.f32.xlu0 %v4256
        %v4258 = vpop.xlane.xlu0 %4257
        %v4259 = vsel %vm4231, %v3860, -inf
        %4260 = vmax.xlane.f32.xlu0 %v4259
        %v4261 = vpop.xlane.xlu0 %4260
        %v4262 = vsel %vm4231, %v3863, -inf
        %4263 = vmax.xlane.f32.xlu0 %v4262
        %v4264 = vpop.xlane.xlu0 %4263
        %v4265 = vsel %vm4231, %v3865, -inf
        %4266 = vmax.xlane.f32.xlu0 %v4265
        %v4267 = vpop.xlane.xlu0 %4266
        %v4268 = vsel %vm4231, %v3868, -inf
        %4269 = vmax.xlane.f32.xlu0 %v4268
        %v4270 = vpop.xlane.xlu0 %4269
        %v4271 = vsel %vm4231, %v3870, -inf
        %4272 = vmax.xlane.f32.xlu0 %v4271
        %v4273 = vpop.xlane.xlu0 %4272
        %v4274 = vsel %vm4231, %v3873, -inf
        %4275 = vmax.xlane.f32.xlu0 %v4274
        %v4276 = vpop.xlane.xlu0 %4275
        %v4277 = vsel %vm4231, %v3875, -inf
        %4278 = vmax.xlane.f32.xlu0 %v4277
        %v4279 = vpop.xlane.xlu0 %4278
        %v4280 = vsel %vm4231, %v3917, -inf
        %4281 = vmax.xlane.f32.xlu0 %v4280
        %v4282 = vpop.xlane.xlu0 %4281
        %v4283 = vsel %vm4231, %v3919, -inf
        %4284 = vmax.xlane.f32.xlu0 %v4283
        %v4285 = vpop.xlane.xlu0 %4284
        %v4286 = vsel %vm4231, %v3922, -inf
        %4287 = vmax.xlane.f32.xlu0 %v4286
        %v4288 = vpop.xlane.xlu0 %4287
        %v4289 = vsel %vm4231, %v3924, -inf
        %4290 = vmax.xlane.f32.xlu0 %v4289
        %v4291 = vpop.xlane.xlu0 %4290
        %v4292 = vsel %vm4231, %v3927, -inf
        %4293 = vmax.xlane.f32.xlu0 %v4292
        %v4294 = vpop.xlane.xlu0 %4293
        %v4295 = vsel %vm4231, %v3929, -inf
        %4296 = vmax.xlane.f32.xlu0 %v4295
        %v4297 = vpop.xlane.xlu0 %4296
        %v4298 = vsel %vm4231, %v3932, -inf
        %4299 = vmax.xlane.f32.xlu0 %v4298
        %v4300 = vpop.xlane.xlu0 %4299
        %v4301 = vsel %vm4231, %v3934, -inf
        %4302 = vmax.xlane.f32.xlu0 %v4301
        %v4303 = vpop.xlane.xlu0 %4302
        %v4304 = vsel %vm4231, %v3976, -inf
        %4305 = vmax.xlane.f32.xlu0 %v4304
        %v4306 = vpop.xlane.xlu0 %4305
        %v4307 = vsel %vm4231, %v3978, -inf
        %4308 = vmax.xlane.f32.xlu0 %v4307
        %v4309 = vpop.xlane.xlu0 %4308
        %v4310 = vsel %vm4231, %v3981, -inf
        %4311 = vmax.xlane.f32.xlu0 %v4310
        %v4312 = vpop.xlane.xlu0 %4311
        %v4313 = vsel %vm4231, %v3983, -inf
        %4314 = vmax.xlane.f32.xlu0 %v4313
        %v4315 = vpop.xlane.xlu0 %4314
        %v4316 = vsel %vm4231, %v3986, -inf
        %4317 = vmax.xlane.f32.xlu0 %v4316
        %v4318 = vpop.xlane.xlu0 %4317
        %v4319 = vsel %vm4231, %v3988, -inf
        %4320 = vmax.xlane.f32.xlu0 %v4319
        %v4321 = vpop.xlane.xlu0 %4320
        %v4322 = vsel %vm4231, %v3991, -inf
        %4323 = vmax.xlane.f32.xlu0 %v4322
        %v4324 = vpop.xlane.xlu0 %4323
        %v4325 = vsel %vm4231, %v3993, -inf
        %4326 = vmax.xlane.f32.xlu0 %v4325
        %v4327 = vpop.xlane.xlu0 %4326
        %v4328 = vsel %vm4231, %v4035, -inf
        %4329 = vmax.xlane.f32.xlu0 %v4328
        %v4330 = vpop.xlane.xlu0 %4329
        %v4331 = vsel %vm4231, %v4037, -inf
        %4332 = vmax.xlane.f32.xlu0 %v4331
        %v4333 = vpop.xlane.xlu0 %4332
        %v4334 = vsel %vm4231, %v4040, -inf
        %4335 = vmax.xlane.f32.xlu0 %v4334
        %v4336 = vpop.xlane.xlu0 %4335
        %v4337 = vsel %vm4231, %v4042, -inf
        %4338 = vmax.xlane.f32.xlu0 %v4337
        %v4339 = vpop.xlane.xlu0 %4338
        %v4340 = vsel %vm4231, %v4045, -inf
        %4341 = vmax.xlane.f32.xlu0 %v4340
        %v4342 = vpop.xlane.xlu0 %4341
        %v4343 = vsel %vm4231, %v4047, -inf
        %4344 = vmax.xlane.f32.xlu0 %v4343
        %v4345 = vpop.xlane.xlu0 %4344
        %v4346 = vsel %vm4231, %v4050, -inf
        %4347 = vmax.xlane.f32.xlu0 %v4346
        %v4348 = vpop.xlane.xlu0 %4347
        %v4349 = vsel %vm4231, %v4052, -inf
        %4350 = vmax.xlane.f32.xlu0 %v4349
        %v4351 = vpop.xlane.xlu0 %4350
        %v4352 = vsel %vm4231, %v4094, -inf
        %4353 = vmax.xlane.f32.xlu0 %v4352
        %v4354 = vpop.xlane.xlu0 %4353
        %v4355 = vsel %vm4231, %v4096, -inf
        %4356 = vmax.xlane.f32.xlu0 %v4355
        %v4357 = vpop.xlane.xlu0 %4356
        %v4358 = vsel %vm4231, %v4099, -inf
        %4359 = vmax.xlane.f32.xlu0 %v4358
        %v4360 = vpop.xlane.xlu0 %4359
        %v4361 = vsel %vm4231, %v4101, -inf
        %4362 = vmax.xlane.f32.xlu0 %v4361
        %v4363 = vpop.xlane.xlu0 %4362
        %v4364 = vsel %vm4231, %v4104, -inf
        %4365 = vmax.xlane.f32.xlu0 %v4364
        %v4366 = vpop.xlane.xlu0 %4365
        %v4367 = vsel %vm4231, %v4106, -inf
        %4368 = vmax.xlane.f32.xlu0 %v4367
        %v4369 = vpop.xlane.xlu0 %4368
        %v4370 = vsel %vm4231, %v4109, -inf
        %4371 = vmax.xlane.f32.xlu0 %v4370
        %v4372 = vpop.xlane.xlu0 %4371
        %v4373 = vsel %vm4231, %v4111, -inf
        %4374 = vmax.xlane.f32.xlu0 %v4373
        %v4375 = vpop.xlane.xlu0 %4374
        %v4376 = vsel %vm4231, %v4153, -inf
        %4377 = vmax.xlane.f32.xlu0 %v4376
        %v4378 = vpop.xlane.xlu0 %4377
        %v4379 = vsel %vm4231, %v4155, -inf
        %4380 = vmax.xlane.f32.xlu0 %v4379
        %v4381 = vpop.xlane.xlu0 %4380
        %v4382 = vsel %vm4231, %v4158, -inf
        %4383 = vmax.xlane.f32.xlu0 %v4382
        %v4384 = vpop.xlane.xlu0 %4383
        %v4385 = vsel %vm4231, %v4160, -inf
        %4386 = vmax.xlane.f32.xlu0 %v4385
        %v4387 = vpop.xlane.xlu0 %4386
        %v4388 = vsel %vm4231, %v4163, -inf
        %4389 = vmax.xlane.f32.xlu0 %v4388
        %v4390 = vpop.xlane.xlu0 %4389
        %v4391 = vsel %vm4231, %v4165, -inf
        %4392 = vmax.xlane.f32.xlu0 %v4391
        %v4393 = vpop.xlane.xlu0 %4392
        %v4394 = vsel %vm4231, %v4168, -inf
        %4395 = vmax.xlane.f32.xlu0 %v4394
        %v4396 = vpop.xlane.xlu0 %4395
        %v4397 = vsel %vm4231, %v4170, -inf
        %4398 = vmax.xlane.f32.xlu0 %v4397
        %v4399 = vpop.xlane.xlu0 %4398
        %v4400 = vsel %vm4231, %v4212, -inf
        %4401 = vmax.xlane.f32.xlu0 %v4400
        %v4402 = vpop.xlane.xlu0 %4401
        %v4403 = vsel %vm4231, %v4214, -inf
        %4404 = vmax.xlane.f32.xlu0 %v4403
        %v4405 = vpop.xlane.xlu0 %4404
        %v4406 = vsel %vm4231, %v4217, -inf
        %4407 = vmax.xlane.f32.xlu0 %v4406
        %v4408 = vpop.xlane.xlu0 %4407
        %v4409 = vsel %vm4231, %v4219, -inf
        %4410 = vmax.xlane.f32.xlu0 %v4409
        %v4411 = vpop.xlane.xlu0 %4410
        %v4412 = vsel %vm4231, %v4222, -inf
        %4413 = vmax.xlane.f32.xlu0 %v4412
        %v4414 = vpop.xlane.xlu0 %4413
        %v4415 = vsel %vm4231, %v4224, -inf
        %4416 = vmax.xlane.f32.xlu0 %v4415
        %v4417 = vpop.xlane.xlu0 %4416
        %v4418 = vsel %vm4231, %v4227, -inf
        %4419 = vmax.xlane.f32.xlu0 %v4418
        %v4420 = vpop.xlane.xlu0 %4419
        %v4421 = vsel %vm4231, %v4229, -inf
        %4422 = vmax.xlane.f32.xlu0 %v4421
        %v4423 = vpop.xlane.xlu0 %4422
        %v4424 = vsub.f32 %v3799, %v4234
        %v4425 = vsub.f32 %v3801, %v4237
        %v4426 = vsub.f32 %v3804, %v4240
        %v4427 = vsub.f32 %v3806, %v4243
        %v4428 = vsub.f32 %v3809, %v4246
        %v4429 = vsub.f32 %v3811, %v4249
        %v4430 = vsub.f32 %v3814, %v4252
        %v4431 = vsub.f32 %v3816, %v4255
        %v4432 = vsub.f32 %v3858, %v4258
        %v4433 = vsub.f32 %v3860, %v4261
        %v4434 = vsub.f32 %v3863, %v4264
        %v4435 = vsub.f32 %v3865, %v4267
        %v4436 = vsub.f32 %v3868, %v4270
        %v4437 = vsub.f32 %v3870, %v4273
        %v4438 = vsub.f32 %v3873, %v4276
        %v4439 = vsub.f32 %v3875, %v4279
        %v4440 = vsub.f32 %v3917, %v4282
        %v4441 = vsub.f32 %v3919, %v4285
        %v4442 = vsub.f32 %v3922, %v4288
        %v4443 = vsub.f32 %v3924, %v4291
        %v4444 = vsub.f32 %v3927, %v4294
        %v4445 = vsub.f32 %v3929, %v4297
        %v4446 = vsub.f32 %v3932, %v4300
        %v4447 = vsub.f32 %v3934, %v4303
        %v4448 = vsub.f32 %v3976, %v4306
        %v4449 = vsub.f32 %v3978, %v4309
        %v4450 = vsub.f32 %v3981, %v4312
        %v4451 = vsub.f32 %v3983, %v4315
        %v4452 = vsub.f32 %v3986, %v4318
        %v4453 = vsub.f32 %v3988, %v4321
        %v4454 = vsub.f32 %v3991, %v4324
        %v4455 = vsub.f32 %v3993, %v4327
        %v4456 = vsub.f32 %v4035, %v4330
        %v4457 = vsub.f32 %v4037, %v4333
        %v4458 = vsub.f32 %v4040, %v4336
        %v4459 = vsub.f32 %v4042, %v4339
        %v4460 = vsub.f32 %v4045, %v4342
        %v4461 = vsub.f32 %v4047, %v4345
        %v4462 = vsub.f32 %v4050, %v4348
        %v4463 = vsub.f32 %v4052, %v4351
        %v4464 = vsub.f32 %v4094, %v4354
        %v4465 = vsub.f32 %v4096, %v4357
        %v4466 = vsub.f32 %v4099, %v4360
        %v4467 = vsub.f32 %v4101, %v4363
        %v4468 = vsub.f32 %v4104, %v4366
        %v4469 = vsub.f32 %v4106, %v4369
        %v4470 = vsub.f32 %v4109, %v4372
        %v4471 = vsub.f32 %v4111, %v4375
        %v4472 = vsub.f32 %v4153, %v4378
        %v4473 = vsub.f32 %v4155, %v4381
        %v4474 = vsub.f32 %v4158, %v4384
        %v4475 = vsub.f32 %v4160, %v4387
        %v4476 = vsub.f32 %v4163, %v4390
        %v4477 = vsub.f32 %v4165, %v4393
        %v4478 = vsub.f32 %v4168, %v4396
        %v4479 = vsub.f32 %v4170, %v4399
        %v4480 = vsub.f32 %v4212, %v4402
        %v4481 = vsub.f32 %v4214, %v4405
        %v4482 = vsub.f32 %v4217, %v4408
        %v4483 = vsub.f32 %v4219, %v4411
        %v4484 = vsub.f32 %v4222, %v4414
        %v4485 = vsub.f32 %v4224, %v4417
        %v4486 = vsub.f32 %v4227, %v4420
        %v4487 = vsub.f32 %v4229, %v4423
        %v4488 = vmul.f32 %v4424, 1.442695
        %v4489 = vpow.pop %v4488
        %v4490 = vmul.f32 %v4425, 1.442695
        %v4491 = vpow.pop %v4490
        %v4492 = vmul.f32 %v4426, 1.442695
        %v4493 = vpow.pop %v4492
        %v4494 = vmul.f32 %v4427, 1.442695
        %v4495 = vpow.pop %v4494
        %v4496 = vmul.f32 %v4428, 1.442695
        %v4497 = vpow.pop %v4496
        %v4498 = vmul.f32 %v4429, 1.442695
        %v4499 = vpow.pop %v4498
        %v4500 = vmul.f32 %v4430, 1.442695
        %v4501 = vpow.pop %v4500
        %v4502 = vmul.f32 %v4431, 1.442695
        %v4503 = vpow.pop %v4502
        %v4504 = vmul.f32 %v4432, 1.442695
        %v4505 = vpow.pop %v4504
        %v4506 = vmul.f32 %v4433, 1.442695
        %v4507 = vpow.pop %v4506
        %v4508 = vmul.f32 %v4434, 1.442695
        %v4509 = vpow.pop %v4508
        %v4510 = vmul.f32 %v4435, 1.442695
        %v4511 = vpow.pop %v4510
        %v4512 = vmul.f32 %v4436, 1.442695
        %v4513 = vpow.pop %v4512
        %v4514 = vmul.f32 %v4437, 1.442695
        %v4515 = vpow.pop %v4514
        %v4516 = vmul.f32 %v4438, 1.442695
        %v4517 = vpow.pop %v4516
        %v4518 = vmul.f32 %v4439, 1.442695
        %v4519 = vpow.pop %v4518
        %v4520 = vmul.f32 %v4440, 1.442695
        %v4521 = vpow.pop %v4520
        %v4522 = vmul.f32 %v4441, 1.442695
        %v4523 = vpow.pop %v4522
        %v4524 = vmul.f32 %v4442, 1.442695
        %v4525 = vpow.pop %v4524
        %v4526 = vmul.f32 %v4443, 1.442695
        %v4527 = vpow.pop %v4526
        %v4528 = vmul.f32 %v4444, 1.442695
        %v4529 = vpow.pop %v4528
        %v4530 = vmul.f32 %v4445, 1.442695
        %v4531 = vpow.pop %v4530
        %v4532 = vmul.f32 %v4446, 1.442695
        %v4533 = vpow.pop %v4532
        %v4534 = vmul.f32 %v4447, 1.442695
        %v4535 = vpow.pop %v4534
        %v4536 = vmul.f32 %v4448, 1.442695
        %v4537 = vpow.pop %v4536
        %v4538 = vmul.f32 %v4449, 1.442695
        %v4539 = vpow.pop %v4538
        %v4540 = vmul.f32 %v4450, 1.442695
        %v4541 = vpow.pop %v4540
        %v4542 = vmul.f32 %v4451, 1.442695
        %v4543 = vpow.pop %v4542
        %v4544 = vmul.f32 %v4452, 1.442695
        %v4545 = vpow.pop %v4544
        %v4546 = vmul.f32 %v4453, 1.442695
        %v4547 = vpow.pop %v4546
        %v4548 = vmul.f32 %v4454, 1.442695
        %v4549 = vpow.pop %v4548
        %v4550 = vmul.f32 %v4455, 1.442695
        %v4551 = vpow.pop %v4550
        %v4552 = vmul.f32 %v4456, 1.442695
        %v4553 = vpow.pop %v4552
        %v4554 = vmul.f32 %v4457, 1.442695
        %v4555 = vpow.pop %v4554
        %v4556 = vmul.f32 %v4458, 1.442695
        %v4557 = vpow.pop %v4556
        %v4558 = vmul.f32 %v4459, 1.442695
        %v4559 = vpow.pop %v4558
        %v4560 = vmul.f32 %v4460, 1.442695
        %v4561 = vpow.pop %v4560
        %v4562 = vmul.f32 %v4461, 1.442695
        %v4563 = vpow.pop %v4562
        %v4564 = vmul.f32 %v4462, 1.442695
        %v4565 = vpow.pop %v4564
        %v4566 = vmul.f32 %v4463, 1.442695
        %v4567 = vpow.pop %v4566
        %v4568 = vmul.f32 %v4464, 1.442695
        %v4569 = vpow.pop %v4568
        %v4570 = vmul.f32 %v4465, 1.442695
        %v4571 = vpow.pop %v4570
        %v4572 = vmul.f32 %v4466, 1.442695
        %v4573 = vpow.pop %v4572
        %v4574 = vmul.f32 %v4467, 1.442695
        %v4575 = vpow.pop %v4574
        %v4576 = vmul.f32 %v4468, 1.442695
        %v4577 = vpow.pop %v4576
        %v4578 = vmul.f32 %v4469, 1.442695
        %v4579 = vpow.pop %v4578
        %v4580 = vmul.f32 %v4470, 1.442695
        %v4581 = vpow.pop %v4580
        %v4582 = vmul.f32 %v4471, 1.442695
        %v4583 = vpow.pop %v4582
        %v4584 = vmul.f32 %v4472, 1.442695
        %v4585 = vpow.pop %v4584
        %v4586 = vmul.f32 %v4473, 1.442695
        %v4587 = vpow.pop %v4586
        %v4588 = vmul.f32 %v4474, 1.442695
        %v4589 = vpow.pop %v4588
        %v4590 = vmul.f32 %v4475, 1.442695
        %v4591 = vpow.pop %v4590
        %v4592 = vmul.f32 %v4476, 1.442695
        %v4593 = vpow.pop %v4592
        %v4594 = vmul.f32 %v4477, 1.442695
        %v4595 = vpow.pop %v4594
        %v4596 = vmul.f32 %v4478, 1.442695
        %v4597 = vpow.pop %v4596
        %v4598 = vmul.f32 %v4479, 1.442695
        %v4599 = vpow.pop %v4598
        %v4600 = vmul.f32 %v4480, 1.442695
        %v4601 = vpow.pop %v4600
        %v4602 = vmul.f32 %v4481, 1.442695
        %v4603 = vpow.pop %v4602
        %v4604 = vmul.f32 %v4482, 1.442695
        %v4605 = vpow.pop %v4604
        %v4606 = vmul.f32 %v4483, 1.442695
        %v4607 = vpow.pop %v4606
        %v4608 = vmul.f32 %v4484, 1.442695
        %v4609 = vpow.pop %v4608
        %v4610 = vmul.f32 %v4485, 1.442695
        %v4611 = vpow.pop %v4610
        %v4612 = vmul.f32 %v4486, 1.442695
        %v4613 = vpow.pop %v4612
        %v4614 = vmul.f32 %v4487, 1.442695
        %v4615 = vpow.pop %v4614
        %v4616 = vsel %vm4231, %v4489, 0.0
        %4617 = vadd.xlane.f32.xlu0 %v4616
        %v4618 = vpop.xlane.xlu0 %4617
        %v4619 = vsel %vm4231, %v4491, 0.0
        %4620 = vadd.xlane.f32.xlu0 %v4619
        %v4621 = vpop.xlane.xlu0 %4620
        %v4622 = vsel %vm4231, %v4493, 0.0
        %4623 = vadd.xlane.f32.xlu0 %v4622
        %v4624 = vpop.xlane.xlu0 %4623
        %v4625 = vsel %vm4231, %v4495, 0.0
        %4626 = vadd.xlane.f32.xlu0 %v4625
        %v4627 = vpop.xlane.xlu0 %4626
        %v4628 = vsel %vm4231, %v4497, 0.0
        %4629 = vadd.xlane.f32.xlu0 %v4628
        %v4630 = vpop.xlane.xlu0 %4629
        %v4631 = vsel %vm4231, %v4499, 0.0
        %4632 = vadd.xlane.f32.xlu0 %v4631
        %v4633 = vpop.xlane.xlu0 %4632
        %v4634 = vsel %vm4231, %v4501, 0.0
        %4635 = vadd.xlane.f32.xlu0 %v4634
        %v4636 = vpop.xlane.xlu0 %4635
        %v4637 = vsel %vm4231, %v4503, 0.0
        %4638 = vadd.xlane.f32.xlu0 %v4637
        %v4639 = vpop.xlane.xlu0 %4638
        %v4640 = vsel %vm4231, %v4505, 0.0
        %4641 = vadd.xlane.f32.xlu0 %v4640
        %v4642 = vpop.xlane.xlu0 %4641
        %v4643 = vsel %vm4231, %v4507, 0.0
        %4644 = vadd.xlane.f32.xlu0 %v4643
        %v4645 = vpop.xlane.xlu0 %4644
        %v4646 = vsel %vm4231, %v4509, 0.0
        %4647 = vadd.xlane.f32.xlu0 %v4646
        %v4648 = vpop.xlane.xlu0 %4647
        %v4649 = vsel %vm4231, %v4511, 0.0
        %4650 = vadd.xlane.f32.xlu0 %v4649
        %v4651 = vpop.xlane.xlu0 %4650
        %v4652 = vsel %vm4231, %v4513, 0.0
        %4653 = vadd.xlane.f32.xlu0 %v4652
        %v4654 = vpop.xlane.xlu0 %4653
        %v4655 = vsel %vm4231, %v4515, 0.0
        %4656 = vadd.xlane.f32.xlu0 %v4655
        %v4657 = vpop.xlane.xlu0 %4656
        %v4658 = vsel %vm4231, %v4517, 0.0
        %4659 = vadd.xlane.f32.xlu0 %v4658
        %v4660 = vpop.xlane.xlu0 %4659
        %v4661 = vsel %vm4231, %v4519, 0.0
        %4662 = vadd.xlane.f32.xlu0 %v4661
        %v4663 = vpop.xlane.xlu0 %4662
        %v4664 = vsel %vm4231, %v4521, 0.0
        %4665 = vadd.xlane.f32.xlu0 %v4664
        %v4666 = vpop.xlane.xlu0 %4665
        %v4667 = vsel %vm4231, %v4523, 0.0
        %4668 = vadd.xlane.f32.xlu0 %v4667
        %v4669 = vpop.xlane.xlu0 %4668
        %v4670 = vsel %vm4231, %v4525, 0.0
        %4671 = vadd.xlane.f32.xlu0 %v4670
        %v4672 = vpop.xlane.xlu0 %4671
        %v4673 = vsel %vm4231, %v4527, 0.0
        %4674 = vadd.xlane.f32.xlu0 %v4673
        %v4675 = vpop.xlane.xlu0 %4674
        %v4676 = vsel %vm4231, %v4529, 0.0
        %4677 = vadd.xlane.f32.xlu0 %v4676
        %v4678 = vpop.xlane.xlu0 %4677
        %v4679 = vsel %vm4231, %v4531, 0.0
        %4680 = vadd.xlane.f32.xlu0 %v4679
        %v4681 = vpop.xlane.xlu0 %4680
        %v4682 = vsel %vm4231, %v4533, 0.0
        %4683 = vadd.xlane.f32.xlu0 %v4682
        %v4684 = vpop.xlane.xlu0 %4683
        %v4685 = vsel %vm4231, %v4535, 0.0
        %4686 = vadd.xlane.f32.xlu0 %v4685
        %v4687 = vpop.xlane.xlu0 %4686
        %v4688 = vsel %vm4231, %v4537, 0.0
        %4689 = vadd.xlane.f32.xlu0 %v4688
        %v4690 = vpop.xlane.xlu0 %4689
        %v4691 = vsel %vm4231, %v4539, 0.0
        %4692 = vadd.xlane.f32.xlu0 %v4691
        %v4693 = vpop.xlane.xlu0 %4692
        %v4694 = vsel %vm4231, %v4541, 0.0
        %4695 = vadd.xlane.f32.xlu0 %v4694
        %v4696 = vpop.xlane.xlu0 %4695
        %v4697 = vsel %vm4231, %v4543, 0.0
        %4698 = vadd.xlane.f32.xlu0 %v4697
        %v4699 = vpop.xlane.xlu0 %4698
        %v4700 = vsel %vm4231, %v4545, 0.0
        %4701 = vadd.xlane.f32.xlu0 %v4700
        %v4702 = vpop.xlane.xlu0 %4701
        %v4703 = vsel %vm4231, %v4547, 0.0
        %4704 = vadd.xlane.f32.xlu0 %v4703
        %v4705 = vpop.xlane.xlu0 %4704
        %v4706 = vsel %vm4231, %v4549, 0.0
        %4707 = vadd.xlane.f32.xlu0 %v4706
        %v4708 = vpop.xlane.xlu0 %4707
        %v4709 = vsel %vm4231, %v4551, 0.0
        %4710 = vadd.xlane.f32.xlu0 %v4709
        %v4711 = vpop.xlane.xlu0 %4710
        %v4712 = vsel %vm4231, %v4553, 0.0
        %4713 = vadd.xlane.f32.xlu0 %v4712
        %v4714 = vpop.xlane.xlu0 %4713
        %v4715 = vsel %vm4231, %v4555, 0.0
        %4716 = vadd.xlane.f32.xlu0 %v4715
        %v4717 = vpop.xlane.xlu0 %4716
        %v4718 = vsel %vm4231, %v4557, 0.0
        %4719 = vadd.xlane.f32.xlu0 %v4718
        %v4720 = vpop.xlane.xlu0 %4719
        %v4721 = vsel %vm4231, %v4559, 0.0
        %4722 = vadd.xlane.f32.xlu0 %v4721
        %v4723 = vpop.xlane.xlu0 %4722
        %v4724 = vsel %vm4231, %v4561, 0.0
        %4725 = vadd.xlane.f32.xlu0 %v4724
        %v4726 = vpop.xlane.xlu0 %4725
        %v4727 = vsel %vm4231, %v4563, 0.0
        %4728 = vadd.xlane.f32.xlu0 %v4727
        %v4729 = vpop.xlane.xlu0 %4728
        %v4730 = vsel %vm4231, %v4565, 0.0
        %4731 = vadd.xlane.f32.xlu0 %v4730
        %v4732 = vpop.xlane.xlu0 %4731
        %v4733 = vsel %vm4231, %v4567, 0.0
        %4734 = vadd.xlane.f32.xlu0 %v4733
        %v4735 = vpop.xlane.xlu0 %4734
        %v4736 = vsel %vm4231, %v4569, 0.0
        %4737 = vadd.xlane.f32.xlu0 %v4736
        %v4738 = vpop.xlane.xlu0 %4737
        %v4739 = vsel %vm4231, %v4571, 0.0
        %4740 = vadd.xlane.f32.xlu0 %v4739
        %v4741 = vpop.xlane.xlu0 %4740
        %v4742 = vsel %vm4231, %v4573, 0.0
        %4743 = vadd.xlane.f32.xlu0 %v4742
        %v4744 = vpop.xlane.xlu0 %4743
        %v4745 = vsel %vm4231, %v4575, 0.0
        %4746 = vadd.xlane.f32.xlu0 %v4745
        %v4747 = vpop.xlane.xlu0 %4746
        %v4748 = vsel %vm4231, %v4577, 0.0
        %4749 = vadd.xlane.f32.xlu0 %v4748
        %v4750 = vpop.xlane.xlu0 %4749
        %v4751 = vsel %vm4231, %v4579, 0.0
        %4752 = vadd.xlane.f32.xlu0 %v4751
        %v4753 = vpop.xlane.xlu0 %4752
        %v4754 = vsel %vm4231, %v4581, 0.0
        %4755 = vadd.xlane.f32.xlu0 %v4754
        %v4756 = vpop.xlane.xlu0 %4755
        %v4757 = vsel %vm4231, %v4583, 0.0
        %4758 = vadd.xlane.f32.xlu0 %v4757
        %v4759 = vpop.xlane.xlu0 %4758
        %v4760 = vsel %vm4231, %v4585, 0.0
        %4761 = vadd.xlane.f32.xlu0 %v4760
        %v4762 = vpop.xlane.xlu0 %4761
        %v4763 = vsel %vm4231, %v4587, 0.0
        %4764 = vadd.xlane.f32.xlu0 %v4763
        %v4765 = vpop.xlane.xlu0 %4764
        %v4766 = vsel %vm4231, %v4589, 0.0
        %4767 = vadd.xlane.f32.xlu0 %v4766
        %v4768 = vpop.xlane.xlu0 %4767
        %v4769 = vsel %vm4231, %v4591, 0.0
        %4770 = vadd.xlane.f32.xlu0 %v4769
        %v4771 = vpop.xlane.xlu0 %4770
        %v4772 = vsel %vm4231, %v4593, 0.0
        %4773 = vadd.xlane.f32.xlu0 %v4772
        %v4774 = vpop.xlane.xlu0 %4773
        %v4775 = vsel %vm4231, %v4595, 0.0
        %4776 = vadd.xlane.f32.xlu0 %v4775
        %v4777 = vpop.xlane.xlu0 %4776
        %v4778 = vsel %vm4231, %v4597, 0.0
        %4779 = vadd.xlane.f32.xlu0 %v4778
        %v4780 = vpop.xlane.xlu0 %4779
        %v4781 = vsel %vm4231, %v4599, 0.0
        %4782 = vadd.xlane.f32.xlu0 %v4781
        %v4783 = vpop.xlane.xlu0 %4782
        %v4784 = vsel %vm4231, %v4601, 0.0
        %4785 = vadd.xlane.f32.xlu0 %v4784
        %v4786 = vpop.xlane.xlu0 %4785
        %v4787 = vsel %vm4231, %v4603, 0.0
        %4788 = vadd.xlane.f32.xlu0 %v4787
        %v4789 = vpop.xlane.xlu0 %4788
        %v4790 = vsel %vm4231, %v4605, 0.0
        %4791 = vadd.xlane.f32.xlu0 %v4790
        %v4792 = vpop.xlane.xlu0 %4791
        %v4793 = vsel %vm4231, %v4607, 0.0
        %4794 = vadd.xlane.f32.xlu0 %v4793
        %v4795 = vpop.xlane.xlu0 %4794
        %v4796 = vsel %vm4231, %v4609, 0.0
        %4797 = vadd.xlane.f32.xlu0 %v4796
        %v4798 = vpop.xlane.xlu0 %4797
        %v4799 = vsel %vm4231, %v4611, 0.0
        %4800 = vadd.xlane.f32.xlu0 %v4799
        %v4801 = vpop.xlane.xlu0 %4800
        %v4802 = vsel %vm4231, %v4613, 0.0
        %4803 = vadd.xlane.f32.xlu0 %v4802
        %v4804 = vpop.xlane.xlu0 %4803
        %v4805 = vsel %vm4231, %v4615, 0.0
        %4806 = vadd.xlane.f32.xlu0 %v4805
        %v4807 = vpop.xlane.xlu0 %4806
        %v4808 = vrcp.pop %v4618
        %v4809 = vrcp.pop %v4621
        %v4810 = vrcp.pop %v4624
        %v4811 = vrcp.pop %v4627
        %v4812 = vrcp.pop %v4630
        %v4813 = vrcp.pop %v4633
        %v4814 = vrcp.pop %v4636
        %v4815 = vrcp.pop %v4639
        %v4816 = vrcp.pop %v4642
        %v4817 = vrcp.pop %v4645
        %v4818 = vrcp.pop %v4648
        %v4819 = vrcp.pop %v4651
        %v4820 = vrcp.pop %v4654
        %v4821 = vrcp.pop %v4657
        %v4822 = vrcp.pop %v4660
        %v4823 = vrcp.pop %v4663
        %v4824 = vrcp.pop %v4666
        %v4825 = vrcp.pop %v4669
        %v4826 = vrcp.pop %v4672
        %v4827 = vrcp.pop %v4675
        %v4828 = vrcp.pop %v4678
        %v4829 = vrcp.pop %v4681
        %v4830 = vrcp.pop %v4684
        %v4831 = vrcp.pop %v4687
        %v4832 = vrcp.pop %v4690
        %v4833 = vrcp.pop %v4693
        %v4834 = vrcp.pop %v4696
        %v4835 = vrcp.pop %v4699
        %v4836 = vrcp.pop %v4702
        %v4837 = vrcp.pop %v4705
        %v4838 = vrcp.pop %v4708
        %v4839 = vrcp.pop %v4711
        %v4840 = vrcp.pop %v4714
        %v4841 = vrcp.pop %v4717
        %v4842 = vrcp.pop %v4720
        %v4843 = vrcp.pop %v4723
        %v4844 = vrcp.pop %v4726
        %v4845 = vrcp.pop %v4729
        %v4846 = vrcp.pop %v4732
        %v4847 = vrcp.pop %v4735
        %v4848 = vrcp.pop %v4738
        %v4849 = vrcp.pop %v4741
        %v4850 = vrcp.pop %v4744
        %v4851 = vrcp.pop %v4747
        %v4852 = vrcp.pop %v4750
        %v4853 = vrcp.pop %v4753
        %v4854 = vrcp.pop %v4756
        %v4855 = vrcp.pop %v4759
        %v4856 = vrcp.pop %v4762
        %v4857 = vrcp.pop %v4765
        %v4858 = vrcp.pop %v4768
        %v4859 = vrcp.pop %v4771
        %v4860 = vrcp.pop %v4774
        %v4861 = vrcp.pop %v4777
        %v4862 = vrcp.pop %v4780
        %v4863 = vrcp.pop %v4783
        %v4864 = vrcp.pop %v4786
        %v4865 = vrcp.pop %v4789
        %v4866 = vrcp.pop %v4792
        %v4867 = vrcp.pop %v4795
        %v4868 = vrcp.pop %v4798
        %v4869 = vrcp.pop %v4801
        %v4870 = vrcp.pop %v4804
        %v4871 = vrcp.pop %v4807
        %v4872 = vmul.f32 %v4489, %v4808
        %v4873 = vmul.f32 %v4491, %v4809
        %v4874 = vmul.f32 %v4493, %v4810
        %v4875 = vmul.f32 %v4495, %v4811
        %v4876 = vmul.f32 %v4497, %v4812
        %v4877 = vmul.f32 %v4499, %v4813
        %v4878 = vmul.f32 %v4501, %v4814
        %v4879 = vmul.f32 %v4503, %v4815
        %v4880 = vmul.f32 %v4505, %v4816
        %v4881 = vmul.f32 %v4507, %v4817
        %v4882 = vmul.f32 %v4509, %v4818
        %v4883 = vmul.f32 %v4511, %v4819
        %v4884 = vmul.f32 %v4513, %v4820
        %v4885 = vmul.f32 %v4515, %v4821
        %v4886 = vmul.f32 %v4517, %v4822
        %v4887 = vmul.f32 %v4519, %v4823
        %v4888 = vmul.f32 %v4521, %v4824
        %v4889 = vmul.f32 %v4523, %v4825
        %v4890 = vmul.f32 %v4525, %v4826
        %v4891 = vmul.f32 %v4527, %v4827
        %v4892 = vmul.f32 %v4529, %v4828
        %v4893 = vmul.f32 %v4531, %v4829
        %v4894 = vmul.f32 %v4533, %v4830
        %v4895 = vmul.f32 %v4535, %v4831
        %v4896 = vmul.f32 %v4537, %v4832
        %v4897 = vmul.f32 %v4539, %v4833
        %v4898 = vmul.f32 %v4541, %v4834
        %v4899 = vmul.f32 %v4543, %v4835
        %v4900 = vmul.f32 %v4545, %v4836
        %v4901 = vmul.f32 %v4547, %v4837
        %v4902 = vmul.f32 %v4549, %v4838
        %v4903 = vmul.f32 %v4551, %v4839
        %v4904 = vmul.f32 %v4553, %v4840
        %v4905 = vmul.f32 %v4555, %v4841
        %v4906 = vmul.f32 %v4557, %v4842
        %v4907 = vmul.f32 %v4559, %v4843
        %v4908 = vmul.f32 %v4561, %v4844
        %v4909 = vmul.f32 %v4563, %v4845
        %v4910 = vmul.f32 %v4565, %v4846
        %v4911 = vmul.f32 %v4567, %v4847
        %v4912 = vmul.f32 %v4569, %v4848
        %v4913 = vmul.f32 %v4571, %v4849
        %v4914 = vmul.f32 %v4573, %v4850
        %v4915 = vmul.f32 %v4575, %v4851
        %v4916 = vmul.f32 %v4577, %v4852
        %v4917 = vmul.f32 %v4579, %v4853
        %v4918 = vmul.f32 %v4581, %v4854
        %v4919 = vmul.f32 %v4583, %v4855
        %v4920 = vmul.f32 %v4585, %v4856
        %v4921 = vmul.f32 %v4587, %v4857
        %v4922 = vmul.f32 %v4589, %v4858
        %v4923 = vmul.f32 %v4591, %v4859
        %v4924 = vmul.f32 %v4593, %v4860
        %v4925 = vmul.f32 %v4595, %v4861
        %v4926 = vmul.f32 %v4597, %v4862
        %v4927 = vmul.f32 %v4599, %v4863
        %v4928 = vmul.f32 %v4601, %v4864
        %v4929 = vmul.f32 %v4603, %v4865
        %v4930 = vmul.f32 %v4605, %v4866
        %v4931 = vmul.f32 %v4607, %v4867
        %v4932 = vmul.f32 %v4609, %v4868
        %v4933 = vmul.f32 %v4611, %v4869
        %v4934 = vmul.f32 %v4613, %v4870
        %v4935 = vmul.f32 %v4615, %v4871
        %v4936 = vpack.c.bf16 %v4872, %v4872
        %v4937 = vpack.c.bf16 %v4873, %v4873
        %v4938 = vpack.c.bf16 %v4874, %v4874
        %v4939 = vpack.c.bf16 %v4875, %v4875
        %v4940 = vpack.c.bf16 %v4876, %v4876
        %v4941 = vpack.c.bf16 %v4877, %v4877
        %v4942 = vpack.c.bf16 %v4878, %v4878
        %v4943 = vpack.c.bf16 %v4879, %v4879
        %v4944 = vpack.c.bf16 %v4880, %v4880
        %v4945 = vpack.c.bf16 %v4881, %v4881
        %v4946 = vpack.c.bf16 %v4882, %v4882
        %v4947 = vpack.c.bf16 %v4883, %v4883
        %v4948 = vpack.c.bf16 %v4884, %v4884
        %v4949 = vpack.c.bf16 %v4885, %v4885
        %v4950 = vpack.c.bf16 %v4886, %v4886
        %v4951 = vpack.c.bf16 %v4887, %v4887
        %v4952 = vpack.c.bf16 %v4888, %v4888
        %v4953 = vpack.c.bf16 %v4889, %v4889
        %v4954 = vpack.c.bf16 %v4890, %v4890
        %v4955 = vpack.c.bf16 %v4891, %v4891
        %v4956 = vpack.c.bf16 %v4892, %v4892
        %v4957 = vpack.c.bf16 %v4893, %v4893
        %v4958 = vpack.c.bf16 %v4894, %v4894
        %v4959 = vpack.c.bf16 %v4895, %v4895
        %v4960 = vpack.c.bf16 %v4896, %v4896
        %v4961 = vpack.c.bf16 %v4897, %v4897
        %v4962 = vpack.c.bf16 %v4898, %v4898
        %v4963 = vpack.c.bf16 %v4899, %v4899
        %v4964 = vpack.c.bf16 %v4900, %v4900
        %v4965 = vpack.c.bf16 %v4901, %v4901
        %v4966 = vpack.c.bf16 %v4902, %v4902
        %v4967 = vpack.c.bf16 %v4903, %v4903
        %v4968 = vpack.c.bf16 %v4904, %v4904
        %v4969 = vpack.c.bf16 %v4905, %v4905
        %v4970 = vpack.c.bf16 %v4906, %v4906
        %v4971 = vpack.c.bf16 %v4907, %v4907
        %v4972 = vpack.c.bf16 %v4908, %v4908
        %v4973 = vpack.c.bf16 %v4909, %v4909
        %v4974 = vpack.c.bf16 %v4910, %v4910
        %v4975 = vpack.c.bf16 %v4911, %v4911
        %v4976 = vpack.c.bf16 %v4912, %v4912
        %v4977 = vpack.c.bf16 %v4913, %v4913
        %v4978 = vpack.c.bf16 %v4914, %v4914
        %v4979 = vpack.c.bf16 %v4915, %v4915
        %v4980 = vpack.c.bf16 %v4916, %v4916
        %v4981 = vpack.c.bf16 %v4917, %v4917
        %v4982 = vpack.c.bf16 %v4918, %v4918
        %v4983 = vpack.c.bf16 %v4919, %v4919
        %v4984 = vpack.c.bf16 %v4920, %v4920
        %v4985 = vpack.c.bf16 %v4921, %v4921
        %v4986 = vpack.c.bf16 %v4922, %v4922
        %v4987 = vpack.c.bf16 %v4923, %v4923
        %v4988 = vpack.c.bf16 %v4924, %v4924
        %v4989 = vpack.c.bf16 %v4925, %v4925
        %v4990 = vpack.c.bf16 %v4926, %v4926
        %v4991 = vpack.c.bf16 %v4927, %v4927
        %v4992 = vpack.c.bf16 %v4928, %v4928
        %v4993 = vpack.c.bf16 %v4929, %v4929
        %v4994 = vpack.c.bf16 %v4930, %v4930
        %v4995 = vpack.c.bf16 %v4931, %v4931
        %v4996 = vpack.c.bf16 %v4932, %v4932
        %v4997 = vpack.c.bf16 %v4933, %v4933
        %v4998 = vpack.c.bf16 %v4934, %v4934
        %v4999 = vpack.c.bf16 %v4935, %v4935
        %v5006 = vunpack.c.l.b16 %v3430
        %v5007 = vunpack.c.l.b16 %v3431
        %v5008 = vunpack.c.l.b16 %v3432
        %v5009 = vunpack.c.l.b16 %v3433
        %v5010 = vunpack.c.l.b16 %v3434
        %v5011 = vunpack.c.l.b16 %v3435
        %v5012 = vpack.c.b16 %v5007, %v5006
        %v5013 = vpack.c.b16 %v5009, %v5008
        %v5014 = vpack.c.b16 %v5011, %v5010
        %v5023 = vunpack.c.l.b16 %v4936
        %v5024 = vunpack.c.l.b16 %v4937
        %v5025 = vunpack.c.l.b16 %v4938
        %v5026 = vunpack.c.l.b16 %v4939
        %v5027 = vunpack.c.l.b16 %v4940
        %v5028 = vunpack.c.l.b16 %v4941
        %v5029 = vunpack.c.l.b16 %v4942
        %v5030 = vunpack.c.l.b16 %v4943
        %v5031 = vpack.c.b16 %v5024, %v5023
        %v5032 = vpack.c.b16 %v5026, %v5025
        %v5033 = vpack.c.b16 %v5028, %v5027
        %v5034 = vpack.c.b16 %v5030, %v5029
        %v5036 = vsel %vm4231, %v5012, 0
        %v5039 = vsel %vm4231, %v5013, 0
        %v5042 = vsel %vm4231, %v5014, 0
        %v5045 = vsel %vm4231, %v5031, 0
        %v5048 = vsel %vm4231, %v5032, 0
        %v5051 = vsel %vm4231, %v5033, 0
        %v5054 = vsel %vm4231, %v5034, 0
        %5056 = vmatpush.bf16.xpose.msra.mxu0 0
        %5057 = vmatpush.bf16.xpose.msra.mxu0 0
        %5058 = vmatpush.bf16.xpose.msra.mxu0 0
        %5059 = vmatpush.bf16.xpose.msra.mxu0 0
        %5060 = vmatpush.bf16.xpose.msra.mxu0 %v5054
        %5061 = vmatpush.bf16.xpose.msra.mxu0 %v5051
        %5062 = vmatpush.bf16.xpose.msra.mxu0 %v5048
        %5063 = vmatpush.bf16.xpose.msra.mxu0 %v5045
        %5064 = vmatmul.bf16.gmra.mxu0 %v5036
        %v5065 = vpop.f32.mrf.mxu0
        %v5066 = vadd.f32 0.0, %v5065
        %v5067 = vpop.f32.mrf.mxu0
        %v5068 = vadd.f32 0.0, %v5067
        %5069 = vmatmul.bf16.gmra.mxu0 %v5039
        %v5070 = vpop.f32.mrf.mxu0
        %v5071 = vadd.f32 0.0, %v5070
        %v5072 = vpop.f32.mrf.mxu0
        %v5073 = vadd.f32 0.0, %v5072
        %5074 = vmatmul.bf16.gmra.mxu0 %v5042
        %v5075 = vpop.f32.mrf.mxu0
        %v5076 = vadd.f32 0.0, %v5075
        %v5077 = vpop.f32.mrf.mxu0
        %v5078 = vadd.f32 0.0, %v5077
        %5079 = vdwg.mxu0
        %v5086 = vunpack.c.l.b16 %v3436
        %v5087 = vunpack.c.l.b16 %v3437
        %v5088 = vunpack.c.l.b16 %v3438
        %v5089 = vunpack.c.l.b16 %v3439
        %v5090 = vunpack.c.l.b16 %v3440
        %v5091 = vunpack.c.l.b16 %v3441
        %v5092 = vpack.c.b16 %v5087, %v5086
        %v5093 = vpack.c.b16 %v5089, %v5088
        %v5094 = vpack.c.b16 %v5091, %v5090
        %v5103 = vunpack.c.l.b16 %v4944
        %v5104 = vunpack.c.l.b16 %v4945
        %v5105 = vunpack.c.l.b16 %v4946
        %v5106 = vunpack.c.l.b16 %v4947
        %v5107 = vunpack.c.l.b16 %v4948
        %v5108 = vunpack.c.l.b16 %v4949
        %v5109 = vunpack.c.l.b16 %v4950
        %v5110 = vunpack.c.l.b16 %v4951
        %v5111 = vpack.c.b16 %v5104, %v5103
        %v5112 = vpack.c.b16 %v5106, %v5105
        %v5113 = vpack.c.b16 %v5108, %v5107
        %v5114 = vpack.c.b16 %v5110, %v5109
        %v5116 = vsel %vm4231, %v5092, 0
        %v5119 = vsel %vm4231, %v5093, 0
        %v5122 = vsel %vm4231, %v5094, 0
        %v5125 = vsel %vm4231, %v5111, 0
        %v5128 = vsel %vm4231, %v5112, 0
        %v5131 = vsel %vm4231, %v5113, 0
        %v5134 = vsel %vm4231, %v5114, 0
        %5136 = vmatpush.bf16.xpose.msra.mxu0 0
        %5137 = vmatpush.bf16.xpose.msra.mxu0 0
        %5138 = vmatpush.bf16.xpose.msra.mxu0 0
        %5139 = vmatpush.bf16.xpose.msra.mxu0 0
        %5140 = vmatpush.bf16.xpose.msra.mxu0 %v5134
        %5141 = vmatpush.bf16.xpose.msra.mxu0 %v5131
        %5142 = vmatpush.bf16.xpose.msra.mxu0 %v5128
        %5143 = vmatpush.bf16.xpose.msra.mxu0 %v5125
        %5144 = vmatmul.bf16.gmra.mxu0 %v5116
        %v5145 = vpop.f32.mrf.mxu0
        %v5146 = vadd.f32 0.0, %v5145
        %v5147 = vpop.f32.mrf.mxu0
        %v5148 = vadd.f32 0.0, %v5147
        %5149 = vmatmul.bf16.gmra.mxu0 %v5119
        %v5150 = vpop.f32.mrf.mxu0
        %v5151 = vadd.f32 0.0, %v5150
        %v5152 = vpop.f32.mrf.mxu0
        %v5153 = vadd.f32 0.0, %v5152
        %5154 = vmatmul.bf16.gmra.mxu0 %v5122
        %v5155 = vpop.f32.mrf.mxu0
        %v5156 = vadd.f32 0.0, %v5155
        %v5157 = vpop.f32.mrf.mxu0
        %v5158 = vadd.f32 0.0, %v5157
        %5159 = vdwg.mxu0
        %v5166 = vunpack.c.l.b16 %v3442
        %v5167 = vunpack.c.l.b16 %v3443
        %v5168 = vunpack.c.l.b16 %v3444
        %v5169 = vunpack.c.l.b16 %v3445
        %v5170 = vunpack.c.l.b16 %v3446
        %v5171 = vunpack.c.l.b16 %v3447
        %v5172 = vpack.c.b16 %v5167, %v5166
        %v5173 = vpack.c.b16 %v5169, %v5168
        %v5174 = vpack.c.b16 %v5171, %v5170
        %v5183 = vunpack.c.l.b16 %v4952
        %v5184 = vunpack.c.l.b16 %v4953
        %v5185 = vunpack.c.l.b16 %v4954
        %v5186 = vunpack.c.l.b16 %v4955
        %v5187 = vunpack.c.l.b16 %v4956
        %v5188 = vunpack.c.l.b16 %v4957
        %v5189 = vunpack.c.l.b16 %v4958
        %v5190 = vunpack.c.l.b16 %v4959
        %v5191 = vpack.c.b16 %v5184, %v5183
        %v5192 = vpack.c.b16 %v5186, %v5185
        %v5193 = vpack.c.b16 %v5188, %v5187
        %v5194 = vpack.c.b16 %v5190, %v5189
        %v5196 = vsel %vm4231, %v5172, 0
        %v5199 = vsel %vm4231, %v5173, 0
        %v5202 = vsel %vm4231, %v5174, 0
        %v5205 = vsel %vm4231, %v5191, 0
        %v5208 = vsel %vm4231, %v5192, 0
        %v5211 = vsel %vm4231, %v5193, 0
        %v5214 = vsel %vm4231, %v5194, 0
        %5216 = vmatpush.bf16.xpose.msra.mxu0 0
        %5217 = vmatpush.bf16.xpose.msra.mxu0 0
        %5218 = vmatpush.bf16.xpose.msra.mxu0 0
        %5219 = vmatpush.bf16.xpose.msra.mxu0 0
        %5220 = vmatpush.bf16.xpose.msra.mxu0 %v5214
        %5221 = vmatpush.bf16.xpose.msra.mxu0 %v5211
        %5222 = vmatpush.bf16.xpose.msra.mxu0 %v5208
        %5223 = vmatpush.bf16.xpose.msra.mxu0 %v5205
        %5224 = vmatmul.bf16.gmra.mxu0 %v5196
        %v5225 = vpop.f32.mrf.mxu0
        %v5226 = vadd.f32 0.0, %v5225
        %v5227 = vpop.f32.mrf.mxu0
        %v5228 = vadd.f32 0.0, %v5227
        %5229 = vmatmul.bf16.gmra.mxu0 %v5199
        %v5230 = vpop.f32.mrf.mxu0
        %v5231 = vadd.f32 0.0, %v5230
        %v5232 = vpop.f32.mrf.mxu0
        %v5233 = vadd.f32 0.0, %v5232
        %5234 = vmatmul.bf16.gmra.mxu0 %v5202
        %v5235 = vpop.f32.mrf.mxu0
        %v5236 = vadd.f32 0.0, %v5235
        %v5237 = vpop.f32.mrf.mxu0
        %v5238 = vadd.f32 0.0, %v5237
        %5239 = vdwg.mxu0
        %v5246 = vunpack.c.l.b16 %v3448
        %v5247 = vunpack.c.l.b16 %v3449
        %v5248 = vunpack.c.l.b16 %v3450
        %v5249 = vunpack.c.l.b16 %v3451
        %v5250 = vunpack.c.l.b16 %v3452
        %v5251 = vunpack.c.l.b16 %v3453
        %v5252 = vpack.c.b16 %v5247, %v5246
        %v5253 = vpack.c.b16 %v5249, %v5248
        %v5254 = vpack.c.b16 %v5251, %v5250
        %v5263 = vunpack.c.l.b16 %v4960
        %v5264 = vunpack.c.l.b16 %v4961
        %v5265 = vunpack.c.l.b16 %v4962
        %v5266 = vunpack.c.l.b16 %v4963
        %v5267 = vunpack.c.l.b16 %v4964
        %v5268 = vunpack.c.l.b16 %v4965
        %v5269 = vunpack.c.l.b16 %v4966
        %v5270 = vunpack.c.l.b16 %v4967
        %v5271 = vpack.c.b16 %v5264, %v5263
        %v5272 = vpack.c.b16 %v5266, %v5265
        %v5273 = vpack.c.b16 %v5268, %v5267
        %v5274 = vpack.c.b16 %v5270, %v5269
        %v5276 = vsel %vm4231, %v5252, 0
        %v5279 = vsel %vm4231, %v5253, 0
        %v5282 = vsel %vm4231, %v5254, 0
        %v5285 = vsel %vm4231, %v5271, 0
        %v5288 = vsel %vm4231, %v5272, 0
        %v5291 = vsel %vm4231, %v5273, 0
        %v5294 = vsel %vm4231, %v5274, 0
        %5296 = vmatpush.bf16.xpose.msra.mxu0 0
        %5297 = vmatpush.bf16.xpose.msra.mxu0 0
        %5298 = vmatpush.bf16.xpose.msra.mxu0 0
        %5299 = vmatpush.bf16.xpose.msra.mxu0 0
        %5300 = vmatpush.bf16.xpose.msra.mxu0 %v5294
        %5301 = vmatpush.bf16.xpose.msra.mxu0 %v5291
        %5302 = vmatpush.bf16.xpose.msra.mxu0 %v5288
        %5303 = vmatpush.bf16.xpose.msra.mxu0 %v5285
        %5304 = vmatmul.bf16.gmra.mxu0 %v5276
        %v5305 = vpop.f32.mrf.mxu0
        %v5306 = vadd.f32 0.0, %v5305
        %v5307 = vpop.f32.mrf.mxu0
        %v5308 = vadd.f32 0.0, %v5307
        %5309 = vmatmul.bf16.gmra.mxu0 %v5279
        %v5310 = vpop.f32.mrf.mxu0
        %v5311 = vadd.f32 0.0, %v5310
        %v5312 = vpop.f32.mrf.mxu0
        %v5313 = vadd.f32 0.0, %v5312
        %5314 = vmatmul.bf16.gmra.mxu0 %v5282
        %v5315 = vpop.f32.mrf.mxu0
        %v5316 = vadd.f32 0.0, %v5315
        %v5317 = vpop.f32.mrf.mxu0
        %v5318 = vadd.f32 0.0, %v5317
        %5319 = vdwg.mxu0
        %v5326 = vunpack.c.l.b16 %v3454
        %v5327 = vunpack.c.l.b16 %v3455
        %v5328 = vunpack.c.l.b16 %v3456
        %v5329 = vunpack.c.l.b16 %v3457
        %v5330 = vunpack.c.l.b16 %v3458
        %v5331 = vunpack.c.l.b16 %v3459
        %v5332 = vpack.c.b16 %v5327, %v5326
        %v5333 = vpack.c.b16 %v5329, %v5328
        %v5334 = vpack.c.b16 %v5331, %v5330
        %v5343 = vunpack.c.l.b16 %v4968
        %v5344 = vunpack.c.l.b16 %v4969
        %v5345 = vunpack.c.l.b16 %v4970
        %v5346 = vunpack.c.l.b16 %v4971
        %v5347 = vunpack.c.l.b16 %v4972
        %v5348 = vunpack.c.l.b16 %v4973
        %v5349 = vunpack.c.l.b16 %v4974
        %v5350 = vunpack.c.l.b16 %v4975
        %v5351 = vpack.c.b16 %v5344, %v5343
        %v5352 = vpack.c.b16 %v5346, %v5345
        %v5353 = vpack.c.b16 %v5348, %v5347
        %v5354 = vpack.c.b16 %v5350, %v5349
        %v5356 = vsel %vm4231, %v5332, 0
        %v5359 = vsel %vm4231, %v5333, 0
        %v5362 = vsel %vm4231, %v5334, 0
        %v5365 = vsel %vm4231, %v5351, 0
        %v5368 = vsel %vm4231, %v5352, 0
        %v5371 = vsel %vm4231, %v5353, 0
        %v5374 = vsel %vm4231, %v5354, 0
        %5376 = vmatpush.bf16.xpose.msra.mxu0 0
        %5377 = vmatpush.bf16.xpose.msra.mxu0 0
        %5378 = vmatpush.bf16.xpose.msra.mxu0 0
        %5379 = vmatpush.bf16.xpose.msra.mxu0 0
        %5380 = vmatpush.bf16.xpose.msra.mxu0 %v5374
        %5381 = vmatpush.bf16.xpose.msra.mxu0 %v5371
        %5382 = vmatpush.bf16.xpose.msra.mxu0 %v5368
        %5383 = vmatpush.bf16.xpose.msra.mxu0 %v5365
        %5384 = vmatmul.bf16.gmra.mxu0 %v5356
        %v5385 = vpop.f32.mrf.mxu0
        %v5386 = vadd.f32 0.0, %v5385
        %v5387 = vpop.f32.mrf.mxu0
        %v5388 = vadd.f32 0.0, %v5387
        %5389 = vmatmul.bf16.gmra.mxu0 %v5359
        %v5390 = vpop.f32.mrf.mxu0
        %v5391 = vadd.f32 0.0, %v5390
        %v5392 = vpop.f32.mrf.mxu0
        %v5393 = vadd.f32 0.0, %v5392
        %5394 = vmatmul.bf16.gmra.mxu0 %v5362
        %v5395 = vpop.f32.mrf.mxu0
        %v5396 = vadd.f32 0.0, %v5395
        %v5397 = vpop.f32.mrf.mxu0
        %v5398 = vadd.f32 0.0, %v5397
        %5399 = vdwg.mxu0
        %v5406 = vunpack.c.l.b16 %v3460
        %v5407 = vunpack.c.l.b16 %v3461
        %v5408 = vunpack.c.l.b16 %v3462
        %v5409 = vunpack.c.l.b16 %v3463
        %v5410 = vunpack.c.l.b16 %v3464
        %v5411 = vunpack.c.l.b16 %v3465
        %v5412 = vpack.c.b16 %v5407, %v5406
        %v5413 = vpack.c.b16 %v5409, %v5408
        %v5414 = vpack.c.b16 %v5411, %v5410
        %v5423 = vunpack.c.l.b16 %v4976
        %v5424 = vunpack.c.l.b16 %v4977
        %v5425 = vunpack.c.l.b16 %v4978
        %v5426 = vunpack.c.l.b16 %v4979
        %v5427 = vunpack.c.l.b16 %v4980
        %v5428 = vunpack.c.l.b16 %v4981
        %v5429 = vunpack.c.l.b16 %v4982
        %v5430 = vunpack.c.l.b16 %v4983
        %v5431 = vpack.c.b16 %v5424, %v5423
        %v5432 = vpack.c.b16 %v5426, %v5425
        %v5433 = vpack.c.b16 %v5428, %v5427
        %v5434 = vpack.c.b16 %v5430, %v5429
        %v5436 = vsel %vm4231, %v5412, 0
        %v5439 = vsel %vm4231, %v5413, 0
        %v5442 = vsel %vm4231, %v5414, 0
        %v5445 = vsel %vm4231, %v5431, 0
        %v5448 = vsel %vm4231, %v5432, 0
        %v5451 = vsel %vm4231, %v5433, 0
        %v5454 = vsel %vm4231, %v5434, 0
        %5456 = vmatpush.bf16.xpose.msra.mxu0 0
        %5457 = vmatpush.bf16.xpose.msra.mxu0 0
        %5458 = vmatpush.bf16.xpose.msra.mxu0 0
        %5459 = vmatpush.bf16.xpose.msra.mxu0 0
        %5460 = vmatpush.bf16.xpose.msra.mxu0 %v5454
        %5461 = vmatpush.bf16.xpose.msra.mxu0 %v5451
        %5462 = vmatpush.bf16.xpose.msra.mxu0 %v5448
        %5463 = vmatpush.bf16.xpose.msra.mxu0 %v5445
        %5464 = vmatmul.bf16.gmra.mxu0 %v5436
        %v5465 = vpop.f32.mrf.mxu0
        %v5466 = vadd.f32 0.0, %v5465
        %v5467 = vpop.f32.mrf.mxu0
        %v5468 = vadd.f32 0.0, %v5467
        %5469 = vmatmul.bf16.gmra.mxu0 %v5439
        %v5470 = vpop.f32.mrf.mxu0
        %v5471 = vadd.f32 0.0, %v5470
        %v5472 = vpop.f32.mrf.mxu0
        %v5473 = vadd.f32 0.0, %v5472
        %5474 = vmatmul.bf16.gmra.mxu0 %v5442
        %v5475 = vpop.f32.mrf.mxu0
        %v5476 = vadd.f32 0.0, %v5475
        %v5477 = vpop.f32.mrf.mxu0
        %v5478 = vadd.f32 0.0, %v5477
        %5479 = vdwg.mxu0
        %v5486 = vunpack.c.l.b16 %v3466
        %v5487 = vunpack.c.l.b16 %v3467
        %v5488 = vunpack.c.l.b16 %v3468
        %v5489 = vunpack.c.l.b16 %v3469
        %v5490 = vunpack.c.l.b16 %v3470
        %v5491 = vunpack.c.l.b16 %v3471
        %v5492 = vpack.c.b16 %v5487, %v5486
        %v5493 = vpack.c.b16 %v5489, %v5488
        %v5494 = vpack.c.b16 %v5491, %v5490
        %v5503 = vunpack.c.l.b16 %v4984
        %v5504 = vunpack.c.l.b16 %v4985
        %v5505 = vunpack.c.l.b16 %v4986
        %v5506 = vunpack.c.l.b16 %v4987
        %v5507 = vunpack.c.l.b16 %v4988
        %v5508 = vunpack.c.l.b16 %v4989
        %v5509 = vunpack.c.l.b16 %v4990
        %v5510 = vunpack.c.l.b16 %v4991
        %v5511 = vpack.c.b16 %v5504, %v5503
        %v5512 = vpack.c.b16 %v5506, %v5505
        %v5513 = vpack.c.b16 %v5508, %v5507
        %v5514 = vpack.c.b16 %v5510, %v5509
        %v5516 = vsel %vm4231, %v5492, 0
        %v5519 = vsel %vm4231, %v5493, 0
        %v5522 = vsel %vm4231, %v5494, 0
        %v5525 = vsel %vm4231, %v5511, 0
        %v5528 = vsel %vm4231, %v5512, 0
        %v5531 = vsel %vm4231, %v5513, 0
        %v5534 = vsel %vm4231, %v5514, 0
        %5536 = vmatpush.bf16.xpose.msra.mxu0 0
        %5537 = vmatpush.bf16.xpose.msra.mxu0 0
        %5538 = vmatpush.bf16.xpose.msra.mxu0 0
        %5539 = vmatpush.bf16.xpose.msra.mxu0 0
        %5540 = vmatpush.bf16.xpose.msra.mxu0 %v5534
        %5541 = vmatpush.bf16.xpose.msra.mxu0 %v5531
        %5542 = vmatpush.bf16.xpose.msra.mxu0 %v5528
        %5543 = vmatpush.bf16.xpose.msra.mxu0 %v5525
        %5544 = vmatmul.bf16.gmra.mxu0 %v5516
        %v5545 = vpop.f32.mrf.mxu0
        %v5546 = vadd.f32 0.0, %v5545
        %v5547 = vpop.f32.mrf.mxu0
        %v5548 = vadd.f32 0.0, %v5547
        %5549 = vmatmul.bf16.gmra.mxu0 %v5519
        %v5550 = vpop.f32.mrf.mxu0
        %v5551 = vadd.f32 0.0, %v5550
        %v5552 = vpop.f32.mrf.mxu0
        %v5553 = vadd.f32 0.0, %v5552
        %5554 = vmatmul.bf16.gmra.mxu0 %v5522
        %v5555 = vpop.f32.mrf.mxu0
        %v5556 = vadd.f32 0.0, %v5555
        %v5557 = vpop.f32.mrf.mxu0
        %v5558 = vadd.f32 0.0, %v5557
        %5559 = vdwg.mxu0
        %v5566 = vunpack.c.l.b16 %v3472
        %v5567 = vunpack.c.l.b16 %v3473
        %v5568 = vunpack.c.l.b16 %v3474
        %v5569 = vunpack.c.l.b16 %v3475
        %v5570 = vunpack.c.l.b16 %v3476
        %v5571 = vunpack.c.l.b16 %v3477
        %v5572 = vpack.c.b16 %v5567, %v5566
        %v5573 = vpack.c.b16 %v5569, %v5568
        %v5574 = vpack.c.b16 %v5571, %v5570
        %v5583 = vunpack.c.l.b16 %v4992
        %v5584 = vunpack.c.l.b16 %v4993
        %v5585 = vunpack.c.l.b16 %v4994
        %v5586 = vunpack.c.l.b16 %v4995
        %v5587 = vunpack.c.l.b16 %v4996
        %v5588 = vunpack.c.l.b16 %v4997
        %v5589 = vunpack.c.l.b16 %v4998
        %v5590 = vunpack.c.l.b16 %v4999
        %v5591 = vpack.c.b16 %v5584, %v5583
        %v5592 = vpack.c.b16 %v5586, %v5585
        %v5593 = vpack.c.b16 %v5588, %v5587
        %v5594 = vpack.c.b16 %v5590, %v5589
        %v5596 = vsel %vm4231, %v5572, 0
        %v5599 = vsel %vm4231, %v5573, 0
        %v5602 = vsel %vm4231, %v5574, 0
        %v5605 = vsel %vm4231, %v5591, 0
        %v5608 = vsel %vm4231, %v5592, 0
        %v5611 = vsel %vm4231, %v5593, 0
        %v5614 = vsel %vm4231, %v5594, 0
        %5616 = vmatpush.bf16.xpose.msra.mxu0 0
        %5617 = vmatpush.bf16.xpose.msra.mxu0 0
        %5618 = vmatpush.bf16.xpose.msra.mxu0 0
        %5619 = vmatpush.bf16.xpose.msra.mxu0 0
        %5620 = vmatpush.bf16.xpose.msra.mxu0 %v5614
        %5621 = vmatpush.bf16.xpose.msra.mxu0 %v5611
        %5622 = vmatpush.bf16.xpose.msra.mxu0 %v5608
        %5623 = vmatpush.bf16.xpose.msra.mxu0 %v5605
        %5624 = vmatmul.bf16.gmra.mxu0 %v5596
        %v5625 = vpop.f32.mrf.mxu0
        %v5626 = vadd.f32 0.0, %v5625
        %v5627 = vpop.f32.mrf.mxu0
        %v5628 = vadd.f32 0.0, %v5627
        %5629 = vmatmul.bf16.gmra.mxu0 %v5599
        %v5630 = vpop.f32.mrf.mxu0
        %v5631 = vadd.f32 0.0, %v5630
        %v5632 = vpop.f32.mrf.mxu0
        %v5633 = vadd.f32 0.0, %v5632
        %5634 = vmatmul.bf16.gmra.mxu0 %v5602
        %v5635 = vpop.f32.mrf.mxu0
        %v5636 = vadd.f32 0.0, %v5635
        %v5637 = vpop.f32.mrf.mxu0
        %v5638 = vadd.f32 0.0, %v5637
        %5639 = vdwg.mxu0
        %v5640 = vpack.c.bf16 %v5066, %v5066
        %v5641 = vpack.c.bf16 %v5068, %v5068
        %v5642 = vpack.c.bf16 %v5071, %v5071
        %v5643 = vpack.c.bf16 %v5073, %v5073
        %v5644 = vpack.c.bf16 %v5076, %v5076
        %v5645 = vpack.c.bf16 %v5078, %v5078
        %v5646 = vpack.c.bf16 %v5146, %v5146
        %v5647 = vpack.c.bf16 %v5148, %v5148
        %v5648 = vpack.c.bf16 %v5151, %v5151
        %v5649 = vpack.c.bf16 %v5153, %v5153
        %v5650 = vpack.c.bf16 %v5156, %v5156
        %v5651 = vpack.c.bf16 %v5158, %v5158
        %v5652 = vpack.c.bf16 %v5226, %v5226
        %v5653 = vpack.c.bf16 %v5228, %v5228
        %v5654 = vpack.c.bf16 %v5231, %v5231
        %v5655 = vpack.c.bf16 %v5233, %v5233
        %v5656 = vpack.c.bf16 %v5236, %v5236
        %v5657 = vpack.c.bf16 %v5238, %v5238
        %v5658 = vpack.c.bf16 %v5306, %v5306
        %v5659 = vpack.c.bf16 %v5308, %v5308
        %v5660 = vpack.c.bf16 %v5311, %v5311
        %v5661 = vpack.c.bf16 %v5313, %v5313
        %v5662 = vpack.c.bf16 %v5316, %v5316
        %v5663 = vpack.c.bf16 %v5318, %v5318
        %v5664 = vpack.c.bf16 %v5386, %v5386
        %v5665 = vpack.c.bf16 %v5388, %v5388
        %v5666 = vpack.c.bf16 %v5391, %v5391
        %v5667 = vpack.c.bf16 %v5393, %v5393
        %v5668 = vpack.c.bf16 %v5396, %v5396
        %v5669 = vpack.c.bf16 %v5398, %v5398
        %v5670 = vpack.c.bf16 %v5466, %v5466
        %v5671 = vpack.c.bf16 %v5468, %v5468
        %v5672 = vpack.c.bf16 %v5471, %v5471
        %v5673 = vpack.c.bf16 %v5473, %v5473
        %v5674 = vpack.c.bf16 %v5476, %v5476
        %v5675 = vpack.c.bf16 %v5478, %v5478
        %v5676 = vpack.c.bf16 %v5546, %v5546
        %v5677 = vpack.c.bf16 %v5548, %v5548
        %v5678 = vpack.c.bf16 %v5551, %v5551
        %v5679 = vpack.c.bf16 %v5553, %v5553
        %v5680 = vpack.c.bf16 %v5556, %v5556
        %v5681 = vpack.c.bf16 %v5558, %v5558
        %v5682 = vpack.c.bf16 %v5626, %v5626
        %v5683 = vpack.c.bf16 %v5628, %v5628
        %v5684 = vpack.c.bf16 %v5631, %v5631
        %v5685 = vpack.c.bf16 %v5633, %v5633
        %v5686 = vpack.c.bf16 %v5636, %v5636
        %v5687 = vpack.c.bf16 %v5638, %v5638
        %v5736 = vunpack.c.l.b16 %v5640
        %v5737 = vunpack.c.l.b16 %v5641
        %v5738 = vunpack.c.l.b16 %v5642
        %v5739 = vunpack.c.l.b16 %v5643
        %v5740 = vunpack.c.l.b16 %v5644
        %v5741 = vunpack.c.l.b16 %v5645
        %v5742 = vunpack.c.l.b16 %v5646
        %v5743 = vunpack.c.l.b16 %v5647
        %v5744 = vunpack.c.l.b16 %v5648
        %v5745 = vunpack.c.l.b16 %v5649
        %v5746 = vunpack.c.l.b16 %v5650
        %v5747 = vunpack.c.l.b16 %v5651
        %v5748 = vunpack.c.l.b16 %v5652
        %v5749 = vunpack.c.l.b16 %v5653
        %v5750 = vunpack.c.l.b16 %v5654
        %v5751 = vunpack.c.l.b16 %v5655
        %v5752 = vunpack.c.l.b16 %v5656
        %v5753 = vunpack.c.l.b16 %v5657
        %v5754 = vunpack.c.l.b16 %v5658
        %v5755 = vunpack.c.l.b16 %v5659
        %v5756 = vunpack.c.l.b16 %v5660
        %v5757 = vunpack.c.l.b16 %v5661
        %v5758 = vunpack.c.l.b16 %v5662
        %v5759 = vunpack.c.l.b16 %v5663
        %v5760 = vunpack.c.l.b16 %v5664
        %v5761 = vunpack.c.l.b16 %v5665
        %v5762 = vunpack.c.l.b16 %v5666
        %v5763 = vunpack.c.l.b16 %v5667
        %v5764 = vunpack.c.l.b16 %v5668
        %v5765 = vunpack.c.l.b16 %v5669
        %v5766 = vunpack.c.l.b16 %v5670
        %v5767 = vunpack.c.l.b16 %v5671
        %v5768 = vunpack.c.l.b16 %v5672
        %v5769 = vunpack.c.l.b16 %v5673
        %v5770 = vunpack.c.l.b16 %v5674
        %v5771 = vunpack.c.l.b16 %v5675
        %v5772 = vunpack.c.l.b16 %v5676
        %v5773 = vunpack.c.l.b16 %v5677
        %v5774 = vunpack.c.l.b16 %v5678
        %v5775 = vunpack.c.l.b16 %v5679
        %v5776 = vunpack.c.l.b16 %v5680
        %v5777 = vunpack.c.l.b16 %v5681
        %v5778 = vunpack.c.l.b16 %v5682
        %v5779 = vunpack.c.l.b16 %v5683
        %v5780 = vunpack.c.l.b16 %v5684
        %v5781 = vunpack.c.l.b16 %v5685
        %v5782 = vunpack.c.l.b16 %v5686
        %v5783 = vunpack.c.l.b16 %v5687
        %v5784 = vpack.c.b16 %v5737, %v5736
        %v5785 = vpack.c.b16 %v5739, %v5738
        %v5786 = vpack.c.b16 %v5741, %v5740
        %v5787 = vpack.c.b16 %v5743, %v5742
        %v5788 = vpack.c.b16 %v5745, %v5744
        %v5789 = vpack.c.b16 %v5747, %v5746
        %v5790 = vpack.c.b16 %v5749, %v5748
        %v5791 = vpack.c.b16 %v5751, %v5750
        %v5792 = vpack.c.b16 %v5753, %v5752
        %v5793 = vpack.c.b16 %v5755, %v5754
        %v5794 = vpack.c.b16 %v5757, %v5756
        %v5795 = vpack.c.b16 %v5759, %v5758
        %v5796 = vpack.c.b16 %v5761, %v5760
        %v5797 = vpack.c.b16 %v5763, %v5762
        %v5798 = vpack.c.b16 %v5765, %v5764
        %v5799 = vpack.c.b16 %v5767, %v5766
        %v5800 = vpack.c.b16 %v5769, %v5768
        %v5801 = vpack.c.b16 %v5771, %v5770
        %v5802 = vpack.c.b16 %v5773, %v5772
        %v5803 = vpack.c.b16 %v5775, %v5774
        %v5804 = vpack.c.b16 %v5777, %v5776
        %v5805 = vpack.c.b16 %v5779, %v5778
        %v5806 = vpack.c.b16 %v5781, %v5780
        %v5807 = vpack.c.b16 %v5783, %v5782
        %5832 = vxpose.xlu0.c.b16.start [1/8] %v5784, 128
        %5833 = vxpose.xlu0.c.b16.cont [2/8] %v5785, 128
        %5834 = vxpose.xlu0.c.b16.cont [3/8] %v5786, 128
        %5835 = vxpose.xlu0.c.b16.cont [4/8] %v5787, 128
        %5836 = vxpose.xlu0.c.b16.cont [5/8] %v5788, 128
        %5837 = vxpose.xlu0.c.b16.cont [6/8] %v5789, 128
        %5838 = vxpose.xlu0.c.b16.cont [7/8] %v5790, 128
        %5839 = vxpose.xlu0.c.b16.end [8/8] %v5791, 128
        %v5840 = vpop.trf.xlu0
        %v5841 = vpop.trf.xlu0
        %v5842 = vpop.trf.xlu0
        %v5843 = vpop.trf.xlu0
        %v5844 = vpop.trf.xlu0
        %v5845 = vpop.trf.xlu0
        %v5846 = vpop.trf.xlu0
        %v5847 = vpop.trf.xlu0
        %5848 = vxpose.xlu0.c.b16.start [1/8] %v5792, 128
        %5849 = vxpose.xlu0.c.b16.cont [2/8] %v5793, 128
        %5850 = vxpose.xlu0.c.b16.cont [3/8] %v5794, 128
        %5851 = vxpose.xlu0.c.b16.cont [4/8] %v5795, 128
        %5852 = vxpose.xlu0.c.b16.cont [5/8] %v5796, 128
        %5853 = vxpose.xlu0.c.b16.cont [6/8] %v5797, 128
        %5854 = vxpose.xlu0.c.b16.cont [7/8] %v5798, 128
        %5855 = vxpose.xlu0.c.b16.end [8/8] %v5799, 128
        %v5856 = vpop.trf.xlu0
        %v5857 = vpop.trf.xlu0
        %v5858 = vpop.trf.xlu0
        %v5859 = vpop.trf.xlu0
        %v5860 = vpop.trf.xlu0
        %v5861 = vpop.trf.xlu0
        %v5862 = vpop.trf.xlu0
        %v5863 = vpop.trf.xlu0
        %5864 = vxpose.xlu0.c.b16.start [1/8] %v5800, 128
        %5865 = vxpose.xlu0.c.b16.cont [2/8] %v5801, 128
        %5866 = vxpose.xlu0.c.b16.cont [3/8] %v5802, 128
        %5867 = vxpose.xlu0.c.b16.cont [4/8] %v5803, 128
        %5868 = vxpose.xlu0.c.b16.cont [5/8] %v5804, 128
        %5869 = vxpose.xlu0.c.b16.cont [6/8] %v5805, 128
        %5870 = vxpose.xlu0.c.b16.cont [7/8] %v5806, 128
        %5871 = vxpose.xlu0.c.b16.end [8/8] %v5807, 128
        %v5872 = vpop.trf.xlu0
        %v5873 = vpop.trf.xlu0
        %v5874 = vpop.trf.xlu0
        %v5875 = vpop.trf.xlu0
        %v5876 = vpop.trf.xlu0
        %v5877 = vpop.trf.xlu0
        %v5878 = vpop.trf.xlu0
        %v5879 = vpop.trf.xlu0
        %v5880 = vld [vmem:[%s5] sm:$0xff]
        %v5881 = vld [vmem:[%s5 + $0x8] sm:$0xf]
        %v5882 = vld [vmem:[%s5 + $0xc] sm:$0xff]
        %v5883 = vld [vmem:[%s5 + $0x14] sm:$0xf]
        %v5884 = vld [vmem:[%s5 + $0x18] sm:$0xff]
        %v5885 = vld [vmem:[%s5 + $0x20] sm:$0xf]
        %v5886 = vld [vmem:[%s5 + $0x24] sm:$0xff]
        %v5887 = vld [vmem:[%s5 + $0x2c] sm:$0xf]
        %v5888 = vld [vmem:[%s5 + $0x30] sm:$0xff]
        %v5889 = vld [vmem:[%s5 + $0x38] sm:$0xf]
        %v5890 = vld [vmem:[%s5 + $0x3c] sm:$0xff]
        %v5891 = vld [vmem:[%s5 + $0x44] sm:$0xf]
        %v5892 = vld [vmem:[%s5 + $0x48] sm:$0xff]
        %v5893 = vld [vmem:[%s5 + $0x50] sm:$0xf]
        %v5894 = vld [vmem:[%s5 + $0x54] sm:$0xff]
        %v5895 = vld [vmem:[%s5 + $0x5c] sm:$0xf]
        %v5896 = vld [vmem:[%s5 + $0x60] sm:$0xff]
        %v5897 = vld [vmem:[%s5 + $0x68] sm:$0xf]
        %v5898 = vld [vmem:[%s5 + $0x6c] sm:$0xff]
        %v5899 = vld [vmem:[%s5 + $0x74] sm:$0xf]
        %v5900 = vld [vmem:[%s5 + $0x78] sm:$0xff]
        %v5901 = vld [vmem:[%s5 + $0x80] sm:$0xf]
        %v5902 = vld [vmem:[%s5 + $0x84] sm:$0xff]
        %v5903 = vld [vmem:[%s5 + $0x8c] sm:$0xf]
        %v5904 = vld [vmem:[%s5 + $0x90] sm:$0xff]
        %v5905 = vld [vmem:[%s5 + $0x98] sm:$0xf]
        %v5906 = vld [vmem:[%s5 + $0x9c] sm:$0xff]
        %v5907 = vld [vmem:[%s5 + $0xa4] sm:$0xf]
        %v5908 = vld [vmem:[%s5 + $0xa8] sm:$0xff]
        %v5909 = vld [vmem:[%s5 + $0xb0] sm:$0xf]
        %v5910 = vld [vmem:[%s5 + $0xb4] sm:$0xff]
        %v5911 = vld [vmem:[%s5 + $0xbc] sm:$0xf]
        %v5912 = vld [vmem:[%s5 + $0xc0] sm:$0xff]
        %v5913 = vld [vmem:[%s5 + $0xc8] sm:$0xf]
        %v5914 = vld [vmem:[%s5 + $0xcc] sm:$0xff]
        %v5915 = vld [vmem:[%s5 + $0xd4] sm:$0xf]
        %v5916 = vld [vmem:[%s5 + $0xd8] sm:$0xff]
        %v5917 = vld [vmem:[%s5 + $0xe0] sm:$0xf]
        %v5918 = vld [vmem:[%s5 + $0xe4] sm:$0xff]
        %v5919 = vld [vmem:[%s5 + $0xec] sm:$0xf]
        %v5920 = vld [vmem:[%s5 + $0xf0] sm:$0xff]
        %v5921 = vld [vmem:[%s5 + $0xf8] sm:$0xf]
        %v5922 = vld [vmem:[%s5 + $0xfc] sm:$0xff]
        %v5923 = vld [vmem:[%s5 + $0x104] sm:$0xf]
        %v5924 = vld [vmem:[%s5 + $0x108] sm:$0xff]
        %v5925 = vld [vmem:[%s5 + $0x110] sm:$0xf]
        %v5926 = vld [vmem:[%s5 + $0x114] sm:$0xff]
        %v5927 = vld [vmem:[%s5 + $0x11c] sm:$0xf]
        %v5928 = vld [vmem:[%s5 + $0x120] sm:$0xff]
        %v5929 = vld [vmem:[%s5 + $0x128] sm:$0xf]
        %v5930 = vld [vmem:[%s5 + $0x12c] sm:$0xff]
        %v5931 = vld [vmem:[%s5 + $0x134] sm:$0xf]
        %v5932 = vld [vmem:[%s5 + $0x138] sm:$0xff]
        %v5933 = vld [vmem:[%s5 + $0x140] sm:$0xf]
        %v5934 = vld [vmem:[%s5 + $0x144] sm:$0xff]
        %v5935 = vld [vmem:[%s5 + $0x14c] sm:$0xf]
        %v5936 = vld [vmem:[%s5 + $0x150] sm:$0xff]
        %v5937 = vld [vmem:[%s5 + $0x158] sm:$0xf]
        %v5938 = vld [vmem:[%s5 + $0x15c] sm:$0xff]
        %v5939 = vld [vmem:[%s5 + $0x164] sm:$0xf]
        %v5940 = vld [vmem:[%s5 + $0x168] sm:$0xff]
        %v5941 = vld [vmem:[%s5 + $0x170] sm:$0xf]
        %v5942 = vld [vmem:[%s5 + $0x174] sm:$0xff]
        %v5943 = vld [vmem:[%s5 + $0x17c] sm:$0xf]
        %v5944 = vld [vmem:[%s5 + $0x180] sm:$0xff]
        %v5945 = vld [vmem:[%s5 + $0x188] sm:$0xf]
        %v5946 = vld [vmem:[%s5 + $0x18c] sm:$0xff]
        %v5947 = vld [vmem:[%s5 + $0x194] sm:$0xf]
        %v5948 = vld [vmem:[%s5 + $0x198] sm:$0xff]
        %v5949 = vld [vmem:[%s5 + $0x1a0] sm:$0xf]
        %v5950 = vld [vmem:[%s5 + $0x1a4] sm:$0xff]
        %v5951 = vld [vmem:[%s5 + $0x1ac] sm:$0xf]
        %v5952 = vld [vmem:[%s5 + $0x1b0] sm:$0xff]
        %v5953 = vld [vmem:[%s5 + $0x1b8] sm:$0xf]
        %v5954 = vld [vmem:[%s5 + $0x1bc] sm:$0xff]
        %v5955 = vld [vmem:[%s5 + $0x1c4] sm:$0xf]
        %v5956 = vld [vmem:[%s5 + $0x1c8] sm:$0xff]
        %v5957 = vld [vmem:[%s5 + $0x1d0] sm:$0xf]
        %v5958 = vld [vmem:[%s5 + $0x1d4] sm:$0xff]
        %v5959 = vld [vmem:[%s5 + $0x1dc] sm:$0xf]
        %v5960 = vld [vmem:[%s5 + $0x1e0] sm:$0xff]
        %v5961 = vld [vmem:[%s5 + $0x1e8] sm:$0xf]
        %v5962 = vld [vmem:[%s5 + $0x1ec] sm:$0xff]
        %v5963 = vld [vmem:[%s5 + $0x1f4] sm:$0xf]
        %v5964 = vld [vmem:[%s5 + $0x1f8] sm:$0xff]
        %v5965 = vld [vmem:[%s5 + $0x200] sm:$0xf]
        %v5966 = vld [vmem:[%s5 + $0x204] sm:$0xff]
        %v5967 = vld [vmem:[%s5 + $0x20c] sm:$0xf]
        %v5968 = vld [vmem:[%s5 + $0x210] sm:$0xff]
        %v5969 = vld [vmem:[%s5 + $0x218] sm:$0xf]
        %v5970 = vld [vmem:[%s5 + $0x21c] sm:$0xff]
        %v5971 = vld [vmem:[%s5 + $0x224] sm:$0xf]
        %v5972 = vld [vmem:[%s5 + $0x228] sm:$0xff]
        %v5973 = vld [vmem:[%s5 + $0x230] sm:$0xf]
        %v5974 = vld [vmem:[%s5 + $0x234] sm:$0xff]
        %v5975 = vld [vmem:[%s5 + $0x23c] sm:$0xf]
        %v6072 = vunpack.c.l.b16 %v5880
        %v6073 = vunpack.c.h.b16 %v5880
        %v6074 = vunpack.c.l.b16 %v5881
        %v6075 = vunpack.c.l.b16 %v5882
        %v6076 = vunpack.c.h.b16 %v5882
        %v6077 = vunpack.c.l.b16 %v5883
        %v6078 = vunpack.c.l.b16 %v5884
        %v6079 = vunpack.c.h.b16 %v5884
        %v6080 = vunpack.c.l.b16 %v5885
        %v6081 = vunpack.c.l.b16 %v5886
        %v6082 = vunpack.c.h.b16 %v5886
        %v6083 = vunpack.c.l.b16 %v5887
        %v6084 = vunpack.c.l.b16 %v5888
        %v6085 = vunpack.c.h.b16 %v5888
        %v6086 = vunpack.c.l.b16 %v5889
        %v6087 = vunpack.c.l.b16 %v5890
        %v6088 = vunpack.c.h.b16 %v5890
        %v6089 = vunpack.c.l.b16 %v5891
        %v6090 = vunpack.c.l.b16 %v5892
        %v6091 = vunpack.c.h.b16 %v5892
        %v6092 = vunpack.c.l.b16 %v5893
        %v6093 = vunpack.c.l.b16 %v5894
        %v6094 = vunpack.c.h.b16 %v5894
        %v6095 = vunpack.c.l.b16 %v5895
        %v6096 = vunpack.c.l.b16 %v5896
        %v6097 = vunpack.c.h.b16 %v5896
        %v6098 = vunpack.c.l.b16 %v5897
        %v6099 = vunpack.c.l.b16 %v5898
        %v6100 = vunpack.c.h.b16 %v5898
        %v6101 = vunpack.c.l.b16 %v5899
        %v6102 = vunpack.c.l.b16 %v5900
        %v6103 = vunpack.c.h.b16 %v5900
        %v6104 = vunpack.c.l.b16 %v5901
        %v6105 = vunpack.c.l.b16 %v5902
        %v6106 = vunpack.c.h.b16 %v5902
        %v6107 = vunpack.c.l.b16 %v5903
        %v6108 = vunpack.c.l.b16 %v5904
        %v6109 = vunpack.c.h.b16 %v5904
        %v6110 = vunpack.c.l.b16 %v5905
        %v6111 = vunpack.c.l.b16 %v5906
        %v6112 = vunpack.c.h.b16 %v5906
        %v6113 = vunpack.c.l.b16 %v5907
        %v6114 = vunpack.c.l.b16 %v5908
        %v6115 = vunpack.c.h.b16 %v5908
        %v6116 = vunpack.c.l.b16 %v5909
        %v6117 = vunpack.c.l.b16 %v5910
        %v6118 = vunpack.c.h.b16 %v5910
        %v6119 = vunpack.c.l.b16 %v5911
        %v6120 = vunpack.c.l.b16 %v5912
        %v6121 = vunpack.c.h.b16 %v5912
        %v6122 = vunpack.c.l.b16 %v5913
        %v6123 = vunpack.c.l.b16 %v5914
        %v6124 = vunpack.c.h.b16 %v5914
        %v6125 = vunpack.c.l.b16 %v5915
        %v6126 = vunpack.c.l.b16 %v5916
        %v6127 = vunpack.c.h.b16 %v5916
        %v6128 = vunpack.c.l.b16 %v5917
        %v6129 = vunpack.c.l.b16 %v5918
        %v6130 = vunpack.c.h.b16 %v5918
        %v6131 = vunpack.c.l.b16 %v5919
        %v6132 = vunpack.c.l.b16 %v5920
        %v6133 = vunpack.c.h.b16 %v5920
        %v6134 = vunpack.c.l.b16 %v5921
        %v6135 = vunpack.c.l.b16 %v5922
        %v6136 = vunpack.c.h.b16 %v5922
        %v6137 = vunpack.c.l.b16 %v5923
        %v6138 = vunpack.c.l.b16 %v5924
        %v6139 = vunpack.c.h.b16 %v5924
        %v6140 = vunpack.c.l.b16 %v5925
        %v6141 = vunpack.c.l.b16 %v5926
        %v6142 = vunpack.c.h.b16 %v5926
        %v6143 = vunpack.c.l.b16 %v5927
        %v6144 = vunpack.c.l.b16 %v5928
        %v6145 = vunpack.c.h.b16 %v5928
        %v6146 = vunpack.c.l.b16 %v5929
        %v6147 = vunpack.c.l.b16 %v5930
        %v6148 = vunpack.c.h.b16 %v5930
        %v6149 = vunpack.c.l.b16 %v5931
        %v6150 = vunpack.c.l.b16 %v5932
        %v6151 = vunpack.c.h.b16 %v5932
        %v6152 = vunpack.c.l.b16 %v5933
        %v6153 = vunpack.c.l.b16 %v5934
        %v6154 = vunpack.c.h.b16 %v5934
        %v6155 = vunpack.c.l.b16 %v5935
        %v6156 = vunpack.c.l.b16 %v5936
        %v6157 = vunpack.c.h.b16 %v5936
        %v6158 = vunpack.c.l.b16 %v5937
        %v6159 = vunpack.c.l.b16 %v5938
        %v6160 = vunpack.c.h.b16 %v5938
        %v6161 = vunpack.c.l.b16 %v5939
        %v6162 = vunpack.c.l.b16 %v5940
        %v6163 = vunpack.c.h.b16 %v5940
        %v6164 = vunpack.c.l.b16 %v5941
        %v6165 = vunpack.c.l.b16 %v5942
        %v6166 = vunpack.c.h.b16 %v5942
        %v6167 = vunpack.c.l.b16 %v5943
        %v6168 = vunpack.c.l.b16 %v5944
        %v6169 = vunpack.c.h.b16 %v5944
        %v6170 = vunpack.c.l.b16 %v5945
        %v6171 = vunpack.c.l.b16 %v5946
        %v6172 = vunpack.c.h.b16 %v5946
        %v6173 = vunpack.c.l.b16 %v5947
        %v6174 = vunpack.c.l.b16 %v5948
        %v6175 = vunpack.c.h.b16 %v5948
        %v6176 = vunpack.c.l.b16 %v5949
        %v6177 = vunpack.c.l.b16 %v5950
        %v6178 = vunpack.c.h.b16 %v5950
        %v6179 = vunpack.c.l.b16 %v5951
        %v6180 = vunpack.c.l.b16 %v5952
        %v6181 = vunpack.c.h.b16 %v5952
        %v6182 = vunpack.c.l.b16 %v5953
        %v6183 = vunpack.c.l.b16 %v5954
        %v6184 = vunpack.c.h.b16 %v5954
        %v6185 = vunpack.c.l.b16 %v5955
        %v6186 = vunpack.c.l.b16 %v5956
        %v6187 = vunpack.c.h.b16 %v5956
        %v6188 = vunpack.c.l.b16 %v5957
        %v6189 = vunpack.c.l.b16 %v5958
        %v6190 = vunpack.c.h.b16 %v5958
        %v6191 = vunpack.c.l.b16 %v5959
        %v6192 = vunpack.c.l.b16 %v5960
        %v6193 = vunpack.c.h.b16 %v5960
        %v6194 = vunpack.c.l.b16 %v5961
        %v6195 = vunpack.c.l.b16 %v5962
        %v6196 = vunpack.c.h.b16 %v5962
        %v6197 = vunpack.c.l.b16 %v5963
        %v6198 = vunpack.c.l.b16 %v5964
        %v6199 = vunpack.c.h.b16 %v5964
        %v6200 = vunpack.c.l.b16 %v5965
        %v6201 = vunpack.c.l.b16 %v5966
        %v6202 = vunpack.c.h.b16 %v5966
        %v6203 = vunpack.c.l.b16 %v5967
        %v6204 = vunpack.c.l.b16 %v5968
        %v6205 = vunpack.c.h.b16 %v5968
        %v6206 = vunpack.c.l.b16 %v5969
        %v6207 = vunpack.c.l.b16 %v5970
        %v6208 = vunpack.c.h.b16 %v5970
        %v6209 = vunpack.c.l.b16 %v5971
        %v6210 = vunpack.c.l.b16 %v5972
        %v6211 = vunpack.c.h.b16 %v5972
        %v6212 = vunpack.c.l.b16 %v5973
        %v6213 = vunpack.c.l.b16 %v5974
        %v6214 = vunpack.c.h.b16 %v5974
        %v6215 = vunpack.c.l.b16 %v5975
        %v6216 = vpack.c.b16 %v6075, %v6072
        %v6217 = vpack.c.b16 %v6076, %v6073
        %v6218 = vpack.c.b16 %v6077, %v6074
        %v6219 = vpack.c.b16 %v6081, %v6078
        %v6220 = vpack.c.b16 %v6082, %v6079
        %v6221 = vpack.c.b16 %v6083, %v6080
        %v6222 = vpack.c.b16 %v6087, %v6084
        %v6223 = vpack.c.b16 %v6088, %v6085
        %v6224 = vpack.c.b16 %v6089, %v6086
        %v6225 = vpack.c.b16 %v6093, %v6090
        %v6226 = vpack.c.b16 %v6094, %v6091
        %v6227 = vpack.c.b16 %v6095, %v6092
        %v6228 = vpack.c.b16 %v6099, %v6096
        %v6229 = vpack.c.b16 %v6100, %v6097
        %v6230 = vpack.c.b16 %v6101, %v6098
        %v6231 = vpack.c.b16 %v6105, %v6102
        %v6232 = vpack.c.b16 %v6106, %v6103
        %v6233 = vpack.c.b16 %v6107, %v6104
        %v6234 = vpack.c.b16 %v6111, %v6108
        %v6235 = vpack.c.b16 %v6112, %v6109
        %v6236 = vpack.c.b16 %v6113, %v6110
        %v6237 = vpack.c.b16 %v6117, %v6114
        %v6238 = vpack.c.b16 %v6118, %v6115
        %v6239 = vpack.c.b16 %v6119, %v6116
        %v6240 = vpack.c.b16 %v6123, %v6120
        %v6241 = vpack.c.b16 %v6124, %v6121
        %v6242 = vpack.c.b16 %v6125, %v6122
        %v6243 = vpack.c.b16 %v6129, %v6126
        %v6244 = vpack.c.b16 %v6130, %v6127
        %v6245 = vpack.c.b16 %v6131, %v6128
        %v6246 = vpack.c.b16 %v6135, %v6132
        %v6247 = vpack.c.b16 %v6136, %v6133
        %v6248 = vpack.c.b16 %v6137, %v6134
        %v6249 = vpack.c.b16 %v6141, %v6138
        %v6250 = vpack.c.b16 %v6142, %v6139
        %v6251 = vpack.c.b16 %v6143, %v6140
        %v6252 = vpack.c.b16 %v6147, %v6144
        %v6253 = vpack.c.b16 %v6148, %v6145
        %v6254 = vpack.c.b16 %v6149, %v6146
        %v6255 = vpack.c.b16 %v6153, %v6150
        %v6256 = vpack.c.b16 %v6154, %v6151
        %v6257 = vpack.c.b16 %v6155, %v6152
        %v6258 = vpack.c.b16 %v6159, %v6156
        %v6259 = vpack.c.b16 %v6160, %v6157
        %v6260 = vpack.c.b16 %v6161, %v6158
        %v6261 = vpack.c.b16 %v6165, %v6162
        %v6262 = vpack.c.b16 %v6166, %v6163
        %v6263 = vpack.c.b16 %v6167, %v6164
        %v6264 = vpack.c.b16 %v6171, %v6168
        %v6265 = vpack.c.b16 %v6172, %v6169
        %v6266 = vpack.c.b16 %v6173, %v6170
        %v6267 = vpack.c.b16 %v6177, %v6174
        %v6268 = vpack.c.b16 %v6178, %v6175
        %v6269 = vpack.c.b16 %v6179, %v6176
        %v6270 = vpack.c.b16 %v6183, %v6180
        %v6271 = vpack.c.b16 %v6184, %v6181
        %v6272 = vpack.c.b16 %v6185, %v6182
        %v6273 = vpack.c.b16 %v6189, %v6186
        %v6274 = vpack.c.b16 %v6190, %v6187
        %v6275 = vpack.c.b16 %v6191, %v6188
        %v6276 = vpack.c.b16 %v6195, %v6192
        %v6277 = vpack.c.b16 %v6196, %v6193
        %v6278 = vpack.c.b16 %v6197, %v6194
        %v6279 = vpack.c.b16 %v6201, %v6198
        %v6280 = vpack.c.b16 %v6202, %v6199
        %v6281 = vpack.c.b16 %v6203, %v6200
        %v6282 = vpack.c.b16 %v6207, %v6204
        %v6283 = vpack.c.b16 %v6208, %v6205
        %v6284 = vpack.c.b16 %v6209, %v6206
        %v6285 = vpack.c.b16 %v6213, %v6210
        %v6286 = vpack.c.b16 %v6214, %v6211
        %v6287 = vpack.c.b16 %v6215, %v6212
        %6360 = vmatpush.bf16.msra.mxu0 %v6237
        %6361 = vmatpush.bf16.msra.mxu0 %v6234
        %6362 = vmatpush.bf16.msra.mxu0 %v6231
        %6363 = vmatpush.bf16.msra.mxu0 %v6228
        %6364 = vmatpush.bf16.msra.mxu0 %v6225
        %6365 = vmatpush.bf16.msra.mxu0 %v6222
        %6366 = vmatpush.bf16.msra.mxu0 %v6219
        %6367 = vmatpush.bf16.msra.mxu0 %v6216
        %6368 = vmatmul.bf16.gmra.mxu0 %v5840
        %v6369 = vpop.f32.mrf.mxu0
        %v6370 = vadd.f32 0.0, %v6369
        %v6371 = vpop.f32.mrf.mxu0
        %v6372 = vadd.f32 0.0, %v6371
        %6373 = vmatmul.bf16.gmra.mxu0 %v5841
        %v6374 = vpop.f32.mrf.mxu0
        %v6375 = vadd.f32 0.0, %v6374
        %v6376 = vpop.f32.mrf.mxu0
        %v6377 = vadd.f32 0.0, %v6376
        %6378 = vmatmul.bf16.gmra.mxu0 %v5842
        %v6379 = vpop.f32.mrf.mxu0
        %v6380 = vadd.f32 0.0, %v6379
        %v6381 = vpop.f32.mrf.mxu0
        %v6382 = vadd.f32 0.0, %v6381
        %6383 = vmatmul.bf16.gmra.mxu0 %v5843
        %v6384 = vpop.f32.mrf.mxu0
        %v6385 = vadd.f32 0.0, %v6384
        %v6386 = vpop.f32.mrf.mxu0
        %v6387 = vadd.f32 0.0, %v6386
        %6388 = vdwg.mxu0
        %6389 = vmatpush.bf16.msra.mxu0 %v6261
        %6390 = vmatpush.bf16.msra.mxu0 %v6258
        %6391 = vmatpush.bf16.msra.mxu0 %v6255
        %6392 = vmatpush.bf16.msra.mxu0 %v6252
        %6393 = vmatpush.bf16.msra.mxu0 %v6249
        %6394 = vmatpush.bf16.msra.mxu0 %v6246
        %6395 = vmatpush.bf16.msra.mxu0 %v6243
        %6396 = vmatpush.bf16.msra.mxu0 %v6240
        %6397 = vmatmul.bf16.gmra.mxu0 %v5856
        %v6398 = vpop.f32.mrf.mxu0
        %v6399 = vadd.f32 %v6370, %v6398
        %v6400 = vpop.f32.mrf.mxu0
        %v6401 = vadd.f32 %v6372, %v6400
        %6402 = vmatmul.bf16.gmra.mxu0 %v5857
        %v6403 = vpop.f32.mrf.mxu0
        %v6404 = vadd.f32 %v6375, %v6403
        %v6405 = vpop.f32.mrf.mxu0
        %v6406 = vadd.f32 %v6377, %v6405
        %6407 = vmatmul.bf16.gmra.mxu0 %v5858
        %v6408 = vpop.f32.mrf.mxu0
        %v6409 = vadd.f32 %v6380, %v6408
        %v6410 = vpop.f32.mrf.mxu0
        %v6411 = vadd.f32 %v6382, %v6410
        %6412 = vmatmul.bf16.gmra.mxu0 %v5859
        %v6413 = vpop.f32.mrf.mxu0
        %v6414 = vadd.f32 %v6385, %v6413
        %v6415 = vpop.f32.mrf.mxu0
        %v6416 = vadd.f32 %v6387, %v6415
        %6417 = vdwg.mxu0
        %6418 = vmatpush.bf16.msra.mxu0 %v6285
        %6419 = vmatpush.bf16.msra.mxu0 %v6282
        %6420 = vmatpush.bf16.msra.mxu0 %v6279
        %6421 = vmatpush.bf16.msra.mxu0 %v6276
        %6422 = vmatpush.bf16.msra.mxu0 %v6273
        %6423 = vmatpush.bf16.msra.mxu0 %v6270
        %6424 = vmatpush.bf16.msra.mxu0 %v6267
        %6425 = vmatpush.bf16.msra.mxu0 %v6264
        %6426 = vmatmul.bf16.gmra.mxu0 %v5872
        %v6427 = vpop.f32.mrf.mxu0
        %v6428 = vadd.f32 %v6399, %v6427
        %v6429 = vpop.f32.mrf.mxu0
        %v6430 = vadd.f32 %v6401, %v6429
        %6431 = vmatmul.bf16.gmra.mxu0 %v5873
        %v6432 = vpop.f32.mrf.mxu0
        %v6433 = vadd.f32 %v6404, %v6432
        %v6434 = vpop.f32.mrf.mxu0
        %v6435 = vadd.f32 %v6406, %v6434
        %6436 = vmatmul.bf16.gmra.mxu0 %v5874
        %v6437 = vpop.f32.mrf.mxu0
        %v6438 = vadd.f32 %v6409, %v6437
        %v6439 = vpop.f32.mrf.mxu0
        %v6440 = vadd.f32 %v6411, %v6439
        %6441 = vmatmul.bf16.gmra.mxu0 %v5875
        %v6442 = vpop.f32.mrf.mxu0
        %v6443 = vadd.f32 %v6414, %v6442
        %v6444 = vpop.f32.mrf.mxu0
        %v6445 = vadd.f32 %v6416, %v6444
        %6446 = vdwg.mxu0
        %6447 = vmatpush.bf16.msra.mxu0 %v6238
        %6448 = vmatpush.bf16.msra.mxu0 %v6235
        %6449 = vmatpush.bf16.msra.mxu0 %v6232
        %6450 = vmatpush.bf16.msra.mxu0 %v6229
        %6451 = vmatpush.bf16.msra.mxu0 %v6226
        %6452 = vmatpush.bf16.msra.mxu0 %v6223
        %6453 = vmatpush.bf16.msra.mxu0 %v6220
        %6454 = vmatpush.bf16.msra.mxu0 %v6217
        %6455 = vmatmul.bf16.gmra.mxu0 %v5840
        %v6456 = vpop.f32.mrf.mxu0
        %v6457 = vadd.f32 0.0, %v6456
        %v6458 = vpop.f32.mrf.mxu0
        %v6459 = vadd.f32 0.0, %v6458
        %6460 = vmatmul.bf16.gmra.mxu0 %v5841
        %v6461 = vpop.f32.mrf.mxu0
        %v6462 = vadd.f32 0.0, %v6461
        %v6463 = vpop.f32.mrf.mxu0
        %v6464 = vadd.f32 0.0, %v6463
        %6465 = vmatmul.bf16.gmra.mxu0 %v5842
        %v6466 = vpop.f32.mrf.mxu0
        %v6467 = vadd.f32 0.0, %v6466
        %v6468 = vpop.f32.mrf.mxu0
        %v6469 = vadd.f32 0.0, %v6468
        %6470 = vmatmul.bf16.gmra.mxu0 %v5843
        %v6471 = vpop.f32.mrf.mxu0
        %v6472 = vadd.f32 0.0, %v6471
        %v6473 = vpop.f32.mrf.mxu0
        %v6474 = vadd.f32 0.0, %v6473
        %6475 = vdwg.mxu0
        %6476 = vmatpush.bf16.msra.mxu0 %v6262
        %6477 = vmatpush.bf16.msra.mxu0 %v6259
        %6478 = vmatpush.bf16.msra.mxu0 %v6256
        %6479 = vmatpush.bf16.msra.mxu0 %v6253
        %6480 = vmatpush.bf16.msra.mxu0 %v6250
        %6481 = vmatpush.bf16.msra.mxu0 %v6247
        %6482 = vmatpush.bf16.msra.mxu0 %v6244
        %6483 = vmatpush.bf16.msra.mxu0 %v6241
        %6484 = vmatmul.bf16.gmra.mxu0 %v5856
        %v6485 = vpop.f32.mrf.mxu0
        %v6486 = vadd.f32 %v6457, %v6485
        %v6487 = vpop.f32.mrf.mxu0
        %v6488 = vadd.f32 %v6459, %v6487
        %6489 = vmatmul.bf16.gmra.mxu0 %v5857
        %v6490 = vpop.f32.mrf.mxu0
        %v6491 = vadd.f32 %v6462, %v6490
        %v6492 = vpop.f32.mrf.mxu0
        %v6493 = vadd.f32 %v6464, %v6492
        %6494 = vmatmul.bf16.gmra.mxu0 %v5858
        %v6495 = vpop.f32.mrf.mxu0
        %v6496 = vadd.f32 %v6467, %v6495
        %v6497 = vpop.f32.mrf.mxu0
        %v6498 = vadd.f32 %v6469, %v6497
        %6499 = vmatmul.bf16.gmra.mxu0 %v5859
        %v6500 = vpop.f32.mrf.mxu0
        %v6501 = vadd.f32 %v6472, %v6500
        %v6502 = vpop.f32.mrf.mxu0
        %v6503 = vadd.f32 %v6474, %v6502
        %6504 = vdwg.mxu0
        %6505 = vmatpush.bf16.msra.mxu0 %v6286
        %6506 = vmatpush.bf16.msra.mxu0 %v6283
        %6507 = vmatpush.bf16.msra.mxu0 %v6280
        %6508 = vmatpush.bf16.msra.mxu0 %v6277
        %6509 = vmatpush.bf16.msra.mxu0 %v6274
        %6510 = vmatpush.bf16.msra.mxu0 %v6271
        %6511 = vmatpush.bf16.msra.mxu0 %v6268
        %6512 = vmatpush.bf16.msra.mxu0 %v6265
        %6513 = vmatmul.bf16.gmra.mxu0 %v5872
        %v6514 = vpop.f32.mrf.mxu0
        %v6515 = vadd.f32 %v6486, %v6514
        %v6516 = vpop.f32.mrf.mxu0
        %v6517 = vadd.f32 %v6488, %v6516
        %6518 = vmatmul.bf16.gmra.mxu0 %v5873
        %v6519 = vpop.f32.mrf.mxu0
        %v6520 = vadd.f32 %v6491, %v6519
        %v6521 = vpop.f32.mrf.mxu0
        %v6522 = vadd.f32 %v6493, %v6521
        %6523 = vmatmul.bf16.gmra.mxu0 %v5874
        %v6524 = vpop.f32.mrf.mxu0
        %v6525 = vadd.f32 %v6496, %v6524
        %v6526 = vpop.f32.mrf.mxu0
        %v6527 = vadd.f32 %v6498, %v6526
        %6528 = vmatmul.bf16.gmra.mxu0 %v5875
        %v6529 = vpop.f32.mrf.mxu0
        %v6530 = vadd.f32 %v6501, %v6529
        %v6531 = vpop.f32.mrf.mxu0
        %v6532 = vadd.f32 %v6503, %v6531
        %6533 = vdwg.mxu0
        %6534 = vmatpush.bf16.msra.mxu0 %v6239
        %6535 = vmatpush.bf16.msra.mxu0 %v6236
        %6536 = vmatpush.bf16.msra.mxu0 %v6233
        %6537 = vmatpush.bf16.msra.mxu0 %v6230
        %6538 = vmatpush.bf16.msra.mxu0 %v6227
        %6539 = vmatpush.bf16.msra.mxu0 %v6224
        %6540 = vmatpush.bf16.msra.mxu0 %v6221
        %6541 = vmatpush.bf16.msra.mxu0 %v6218
        %6542 = vmatmul.bf16.gmra.mxu0 %v5840
        %v6543 = vpop.f32.mrf.mxu0
        %v6544 = vadd.f32 0.0, %v6543
        %v6545 = vpop.f32.mrf.mxu0
        %v6546 = vadd.f32 0.0, %v6545
        %6547 = vmatmul.bf16.gmra.mxu0 %v5841
        %v6548 = vpop.f32.mrf.mxu0
        %v6549 = vadd.f32 0.0, %v6548
        %v6550 = vpop.f32.mrf.mxu0
        %v6551 = vadd.f32 0.0, %v6550
        %6552 = vmatmul.bf16.gmra.mxu0 %v5842
        %v6553 = vpop.f32.mrf.mxu0
        %v6554 = vadd.f32 0.0, %v6553
        %v6555 = vpop.f32.mrf.mxu0
        %v6556 = vadd.f32 0.0, %v6555
        %6557 = vmatmul.bf16.gmra.mxu0 %v5843
        %v6558 = vpop.f32.mrf.mxu0
        %v6559 = vadd.f32 0.0, %v6558
        %v6560 = vpop.f32.mrf.mxu0
        %v6561 = vadd.f32 0.0, %v6560
        %6562 = vdwg.mxu0
        %6563 = vmatpush.bf16.msra.mxu0 %v6263
        %6564 = vmatpush.bf16.msra.mxu0 %v6260
        %6565 = vmatpush.bf16.msra.mxu0 %v6257
        %6566 = vmatpush.bf16.msra.mxu0 %v6254
        %6567 = vmatpush.bf16.msra.mxu0 %v6251
        %6568 = vmatpush.bf16.msra.mxu0 %v6248
        %6569 = vmatpush.bf16.msra.mxu0 %v6245
        %6570 = vmatpush.bf16.msra.mxu0 %v6242
        %6571 = vmatmul.bf16.gmra.mxu0 %v5856
        %v6572 = vpop.f32.mrf.mxu0
        %v6573 = vadd.f32 %v6544, %v6572
        %v6574 = vpop.f32.mrf.mxu0
        %v6575 = vadd.f32 %v6546, %v6574
        %6576 = vmatmul.bf16.gmra.mxu0 %v5857
        %v6577 = vpop.f32.mrf.mxu0
        %v6578 = vadd.f32 %v6549, %v6577
        %v6579 = vpop.f32.mrf.mxu0
        %v6580 = vadd.f32 %v6551, %v6579
        %6581 = vmatmul.bf16.gmra.mxu0 %v5858
        %v6582 = vpop.f32.mrf.mxu0
        %v6583 = vadd.f32 %v6554, %v6582
        %v6584 = vpop.f32.mrf.mxu0
        %v6585 = vadd.f32 %v6556, %v6584
        %6586 = vmatmul.bf16.gmra.mxu0 %v5859
        %v6587 = vpop.f32.mrf.mxu0
        %v6588 = vadd.f32 %v6559, %v6587
        %v6589 = vpop.f32.mrf.mxu0
        %v6590 = vadd.f32 %v6561, %v6589
        %6591 = vdwg.mxu0
        %6592 = vmatpush.bf16.msra.mxu0 %v6287
        %6593 = vmatpush.bf16.msra.mxu0 %v6284
        %6594 = vmatpush.bf16.msra.mxu0 %v6281
        %6595 = vmatpush.bf16.msra.mxu0 %v6278
        %6596 = vmatpush.bf16.msra.mxu0 %v6275
        %6597 = vmatpush.bf16.msra.mxu0 %v6272
        %6598 = vmatpush.bf16.msra.mxu0 %v6269
        %6599 = vmatpush.bf16.msra.mxu0 %v6266
        %6600 = vmatmul.bf16.gmra.mxu0 %v5872
        %v6601 = vpop.f32.mrf.mxu0
        %v6602 = vadd.f32 %v6573, %v6601
        %v6603 = vpop.f32.mrf.mxu0
        %v6604 = vadd.f32 %v6575, %v6603
        %6605 = vmatmul.bf16.gmra.mxu0 %v5873
        %v6606 = vpop.f32.mrf.mxu0
        %v6607 = vadd.f32 %v6578, %v6606
        %v6608 = vpop.f32.mrf.mxu0
        %v6609 = vadd.f32 %v6580, %v6608
        %6610 = vmatmul.bf16.gmra.mxu0 %v5874
        %v6611 = vpop.f32.mrf.mxu0
        %v6612 = vadd.f32 %v6583, %v6611
        %v6613 = vpop.f32.mrf.mxu0
        %v6614 = vadd.f32 %v6585, %v6613
        %6615 = vmatmul.bf16.gmra.mxu0 %v5875
        %v6616 = vpop.f32.mrf.mxu0
        %v6617 = vadd.f32 %v6588, %v6616
        %v6618 = vpop.f32.mrf.mxu0
        %v6619 = vadd.f32 %v6590, %v6618
        %6620 = vdwg.mxu0
        %v6621 = vadd.f32 %v440, %v6428
        %v6622 = vadd.f32 %v441, %v6515
        %v6623 = vadd.f32 %v442, %v6602
        %v6624 = vadd.f32 %v443, %v6430
        %v6625 = vadd.f32 %v444, %v6517
        %v6626 = vadd.f32 %v445, %v6604
        %v6627 = vadd.f32 %v446, %v6433
        %v6628 = vadd.f32 %v447, %v6520
        %v6629 = vadd.f32 %v448, %v6607
        %v6630 = vadd.f32 %v449, %v6435
        %v6631 = vadd.f32 %v450, %v6522
        %v6632 = vadd.f32 %v451, %v6609
        %v6633 = vadd.f32 %v452, %v6438
        %v6634 = vadd.f32 %v453, %v6525
        %v6635 = vadd.f32 %v454, %v6612
        %v6636 = vadd.f32 %v455, %v6440
        %v6637 = vadd.f32 %v456, %v6527
        %v6638 = vadd.f32 %v457, %v6614
        %v6639 = vadd.f32 %v458, %v6443
        %v6640 = vadd.f32 %v459, %v6530
        %v6641 = vadd.f32 %v460, %v6617
        %v6642 = vadd.f32 %v461, %v6445
        %v6643 = vadd.f32 %v462, %v6532
        %v6644 = vadd.f32 %v463, %v6619
        %v6645 = vld [vmem:[%s6] sm:$0x7]
        %v6647 = vperm.slane %v6645, 0
        %v6648 = vperm.slane %v6645, 1
        %v6649 = vperm.slane %v6645, 2
        %v6653 = vadd.f32 %v6621, %v6647
        %v6654 = vadd.f32 %v6622, %v6648
        %v6655 = vadd.f32 %v6623, %v6649
        %v6656 = vadd.f32 %v6624, %v6647
        %v6657 = vadd.f32 %v6625, %v6648
        %v6658 = vadd.f32 %v6626, %v6649
        %v6659 = vadd.f32 %v6627, %v6647
        %v6660 = vadd.f32 %v6628, %v6648
        %v6661 = vadd.f32 %v6629, %v6649
        %v6662 = vadd.f32 %v6630, %v6647
        %v6663 = vadd.f32 %v6631, %v6648
        %v6664 = vadd.f32 %v6632, %v6649
        %v6665 = vadd.f32 %v6633, %v6647
        %v6666 = vadd.f32 %v6634, %v6648
        %v6667 = vadd.f32 %v6635, %v6649
        %v6668 = vadd.f32 %v6636, %v6647
        %v6669 = vadd.f32 %v6637, %v6648
        %v6670 = vadd.f32 %v6638, %v6649
        %v6671 = vadd.f32 %v6639, %v6647
        %v6672 = vadd.f32 %v6640, %v6648
        %v6673 = vadd.f32 %v6641, %v6649
        %v6674 = vadd.f32 %v6642, %v6647
        %v6675 = vadd.f32 %v6643, %v6648
        %v6676 = vadd.f32 %v6644, %v6649
        %v6677 = vld [vmem:[%s7] sm:$0x7]
        %v6678 = vld [vmem:[%s8] sm:$0x7]
        %v6679 = vadd.f32 %v6653, %v6654
        %v6680 = vadd.f32 %v6679, %v6655
        %6681 = vadd.xlane.f32.xlu0 %v6680
        %v6682 = vpop.xlane.xlu0 %6681
        %v6683 = vadd.f32 %v6656, %v6657
        %v6684 = vadd.f32 %v6683, %v6658
        %6685 = vadd.xlane.f32.xlu0 %v6684
        %v6686 = vpop.xlane.xlu0 %6685
        %v6687 = vadd.f32 %v6659, %v6660
        %v6688 = vadd.f32 %v6687, %v6661
        %6689 = vadd.xlane.f32.xlu0 %v6688
        %v6690 = vpop.xlane.xlu0 %6689
        %v6691 = vadd.f32 %v6662, %v6663
        %v6692 = vadd.f32 %v6691, %v6664
        %6693 = vadd.xlane.f32.xlu0 %v6692
        %v6694 = vpop.xlane.xlu0 %6693
        %v6695 = vadd.f32 %v6665, %v6666
        %v6696 = vadd.f32 %v6695, %v6667
        %6697 = vadd.xlane.f32.xlu0 %v6696
        %v6698 = vpop.xlane.xlu0 %6697
        %v6699 = vadd.f32 %v6668, %v6669
        %v6700 = vadd.f32 %v6699, %v6670
        %6701 = vadd.xlane.f32.xlu0 %v6700
        %v6702 = vpop.xlane.xlu0 %6701
        %v6703 = vadd.f32 %v6671, %v6672
        %v6704 = vadd.f32 %v6703, %v6673
        %6705 = vadd.xlane.f32.xlu0 %v6704
        %v6706 = vpop.xlane.xlu0 %6705
        %v6707 = vadd.f32 %v6674, %v6675
        %v6708 = vadd.f32 %v6707, %v6676
        %6709 = vadd.xlane.f32.xlu0 %v6708
        %v6710 = vpop.xlane.xlu0 %6709
        %v6711 = vmul.f32 %v6682, %v504
        %v6712 = vmul.f32 %v6686, %v504
        %v6713 = vmul.f32 %v6690, %v504
        %v6714 = vmul.f32 %v6694, %v504
        %v6715 = vmul.f32 %v6698, %v504
        %v6716 = vmul.f32 %v6702, %v504
        %v6717 = vmul.f32 %v6706, %v504
        %v6718 = vmul.f32 %v6710, %v504
        %v6719 = vsub.f32 %v6653, %v6711
        %v6720 = vsub.f32 %v6654, %v6711
        %v6721 = vsub.f32 %v6655, %v6711
        %v6722 = vsub.f32 %v6656, %v6712
        %v6723 = vsub.f32 %v6657, %v6712
        %v6724 = vsub.f32 %v6658, %v6712
        %v6725 = vsub.f32 %v6659, %v6713
        %v6726 = vsub.f32 %v6660, %v6713
        %v6727 = vsub.f32 %v6661, %v6713
        %v6728 = vsub.f32 %v6662, %v6714
        %v6729 = vsub.f32 %v6663, %v6714
        %v6730 = vsub.f32 %v6664, %v6714
        %v6731 = vsub.f32 %v6665, %v6715
        %v6732 = vsub.f32 %v6666, %v6715
        %v6733 = vsub.f32 %v6667, %v6715
        %v6734 = vsub.f32 %v6668, %v6716
        %v6735 = vsub.f32 %v6669, %v6716
        %v6736 = vsub.f32 %v6670, %v6716
        %v6737 = vsub.f32 %v6671, %v6717
        %v6738 = vsub.f32 %v6672, %v6717
        %v6739 = vsub.f32 %v6673, %v6717
        %v6740 = vsub.f32 %v6674, %v6718
        %v6741 = vsub.f32 %v6675, %v6718
        %v6742 = vsub.f32 %v6676, %v6718
        %v6743 = vmul.f32 %v6719, %v6719
        %v6744 = vmul.f32 %v6720, %v6720
        %v6745 = vmul.f32 %v6721, %v6721
        %v6746 = vmul.f32 %v6722, %v6722
        %v6747 = vmul.f32 %v6723, %v6723
        %v6748 = vmul.f32 %v6724, %v6724
        %v6749 = vmul.f32 %v6725, %v6725
        %v6750 = vmul.f32 %v6726, %v6726
        %v6751 = vmul.f32 %v6727, %v6727
        %v6752 = vmul.f32 %v6728, %v6728
        %v6753 = vmul.f32 %v6729, %v6729
        %v6754 = vmul.f32 %v6730, %v6730
        %v6755 = vmul.f32 %v6731, %v6731
        %v6756 = vmul.f32 %v6732, %v6732
        %v6757 = vmul.f32 %v6733, %v6733
        %v6758 = vmul.f32 %v6734, %v6734
        %v6759 = vmul.f32 %v6735, %v6735
        %v6760 = vmul.f32 %v6736, %v6736
        %v6761 = vmul.f32 %v6737, %v6737
        %v6762 = vmul.f32 %v6738, %v6738
        %v6763 = vmul.f32 %v6739, %v6739
        %v6764 = vmul.f32 %v6740, %v6740
        %v6765 = vmul.f32 %v6741, %v6741
        %v6766 = vmul.f32 %v6742, %v6742
        %v6767 = vadd.f32 %v6743, %v6744
        %v6768 = vadd.f32 %v6767, %v6745
        %6769 = vadd.xlane.f32.xlu0 %v6768
        %v6770 = vpop.xlane.xlu0 %6769
        %v6771 = vadd.f32 %v6746, %v6747
        %v6772 = vadd.f32 %v6771, %v6748
        %6773 = vadd.xlane.f32.xlu0 %v6772
        %v6774 = vpop.xlane.xlu0 %6773
        %v6775 = vadd.f32 %v6749, %v6750
        %v6776 = vadd.f32 %v6775, %v6751
        %6777 = vadd.xlane.f32.xlu0 %v6776
        %v6778 = vpop.xlane.xlu0 %6777
        %v6779 = vadd.f32 %v6752, %v6753
        %v6780 = vadd.f32 %v6779, %v6754
        %6781 = vadd.xlane.f32.xlu0 %v6780
        %v6782 = vpop.xlane.xlu0 %6781
        %v6783 = vadd.f32 %v6755, %v6756
        %v6784 = vadd.f32 %v6783, %v6757
        %6785 = vadd.xlane.f32.xlu0 %v6784
        %v6786 = vpop.xlane.xlu0 %6785
        %v6787 = vadd.f32 %v6758, %v6759
        %v6788 = vadd.f32 %v6787, %v6760
        %6789 = vadd.xlane.f32.xlu0 %v6788
        %v6790 = vpop.xlane.xlu0 %6789
        %v6791 = vadd.f32 %v6761, %v6762
        %v6792 = vadd.f32 %v6791, %v6763
        %6793 = vadd.xlane.f32.xlu0 %v6792
        %v6794 = vpop.xlane.xlu0 %6793
        %v6795 = vadd.f32 %v6764, %v6765
        %v6796 = vadd.f32 %v6795, %v6766
        %6797 = vadd.xlane.f32.xlu0 %v6796
        %v6798 = vpop.xlane.xlu0 %6797
        %v6799 = vmul.f32 %v6770, %v504
        %v6800 = vmul.f32 %v6774, %v504
        %v6801 = vmul.f32 %v6778, %v504
        %v6802 = vmul.f32 %v6782, %v504
        %v6803 = vmul.f32 %v6786, %v504
        %v6804 = vmul.f32 %v6790, %v504
        %v6805 = vmul.f32 %v6794, %v504
        %v6806 = vmul.f32 %v6798, %v504
        %v6807 = vadd.f32 %v6799, 1e-05
        %v6808 = vadd.f32 %v6800, 1e-05
        %v6809 = vadd.f32 %v6801, 1e-05
        %v6810 = vadd.f32 %v6802, 1e-05
        %v6811 = vadd.f32 %v6803, 1e-05
        %v6812 = vadd.f32 %v6804, 1e-05
        %v6813 = vadd.f32 %v6805, 1e-05
        %v6814 = vadd.f32 %v6806, 1e-05
        %v6815 = vrsqrt.pop %v6807
        %v6816 = vmul.f32 %v6815, %v6807
        %v6817 = vmul.f32 %v6816, %v6815
        %v6818 = vmul.f32 0.5, %v6817
        %v6819 = vsub.f32 1.5, %v6818
        %v6820 = vmul.f32 %v6815, %v6819
        %vm6821 = vweird.f32 %v6807
        %vm6822 = vweird.f32 %v6815
        %vm6823 = vmor %vm6821, %vm6822
        %v6824 = vsel %vm6823, %v6815, %v6820
        %v6825 = vrsqrt.pop %v6808
        %v6826 = vmul.f32 %v6825, %v6808
        %v6827 = vmul.f32 %v6826, %v6825
        %v6828 = vmul.f32 0.5, %v6827
        %v6829 = vsub.f32 1.5, %v6828
        %v6830 = vmul.f32 %v6825, %v6829
        %vm6831 = vweird.f32 %v6808
        %vm6832 = vweird.f32 %v6825
        %vm6833 = vmor %vm6831, %vm6832
        %v6834 = vsel %vm6833, %v6825, %v6830
        %v6835 = vrsqrt.pop %v6809
        %v6836 = vmul.f32 %v6835, %v6809
        %v6837 = vmul.f32 %v6836, %v6835
        %v6838 = vmul.f32 0.5, %v6837
        %v6839 = vsub.f32 1.5, %v6838
        %v6840 = vmul.f32 %v6835, %v6839
        %vm6841 = vweird.f32 %v6809
        %vm6842 = vweird.f32 %v6835
        %vm6843 = vmor %vm6841, %vm6842
        %v6844 = vsel %vm6843, %v6835, %v6840
        %v6845 = vrsqrt.pop %v6810
        %v6846 = vmul.f32 %v6845, %v6810
        %v6847 = vmul.f32 %v6846, %v6845
        %v6848 = vmul.f32 0.5, %v6847
        %v6849 = vsub.f32 1.5, %v6848
        %v6850 = vmul.f32 %v6845, %v6849
        %vm6851 = vweird.f32 %v6810
        %vm6852 = vweird.f32 %v6845
        %vm6853 = vmor %vm6851, %vm6852
        %v6854 = vsel %vm6853, %v6845, %v6850
        %v6855 = vrsqrt.pop %v6811
        %v6856 = vmul.f32 %v6855, %v6811
        %v6857 = vmul.f32 %v6856, %v6855
        %v6858 = vmul.f32 0.5, %v6857
        %v6859 = vsub.f32 1.5, %v6858
        %v6860 = vmul.f32 %v6855, %v6859
        %vm6861 = vweird.f32 %v6811
        %vm6862 = vweird.f32 %v6855
        %vm6863 = vmor %vm6861, %vm6862
        %v6864 = vsel %vm6863, %v6855, %v6860
        %v6865 = vrsqrt.pop %v6812
        %v6866 = vmul.f32 %v6865, %v6812
        %v6867 = vmul.f32 %v6866, %v6865
        %v6868 = vmul.f32 0.5, %v6867
        %v6869 = vsub.f32 1.5, %v6868
        %v6870 = vmul.f32 %v6865, %v6869
        %vm6871 = vweird.f32 %v6812
        %vm6872 = vweird.f32 %v6865
        %vm6873 = vmor %vm6871, %vm6872
        %v6874 = vsel %vm6873, %v6865, %v6870
        %v6875 = vrsqrt.pop %v6813
        %v6876 = vmul.f32 %v6875, %v6813
        %v6877 = vmul.f32 %v6876, %v6875
        %v6878 = vmul.f32 0.5, %v6877
        %v6879 = vsub.f32 1.5, %v6878
        %v6880 = vmul.f32 %v6875, %v6879
        %vm6881 = vweird.f32 %v6813
        %vm6882 = vweird.f32 %v6875
        %vm6883 = vmor %vm6881, %vm6882
        %v6884 = vsel %vm6883, %v6875, %v6880
        %v6885 = vrsqrt.pop %v6814
        %v6886 = vmul.f32 %v6885, %v6814
        %v6887 = vmul.f32 %v6886, %v6885
        %v6888 = vmul.f32 0.5, %v6887
        %v6889 = vsub.f32 1.5, %v6888
        %v6890 = vmul.f32 %v6885, %v6889
        %vm6891 = vweird.f32 %v6814
        %vm6892 = vweird.f32 %v6885
        %vm6893 = vmor %vm6891, %vm6892
        %v6894 = vsel %vm6893, %v6885, %v6890
        %v6895 = vmul.f32 %v6719, %v6824
        %v6896 = vmul.f32 %v6720, %v6824
        %v6897 = vmul.f32 %v6721, %v6824
        %v6898 = vmul.f32 %v6722, %v6834
        %v6899 = vmul.f32 %v6723, %v6834
        %v6900 = vmul.f32 %v6724, %v6834
        %v6901 = vmul.f32 %v6725, %v6844
        %v6902 = vmul.f32 %v6726, %v6844
        %v6903 = vmul.f32 %v6727, %v6844
        %v6904 = vmul.f32 %v6728, %v6854
        %v6905 = vmul.f32 %v6729, %v6854
        %v6906 = vmul.f32 %v6730, %v6854
        %v6907 = vmul.f32 %v6731, %v6864
        %v6908 = vmul.f32 %v6732, %v6864
        %v6909 = vmul.f32 %v6733, %v6864
        %v6910 = vmul.f32 %v6734, %v6874
        %v6911 = vmul.f32 %v6735, %v6874
        %v6912 = vmul.f32 %v6736, %v6874
        %v6913 = vmul.f32 %v6737, %v6884
        %v6914 = vmul.f32 %v6738, %v6884
        %v6915 = vmul.f32 %v6739, %v6884
        %v6916 = vmul.f32 %v6740, %v6894
        %v6917 = vmul.f32 %v6741, %v6894
        %v6918 = vmul.f32 %v6742, %v6894
        %v6920 = vperm.slane %v6677, 0
        %v6921 = vperm.slane %v6677, 1
        %v6922 = vperm.slane %v6677, 2
        %v6926 = vmul.f32 %v6895, %v6920
        %v6927 = vmul.f32 %v6896, %v6921
        %v6928 = vmul.f32 %v6897, %v6922
        %v6929 = vmul.f32 %v6898, %v6920
        %v6930 = vmul.f32 %v6899, %v6921
        %v6931 = vmul.f32 %v6900, %v6922
        %v6932 = vmul.f32 %v6901, %v6920
        %v6933 = vmul.f32 %v6902, %v6921
        %v6934 = vmul.f32 %v6903, %v6922
        %v6935 = vmul.f32 %v6904, %v6920
        %v6936 = vmul.f32 %v6905, %v6921
        %v6937 = vmul.f32 %v6906, %v6922
        %v6938 = vmul.f32 %v6907, %v6920
        %v6939 = vmul.f32 %v6908, %v6921
        %v6940 = vmul.f32 %v6909, %v6922
        %v6941 = vmul.f32 %v6910, %v6920
        %v6942 = vmul.f32 %v6911, %v6921
        %v6943 = vmul.f32 %v6912, %v6922
        %v6944 = vmul.f32 %v6913, %v6920
        %v6945 = vmul.f32 %v6914, %v6921
        %v6946 = vmul.f32 %v6915, %v6922
        %v6947 = vmul.f32 %v6916, %v6920
        %v6948 = vmul.f32 %v6917, %v6921
        %v6949 = vmul.f32 %v6918, %v6922
        %v6951 = vperm.slane %v6678, 0
        %v6952 = vperm.slane %v6678, 1
        %v6953 = vperm.slane %v6678, 2
        %v6957 = vadd.f32 %v6926, %v6951
        %v6958 = vadd.f32 %v6927, %v6952
        %v6959 = vadd.f32 %v6928, %v6953
        %v6960 = vadd.f32 %v6929, %v6951
        %v6961 = vadd.f32 %v6930, %v6952
        %v6962 = vadd.f32 %v6931, %v6953
        %v6963 = vadd.f32 %v6932, %v6951
        %v6964 = vadd.f32 %v6933, %v6952
        %v6965 = vadd.f32 %v6934, %v6953
        %v6966 = vadd.f32 %v6935, %v6951
        %v6967 = vadd.f32 %v6936, %v6952
        %v6968 = vadd.f32 %v6937, %v6953
        %v6969 = vadd.f32 %v6938, %v6951
        %v6970 = vadd.f32 %v6939, %v6952
        %v6971 = vadd.f32 %v6940, %v6953
        %v6972 = vadd.f32 %v6941, %v6951
        %v6973 = vadd.f32 %v6942, %v6952
        %v6974 = vadd.f32 %v6943, %v6953
        %v6975 = vadd.f32 %v6944, %v6951
        %v6976 = vadd.f32 %v6945, %v6952
        %v6977 = vadd.f32 %v6946, %v6953
        %v6978 = vadd.f32 %v6947, %v6951
        %v6979 = vadd.f32 %v6948, %v6952
        %v6980 = vadd.f32 %v6949, %v6953
        %v6981 = vpack.c.bf16 %v6960, %v6957
        %v6982 = vpack.c.bf16 %v6961, %v6958
        %v6983 = vpack.c.bf16 %v6962, %v6959
        %v6984 = vpack.c.bf16 %v6966, %v6963
        %v6985 = vpack.c.bf16 %v6967, %v6964
        %v6986 = vpack.c.bf16 %v6968, %v6965
        %v6987 = vpack.c.bf16 %v6972, %v6969
        %v6988 = vpack.c.bf16 %v6973, %v6970
        %v6989 = vpack.c.bf16 %v6974, %v6971
        %v6990 = vpack.c.bf16 %v6978, %v6975
        %v6991 = vpack.c.bf16 %v6979, %v6976
        %v6992 = vpack.c.bf16 %v6980, %v6977
        %v6993 = vld [vmem:[%s9] sm:$0xff]
        %v6994 = vld [vmem:[%s9 + $0x8] sm:$0xff]
        %v6995 = vld [vmem:[%s9 + $0x10] sm:$0xff]
        %v6996 = vld [vmem:[%s9 + $0x18] sm:$0xff]
        %v6997 = vld [vmem:[%s9 + $0x20] sm:$0xff]
        %v6998 = vld [vmem:[%s9 + $0x28] sm:$0xff]
        %v6999 = vld [vmem:[%s9 + $0x30] sm:$0xff]
        %v7000 = vld [vmem:[%s9 + $0x38] sm:$0xff]
        %v7001 = vld [vmem:[%s9 + $0x40] sm:$0xff]
        %v7002 = vld [vmem:[%s9 + $0x48] sm:$0xff]
        %v7003 = vld [vmem:[%s9 + $0x50] sm:$0xff]
        %v7004 = vld [vmem:[%s9 + $0x58] sm:$0xff]
        %v7005 = vld [vmem:[%s9 + $0x60] sm:$0xff]
        %v7006 = vld [vmem:[%s9 + $0x68] sm:$0xff]
        %v7007 = vld [vmem:[%s9 + $0x70] sm:$0xff]
        %v7008 = vld [vmem:[%s9 + $0x78] sm:$0xff]
        %v7009 = vld [vmem:[%s9 + $0x80] sm:$0xff]
        %v7010 = vld [vmem:[%s9 + $0x88] sm:$0xff]
        %v7011 = vld [vmem:[%s9 + $0x90] sm:$0xff]
        %v7012 = vld [vmem:[%s9 + $0x98] sm:$0xff]
        %v7013 = vld [vmem:[%s9 + $0xa0] sm:$0xff]
        %v7014 = vld [vmem:[%s9 + $0xa8] sm:$0xff]
        %v7015 = vld [vmem:[%s9 + $0xb0] sm:$0xff]
        %v7016 = vld [vmem:[%s9 + $0xb8] sm:$0xff]
        %v7017 = vld [vmem:[%s9 + $0xc0] sm:$0xff]
        %v7018 = vld [vmem:[%s9 + $0xc8] sm:$0xff]
        %v7019 = vld [vmem:[%s9 + $0xd0] sm:$0xff]
        %v7020 = vld [vmem:[%s9 + $0xd8] sm:$0xff]
        %v7021 = vld [vmem:[%s9 + $0xe0] sm:$0xff]
        %v7022 = vld [vmem:[%s9 + $0xe8] sm:$0xff]
        %v7023 = vld [vmem:[%s9 + $0xf0] sm:$0xff]
        %v7024 = vld [vmem:[%s9 + $0xf8] sm:$0xff]
        %v7025 = vld [vmem:[%s9 + $0x100] sm:$0xff]
        %v7026 = vld [vmem:[%s9 + $0x108] sm:$0xff]
        %v7027 = vld [vmem:[%s9 + $0x110] sm:$0xff]
        %v7028 = vld [vmem:[%s9 + $0x118] sm:$0xff]
        %v7029 = vld [vmem:[%s9 + $0x120] sm:$0xff]
        %v7030 = vld [vmem:[%s9 + $0x128] sm:$0xff]
        %v7031 = vld [vmem:[%s9 + $0x130] sm:$0xff]
        %v7032 = vld [vmem:[%s9 + $0x138] sm:$0xff]
        %v7033 = vld [vmem:[%s9 + $0x140] sm:$0xff]
        %v7034 = vld [vmem:[%s9 + $0x148] sm:$0xff]
        %v7035 = vld [vmem:[%s9 + $0x150] sm:$0xff]
        %v7036 = vld [vmem:[%s9 + $0x158] sm:$0xff]
        %v7037 = vld [vmem:[%s9 + $0x160] sm:$0xff]
        %v7038 = vld [vmem:[%s9 + $0x168] sm:$0xff]
        %v7039 = vld [vmem:[%s9 + $0x170] sm:$0xff]
        %v7040 = vld [vmem:[%s9 + $0x178] sm:$0xff]
        %v7041 = vld [vmem:[%s9 + $0x180] sm:$0xff]
        %v7042 = vld [vmem:[%s9 + $0x188] sm:$0xff]
        %v7043 = vld [vmem:[%s9 + $0x190] sm:$0xff]
        %v7044 = vld [vmem:[%s9 + $0x198] sm:$0xff]
        %v7045 = vld [vmem:[%s9 + $0x1a0] sm:$0xff]
        %v7046 = vld [vmem:[%s9 + $0x1a8] sm:$0xff]
        %v7047 = vld [vmem:[%s9 + $0x1b0] sm:$0xff]
        %v7048 = vld [vmem:[%s9 + $0x1b8] sm:$0xff]
        %v7049 = vld [vmem:[%s9 + $0x1c0] sm:$0xff]
        %v7050 = vld [vmem:[%s9 + $0x1c8] sm:$0xff]
        %v7051 = vld [vmem:[%s9 + $0x1d0] sm:$0xff]
        %v7052 = vld [vmem:[%s9 + $0x1d8] sm:$0xff]
        %v7053 = vld [vmem:[%s9 + $0x1e0] sm:$0xff]
        %v7054 = vld [vmem:[%s9 + $0x1e8] sm:$0xff]
        %v7055 = vld [vmem:[%s9 + $0x1f0] sm:$0xff]
        %v7056 = vld [vmem:[%s9 + $0x1f8] sm:$0xff]
        %v7057 = vld [vmem:[%s9 + $0x200] sm:$0xff]
        %v7058 = vld [vmem:[%s9 + $0x208] sm:$0xff]
        %v7059 = vld [vmem:[%s9 + $0x210] sm:$0xff]
        %v7060 = vld [vmem:[%s9 + $0x218] sm:$0xff]
        %v7061 = vld [vmem:[%s9 + $0x220] sm:$0xff]
        %v7062 = vld [vmem:[%s9 + $0x228] sm:$0xff]
        %v7063 = vld [vmem:[%s9 + $0x230] sm:$0xff]
        %v7064 = vld [vmem:[%s9 + $0x238] sm:$0xff]
        %v7065 = vld [vmem:[%s9 + $0x240] sm:$0xff]
        %v7066 = vld [vmem:[%s9 + $0x248] sm:$0xff]
        %v7067 = vld [vmem:[%s9 + $0x250] sm:$0xff]
        %v7068 = vld [vmem:[%s9 + $0x258] sm:$0xff]
        %v7069 = vld [vmem:[%s9 + $0x260] sm:$0xff]
        %v7070 = vld [vmem:[%s9 + $0x268] sm:$0xff]
        %v7071 = vld [vmem:[%s9 + $0x270] sm:$0xff]
        %v7072 = vld [vmem:[%s9 + $0x278] sm:$0xff]
        %v7073 = vld [vmem:[%s9 + $0x280] sm:$0xff]
        %v7074 = vld [vmem:[%s9 + $0x288] sm:$0xff]
        %v7075 = vld [vmem:[%s9 + $0x290] sm:$0xff]
        %v7076 = vld [vmem:[%s9 + $0x298] sm:$0xff]
        %v7077 = vld [vmem:[%s9 + $0x2a0] sm:$0xff]
        %v7078 = vld [vmem:[%s9 + $0x2a8] sm:$0xff]
        %v7079 = vld [vmem:[%s9 + $0x2b0] sm:$0xff]
        %v7080 = vld [vmem:[%s9 + $0x2b8] sm:$0xff]
        %v7081 = vld [vmem:[%s9 + $0x2c0] sm:$0xff]
        %v7082 = vld [vmem:[%s9 + $0x2c8] sm:$0xff]
        %v7083 = vld [vmem:[%s9 + $0x2d0] sm:$0xff]
        %v7084 = vld [vmem:[%s9 + $0x2d8] sm:$0xff]
        %v7085 = vld [vmem:[%s9 + $0x2e0] sm:$0xff]
        %v7086 = vld [vmem:[%s9 + $0x2e8] sm:$0xff]
        %v7087 = vld [vmem:[%s9 + $0x2f0] sm:$0xff]
        %v7088 = vld [vmem:[%s9 + $0x2f8] sm:$0xff]
        %v7089 = vld [vmem:[%s9 + $0x300] sm:$0xff]
        %v7090 = vld [vmem:[%s9 + $0x308] sm:$0xff]
        %v7091 = vld [vmem:[%s9 + $0x310] sm:$0xff]
        %v7092 = vld [vmem:[%s9 + $0x318] sm:$0xff]
        %v7093 = vld [vmem:[%s9 + $0x320] sm:$0xff]
        %v7094 = vld [vmem:[%s9 + $0x328] sm:$0xff]
        %v7095 = vld [vmem:[%s9 + $0x330] sm:$0xff]
        %v7096 = vld [vmem:[%s9 + $0x338] sm:$0xff]
        %v7097 = vld [vmem:[%s9 + $0x340] sm:$0xff]
        %v7098 = vld [vmem:[%s9 + $0x348] sm:$0xff]
        %v7099 = vld [vmem:[%s9 + $0x350] sm:$0xff]
        %v7100 = vld [vmem:[%s9 + $0x358] sm:$0xff]
        %v7101 = vld [vmem:[%s9 + $0x360] sm:$0xff]
        %v7102 = vld [vmem:[%s9 + $0x368] sm:$0xff]
        %v7103 = vld [vmem:[%s9 + $0x370] sm:$0xff]
        %v7104 = vld [vmem:[%s9 + $0x378] sm:$0xff]
        %v7105 = vld [vmem:[%s9 + $0x380] sm:$0xff]
        %v7106 = vld [vmem:[%s9 + $0x388] sm:$0xff]
        %v7107 = vld [vmem:[%s9 + $0x390] sm:$0xff]
        %v7108 = vld [vmem:[%s9 + $0x398] sm:$0xff]
        %v7109 = vld [vmem:[%s9 + $0x3a0] sm:$0xff]
        %v7110 = vld [vmem:[%s9 + $0x3a8] sm:$0xff]
        %v7111 = vld [vmem:[%s9 + $0x3b0] sm:$0xff]
        %v7112 = vld [vmem:[%s9 + $0x3b8] sm:$0xff]
        %v7113 = vld [vmem:[%s9 + $0x3c0] sm:$0xff]
        %v7114 = vld [vmem:[%s9 + $0x3c8] sm:$0xff]
        %v7115 = vld [vmem:[%s9 + $0x3d0] sm:$0xff]
        %v7116 = vld [vmem:[%s9 + $0x3d8] sm:$0xff]
        %v7117 = vld [vmem:[%s9 + $0x3e0] sm:$0xff]
        %v7118 = vld [vmem:[%s9 + $0x3e8] sm:$0xff]
        %v7119 = vld [vmem:[%s9 + $0x3f0] sm:$0xff]
        %v7120 = vld [vmem:[%s9 + $0x3f8] sm:$0xff]
        %v7121 = vld [vmem:[%s9 + $0x400] sm:$0xff]
        %v7122 = vld [vmem:[%s9 + $0x408] sm:$0xff]
        %v7123 = vld [vmem:[%s9 + $0x410] sm:$0xff]
        %v7124 = vld [vmem:[%s9 + $0x418] sm:$0xff]
        %v7125 = vld [vmem:[%s9 + $0x420] sm:$0xff]
        %v7126 = vld [vmem:[%s9 + $0x428] sm:$0xff]
        %v7127 = vld [vmem:[%s9 + $0x430] sm:$0xff]
        %v7128 = vld [vmem:[%s9 + $0x438] sm:$0xff]
        %v7129 = vld [vmem:[%s9 + $0x440] sm:$0xff]
        %v7130 = vld [vmem:[%s9 + $0x448] sm:$0xff]
        %v7131 = vld [vmem:[%s9 + $0x450] sm:$0xff]
        %v7132 = vld [vmem:[%s9 + $0x458] sm:$0xff]
        %v7133 = vld [vmem:[%s9 + $0x460] sm:$0xff]
        %v7134 = vld [vmem:[%s9 + $0x468] sm:$0xff]
        %v7135 = vld [vmem:[%s9 + $0x470] sm:$0xff]
        %v7136 = vld [vmem:[%s9 + $0x478] sm:$0xff]
        %v7137 = vld [vmem:[%s9 + $0x480] sm:$0xff]
        %v7138 = vld [vmem:[%s9 + $0x488] sm:$0xff]
        %v7139 = vld [vmem:[%s9 + $0x490] sm:$0xff]
        %v7140 = vld [vmem:[%s9 + $0x498] sm:$0xff]
        %v7141 = vld [vmem:[%s9 + $0x4a0] sm:$0xff]
        %v7142 = vld [vmem:[%s9 + $0x4a8] sm:$0xff]
        %v7143 = vld [vmem:[%s9 + $0x4b0] sm:$0xff]
        %v7144 = vld [vmem:[%s9 + $0x4b8] sm:$0xff]
        %v7145 = vld [vmem:[%s9 + $0x4c0] sm:$0xff]
        %v7146 = vld [vmem:[%s9 + $0x4c8] sm:$0xff]
        %v7147 = vld [vmem:[%s9 + $0x4d0] sm:$0xff]
        %v7148 = vld [vmem:[%s9 + $0x4d8] sm:$0xff]
        %v7149 = vld [vmem:[%s9 + $0x4e0] sm:$0xff]
        %v7150 = vld [vmem:[%s9 + $0x4e8] sm:$0xff]
        %v7151 = vld [vmem:[%s9 + $0x4f0] sm:$0xff]
        %v7152 = vld [vmem:[%s9 + $0x4f8] sm:$0xff]
        %v7153 = vld [vmem:[%s9 + $0x500] sm:$0xff]
        %v7154 = vld [vmem:[%s9 + $0x508] sm:$0xff]
        %v7155 = vld [vmem:[%s9 + $0x510] sm:$0xff]
        %v7156 = vld [vmem:[%s9 + $0x518] sm:$0xff]
        %v7157 = vld [vmem:[%s9 + $0x520] sm:$0xff]
        %v7158 = vld [vmem:[%s9 + $0x528] sm:$0xff]
        %v7159 = vld [vmem:[%s9 + $0x530] sm:$0xff]
        %v7160 = vld [vmem:[%s9 + $0x538] sm:$0xff]
        %v7161 = vld [vmem:[%s9 + $0x540] sm:$0xff]
        %v7162 = vld [vmem:[%s9 + $0x548] sm:$0xff]
        %v7163 = vld [vmem:[%s9 + $0x550] sm:$0xff]
        %v7164 = vld [vmem:[%s9 + $0x558] sm:$0xff]
        %v7165 = vld [vmem:[%s9 + $0x560] sm:$0xff]
        %v7166 = vld [vmem:[%s9 + $0x568] sm:$0xff]
        %v7167 = vld [vmem:[%s9 + $0x570] sm:$0xff]
        %v7168 = vld [vmem:[%s9 + $0x578] sm:$0xff]
        %v7169 = vld [vmem:[%s9 + $0x580] sm:$0xff]
        %v7170 = vld [vmem:[%s9 + $0x588] sm:$0xff]
        %v7171 = vld [vmem:[%s9 + $0x590] sm:$0xff]
        %v7172 = vld [vmem:[%s9 + $0x598] sm:$0xff]
        %v7173 = vld [vmem:[%s9 + $0x5a0] sm:$0xff]
        %v7174 = vld [vmem:[%s9 + $0x5a8] sm:$0xff]
        %v7175 = vld [vmem:[%s9 + $0x5b0] sm:$0xff]
        %v7176 = vld [vmem:[%s9 + $0x5b8] sm:$0xff]
        %v7177 = vld [vmem:[%s9 + $0x5c0] sm:$0xff]
        %v7178 = vld [vmem:[%s9 + $0x5c8] sm:$0xff]
        %v7179 = vld [vmem:[%s9 + $0x5d0] sm:$0xff]
        %v7180 = vld [vmem:[%s9 + $0x5d8] sm:$0xff]
        %v7181 = vld [vmem:[%s9 + $0x5e0] sm:$0xff]
        %v7182 = vld [vmem:[%s9 + $0x5e8] sm:$0xff]
        %v7183 = vld [vmem:[%s9 + $0x5f0] sm:$0xff]
        %v7184 = vld [vmem:[%s9 + $0x5f8] sm:$0xff]
        %v7185 = vld [vmem:[%s9 + $0x600] sm:$0xff]
        %v7186 = vld [vmem:[%s9 + $0x608] sm:$0xff]
        %v7187 = vld [vmem:[%s9 + $0x610] sm:$0xff]
        %v7188 = vld [vmem:[%s9 + $0x618] sm:$0xff]
        %v7189 = vld [vmem:[%s9 + $0x620] sm:$0xff]
        %v7190 = vld [vmem:[%s9 + $0x628] sm:$0xff]
        %v7191 = vld [vmem:[%s9 + $0x630] sm:$0xff]
        %v7192 = vld [vmem:[%s9 + $0x638] sm:$0xff]
        %v7193 = vld [vmem:[%s9 + $0x640] sm:$0xff]
        %v7194 = vld [vmem:[%s9 + $0x648] sm:$0xff]
        %v7195 = vld [vmem:[%s9 + $0x650] sm:$0xff]
        %v7196 = vld [vmem:[%s9 + $0x658] sm:$0xff]
        %v7197 = vld [vmem:[%s9 + $0x660] sm:$0xff]
        %v7198 = vld [vmem:[%s9 + $0x668] sm:$0xff]
        %v7199 = vld [vmem:[%s9 + $0x670] sm:$0xff]
        %v7200 = vld [vmem:[%s9 + $0x678] sm:$0xff]
        %v7201 = vld [vmem:[%s9 + $0x680] sm:$0xff]
        %v7202 = vld [vmem:[%s9 + $0x688] sm:$0xff]
        %v7203 = vld [vmem:[%s9 + $0x690] sm:$0xff]
        %v7204 = vld [vmem:[%s9 + $0x698] sm:$0xff]
        %v7205 = vld [vmem:[%s9 + $0x6a0] sm:$0xff]
        %v7206 = vld [vmem:[%s9 + $0x6a8] sm:$0xff]
        %v7207 = vld [vmem:[%s9 + $0x6b0] sm:$0xff]
        %v7208 = vld [vmem:[%s9 + $0x6b8] sm:$0xff]
        %v7209 = vld [vmem:[%s9 + $0x6c0] sm:$0xff]
        %v7210 = vld [vmem:[%s9 + $0x6c8] sm:$0xff]
        %v7211 = vld [vmem:[%s9 + $0x6d0] sm:$0xff]
        %v7212 = vld [vmem:[%s9 + $0x6d8] sm:$0xff]
        %v7213 = vld [vmem:[%s9 + $0x6e0] sm:$0xff]
        %v7214 = vld [vmem:[%s9 + $0x6e8] sm:$0xff]
        %v7215 = vld [vmem:[%s9 + $0x6f0] sm:$0xff]
        %v7216 = vld [vmem:[%s9 + $0x6f8] sm:$0xff]
        %v7217 = vld [vmem:[%s9 + $0x700] sm:$0xff]
        %v7218 = vld [vmem:[%s9 + $0x708] sm:$0xff]
        %v7219 = vld [vmem:[%s9 + $0x710] sm:$0xff]
        %v7220 = vld [vmem:[%s9 + $0x718] sm:$0xff]
        %v7221 = vld [vmem:[%s9 + $0x720] sm:$0xff]
        %v7222 = vld [vmem:[%s9 + $0x728] sm:$0xff]
        %v7223 = vld [vmem:[%s9 + $0x730] sm:$0xff]
        %v7224 = vld [vmem:[%s9 + $0x738] sm:$0xff]
        %v7225 = vld [vmem:[%s9 + $0x740] sm:$0xff]
        %v7226 = vld [vmem:[%s9 + $0x748] sm:$0xff]
        %v7227 = vld [vmem:[%s9 + $0x750] sm:$0xff]
        %v7228 = vld [vmem:[%s9 + $0x758] sm:$0xff]
        %v7229 = vld [vmem:[%s9 + $0x760] sm:$0xff]
        %v7230 = vld [vmem:[%s9 + $0x768] sm:$0xff]
        %v7231 = vld [vmem:[%s9 + $0x770] sm:$0xff]
        %v7232 = vld [vmem:[%s9 + $0x778] sm:$0xff]
        %v7233 = vld [vmem:[%s9 + $0x780] sm:$0xff]
        %v7234 = vld [vmem:[%s9 + $0x788] sm:$0xff]
        %v7235 = vld [vmem:[%s9 + $0x790] sm:$0xff]
        %v7236 = vld [vmem:[%s9 + $0x798] sm:$0xff]
        %v7237 = vld [vmem:[%s9 + $0x7a0] sm:$0xff]
        %v7238 = vld [vmem:[%s9 + $0x7a8] sm:$0xff]
        %v7239 = vld [vmem:[%s9 + $0x7b0] sm:$0xff]
        %v7240 = vld [vmem:[%s9 + $0x7b8] sm:$0xff]
        %v7241 = vld [vmem:[%s9 + $0x7c0] sm:$0xff]
        %v7242 = vld [vmem:[%s9 + $0x7c8] sm:$0xff]
        %v7243 = vld [vmem:[%s9 + $0x7d0] sm:$0xff]
        %v7244 = vld [vmem:[%s9 + $0x7d8] sm:$0xff]
        %v7245 = vld [vmem:[%s9 + $0x7e0] sm:$0xff]
        %v7246 = vld [vmem:[%s9 + $0x7e8] sm:$0xff]
        %v7247 = vld [vmem:[%s9 + $0x7f0] sm:$0xff]
        %v7248 = vld [vmem:[%s9 + $0x7f8] sm:$0xff]
        %v7249 = vld [vmem:[%s9 + $0x800] sm:$0xff]
        %v7250 = vld [vmem:[%s9 + $0x808] sm:$0xff]
        %v7251 = vld [vmem:[%s9 + $0x810] sm:$0xff]
        %v7252 = vld [vmem:[%s9 + $0x818] sm:$0xff]
        %v7253 = vld [vmem:[%s9 + $0x820] sm:$0xff]
        %v7254 = vld [vmem:[%s9 + $0x828] sm:$0xff]
        %v7255 = vld [vmem:[%s9 + $0x830] sm:$0xff]
        %v7256 = vld [vmem:[%s9 + $0x838] sm:$0xff]
        %v7257 = vld [vmem:[%s9 + $0x840] sm:$0xff]
        %v7258 = vld [vmem:[%s9 + $0x848] sm:$0xff]
        %v7259 = vld [vmem:[%s9 + $0x850] sm:$0xff]
        %v7260 = vld [vmem:[%s9 + $0x858] sm:$0xff]
        %v7261 = vld [vmem:[%s9 + $0x860] sm:$0xff]
        %v7262 = vld [vmem:[%s9 + $0x868] sm:$0xff]
        %v7263 = vld [vmem:[%s9 + $0x870] sm:$0xff]
        %v7264 = vld [vmem:[%s9 + $0x878] sm:$0xff]
        %v7265 = vld [vmem:[%s9 + $0x880] sm:$0xff]
        %v7266 = vld [vmem:[%s9 + $0x888] sm:$0xff]
        %v7267 = vld [vmem:[%s9 + $0x890] sm:$0xff]
        %v7268 = vld [vmem:[%s9 + $0x898] sm:$0xff]
        %v7269 = vld [vmem:[%s9 + $0x8a0] sm:$0xff]
        %v7270 = vld [vmem:[%s9 + $0x8a8] sm:$0xff]
        %v7271 = vld [vmem:[%s9 + $0x8b0] sm:$0xff]
        %v7272 = vld [vmem:[%s9 + $0x8b8] sm:$0xff]
        %v7273 = vld [vmem:[%s9 + $0x8c0] sm:$0xff]
        %v7274 = vld [vmem:[%s9 + $0x8c8] sm:$0xff]
        %v7275 = vld [vmem:[%s9 + $0x8d0] sm:$0xff]
        %v7276 = vld [vmem:[%s9 + $0x8d8] sm:$0xff]
        %v7277 = vld [vmem:[%s9 + $0x8e0] sm:$0xff]
        %v7278 = vld [vmem:[%s9 + $0x8e8] sm:$0xff]
        %v7279 = vld [vmem:[%s9 + $0x8f0] sm:$0xff]
        %v7280 = vld [vmem:[%s9 + $0x8f8] sm:$0xff]
        %v7281 = vld [vmem:[%s10] sm:$0xff]
        %v7282 = vld [vmem:[%s10 + $0x8] sm:$0xf]
        %v7285 = vperm.slane %v7281, 0
        %v7286 = vperm.slane %v7281, 1
        %v7287 = vperm.slane %v7281, 2
        %v7288 = vperm.slane %v7281, 3
        %v7289 = vperm.slane %v7281, 4
        %v7290 = vperm.slane %v7281, 5
        %v7291 = vperm.slane %v7281, 6
        %v7292 = vperm.slane %v7281, 7
        %v7293 = vperm.slane %v7282, 0
        %v7294 = vperm.slane %v7282, 1
        %v7295 = vperm.slane %v7282, 2
        %v7296 = vperm.slane %v7282, 3
        %v7597 = vunpack.c.l.b16 %v6993
        %v7598 = vunpack.c.h.b16 %v6993
        %v7599 = vunpack.c.l.b16 %v6994
        %v7600 = vunpack.c.h.b16 %v6994
        %v7601 = vunpack.c.l.b16 %v6995
        %v7602 = vunpack.c.h.b16 %v6995
        %v7603 = vunpack.c.l.b16 %v6996
        %v7604 = vunpack.c.h.b16 %v6996
        %v7605 = vunpack.c.l.b16 %v6997
        %v7606 = vunpack.c.h.b16 %v6997
        %v7607 = vunpack.c.l.b16 %v6998
        %v7608 = vunpack.c.h.b16 %v6998
        %v7609 = vunpack.c.l.b16 %v6999
        %v7610 = vunpack.c.h.b16 %v6999
        %v7611 = vunpack.c.l.b16 %v7000
        %v7612 = vunpack.c.h.b16 %v7000
        %v7613 = vunpack.c.l.b16 %v7001
        %v7614 = vunpack.c.h.b16 %v7001
        %v7615 = vunpack.c.l.b16 %v7002
        %v7616 = vunpack.c.h.b16 %v7002
        %v7617 = vunpack.c.l.b16 %v7003
        %v7618 = vunpack.c.h.b16 %v7003
        %v7619 = vunpack.c.l.b16 %v7004
        %v7620 = vunpack.c.h.b16 %v7004
        %v7621 = vunpack.c.l.b16 %v7005
        %v7622 = vunpack.c.h.b16 %v7005
        %v7623 = vunpack.c.l.b16 %v7006
        %v7624 = vunpack.c.h.b16 %v7006
        %v7625 = vunpack.c.l.b16 %v7007
        %v7626 = vunpack.c.h.b16 %v7007
        %v7627 = vunpack.c.l.b16 %v7008
        %v7628 = vunpack.c.h.b16 %v7008
        %v7629 = vunpack.c.l.b16 %v7009
        %v7630 = vunpack.c.h.b16 %v7009
        %v7631 = vunpack.c.l.b16 %v7010
        %v7632 = vunpack.c.h.b16 %v7010
        %v7633 = vunpack.c.l.b16 %v7011
        %v7634 = vunpack.c.h.b16 %v7011
        %v7635 = vunpack.c.l.b16 %v7012
        %v7636 = vunpack.c.h.b16 %v7012
        %v7637 = vunpack.c.l.b16 %v7013
        %v7638 = vunpack.c.h.b16 %v7013
        %v7639 = vunpack.c.l.b16 %v7014
        %v7640 = vunpack.c.h.b16 %v7014
        %v7641 = vunpack.c.l.b16 %v7015
        %v7642 = vunpack.c.h.b16 %v7015
        %v7643 = vunpack.c.l.b16 %v7016
        %v7644 = vunpack.c.h.b16 %v7016
        %v7645 = vunpack.c.l.b16 %v7017
        %v7646 = vunpack.c.h.b16 %v7017
        %v7647 = vunpack.c.l.b16 %v7018
        %v7648 = vunpack.c.h.b16 %v7018
        %v7649 = vunpack.c.l.b16 %v7019
        %v7650 = vunpack.c.h.b16 %v7019
        %v7651 = vunpack.c.l.b16 %v7020
        %v7652 = vunpack.c.h.b16 %v7020
        %v7653 = vunpack.c.l.b16 %v7021
        %v7654 = vunpack.c.h.b16 %v7021
        %v7655 = vunpack.c.l.b16 %v7022
        %v7656 = vunpack.c.h.b16 %v7022
        %v7657 = vunpack.c.l.b16 %v7023
        %v7658 = vunpack.c.h.b16 %v7023
        %v7659 = vunpack.c.l.b16 %v7024
        %v7660 = vunpack.c.h.b16 %v7024
        %v7661 = vunpack.c.l.b16 %v7025
        %v7662 = vunpack.c.h.b16 %v7025
        %v7663 = vunpack.c.l.b16 %v7026
        %v7664 = vunpack.c.h.b16 %v7026
        %v7665 = vunpack.c.l.b16 %v7027
        %v7666 = vunpack.c.h.b16 %v7027
        %v7667 = vunpack.c.l.b16 %v7028
        %v7668 = vunpack.c.h.b16 %v7028
        %v7669 = vunpack.c.l.b16 %v7029
        %v7670 = vunpack.c.h.b16 %v7029
        %v7671 = vunpack.c.l.b16 %v7030
        %v7672 = vunpack.c.h.b16 %v7030
        %v7673 = vunpack.c.l.b16 %v7031
        %v7674 = vunpack.c.h.b16 %v7031
        %v7675 = vunpack.c.l.b16 %v7032
        %v7676 = vunpack.c.h.b16 %v7032
        %v7677 = vunpack.c.l.b16 %v7033
        %v7678 = vunpack.c.h.b16 %v7033
        %v7679 = vunpack.c.l.b16 %v7034
        %v7680 = vunpack.c.h.b16 %v7034
        %v7681 = vunpack.c.l.b16 %v7035
        %v7682 = vunpack.c.h.b16 %v7035
        %v7683 = vunpack.c.l.b16 %v7036
        %v7684 = vunpack.c.h.b16 %v7036
        %v7685 = vunpack.c.l.b16 %v7037
        %v7686 = vunpack.c.h.b16 %v7037
        %v7687 = vunpack.c.l.b16 %v7038
        %v7688 = vunpack.c.h.b16 %v7038
        %v7689 = vunpack.c.l.b16 %v7039
        %v7690 = vunpack.c.h.b16 %v7039
        %v7691 = vunpack.c.l.b16 %v7040
        %v7692 = vunpack.c.h.b16 %v7040
        %v7693 = vunpack.c.l.b16 %v7041
        %v7694 = vunpack.c.h.b16 %v7041
        %v7695 = vunpack.c.l.b16 %v7042
        %v7696 = vunpack.c.h.b16 %v7042
        %v7697 = vunpack.c.l.b16 %v7043
        %v7698 = vunpack.c.h.b16 %v7043
        %v7699 = vunpack.c.l.b16 %v7044
        %v7700 = vunpack.c.h.b16 %v7044
        %v7701 = vunpack.c.l.b16 %v7045
        %v7702 = vunpack.c.h.b16 %v7045
        %v7703 = vunpack.c.l.b16 %v7046
        %v7704 = vunpack.c.h.b16 %v7046
        %v7705 = vunpack.c.l.b16 %v7047
        %v7706 = vunpack.c.h.b16 %v7047
        %v7707 = vunpack.c.l.b16 %v7048
        %v7708 = vunpack.c.h.b16 %v7048
        %v7709 = vunpack.c.l.b16 %v7049
        %v7710 = vunpack.c.h.b16 %v7049
        %v7711 = vunpack.c.l.b16 %v7050
        %v7712 = vunpack.c.h.b16 %v7050
        %v7713 = vunpack.c.l.b16 %v7051
        %v7714 = vunpack.c.h.b16 %v7051
        %v7715 = vunpack.c.l.b16 %v7052
        %v7716 = vunpack.c.h.b16 %v7052
        %v7717 = vunpack.c.l.b16 %v7053
        %v7718 = vunpack.c.h.b16 %v7053
        %v7719 = vunpack.c.l.b16 %v7054
        %v7720 = vunpack.c.h.b16 %v7054
        %v7721 = vunpack.c.l.b16 %v7055
        %v7722 = vunpack.c.h.b16 %v7055
        %v7723 = vunpack.c.l.b16 %v7056
        %v7724 = vunpack.c.h.b16 %v7056
        %v7725 = vunpack.c.l.b16 %v7057
        %v7726 = vunpack.c.h.b16 %v7057
        %v7727 = vunpack.c.l.b16 %v7058
        %v7728 = vunpack.c.h.b16 %v7058
        %v7729 = vunpack.c.l.b16 %v7059
        %v7730 = vunpack.c.h.b16 %v7059
        %v7731 = vunpack.c.l.b16 %v7060
        %v7732 = vunpack.c.h.b16 %v7060
        %v7733 = vunpack.c.l.b16 %v7061
        %v7734 = vunpack.c.h.b16 %v7061
        %v7735 = vunpack.c.l.b16 %v7062
        %v7736 = vunpack.c.h.b16 %v7062
        %v7737 = vunpack.c.l.b16 %v7063
        %v7738 = vunpack.c.h.b16 %v7063
        %v7739 = vunpack.c.l.b16 %v7064
        %v7740 = vunpack.c.h.b16 %v7064
        %v7741 = vunpack.c.l.b16 %v7065
        %v7742 = vunpack.c.h.b16 %v7065
        %v7743 = vunpack.c.l.b16 %v7066
        %v7744 = vunpack.c.h.b16 %v7066
        %v7745 = vunpack.c.l.b16 %v7067
        %v7746 = vunpack.c.h.b16 %v7067
        %v7747 = vunpack.c.l.b16 %v7068
        %v7748 = vunpack.c.h.b16 %v7068
        %v7749 = vunpack.c.l.b16 %v7069
        %v7750 = vunpack.c.h.b16 %v7069
        %v7751 = vunpack.c.l.b16 %v7070
        %v7752 = vunpack.c.h.b16 %v7070
        %v7753 = vunpack.c.l.b16 %v7071
        %v7754 = vunpack.c.h.b16 %v7071
        %v7755 = vunpack.c.l.b16 %v7072
        %v7756 = vunpack.c.h.b16 %v7072
        %v7757 = vunpack.c.l.b16 %v7073
        %v7758 = vunpack.c.h.b16 %v7073
        %v7759 = vunpack.c.l.b16 %v7074
        %v7760 = vunpack.c.h.b16 %v7074
        %v7761 = vunpack.c.l.b16 %v7075
        %v7762 = vunpack.c.h.b16 %v7075
        %v7763 = vunpack.c.l.b16 %v7076
        %v7764 = vunpack.c.h.b16 %v7076
        %v7765 = vunpack.c.l.b16 %v7077
        %v7766 = vunpack.c.h.b16 %v7077
        %v7767 = vunpack.c.l.b16 %v7078
        %v7768 = vunpack.c.h.b16 %v7078
        %v7769 = vunpack.c.l.b16 %v7079
        %v7770 = vunpack.c.h.b16 %v7079
        %v7771 = vunpack.c.l.b16 %v7080
        %v7772 = vunpack.c.h.b16 %v7080
        %v7773 = vunpack.c.l.b16 %v7081
        %v7774 = vunpack.c.h.b16 %v7081
        %v7775 = vunpack.c.l.b16 %v7082
        %v7776 = vunpack.c.h.b16 %v7082
        %v7777 = vunpack.c.l.b16 %v7083
        %v7778 = vunpack.c.h.b16 %v7083
        %v7779 = vunpack.c.l.b16 %v7084
        %v7780 = vunpack.c.h.b16 %v7084
        %v7781 = vunpack.c.l.b16 %v7085
        %v7782 = vunpack.c.h.b16 %v7085
        %v7783 = vunpack.c.l.b16 %v7086
        %v7784 = vunpack.c.h.b16 %v7086
        %v7785 = vunpack.c.l.b16 %v7087
        %v7786 = vunpack.c.h.b16 %v7087
        %v7787 = vunpack.c.l.b16 %v7088
        %v7788 = vunpack.c.h.b16 %v7088
        %v7789 = vunpack.c.l.b16 %v7089
        %v7790 = vunpack.c.h.b16 %v7089
        %v7791 = vunpack.c.l.b16 %v7090
        %v7792 = vunpack.c.h.b16 %v7090
        %v7793 = vunpack.c.l.b16 %v7091
        %v7794 = vunpack.c.h.b16 %v7091
        %v7795 = vunpack.c.l.b16 %v7092
        %v7796 = vunpack.c.h.b16 %v7092
        %v7797 = vunpack.c.l.b16 %v7093
        %v7798 = vunpack.c.h.b16 %v7093
        %v7799 = vunpack.c.l.b16 %v7094
        %v7800 = vunpack.c.h.b16 %v7094
        %v7801 = vunpack.c.l.b16 %v7095
        %v7802 = vunpack.c.h.b16 %v7095
        %v7803 = vunpack.c.l.b16 %v7096
        %v7804 = vunpack.c.h.b16 %v7096
        %v7805 = vunpack.c.l.b16 %v7097
        %v7806 = vunpack.c.h.b16 %v7097
        %v7807 = vunpack.c.l.b16 %v7098
        %v7808 = vunpack.c.h.b16 %v7098
        %v7809 = vunpack.c.l.b16 %v7099
        %v7810 = vunpack.c.h.b16 %v7099
        %v7811 = vunpack.c.l.b16 %v7100
        %v7812 = vunpack.c.h.b16 %v7100
        %v7813 = vunpack.c.l.b16 %v7101
        %v7814 = vunpack.c.h.b16 %v7101
        %v7815 = vunpack.c.l.b16 %v7102
        %v7816 = vunpack.c.h.b16 %v7102
        %v7817 = vunpack.c.l.b16 %v7103
        %v7818 = vunpack.c.h.b16 %v7103
        %v7819 = vunpack.c.l.b16 %v7104
        %v7820 = vunpack.c.h.b16 %v7104
        %v7821 = vunpack.c.l.b16 %v7105
        %v7822 = vunpack.c.h.b16 %v7105
        %v7823 = vunpack.c.l.b16 %v7106
        %v7824 = vunpack.c.h.b16 %v7106
        %v7825 = vunpack.c.l.b16 %v7107
        %v7826 = vunpack.c.h.b16 %v7107
        %v7827 = vunpack.c.l.b16 %v7108
        %v7828 = vunpack.c.h.b16 %v7108
        %v7829 = vunpack.c.l.b16 %v7109
        %v7830 = vunpack.c.h.b16 %v7109
        %v7831 = vunpack.c.l.b16 %v7110
        %v7832 = vunpack.c.h.b16 %v7110
        %v7833 = vunpack.c.l.b16 %v7111
        %v7834 = vunpack.c.h.b16 %v7111
        %v7835 = vunpack.c.l.b16 %v7112
        %v7836 = vunpack.c.h.b16 %v7112
        %v7837 = vunpack.c.l.b16 %v7113
        %v7838 = vunpack.c.h.b16 %v7113
        %v7839 = vunpack.c.l.b16 %v7114
        %v7840 = vunpack.c.h.b16 %v7114
        %v7841 = vunpack.c.l.b16 %v7115
        %v7842 = vunpack.c.h.b16 %v7115
        %v7843 = vunpack.c.l.b16 %v7116
        %v7844 = vunpack.c.h.b16 %v7116
        %v7845 = vunpack.c.l.b16 %v7117
        %v7846 = vunpack.c.h.b16 %v7117
        %v7847 = vunpack.c.l.b16 %v7118
        %v7848 = vunpack.c.h.b16 %v7118
        %v7849 = vunpack.c.l.b16 %v7119
        %v7850 = vunpack.c.h.b16 %v7119
        %v7851 = vunpack.c.l.b16 %v7120
        %v7852 = vunpack.c.h.b16 %v7120
        %v7853 = vunpack.c.l.b16 %v7121
        %v7854 = vunpack.c.h.b16 %v7121
        %v7855 = vunpack.c.l.b16 %v7122
        %v7856 = vunpack.c.h.b16 %v7122
        %v7857 = vunpack.c.l.b16 %v7123
        %v7858 = vunpack.c.h.b16 %v7123
        %v7859 = vunpack.c.l.b16 %v7124
        %v7860 = vunpack.c.h.b16 %v7124
        %v7861 = vunpack.c.l.b16 %v7125
        %v7862 = vunpack.c.h.b16 %v7125
        %v7863 = vunpack.c.l.b16 %v7126
        %v7864 = vunpack.c.h.b16 %v7126
        %v7865 = vunpack.c.l.b16 %v7127
        %v7866 = vunpack.c.h.b16 %v7127
        %v7867 = vunpack.c.l.b16 %v7128
        %v7868 = vunpack.c.h.b16 %v7128
        %v7869 = vunpack.c.l.b16 %v7129
        %v7870 = vunpack.c.h.b16 %v7129
        %v7871 = vunpack.c.l.b16 %v7130
        %v7872 = vunpack.c.h.b16 %v7130
        %v7873 = vunpack.c.l.b16 %v7131
        %v7874 = vunpack.c.h.b16 %v7131
        %v7875 = vunpack.c.l.b16 %v7132
        %v7876 = vunpack.c.h.b16 %v7132
        %v7877 = vunpack.c.l.b16 %v7133
        %v7878 = vunpack.c.h.b16 %v7133
        %v7879 = vunpack.c.l.b16 %v7134
        %v7880 = vunpack.c.h.b16 %v7134
        %v7881 = vunpack.c.l.b16 %v7135
        %v7882 = vunpack.c.h.b16 %v7135
        %v7883 = vunpack.c.l.b16 %v7136
        %v7884 = vunpack.c.h.b16 %v7136
        %v7885 = vunpack.c.l.b16 %v7137
        %v7886 = vunpack.c.h.b16 %v7137
        %v7887 = vunpack.c.l.b16 %v7138
        %v7888 = vunpack.c.h.b16 %v7138
        %v7889 = vunpack.c.l.b16 %v7139
        %v7890 = vunpack.c.h.b16 %v7139
        %v7891 = vunpack.c.l.b16 %v7140
        %v7892 = vunpack.c.h.b16 %v7140
        %v7893 = vunpack.c.l.b16 %v7141
        %v7894 = vunpack.c.h.b16 %v7141
        %v7895 = vunpack.c.l.b16 %v7142
        %v7896 = vunpack.c.h.b16 %v7142
        %v7897 = vunpack.c.l.b16 %v7143
        %v7898 = vunpack.c.h.b16 %v7143
        %v7899 = vunpack.c.l.b16 %v7144
        %v7900 = vunpack.c.h.b16 %v7144
        %v7901 = vunpack.c.l.b16 %v7145
        %v7902 = vunpack.c.h.b16 %v7145
        %v7903 = vunpack.c.l.b16 %v7146
        %v7904 = vunpack.c.h.b16 %v7146
        %v7905 = vunpack.c.l.b16 %v7147
        %v7906 = vunpack.c.h.b16 %v7147
        %v7907 = vunpack.c.l.b16 %v7148
        %v7908 = vunpack.c.h.b16 %v7148
        %v7909 = vunpack.c.l.b16 %v7149
        %v7910 = vunpack.c.h.b16 %v7149
        %v7911 = vunpack.c.l.b16 %v7150
        %v7912 = vunpack.c.h.b16 %v7150
        %v7913 = vunpack.c.l.b16 %v7151
        %v7914 = vunpack.c.h.b16 %v7151
        %v7915 = vunpack.c.l.b16 %v7152
        %v7916 = vunpack.c.h.b16 %v7152
        %v7917 = vunpack.c.l.b16 %v7153
        %v7918 = vunpack.c.h.b16 %v7153
        %v7919 = vunpack.c.l.b16 %v7154
        %v7920 = vunpack.c.h.b16 %v7154
        %v7921 = vunpack.c.l.b16 %v7155
        %v7922 = vunpack.c.h.b16 %v7155
        %v7923 = vunpack.c.l.b16 %v7156
        %v7924 = vunpack.c.h.b16 %v7156
        %v7925 = vunpack.c.l.b16 %v7157
        %v7926 = vunpack.c.h.b16 %v7157
        %v7927 = vunpack.c.l.b16 %v7158
        %v7928 = vunpack.c.h.b16 %v7158
        %v7929 = vunpack.c.l.b16 %v7159
        %v7930 = vunpack.c.h.b16 %v7159
        %v7931 = vunpack.c.l.b16 %v7160
        %v7932 = vunpack.c.h.b16 %v7160
        %v7933 = vunpack.c.l.b16 %v7161
        %v7934 = vunpack.c.h.b16 %v7161
        %v7935 = vunpack.c.l.b16 %v7162
        %v7936 = vunpack.c.h.b16 %v7162
        %v7937 = vunpack.c.l.b16 %v7163
        %v7938 = vunpack.c.h.b16 %v7163
        %v7939 = vunpack.c.l.b16 %v7164
        %v7940 = vunpack.c.h.b16 %v7164
        %v7941 = vunpack.c.l.b16 %v7165
        %v7942 = vunpack.c.h.b16 %v7165
        %v7943 = vunpack.c.l.b16 %v7166
        %v7944 = vunpack.c.h.b16 %v7166
        %v7945 = vunpack.c.l.b16 %v7167
        %v7946 = vunpack.c.h.b16 %v7167
        %v7947 = vunpack.c.l.b16 %v7168
        %v7948 = vunpack.c.h.b16 %v7168
        %v7949 = vunpack.c.l.b16 %v7169
        %v7950 = vunpack.c.h.b16 %v7169
        %v7951 = vunpack.c.l.b16 %v7170
        %v7952 = vunpack.c.h.b16 %v7170
        %v7953 = vunpack.c.l.b16 %v7171
        %v7954 = vunpack.c.h.b16 %v7171
        %v7955 = vunpack.c.l.b16 %v7172
        %v7956 = vunpack.c.h.b16 %v7172
        %v7957 = vunpack.c.l.b16 %v7173
        %v7958 = vunpack.c.h.b16 %v7173
        %v7959 = vunpack.c.l.b16 %v7174
        %v7960 = vunpack.c.h.b16 %v7174
        %v7961 = vunpack.c.l.b16 %v7175
        %v7962 = vunpack.c.h.b16 %v7175
        %v7963 = vunpack.c.l.b16 %v7176
        %v7964 = vunpack.c.h.b16 %v7176
        %v7965 = vunpack.c.l.b16 %v7177
        %v7966 = vunpack.c.h.b16 %v7177
        %v7967 = vunpack.c.l.b16 %v7178
        %v7968 = vunpack.c.h.b16 %v7178
        %v7969 = vunpack.c.l.b16 %v7179
        %v7970 = vunpack.c.h.b16 %v7179
        %v7971 = vunpack.c.l.b16 %v7180
        %v7972 = vunpack.c.h.b16 %v7180
        %v7973 = vunpack.c.l.b16 %v7181
        %v7974 = vunpack.c.h.b16 %v7181
        %v7975 = vunpack.c.l.b16 %v7182
        %v7976 = vunpack.c.h.b16 %v7182
        %v7977 = vunpack.c.l.b16 %v7183
        %v7978 = vunpack.c.h.b16 %v7183
        %v7979 = vunpack.c.l.b16 %v7184
        %v7980 = vunpack.c.h.b16 %v7184
        %v7981 = vunpack.c.l.b16 %v7185
        %v7982 = vunpack.c.h.b16 %v7185
        %v7983 = vunpack.c.l.b16 %v7186
        %v7984 = vunpack.c.h.b16 %v7186
        %v7985 = vunpack.c.l.b16 %v7187
        %v7986 = vunpack.c.h.b16 %v7187
        %v7987 = vunpack.c.l.b16 %v7188
        %v7988 = vunpack.c.h.b16 %v7188
        %v7989 = vunpack.c.l.b16 %v7189
        %v7990 = vunpack.c.h.b16 %v7189
        %v7991 = vunpack.c.l.b16 %v7190
        %v7992 = vunpack.c.h.b16 %v7190
        %v7993 = vunpack.c.l.b16 %v7191
        %v7994 = vunpack.c.h.b16 %v7191
        %v7995 = vunpack.c.l.b16 %v7192
        %v7996 = vunpack.c.h.b16 %v7192
        %v7997 = vunpack.c.l.b16 %v7193
        %v7998 = vunpack.c.h.b16 %v7193
        %v7999 = vunpack.c.l.b16 %v7194
        %v8000 = vunpack.c.h.b16 %v7194
        %v8001 = vunpack.c.l.b16 %v7195
        %v8002 = vunpack.c.h.b16 %v7195
        %v8003 = vunpack.c.l.b16 %v7196
        %v8004 = vunpack.c.h.b16 %v7196
        %v8005 = vunpack.c.l.b16 %v7197
        %v8006 = vunpack.c.h.b16 %v7197
        %v8007 = vunpack.c.l.b16 %v7198
        %v8008 = vunpack.c.h.b16 %v7198
        %v8009 = vunpack.c.l.b16 %v7199
        %v8010 = vunpack.c.h.b16 %v7199
        %v8011 = vunpack.c.l.b16 %v7200
        %v8012 = vunpack.c.h.b16 %v7200
        %v8013 = vunpack.c.l.b16 %v7201
        %v8014 = vunpack.c.h.b16 %v7201
        %v8015 = vunpack.c.l.b16 %v7202
        %v8016 = vunpack.c.h.b16 %v7202
        %v8017 = vunpack.c.l.b16 %v7203
        %v8018 = vunpack.c.h.b16 %v7203
        %v8019 = vunpack.c.l.b16 %v7204
        %v8020 = vunpack.c.h.b16 %v7204
        %v8021 = vunpack.c.l.b16 %v7205
        %v8022 = vunpack.c.h.b16 %v7205
        %v8023 = vunpack.c.l.b16 %v7206
        %v8024 = vunpack.c.h.b16 %v7206
        %v8025 = vunpack.c.l.b16 %v7207
        %v8026 = vunpack.c.h.b16 %v7207
        %v8027 = vunpack.c.l.b16 %v7208
        %v8028 = vunpack.c.h.b16 %v7208
        %v8029 = vunpack.c.l.b16 %v7209
        %v8030 = vunpack.c.h.b16 %v7209
        %v8031 = vunpack.c.l.b16 %v7210
        %v8032 = vunpack.c.h.b16 %v7210
        %v8033 = vunpack.c.l.b16 %v7211
        %v8034 = vunpack.c.h.b16 %v7211
        %v8035 = vunpack.c.l.b16 %v7212
        %v8036 = vunpack.c.h.b16 %v7212
        %v8037 = vunpack.c.l.b16 %v7213
        %v8038 = vunpack.c.h.b16 %v7213
        %v8039 = vunpack.c.l.b16 %v7214
        %v8040 = vunpack.c.h.b16 %v7214
        %v8041 = vunpack.c.l.b16 %v7215
        %v8042 = vunpack.c.h.b16 %v7215
        %v8043 = vunpack.c.l.b16 %v7216
        %v8044 = vunpack.c.h.b16 %v7216
        %v8045 = vunpack.c.l.b16 %v7217
        %v8046 = vunpack.c.h.b16 %v7217
        %v8047 = vunpack.c.l.b16 %v7218
        %v8048 = vunpack.c.h.b16 %v7218
        %v8049 = vunpack.c.l.b16 %v7219
        %v8050 = vunpack.c.h.b16 %v7219
        %v8051 = vunpack.c.l.b16 %v7220
        %v8052 = vunpack.c.h.b16 %v7220
        %v8053 = vunpack.c.l.b16 %v7221
        %v8054 = vunpack.c.h.b16 %v7221
        %v8055 = vunpack.c.l.b16 %v7222
        %v8056 = vunpack.c.h.b16 %v7222
        %v8057 = vunpack.c.l.b16 %v7223
        %v8058 = vunpack.c.h.b16 %v7223
        %v8059 = vunpack.c.l.b16 %v7224
        %v8060 = vunpack.c.h.b16 %v7224
        %v8061 = vunpack.c.l.b16 %v7225
        %v8062 = vunpack.c.h.b16 %v7225
        %v8063 = vunpack.c.l.b16 %v7226
        %v8064 = vunpack.c.h.b16 %v7226
        %v8065 = vunpack.c.l.b16 %v7227
        %v8066 = vunpack.c.h.b16 %v7227
        %v8067 = vunpack.c.l.b16 %v7228
        %v8068 = vunpack.c.h.b16 %v7228
        %v8069 = vunpack.c.l.b16 %v7229
        %v8070 = vunpack.c.h.b16 %v7229
        %v8071 = vunpack.c.l.b16 %v7230
        %v8072 = vunpack.c.h.b16 %v7230
        %v8073 = vunpack.c.l.b16 %v7231
        %v8074 = vunpack.c.h.b16 %v7231
        %v8075 = vunpack.c.l.b16 %v7232
        %v8076 = vunpack.c.h.b16 %v7232
        %v8077 = vunpack.c.l.b16 %v7233
        %v8078 = vunpack.c.h.b16 %v7233
        %v8079 = vunpack.c.l.b16 %v7234
        %v8080 = vunpack.c.h.b16 %v7234
        %v8081 = vunpack.c.l.b16 %v7235
        %v8082 = vunpack.c.h.b16 %v7235
        %v8083 = vunpack.c.l.b16 %v7236
        %v8084 = vunpack.c.h.b16 %v7236
        %v8085 = vunpack.c.l.b16 %v7237
        %v8086 = vunpack.c.h.b16 %v7237
        %v8087 = vunpack.c.l.b16 %v7238
        %v8088 = vunpack.c.h.b16 %v7238
        %v8089 = vunpack.c.l.b16 %v7239
        %v8090 = vunpack.c.h.b16 %v7239
        %v8091 = vunpack.c.l.b16 %v7240
        %v8092 = vunpack.c.h.b16 %v7240
        %v8093 = vunpack.c.l.b16 %v7241
        %v8094 = vunpack.c.h.b16 %v7241
        %v8095 = vunpack.c.l.b16 %v7242
        %v8096 = vunpack.c.h.b16 %v7242
        %v8097 = vunpack.c.l.b16 %v7243
        %v8098 = vunpack.c.h.b16 %v7243
        %v8099 = vunpack.c.l.b16 %v7244
        %v8100 = vunpack.c.h.b16 %v7244
        %v8101 = vunpack.c.l.b16 %v7245
        %v8102 = vunpack.c.h.b16 %v7245
        %v8103 = vunpack.c.l.b16 %v7246
        %v8104 = vunpack.c.h.b16 %v7246
        %v8105 = vunpack.c.l.b16 %v7247
        %v8106 = vunpack.c.h.b16 %v7247
        %v8107 = vunpack.c.l.b16 %v7248
        %v8108 = vunpack.c.h.b16 %v7248
        %v8109 = vunpack.c.l.b16 %v7249
        %v8110 = vunpack.c.h.b16 %v7249
        %v8111 = vunpack.c.l.b16 %v7250
        %v8112 = vunpack.c.h.b16 %v7250
        %v8113 = vunpack.c.l.b16 %v7251
        %v8114 = vunpack.c.h.b16 %v7251
        %v8115 = vunpack.c.l.b16 %v7252
        %v8116 = vunpack.c.h.b16 %v7252
        %v8117 = vunpack.c.l.b16 %v7253
        %v8118 = vunpack.c.h.b16 %v7253
        %v8119 = vunpack.c.l.b16 %v7254
        %v8120 = vunpack.c.h.b16 %v7254
        %v8121 = vunpack.c.l.b16 %v7255
        %v8122 = vunpack.c.h.b16 %v7255
        %v8123 = vunpack.c.l.b16 %v7256
        %v8124 = vunpack.c.h.b16 %v7256
        %v8125 = vunpack.c.l.b16 %v7257
        %v8126 = vunpack.c.h.b16 %v7257
        %v8127 = vunpack.c.l.b16 %v7258
        %v8128 = vunpack.c.h.b16 %v7258
        %v8129 = vunpack.c.l.b16 %v7259
        %v8130 = vunpack.c.h.b16 %v7259
        %v8131 = vunpack.c.l.b16 %v7260
        %v8132 = vunpack.c.h.b16 %v7260
        %v8133 = vunpack.c.l.b16 %v7261
        %v8134 = vunpack.c.h.b16 %v7261
        %v8135 = vunpack.c.l.b16 %v7262
        %v8136 = vunpack.c.h.b16 %v7262
        %v8137 = vunpack.c.l.b16 %v7263
        %v8138 = vunpack.c.h.b16 %v7263
        %v8139 = vunpack.c.l.b16 %v7264
        %v8140 = vunpack.c.h.b16 %v7264
        %v8141 = vunpack.c.l.b16 %v7265
        %v8142 = vunpack.c.h.b16 %v7265
        %v8143 = vunpack.c.l.b16 %v7266
        %v8144 = vunpack.c.h.b16 %v7266
        %v8145 = vunpack.c.l.b16 %v7267
        %v8146 = vunpack.c.h.b16 %v7267
        %v8147 = vunpack.c.l.b16 %v7268
        %v8148 = vunpack.c.h.b16 %v7268
        %v8149 = vunpack.c.l.b16 %v7269
        %v8150 = vunpack.c.h.b16 %v7269
        %v8151 = vunpack.c.l.b16 %v7270
        %v8152 = vunpack.c.h.b16 %v7270
        %v8153 = vunpack.c.l.b16 %v7271
        %v8154 = vunpack.c.h.b16 %v7271
        %v8155 = vunpack.c.l.b16 %v7272
        %v8156 = vunpack.c.h.b16 %v7272
        %v8157 = vunpack.c.l.b16 %v7273
        %v8158 = vunpack.c.h.b16 %v7273
        %v8159 = vunpack.c.l.b16 %v7274
        %v8160 = vunpack.c.h.b16 %v7274
        %v8161 = vunpack.c.l.b16 %v7275
        %v8162 = vunpack.c.h.b16 %v7275
        %v8163 = vunpack.c.l.b16 %v7276
        %v8164 = vunpack.c.h.b16 %v7276
        %v8165 = vunpack.c.l.b16 %v7277
        %v8166 = vunpack.c.h.b16 %v7277
        %v8167 = vunpack.c.l.b16 %v7278
        %v8168 = vunpack.c.h.b16 %v7278
        %v8169 = vunpack.c.l.b16 %v7279
        %v8170 = vunpack.c.h.b16 %v7279
        %v8171 = vunpack.c.l.b16 %v7280
        %v8172 = vunpack.c.h.b16 %v7280
        %v8173 = vpack.c.b16 %v7609, %v7597
        %v8174 = vpack.c.b16 %v7610, %v7598
        %v8175 = vpack.c.b16 %v7611, %v7599
        %v8176 = vpack.c.b16 %v7612, %v7600
        %v8177 = vpack.c.b16 %v7613, %v7601
        %v8178 = vpack.c.b16 %v7614, %v7602
        %v8179 = vpack.c.b16 %v7615, %v7603
        %v8180 = vpack.c.b16 %v7616, %v7604
        %v8181 = vpack.c.b16 %v7617, %v7605
        %v8182 = vpack.c.b16 %v7618, %v7606
        %v8183 = vpack.c.b16 %v7619, %v7607
        %v8184 = vpack.c.b16 %v7620, %v7608
        %v8185 = vpack.c.b16 %v7633, %v7621
        %v8186 = vpack.c.b16 %v7634, %v7622
        %v8187 = vpack.c.b16 %v7635, %v7623
        %v8188 = vpack.c.b16 %v7636, %v7624
        %v8189 = vpack.c.b16 %v7637, %v7625
        %v8190 = vpack.c.b16 %v7638, %v7626
        %v8191 = vpack.c.b16 %v7639, %v7627
        %v8192 = vpack.c.b16 %v7640, %v7628
        %v8193 = vpack.c.b16 %v7641, %v7629
        %v8194 = vpack.c.b16 %v7642, %v7630
        %v8195 = vpack.c.b16 %v7643, %v7631
        %v8196 = vpack.c.b16 %v7644, %v7632
        %v8197 = vpack.c.b16 %v7657, %v7645
        %v8198 = vpack.c.b16 %v7658, %v7646
        %v8199 = vpack.c.b16 %v7659, %v7647
        %v8200 = vpack.c.b16 %v7660, %v7648
        %v8201 = vpack.c.b16 %v7661, %v7649
        %v8202 = vpack.c.b16 %v7662, %v7650
        %v8203 = vpack.c.b16 %v7663, %v7651
        %v8204 = vpack.c.b16 %v7664, %v7652
        %v8205 = vpack.c.b16 %v7665, %v7653
        %v8206 = vpack.c.b16 %v7666, %v7654
        %v8207 = vpack.c.b16 %v7667, %v7655
        %v8208 = vpack.c.b16 %v7668, %v7656
        %v8209 = vpack.c.b16 %v7681, %v7669
        %v8210 = vpack.c.b16 %v7682, %v7670
        %v8211 = vpack.c.b16 %v7683, %v7671
        %v8212 = vpack.c.b16 %v7684, %v7672
        %v8213 = vpack.c.b16 %v7685, %v7673
        %v8214 = vpack.c.b16 %v7686, %v7674
        %v8215 = vpack.c.b16 %v7687, %v7675
        %v8216 = vpack.c.b16 %v7688, %v7676
        %v8217 = vpack.c.b16 %v7689, %v7677
        %v8218 = vpack.c.b16 %v7690, %v7678
        %v8219 = vpack.c.b16 %v7691, %v7679
        %v8220 = vpack.c.b16 %v7692, %v7680
        %v8221 = vpack.c.b16 %v7705, %v7693
        %v8222 = vpack.c.b16 %v7706, %v7694
        %v8223 = vpack.c.b16 %v7707, %v7695
        %v8224 = vpack.c.b16 %v7708, %v7696
        %v8225 = vpack.c.b16 %v7709, %v7697
        %v8226 = vpack.c.b16 %v7710, %v7698
        %v8227 = vpack.c.b16 %v7711, %v7699
        %v8228 = vpack.c.b16 %v7712, %v7700
        %v8229 = vpack.c.b16 %v7713, %v7701
        %v8230 = vpack.c.b16 %v7714, %v7702
        %v8231 = vpack.c.b16 %v7715, %v7703
        %v8232 = vpack.c.b16 %v7716, %v7704
        %v8233 = vpack.c.b16 %v7729, %v7717
        %v8234 = vpack.c.b16 %v7730, %v7718
        %v8235 = vpack.c.b16 %v7731, %v7719
        %v8236 = vpack.c.b16 %v7732, %v7720
        %v8237 = vpack.c.b16 %v7733, %v7721
        %v8238 = vpack.c.b16 %v7734, %v7722
        %v8239 = vpack.c.b16 %v7735, %v7723
        %v8240 = vpack.c.b16 %v7736, %v7724
        %v8241 = vpack.c.b16 %v7737, %v7725
        %v8242 = vpack.c.b16 %v7738, %v7726
        %v8243 = vpack.c.b16 %v7739, %v7727
        %v8244 = vpack.c.b16 %v7740, %v7728
        %v8245 = vpack.c.b16 %v7753, %v7741
        %v8246 = vpack.c.b16 %v7754, %v7742
        %v8247 = vpack.c.b16 %v7755, %v7743
        %v8248 = vpack.c.b16 %v7756, %v7744
        %v8249 = vpack.c.b16 %v7757, %v7745
        %v8250 = vpack.c.b16 %v7758, %v7746
        %v8251 = vpack.c.b16 %v7759, %v7747
        %v8252 = vpack.c.b16 %v7760, %v7748
        %v8253 = vpack.c.b16 %v7761, %v7749
        %v8254 = vpack.c.b16 %v7762, %v7750
        %v8255 = vpack.c.b16 %v7763, %v7751
        %v8256 = vpack.c.b16 %v7764, %v7752
        %v8257 = vpack.c.b16 %v7777, %v7765
        %v8258 = vpack.c.b16 %v7778, %v7766
        %v8259 = vpack.c.b16 %v7779, %v7767
        %v8260 = vpack.c.b16 %v7780, %v7768
        %v8261 = vpack.c.b16 %v7781, %v7769
        %v8262 = vpack.c.b16 %v7782, %v7770
        %v8263 = vpack.c.b16 %v7783, %v7771
        %v8264 = vpack.c.b16 %v7784, %v7772
        %v8265 = vpack.c.b16 %v7785, %v7773
        %v8266 = vpack.c.b16 %v7786, %v7774
        %v8267 = vpack.c.b16 %v7787, %v7775
        %v8268 = vpack.c.b16 %v7788, %v7776
        %v8269 = vpack.c.b16 %v7801, %v7789
        %v8270 = vpack.c.b16 %v7802, %v7790
        %v8271 = vpack.c.b16 %v7803, %v7791
        %v8272 = vpack.c.b16 %v7804, %v7792
        %v8273 = vpack.c.b16 %v7805, %v7793
        %v8274 = vpack.c.b16 %v7806, %v7794
        %v8275 = vpack.c.b16 %v7807, %v7795
        %v8276 = vpack.c.b16 %v7808, %v7796
        %v8277 = vpack.c.b16 %v7809, %v7797
        %v8278 = vpack.c.b16 %v7810, %v7798
        %v8279 = vpack.c.b16 %v7811, %v7799
        %v8280 = vpack.c.b16 %v7812, %v7800
        %v8281 = vpack.c.b16 %v7825, %v7813
        %v8282 = vpack.c.b16 %v7826, %v7814
        %v8283 = vpack.c.b16 %v7827, %v7815
        %v8284 = vpack.c.b16 %v7828, %v7816
        %v8285 = vpack.c.b16 %v7829, %v7817
        %v8286 = vpack.c.b16 %v7830, %v7818
        %v8287 = vpack.c.b16 %v7831, %v7819
        %v8288 = vpack.c.b16 %v7832, %v7820
        %v8289 = vpack.c.b16 %v7833, %v7821
        %v8290 = vpack.c.b16 %v7834, %v7822
        %v8291 = vpack.c.b16 %v7835, %v7823
        %v8292 = vpack.c.b16 %v7836, %v7824
        %v8293 = vpack.c.b16 %v7849, %v7837
        %v8294 = vpack.c.b16 %v7850, %v7838
        %v8295 = vpack.c.b16 %v7851, %v7839
        %v8296 = vpack.c.b16 %v7852, %v7840
        %v8297 = vpack.c.b16 %v7853, %v7841
        %v8298 = vpack.c.b16 %v7854, %v7842
        %v8299 = vpack.c.b16 %v7855, %v7843
        %v8300 = vpack.c.b16 %v7856, %v7844
        %v8301 = vpack.c.b16 %v7857, %v7845
        %v8302 = vpack.c.b16 %v7858, %v7846
        %v8303 = vpack.c.b16 %v7859, %v7847
        %v8304 = vpack.c.b16 %v7860, %v7848
        %v8305 = vpack.c.b16 %v7873, %v7861
        %v8306 = vpack.c.b16 %v7874, %v7862
        %v8307 = vpack.c.b16 %v7875, %v7863
        %v8308 = vpack.c.b16 %v7876, %v7864
        %v8309 = vpack.c.b16 %v7877, %v7865
        %v8310 = vpack.c.b16 %v7878, %v7866
        %v8311 = vpack.c.b16 %v7879, %v7867
        %v8312 = vpack.c.b16 %v7880, %v7868
        %v8313 = vpack.c.b16 %v7881, %v7869
        %v8314 = vpack.c.b16 %v7882, %v7870
        %v8315 = vpack.c.b16 %v7883, %v7871
        %v8316 = vpack.c.b16 %v7884, %v7872
        %v8317 = vpack.c.b16 %v7897, %v7885
        %v8318 = vpack.c.b16 %v7898, %v7886
        %v8319 = vpack.c.b16 %v7899, %v7887
        %v8320 = vpack.c.b16 %v7900, %v7888
        %v8321 = vpack.c.b16 %v7901, %v7889
        %v8322 = vpack.c.b16 %v7902, %v7890
        %v8323 = vpack.c.b16 %v7903, %v7891
        %v8324 = vpack.c.b16 %v7904, %v7892
        %v8325 = vpack.c.b16 %v7905, %v7893
        %v8326 = vpack.c.b16 %v7906, %v7894
        %v8327 = vpack.c.b16 %v7907, %v7895
        %v8328 = vpack.c.b16 %v7908, %v7896
        %v8329 = vpack.c.b16 %v7921, %v7909
        %v8330 = vpack.c.b16 %v7922, %v7910
        %v8331 = vpack.c.b16 %v7923, %v7911
        %v8332 = vpack.c.b16 %v7924, %v7912
        %v8333 = vpack.c.b16 %v7925, %v7913
        %v8334 = vpack.c.b16 %v7926, %v7914
        %v8335 = vpack.c.b16 %v7927, %v7915
        %v8336 = vpack.c.b16 %v7928, %v7916
        %v8337 = vpack.c.b16 %v7929, %v7917
        %v8338 = vpack.c.b16 %v7930, %v7918
        %v8339 = vpack.c.b16 %v7931, %v7919
        %v8340 = vpack.c.b16 %v7932, %v7920
        %v8341 = vpack.c.b16 %v7945, %v7933
        %v8342 = vpack.c.b16 %v7946, %v7934
        %v8343 = vpack.c.b16 %v7947, %v7935
        %v8344 = vpack.c.b16 %v7948, %v7936
        %v8345 = vpack.c.b16 %v7949, %v7937
        %v8346 = vpack.c.b16 %v7950, %v7938
        %v8347 = vpack.c.b16 %v7951, %v7939
        %v8348 = vpack.c.b16 %v7952, %v7940
        %v8349 = vpack.c.b16 %v7953, %v7941
        %v8350 = vpack.c.b16 %v7954, %v7942
        %v8351 = vpack.c.b16 %v7955, %v7943
        %v8352 = vpack.c.b16 %v7956, %v7944
        %v8353 = vpack.c.b16 %v7969, %v7957
        %v8354 = vpack.c.b16 %v7970, %v7958
        %v8355 = vpack.c.b16 %v7971, %v7959
        %v8356 = vpack.c.b16 %v7972, %v7960
        %v8357 = vpack.c.b16 %v7973, %v7961
        %v8358 = vpack.c.b16 %v7974, %v7962
        %v8359 = vpack.c.b16 %v7975, %v7963
        %v8360 = vpack.c.b16 %v7976, %v7964
        %v8361 = vpack.c.b16 %v7977, %v7965
        %v8362 = vpack.c.b16 %v7978, %v7966
        %v8363 = vpack.c.b16 %v7979, %v7967
        %v8364 = vpack.c.b16 %v7980, %v7968
        %v8365 = vpack.c.b16 %v7993, %v7981
        %v8366 = vpack.c.b16 %v7994, %v7982
        %v8367 = vpack.c.b16 %v7995, %v7983
        %v8368 = vpack.c.b16 %v7996, %v7984
        %v8369 = vpack.c.b16 %v7997, %v7985
        %v8370 = vpack.c.b16 %v7998, %v7986
        %v8371 = vpack.c.b16 %v7999, %v7987
        %v8372 = vpack.c.b16 %v8000, %v7988
        %v8373 = vpack.c.b16 %v8001, %v7989
        %v8374 = vpack.c.b16 %v8002, %v7990
        %v8375 = vpack.c.b16 %v8003, %v7991
        %v8376 = vpack.c.b16 %v8004, %v7992
        %v8377 = vpack.c.b16 %v8017, %v8005
        %v8378 = vpack.c.b16 %v8018, %v8006
        %v8379 = vpack.c.b16 %v8019, %v8007
        %v8380 = vpack.c.b16 %v8020, %v8008
        %v8381 = vpack.c.b16 %v8021, %v8009
        %v8382 = vpack.c.b16 %v8022, %v8010
        %v8383 = vpack.c.b16 %v8023, %v8011
        %v8384 = vpack.c.b16 %v8024, %v8012
        %v8385 = vpack.c.b16 %v8025, %v8013
        %v8386 = vpack.c.b16 %v8026, %v8014
        %v8387 = vpack.c.b16 %v8027, %v8015
        %v8388 = vpack.c.b16 %v8028, %v8016
        %v8389 = vpack.c.b16 %v8041, %v8029
        %v8390 = vpack.c.b16 %v8042, %v8030
        %v8391 = vpack.c.b16 %v8043, %v8031
        %v8392 = vpack.c.b16 %v8044, %v8032
        %v8393 = vpack.c.b16 %v8045, %v8033
        %v8394 = vpack.c.b16 %v8046, %v8034
        %v8395 = vpack.c.b16 %v8047, %v8035
        %v8396 = vpack.c.b16 %v8048, %v8036
        %v8397 = vpack.c.b16 %v8049, %v8037
        %v8398 = vpack.c.b16 %v8050, %v8038
        %v8399 = vpack.c.b16 %v8051, %v8039
        %v8400 = vpack.c.b16 %v8052, %v8040
        %v8401 = vpack.c.b16 %v8065, %v8053
        %v8402 = vpack.c.b16 %v8066, %v8054
        %v8403 = vpack.c.b16 %v8067, %v8055
        %v8404 = vpack.c.b16 %v8068, %v8056
        %v8405 = vpack.c.b16 %v8069, %v8057
        %v8406 = vpack.c.b16 %v8070, %v8058
        %v8407 = vpack.c.b16 %v8071, %v8059
        %v8408 = vpack.c.b16 %v8072, %v8060
        %v8409 = vpack.c.b16 %v8073, %v8061
        %v8410 = vpack.c.b16 %v8074, %v8062
        %v8411 = vpack.c.b16 %v8075, %v8063
        %v8412 = vpack.c.b16 %v8076, %v8064
        %v8413 = vpack.c.b16 %v8089, %v8077
        %v8414 = vpack.c.b16 %v8090, %v8078
        %v8415 = vpack.c.b16 %v8091, %v8079
        %v8416 = vpack.c.b16 %v8092, %v8080
        %v8417 = vpack.c.b16 %v8093, %v8081
        %v8418 = vpack.c.b16 %v8094, %v8082
        %v8419 = vpack.c.b16 %v8095, %v8083
        %v8420 = vpack.c.b16 %v8096, %v8084
        %v8421 = vpack.c.b16 %v8097, %v8085
        %v8422 = vpack.c.b16 %v8098, %v8086
        %v8423 = vpack.c.b16 %v8099, %v8087
        %v8424 = vpack.c.b16 %v8100, %v8088
        %v8425 = vpack.c.b16 %v8113, %v8101
        %v8426 = vpack.c.b16 %v8114, %v8102
        %v8427 = vpack.c.b16 %v8115, %v8103
        %v8428 = vpack.c.b16 %v8116, %v8104
        %v8429 = vpack.c.b16 %v8117, %v8105
        %v8430 = vpack.c.b16 %v8118, %v8106
        %v8431 = vpack.c.b16 %v8119, %v8107
        %v8432 = vpack.c.b16 %v8120, %v8108
        %v8433 = vpack.c.b16 %v8121, %v8109
        %v8434 = vpack.c.b16 %v8122, %v8110
        %v8435 = vpack.c.b16 %v8123, %v8111
        %v8436 = vpack.c.b16 %v8124, %v8112
        %v8437 = vpack.c.b16 %v8137, %v8125
        %v8438 = vpack.c.b16 %v8138, %v8126
        %v8439 = vpack.c.b16 %v8139, %v8127
        %v8440 = vpack.c.b16 %v8140, %v8128
        %v8441 = vpack.c.b16 %v8141, %v8129
        %v8442 = vpack.c.b16 %v8142, %v8130
        %v8443 = vpack.c.b16 %v8143, %v8131
        %v8444 = vpack.c.b16 %v8144, %v8132
        %v8445 = vpack.c.b16 %v8145, %v8133
        %v8446 = vpack.c.b16 %v8146, %v8134
        %v8447 = vpack.c.b16 %v8147, %v8135
        %v8448 = vpack.c.b16 %v8148, %v8136
        %v8449 = vpack.c.b16 %v8161, %v8149
        %v8450 = vpack.c.b16 %v8162, %v8150
        %v8451 = vpack.c.b16 %v8163, %v8151
        %v8452 = vpack.c.b16 %v8164, %v8152
        %v8453 = vpack.c.b16 %v8165, %v8153
        %v8454 = vpack.c.b16 %v8166, %v8154
        %v8455 = vpack.c.b16 %v8167, %v8155
        %v8456 = vpack.c.b16 %v8168, %v8156
        %v8457 = vpack.c.b16 %v8169, %v8157
        %v8458 = vpack.c.b16 %v8170, %v8158
        %v8459 = vpack.c.b16 %v8171, %v8159
        %v8460 = vpack.c.b16 %v8172, %v8160
        %8749 = vmatpush.bf16.msra.mxu0 %v8257
        %8750 = vmatpush.bf16.msra.mxu0 %v8245
        %8751 = vmatpush.bf16.msra.mxu0 %v8233
        %8752 = vmatpush.bf16.msra.mxu0 %v8221
        %8753 = vmatpush.bf16.msra.mxu0 %v8209
        %8754 = vmatpush.bf16.msra.mxu0 %v8197
        %8755 = vmatpush.bf16.msra.mxu0 %v8185
        %8756 = vmatpush.bf16.msra.mxu0 %v8173
        %8757 = vmatmul.bf16.gmra.mxu0 %v6981
        %v8758 = vpop.f32.mrf.mxu0
        %v8759 = vadd.f32 %v7285, %v8758
        %v8760 = vpop.f32.mrf.mxu0
        %v8761 = vadd.f32 %v7285, %v8760
        %8762 = vmatmul.bf16.gmra.mxu0 %v6984
        %v8763 = vpop.f32.mrf.mxu0
        %v8764 = vadd.f32 %v7285, %v8763
        %v8765 = vpop.f32.mrf.mxu0
        %v8766 = vadd.f32 %v7285, %v8765
        %8767 = vmatmul.bf16.gmra.mxu0 %v6987
        %v8768 = vpop.f32.mrf.mxu0
        %v8769 = vadd.f32 %v7285, %v8768
        %v8770 = vpop.f32.mrf.mxu0
        %v8771 = vadd.f32 %v7285, %v8770
        %8772 = vmatmul.bf16.gmra.mxu0 %v6990
        %v8773 = vpop.f32.mrf.mxu0
        %v8774 = vadd.f32 %v7285, %v8773
        %v8775 = vpop.f32.mrf.mxu0
        %v8776 = vadd.f32 %v7285, %v8775
        %8777 = vdwg.mxu0
        %8778 = vmatpush.bf16.msra.mxu0 %v8353
        %8779 = vmatpush.bf16.msra.mxu0 %v8341
        %8780 = vmatpush.bf16.msra.mxu0 %v8329
        %8781 = vmatpush.bf16.msra.mxu0 %v8317
        %8782 = vmatpush.bf16.msra.mxu0 %v8305
        %8783 = vmatpush.bf16.msra.mxu0 %v8293
        %8784 = vmatpush.bf16.msra.mxu0 %v8281
        %8785 = vmatpush.bf16.msra.mxu0 %v8269
        %8786 = vmatmul.bf16.gmra.mxu0 %v6982
        %v8787 = vpop.f32.mrf.mxu0
        %v8788 = vadd.f32 %v8759, %v8787
        %v8789 = vpop.f32.mrf.mxu0
        %v8790 = vadd.f32 %v8761, %v8789
        %8791 = vmatmul.bf16.gmra.mxu0 %v6985
        %v8792 = vpop.f32.mrf.mxu0
        %v8793 = vadd.f32 %v8764, %v8792
        %v8794 = vpop.f32.mrf.mxu0
        %v8795 = vadd.f32 %v8766, %v8794
        %8796 = vmatmul.bf16.gmra.mxu0 %v6988
        %v8797 = vpop.f32.mrf.mxu0
        %v8798 = vadd.f32 %v8769, %v8797
        %v8799 = vpop.f32.mrf.mxu0
        %v8800 = vadd.f32 %v8771, %v8799
        %8801 = vmatmul.bf16.gmra.mxu0 %v6991
        %v8802 = vpop.f32.mrf.mxu0
        %v8803 = vadd.f32 %v8774, %v8802
        %v8804 = vpop.f32.mrf.mxu0
        %v8805 = vadd.f32 %v8776, %v8804
        %8806 = vdwg.mxu0
        %8807 = vmatpush.bf16.msra.mxu0 %v8449
        %8808 = vmatpush.bf16.msra.mxu0 %v8437
        %8809 = vmatpush.bf16.msra.mxu0 %v8425
        %8810 = vmatpush.bf16.msra.mxu0 %v8413
        %8811 = vmatpush.bf16.msra.mxu0 %v8401
        %8812 = vmatpush.bf16.msra.mxu0 %v8389
        %8813 = vmatpush.bf16.msra.mxu0 %v8377
        %8814 = vmatpush.bf16.msra.mxu0 %v8365
        %8815 = vmatmul.bf16.gmra.mxu0 %v6983
        %v8816 = vpop.f32.mrf.mxu0
        %v8817 = vadd.f32 %v8788, %v8816
        %v8818 = vpop.f32.mrf.mxu0
        %v8819 = vadd.f32 %v8790, %v8818
        %8820 = vmatmul.bf16.gmra.mxu0 %v6986
        %v8821 = vpop.f32.mrf.mxu0
        %v8822 = vadd.f32 %v8793, %v8821
        %v8823 = vpop.f32.mrf.mxu0
        %v8824 = vadd.f32 %v8795, %v8823
        %8825 = vmatmul.bf16.gmra.mxu0 %v6989
        %v8826 = vpop.f32.mrf.mxu0
        %v8827 = vadd.f32 %v8798, %v8826
        %v8828 = vpop.f32.mrf.mxu0
        %v8829 = vadd.f32 %v8800, %v8828
        %8830 = vmatmul.bf16.gmra.mxu0 %v6992
        %v8831 = vpop.f32.mrf.mxu0
        %v8832 = vadd.f32 %v8803, %v8831
        %v8833 = vpop.f32.mrf.mxu0
        %v8834 = vadd.f32 %v8805, %v8833
        %8835 = vdwg.mxu0
        %8836 = vmatpush.bf16.msra.mxu0 %v8258
        %8837 = vmatpush.bf16.msra.mxu0 %v8246
        %8838 = vmatpush.bf16.msra.mxu0 %v8234
        %8839 = vmatpush.bf16.msra.mxu0 %v8222
        %8840 = vmatpush.bf16.msra.mxu0 %v8210
        %8841 = vmatpush.bf16.msra.mxu0 %v8198
        %8842 = vmatpush.bf16.msra.mxu0 %v8186
        %8843 = vmatpush.bf16.msra.mxu0 %v8174
        %8844 = vmatmul.bf16.gmra.mxu0 %v6981
        %v8845 = vpop.f32.mrf.mxu0
        %v8846 = vadd.f32 %v7286, %v8845
        %v8847 = vpop.f32.mrf.mxu0
        %v8848 = vadd.f32 %v7286, %v8847
        %8849 = vmatmul.bf16.gmra.mxu0 %v6984
        %v8850 = vpop.f32.mrf.mxu0
        %v8851 = vadd.f32 %v7286, %v8850
        %v8852 = vpop.f32.mrf.mxu0
        %v8853 = vadd.f32 %v7286, %v8852
        %8854 = vmatmul.bf16.gmra.mxu0 %v6987
        %v8855 = vpop.f32.mrf.mxu0
        %v8856 = vadd.f32 %v7286, %v8855
        %v8857 = vpop.f32.mrf.mxu0
        %v8858 = vadd.f32 %v7286, %v8857
        %8859 = vmatmul.bf16.gmra.mxu0 %v6990
        %v8860 = vpop.f32.mrf.mxu0
        %v8861 = vadd.f32 %v7286, %v8860
        %v8862 = vpop.f32.mrf.mxu0
        %v8863 = vadd.f32 %v7286, %v8862
        %8864 = vdwg.mxu0
        %8865 = vmatpush.bf16.msra.mxu0 %v8354
        %8866 = vmatpush.bf16.msra.mxu0 %v8342
        %8867 = vmatpush.bf16.msra.mxu0 %v8330
        %8868 = vmatpush.bf16.msra.mxu0 %v8318
        %8869 = vmatpush.bf16.msra.mxu0 %v8306
        %8870 = vmatpush.bf16.msra.mxu0 %v8294
        %8871 = vmatpush.bf16.msra.mxu0 %v8282
        %8872 = vmatpush.bf16.msra.mxu0 %v8270
        %8873 = vmatmul.bf16.gmra.mxu0 %v6982
        %v8874 = vpop.f32.mrf.mxu0
        %v8875 = vadd.f32 %v8846, %v8874
        %v8876 = vpop.f32.mrf.mxu0
        %v8877 = vadd.f32 %v8848, %v8876
        %8878 = vmatmul.bf16.gmra.mxu0 %v6985
        %v8879 = vpop.f32.mrf.mxu0
        %v8880 = vadd.f32 %v8851, %v8879
        %v8881 = vpop.f32.mrf.mxu0
        %v8882 = vadd.f32 %v8853, %v8881
        %8883 = vmatmul.bf16.gmra.mxu0 %v6988
        %v8884 = vpop.f32.mrf.mxu0
        %v8885 = vadd.f32 %v8856, %v8884
        %v8886 = vpop.f32.mrf.mxu0
        %v8887 = vadd.f32 %v8858, %v8886
        %8888 = vmatmul.bf16.gmra.mxu0 %v6991
        %v8889 = vpop.f32.mrf.mxu0
        %v8890 = vadd.f32 %v8861, %v8889
        %v8891 = vpop.f32.mrf.mxu0
        %v8892 = vadd.f32 %v8863, %v8891
        %8893 = vdwg.mxu0
        %8894 = vmatpush.bf16.msra.mxu0 %v8450
        %8895 = vmatpush.bf16.msra.mxu0 %v8438
        %8896 = vmatpush.bf16.msra.mxu0 %v8426
        %8897 = vmatpush.bf16.msra.mxu0 %v8414
        %8898 = vmatpush.bf16.msra.mxu0 %v8402
        %8899 = vmatpush.bf16.msra.mxu0 %v8390
        %8900 = vmatpush.bf16.msra.mxu0 %v8378
        %8901 = vmatpush.bf16.msra.mxu0 %v8366
        %8902 = vmatmul.bf16.gmra.mxu0 %v6983
        %v8903 = vpop.f32.mrf.mxu0
        %v8904 = vadd.f32 %v8875, %v8903
        %v8905 = vpop.f32.mrf.mxu0
        %v8906 = vadd.f32 %v8877, %v8905
        %8907 = vmatmul.bf16.gmra.mxu0 %v6986
        %v8908 = vpop.f32.mrf.mxu0
        %v8909 = vadd.f32 %v8880, %v8908
        %v8910 = vpop.f32.mrf.mxu0
        %v8911 = vadd.f32 %v8882, %v8910
        %8912 = vmatmul.bf16.gmra.mxu0 %v6989
        %v8913 = vpop.f32.mrf.mxu0
        %v8914 = vadd.f32 %v8885, %v8913
        %v8915 = vpop.f32.mrf.mxu0
        %v8916 = vadd.f32 %v8887, %v8915
        %8917 = vmatmul.bf16.gmra.mxu0 %v6992
        %v8918 = vpop.f32.mrf.mxu0
        %v8919 = vadd.f32 %v8890, %v8918
        %v8920 = vpop.f32.mrf.mxu0
        %v8921 = vadd.f32 %v8892, %v8920
        %8922 = vdwg.mxu0
        %8923 = vmatpush.bf16.msra.mxu0 %v8259
        %8924 = vmatpush.bf16.msra.mxu0 %v8247
        %8925 = vmatpush.bf16.msra.mxu0 %v8235
        %8926 = vmatpush.bf16.msra.mxu0 %v8223
        %8927 = vmatpush.bf16.msra.mxu0 %v8211
        %8928 = vmatpush.bf16.msra.mxu0 %v8199
        %8929 = vmatpush.bf16.msra.mxu0 %v8187
        %8930 = vmatpush.bf16.msra.mxu0 %v8175
        %8931 = vmatmul.bf16.gmra.mxu0 %v6981
        %v8932 = vpop.f32.mrf.mxu0
        %v8933 = vadd.f32 %v7287, %v8932
        %v8934 = vpop.f32.mrf.mxu0
        %v8935 = vadd.f32 %v7287, %v8934
        %8936 = vmatmul.bf16.gmra.mxu0 %v6984
        %v8937 = vpop.f32.mrf.mxu0
        %v8938 = vadd.f32 %v7287, %v8937
        %v8939 = vpop.f32.mrf.mxu0
        %v8940 = vadd.f32 %v7287, %v8939
        %8941 = vmatmul.bf16.gmra.mxu0 %v6987
        %v8942 = vpop.f32.mrf.mxu0
        %v8943 = vadd.f32 %v7287, %v8942
        %v8944 = vpop.f32.mrf.mxu0
        %v8945 = vadd.f32 %v7287, %v8944
        %8946 = vmatmul.bf16.gmra.mxu0 %v6990
        %v8947 = vpop.f32.mrf.mxu0
        %v8948 = vadd.f32 %v7287, %v8947
        %v8949 = vpop.f32.mrf.mxu0
        %v8950 = vadd.f32 %v7287, %v8949
        %8951 = vdwg.mxu0
        %8952 = vmatpush.bf16.msra.mxu0 %v8355
        %8953 = vmatpush.bf16.msra.mxu0 %v8343
        %8954 = vmatpush.bf16.msra.mxu0 %v8331
        %8955 = vmatpush.bf16.msra.mxu0 %v8319
        %8956 = vmatpush.bf16.msra.mxu0 %v8307
        %8957 = vmatpush.bf16.msra.mxu0 %v8295
        %8958 = vmatpush.bf16.msra.mxu0 %v8283
        %8959 = vmatpush.bf16.msra.mxu0 %v8271
        %8960 = vmatmul.bf16.gmra.mxu0 %v6982
        %v8961 = vpop.f32.mrf.mxu0
        %v8962 = vadd.f32 %v8933, %v8961
        %v8963 = vpop.f32.mrf.mxu0
        %v8964 = vadd.f32 %v8935, %v8963
        %8965 = vmatmul.bf16.gmra.mxu0 %v6985
        %v8966 = vpop.f32.mrf.mxu0
        %v8967 = vadd.f32 %v8938, %v8966
        %v8968 = vpop.f32.mrf.mxu0
        %v8969 = vadd.f32 %v8940, %v8968
        %8970 = vmatmul.bf16.gmra.mxu0 %v6988
        %v8971 = vpop.f32.mrf.mxu0
        %v8972 = vadd.f32 %v8943, %v8971
        %v8973 = vpop.f32.mrf.mxu0
        %v8974 = vadd.f32 %v8945, %v8973
        %8975 = vmatmul.bf16.gmra.mxu0 %v6991
        %v8976 = vpop.f32.mrf.mxu0
        %v8977 = vadd.f32 %v8948, %v8976
        %v8978 = vpop.f32.mrf.mxu0
        %v8979 = vadd.f32 %v8950, %v8978
        %8980 = vdwg.mxu0
        %8981 = vmatpush.bf16.msra.mxu0 %v8451
        %8982 = vmatpush.bf16.msra.mxu0 %v8439
        %8983 = vmatpush.bf16.msra.mxu0 %v8427
        %8984 = vmatpush.bf16.msra.mxu0 %v8415
        %8985 = vmatpush.bf16.msra.mxu0 %v8403
        %8986 = vmatpush.bf16.msra.mxu0 %v8391
        %8987 = vmatpush.bf16.msra.mxu0 %v8379
        %8988 = vmatpush.bf16.msra.mxu0 %v8367
        %8989 = vmatmul.bf16.gmra.mxu0 %v6983
        %v8990 = vpop.f32.mrf.mxu0
        %v8991 = vadd.f32 %v8962, %v8990
        %v8992 = vpop.f32.mrf.mxu0
        %v8993 = vadd.f32 %v8964, %v8992
        %8994 = vmatmul.bf16.gmra.mxu0 %v6986
        %v8995 = vpop.f32.mrf.mxu0
        %v8996 = vadd.f32 %v8967, %v8995
        %v8997 = vpop.f32.mrf.mxu0
        %v8998 = vadd.f32 %v8969, %v8997
        %8999 = vmatmul.bf16.gmra.mxu0 %v6989
        %v9000 = vpop.f32.mrf.mxu0
        %v9001 = vadd.f32 %v8972, %v9000
        %v9002 = vpop.f32.mrf.mxu0
        %v9003 = vadd.f32 %v8974, %v9002
        %9004 = vmatmul.bf16.gmra.mxu0 %v6992
        %v9005 = vpop.f32.mrf.mxu0
        %v9006 = vadd.f32 %v8977, %v9005
        %v9007 = vpop.f32.mrf.mxu0
        %v9008 = vadd.f32 %v8979, %v9007
        %9009 = vdwg.mxu0
        %9010 = vmatpush.bf16.msra.mxu0 %v8260
        %9011 = vmatpush.bf16.msra.mxu0 %v8248
        %9012 = vmatpush.bf16.msra.mxu0 %v8236
        %9013 = vmatpush.bf16.msra.mxu0 %v8224
        %9014 = vmatpush.bf16.msra.mxu0 %v8212
        %9015 = vmatpush.bf16.msra.mxu0 %v8200
        %9016 = vmatpush.bf16.msra.mxu0 %v8188
        %9017 = vmatpush.bf16.msra.mxu0 %v8176
        %9018 = vmatmul.bf16.gmra.mxu0 %v6981
        %v9019 = vpop.f32.mrf.mxu0
        %v9020 = vadd.f32 %v7288, %v9019
        %v9021 = vpop.f32.mrf.mxu0
        %v9022 = vadd.f32 %v7288, %v9021
        %9023 = vmatmul.bf16.gmra.mxu0 %v6984
        %v9024 = vpop.f32.mrf.mxu0
        %v9025 = vadd.f32 %v7288, %v9024
        %v9026 = vpop.f32.mrf.mxu0
        %v9027 = vadd.f32 %v7288, %v9026
        %9028 = vmatmul.bf16.gmra.mxu0 %v6987
        %v9029 = vpop.f32.mrf.mxu0
        %v9030 = vadd.f32 %v7288, %v9029
        %v9031 = vpop.f32.mrf.mxu0
        %v9032 = vadd.f32 %v7288, %v9031
        %9033 = vmatmul.bf16.gmra.mxu0 %v6990
        %v9034 = vpop.f32.mrf.mxu0
        %v9035 = vadd.f32 %v7288, %v9034
        %v9036 = vpop.f32.mrf.mxu0
        %v9037 = vadd.f32 %v7288, %v9036
        %9038 = vdwg.mxu0
        %9039 = vmatpush.bf16.msra.mxu0 %v8356
        %9040 = vmatpush.bf16.msra.mxu0 %v8344
        %9041 = vmatpush.bf16.msra.mxu0 %v8332
        %9042 = vmatpush.bf16.msra.mxu0 %v8320
        %9043 = vmatpush.bf16.msra.mxu0 %v8308
        %9044 = vmatpush.bf16.msra.mxu0 %v8296
        %9045 = vmatpush.bf16.msra.mxu0 %v8284
        %9046 = vmatpush.bf16.msra.mxu0 %v8272
        %9047 = vmatmul.bf16.gmra.mxu0 %v6982
        %v9048 = vpop.f32.mrf.mxu0
        %v9049 = vadd.f32 %v9020, %v9048
        %v9050 = vpop.f32.mrf.mxu0
        %v9051 = vadd.f32 %v9022, %v9050
        %9052 = vmatmul.bf16.gmra.mxu0 %v6985
        %v9053 = vpop.f32.mrf.mxu0
        %v9054 = vadd.f32 %v9025, %v9053
        %v9055 = vpop.f32.mrf.mxu0
        %v9056 = vadd.f32 %v9027, %v9055
        %9057 = vmatmul.bf16.gmra.mxu0 %v6988
        %v9058 = vpop.f32.mrf.mxu0
        %v9059 = vadd.f32 %v9030, %v9058
        %v9060 = vpop.f32.mrf.mxu0
        %v9061 = vadd.f32 %v9032, %v9060
        %9062 = vmatmul.bf16.gmra.mxu0 %v6991
        %v9063 = vpop.f32.mrf.mxu0
        %v9064 = vadd.f32 %v9035, %v9063
        %v9065 = vpop.f32.mrf.mxu0
        %v9066 = vadd.f32 %v9037, %v9065
        %9067 = vdwg.mxu0
        %9068 = vmatpush.bf16.msra.mxu0 %v8452
        %9069 = vmatpush.bf16.msra.mxu0 %v8440
        %9070 = vmatpush.bf16.msra.mxu0 %v8428
        %9071 = vmatpush.bf16.msra.mxu0 %v8416
        %9072 = vmatpush.bf16.msra.mxu0 %v8404
        %9073 = vmatpush.bf16.msra.mxu0 %v8392
        %9074 = vmatpush.bf16.msra.mxu0 %v8380
        %9075 = vmatpush.bf16.msra.mxu0 %v8368
        %9076 = vmatmul.bf16.gmra.mxu0 %v6983
        %v9077 = vpop.f32.mrf.mxu0
        %v9078 = vadd.f32 %v9049, %v9077
        %v9079 = vpop.f32.mrf.mxu0
        %v9080 = vadd.f32 %v9051, %v9079
        %9081 = vmatmul.bf16.gmra.mxu0 %v6986
        %v9082 = vpop.f32.mrf.mxu0
        %v9083 = vadd.f32 %v9054, %v9082
        %v9084 = vpop.f32.mrf.mxu0
        %v9085 = vadd.f32 %v9056, %v9084
        %9086 = vmatmul.bf16.gmra.mxu0 %v6989
        %v9087 = vpop.f32.mrf.mxu0
        %v9088 = vadd.f32 %v9059, %v9087
        %v9089 = vpop.f32.mrf.mxu0
        %v9090 = vadd.f32 %v9061, %v9089
        %9091 = vmatmul.bf16.gmra.mxu0 %v6992
        %v9092 = vpop.f32.mrf.mxu0
        %v9093 = vadd.f32 %v9064, %v9092
        %v9094 = vpop.f32.mrf.mxu0
        %v9095 = vadd.f32 %v9066, %v9094
        %9096 = vdwg.mxu0
        %9097 = vmatpush.bf16.msra.mxu0 %v8261
        %9098 = vmatpush.bf16.msra.mxu0 %v8249
        %9099 = vmatpush.bf16.msra.mxu0 %v8237
        %9100 = vmatpush.bf16.msra.mxu0 %v8225
        %9101 = vmatpush.bf16.msra.mxu0 %v8213
        %9102 = vmatpush.bf16.msra.mxu0 %v8201
        %9103 = vmatpush.bf16.msra.mxu0 %v8189
        %9104 = vmatpush.bf16.msra.mxu0 %v8177
        %9105 = vmatmul.bf16.gmra.mxu0 %v6981
        %v9106 = vpop.f32.mrf.mxu0
        %v9107 = vadd.f32 %v7289, %v9106
        %v9108 = vpop.f32.mrf.mxu0
        %v9109 = vadd.f32 %v7289, %v9108
        %9110 = vmatmul.bf16.gmra.mxu0 %v6984
        %v9111 = vpop.f32.mrf.mxu0
        %v9112 = vadd.f32 %v7289, %v9111
        %v9113 = vpop.f32.mrf.mxu0
        %v9114 = vadd.f32 %v7289, %v9113
        %9115 = vmatmul.bf16.gmra.mxu0 %v6987
        %v9116 = vpop.f32.mrf.mxu0
        %v9117 = vadd.f32 %v7289, %v9116
        %v9118 = vpop.f32.mrf.mxu0
        %v9119 = vadd.f32 %v7289, %v9118
        %9120 = vmatmul.bf16.gmra.mxu0 %v6990
        %v9121 = vpop.f32.mrf.mxu0
        %v9122 = vadd.f32 %v7289, %v9121
        %v9123 = vpop.f32.mrf.mxu0
        %v9124 = vadd.f32 %v7289, %v9123
        %9125 = vdwg.mxu0
        %9126 = vmatpush.bf16.msra.mxu0 %v8357
        %9127 = vmatpush.bf16.msra.mxu0 %v8345
        %9128 = vmatpush.bf16.msra.mxu0 %v8333
        %9129 = vmatpush.bf16.msra.mxu0 %v8321
        %9130 = vmatpush.bf16.msra.mxu0 %v8309
        %9131 = vmatpush.bf16.msra.mxu0 %v8297
        %9132 = vmatpush.bf16.msra.mxu0 %v8285
        %9133 = vmatpush.bf16.msra.mxu0 %v8273
        %9134 = vmatmul.bf16.gmra.mxu0 %v6982
        %v9135 = vpop.f32.mrf.mxu0
        %v9136 = vadd.f32 %v9107, %v9135
        %v9137 = vpop.f32.mrf.mxu0
        %v9138 = vadd.f32 %v9109, %v9137
        %9139 = vmatmul.bf16.gmra.mxu0 %v6985
        %v9140 = vpop.f32.mrf.mxu0
        %v9141 = vadd.f32 %v9112, %v9140
        %v9142 = vpop.f32.mrf.mxu0
        %v9143 = vadd.f32 %v9114, %v9142
        %9144 = vmatmul.bf16.gmra.mxu0 %v6988
        %v9145 = vpop.f32.mrf.mxu0
        %v9146 = vadd.f32 %v9117, %v9145
        %v9147 = vpop.f32.mrf.mxu0
        %v9148 = vadd.f32 %v9119, %v9147
        %9149 = vmatmul.bf16.gmra.mxu0 %v6991
        %v9150 = vpop.f32.mrf.mxu0
        %v9151 = vadd.f32 %v9122, %v9150
        %v9152 = vpop.f32.mrf.mxu0
        %v9153 = vadd.f32 %v9124, %v9152
        %9154 = vdwg.mxu0
        %9155 = vmatpush.bf16.msra.mxu0 %v8453
        %9156 = vmatpush.bf16.msra.mxu0 %v8441
        %9157 = vmatpush.bf16.msra.mxu0 %v8429
        %9158 = vmatpush.bf16.msra.mxu0 %v8417
        %9159 = vmatpush.bf16.msra.mxu0 %v8405
        %9160 = vmatpush.bf16.msra.mxu0 %v8393
        %9161 = vmatpush.bf16.msra.mxu0 %v8381
        %9162 = vmatpush.bf16.msra.mxu0 %v8369
        %9163 = vmatmul.bf16.gmra.mxu0 %v6983
        %v9164 = vpop.f32.mrf.mxu0
        %v9165 = vadd.f32 %v9136, %v9164
        %v9166 = vpop.f32.mrf.mxu0
        %v9167 = vadd.f32 %v9138, %v9166
        %9168 = vmatmul.bf16.gmra.mxu0 %v6986
        %v9169 = vpop.f32.mrf.mxu0
        %v9170 = vadd.f32 %v9141, %v9169
        %v9171 = vpop.f32.mrf.mxu0
        %v9172 = vadd.f32 %v9143, %v9171
        %9173 = vmatmul.bf16.gmra.mxu0 %v6989
        %v9174 = vpop.f32.mrf.mxu0
        %v9175 = vadd.f32 %v9146, %v9174
        %v9176 = vpop.f32.mrf.mxu0
        %v9177 = vadd.f32 %v9148, %v9176
        %9178 = vmatmul.bf16.gmra.mxu0 %v6992
        %v9179 = vpop.f32.mrf.mxu0
        %v9180 = vadd.f32 %v9151, %v9179
        %v9181 = vpop.f32.mrf.mxu0
        %v9182 = vadd.f32 %v9153, %v9181
        %9183 = vdwg.mxu0
        %9184 = vmatpush.bf16.msra.mxu0 %v8262
        %9185 = vmatpush.bf16.msra.mxu0 %v8250
        %9186 = vmatpush.bf16.msra.mxu0 %v8238
        %9187 = vmatpush.bf16.msra.mxu0 %v8226
        %9188 = vmatpush.bf16.msra.mxu0 %v8214
        %9189 = vmatpush.bf16.msra.mxu0 %v8202
        %9190 = vmatpush.bf16.msra.mxu0 %v8190
        %9191 = vmatpush.bf16.msra.mxu0 %v8178
        %9192 = vmatmul.bf16.gmra.mxu0 %v6981
        %v9193 = vpop.f32.mrf.mxu0
        %v9194 = vadd.f32 %v7290, %v9193
        %v9195 = vpop.f32.mrf.mxu0
        %v9196 = vadd.f32 %v7290, %v9195
        %9197 = vmatmul.bf16.gmra.mxu0 %v6984
        %v9198 = vpop.f32.mrf.mxu0
        %v9199 = vadd.f32 %v7290, %v9198
        %v9200 = vpop.f32.mrf.mxu0
        %v9201 = vadd.f32 %v7290, %v9200
        %9202 = vmatmul.bf16.gmra.mxu0 %v6987
        %v9203 = vpop.f32.mrf.mxu0
        %v9204 = vadd.f32 %v7290, %v9203
        %v9205 = vpop.f32.mrf.mxu0
        %v9206 = vadd.f32 %v7290, %v9205
        %9207 = vmatmul.bf16.gmra.mxu0 %v6990
        %v9208 = vpop.f32.mrf.mxu0
        %v9209 = vadd.f32 %v7290, %v9208
        %v9210 = vpop.f32.mrf.mxu0
        %v9211 = vadd.f32 %v7290, %v9210
        %9212 = vdwg.mxu0
        %9213 = vmatpush.bf16.msra.mxu0 %v8358
        %9214 = vmatpush.bf16.msra.mxu0 %v8346
        %9215 = vmatpush.bf16.msra.mxu0 %v8334
        %9216 = vmatpush.bf16.msra.mxu0 %v8322
        %9217 = vmatpush.bf16.msra.mxu0 %v8310
        %9218 = vmatpush.bf16.msra.mxu0 %v8298
        %9219 = vmatpush.bf16.msra.mxu0 %v8286
        %9220 = vmatpush.bf16.msra.mxu0 %v8274
        %9221 = vmatmul.bf16.gmra.mxu0 %v6982
        %v9222 = vpop.f32.mrf.mxu0
        %v9223 = vadd.f32 %v9194, %v9222
        %v9224 = vpop.f32.mrf.mxu0
        %v9225 = vadd.f32 %v9196, %v9224
        %9226 = vmatmul.bf16.gmra.mxu0 %v6985
        %v9227 = vpop.f32.mrf.mxu0
        %v9228 = vadd.f32 %v9199, %v9227
        %v9229 = vpop.f32.mrf.mxu0
        %v9230 = vadd.f32 %v9201, %v9229
        %9231 = vmatmul.bf16.gmra.mxu0 %v6988
        %v9232 = vpop.f32.mrf.mxu0
        %v9233 = vadd.f32 %v9204, %v9232
        %v9234 = vpop.f32.mrf.mxu0
        %v9235 = vadd.f32 %v9206, %v9234
        %9236 = vmatmul.bf16.gmra.mxu0 %v6991
        %v9237 = vpop.f32.mrf.mxu0
        %v9238 = vadd.f32 %v9209, %v9237
        %v9239 = vpop.f32.mrf.mxu0
        %v9240 = vadd.f32 %v9211, %v9239
        %9241 = vdwg.mxu0
        %9242 = vmatpush.bf16.msra.mxu0 %v8454
        %9243 = vmatpush.bf16.msra.mxu0 %v8442
        %9244 = vmatpush.bf16.msra.mxu0 %v8430
        %9245 = vmatpush.bf16.msra.mxu0 %v8418
        %9246 = vmatpush.bf16.msra.mxu0 %v8406
        %9247 = vmatpush.bf16.msra.mxu0 %v8394
        %9248 = vmatpush.bf16.msra.mxu0 %v8382
        %9249 = vmatpush.bf16.msra.mxu0 %v8370
        %9250 = vmatmul.bf16.gmra.mxu0 %v6983
        %v9251 = vpop.f32.mrf.mxu0
        %v9252 = vadd.f32 %v9223, %v9251
        %v9253 = vpop.f32.mrf.mxu0
        %v9254 = vadd.f32 %v9225, %v9253
        %9255 = vmatmul.bf16.gmra.mxu0 %v6986
        %v9256 = vpop.f32.mrf.mxu0
        %v9257 = vadd.f32 %v9228, %v9256
        %v9258 = vpop.f32.mrf.mxu0
        %v9259 = vadd.f32 %v9230, %v9258
        %9260 = vmatmul.bf16.gmra.mxu0 %v6989
        %v9261 = vpop.f32.mrf.mxu0
        %v9262 = vadd.f32 %v9233, %v9261
        %v9263 = vpop.f32.mrf.mxu0
        %v9264 = vadd.f32 %v9235, %v9263
        %9265 = vmatmul.bf16.gmra.mxu0 %v6992
        %v9266 = vpop.f32.mrf.mxu0
        %v9267 = vadd.f32 %v9238, %v9266
        %v9268 = vpop.f32.mrf.mxu0
        %v9269 = vadd.f32 %v9240, %v9268
        %9270 = vdwg.mxu0
        %9271 = vmatpush.bf16.msra.mxu0 %v8263
        %9272 = vmatpush.bf16.msra.mxu0 %v8251
        %9273 = vmatpush.bf16.msra.mxu0 %v8239
        %9274 = vmatpush.bf16.msra.mxu0 %v8227
        %9275 = vmatpush.bf16.msra.mxu0 %v8215
        %9276 = vmatpush.bf16.msra.mxu0 %v8203
        %9277 = vmatpush.bf16.msra.mxu0 %v8191
        %9278 = vmatpush.bf16.msra.mxu0 %v8179
        %9279 = vmatmul.bf16.gmra.mxu0 %v6981
        %v9280 = vpop.f32.mrf.mxu0
        %v9281 = vadd.f32 %v7291, %v9280
        %v9282 = vpop.f32.mrf.mxu0
        %v9283 = vadd.f32 %v7291, %v9282
        %9284 = vmatmul.bf16.gmra.mxu0 %v6984
        %v9285 = vpop.f32.mrf.mxu0
        %v9286 = vadd.f32 %v7291, %v9285
        %v9287 = vpop.f32.mrf.mxu0
        %v9288 = vadd.f32 %v7291, %v9287
        %9289 = vmatmul.bf16.gmra.mxu0 %v6987
        %v9290 = vpop.f32.mrf.mxu0
        %v9291 = vadd.f32 %v7291, %v9290
        %v9292 = vpop.f32.mrf.mxu0
        %v9293 = vadd.f32 %v7291, %v9292
        %9294 = vmatmul.bf16.gmra.mxu0 %v6990
        %v9295 = vpop.f32.mrf.mxu0
        %v9296 = vadd.f32 %v7291, %v9295
        %v9297 = vpop.f32.mrf.mxu0
        %v9298 = vadd.f32 %v7291, %v9297
        %9299 = vdwg.mxu0
        %9300 = vmatpush.bf16.msra.mxu0 %v8359
        %9301 = vmatpush.bf16.msra.mxu0 %v8347
        %9302 = vmatpush.bf16.msra.mxu0 %v8335
        %9303 = vmatpush.bf16.msra.mxu0 %v8323
        %9304 = vmatpush.bf16.msra.mxu0 %v8311
        %9305 = vmatpush.bf16.msra.mxu0 %v8299
        %9306 = vmatpush.bf16.msra.mxu0 %v8287
        %9307 = vmatpush.bf16.msra.mxu0 %v8275
        %9308 = vmatmul.bf16.gmra.mxu0 %v6982
        %v9309 = vpop.f32.mrf.mxu0
        %v9310 = vadd.f32 %v9281, %v9309
        %v9311 = vpop.f32.mrf.mxu0
        %v9312 = vadd.f32 %v9283, %v9311
        %9313 = vmatmul.bf16.gmra.mxu0 %v6985
        %v9314 = vpop.f32.mrf.mxu0
        %v9315 = vadd.f32 %v9286, %v9314
        %v9316 = vpop.f32.mrf.mxu0
        %v9317 = vadd.f32 %v9288, %v9316
        %9318 = vmatmul.bf16.gmra.mxu0 %v6988
        %v9319 = vpop.f32.mrf.mxu0
        %v9320 = vadd.f32 %v9291, %v9319
        %v9321 = vpop.f32.mrf.mxu0
        %v9322 = vadd.f32 %v9293, %v9321
        %9323 = vmatmul.bf16.gmra.mxu0 %v6991
        %v9324 = vpop.f32.mrf.mxu0
        %v9325 = vadd.f32 %v9296, %v9324
        %v9326 = vpop.f32.mrf.mxu0
        %v9327 = vadd.f32 %v9298, %v9326
        %9328 = vdwg.mxu0
        %9329 = vmatpush.bf16.msra.mxu0 %v8455
        %9330 = vmatpush.bf16.msra.mxu0 %v8443
        %9331 = vmatpush.bf16.msra.mxu0 %v8431
        %9332 = vmatpush.bf16.msra.mxu0 %v8419
        %9333 = vmatpush.bf16.msra.mxu0 %v8407
        %9334 = vmatpush.bf16.msra.mxu0 %v8395
        %9335 = vmatpush.bf16.msra.mxu0 %v8383
        %9336 = vmatpush.bf16.msra.mxu0 %v8371
        %9337 = vmatmul.bf16.gmra.mxu0 %v6983
        %v9338 = vpop.f32.mrf.mxu0
        %v9339 = vadd.f32 %v9310, %v9338
        %v9340 = vpop.f32.mrf.mxu0
        %v9341 = vadd.f32 %v9312, %v9340
        %9342 = vmatmul.bf16.gmra.mxu0 %v6986
        %v9343 = vpop.f32.mrf.mxu0
        %v9344 = vadd.f32 %v9315, %v9343
        %v9345 = vpop.f32.mrf.mxu0
        %v9346 = vadd.f32 %v9317, %v9345
        %9347 = vmatmul.bf16.gmra.mxu0 %v6989
        %v9348 = vpop.f32.mrf.mxu0
        %v9349 = vadd.f32 %v9320, %v9348
        %v9350 = vpop.f32.mrf.mxu0
        %v9351 = vadd.f32 %v9322, %v9350
        %9352 = vmatmul.bf16.gmra.mxu0 %v6992
        %v9353 = vpop.f32.mrf.mxu0
        %v9354 = vadd.f32 %v9325, %v9353
        %v9355 = vpop.f32.mrf.mxu0
        %v9356 = vadd.f32 %v9327, %v9355
        %9357 = vdwg.mxu0
        %9358 = vmatpush.bf16.msra.mxu0 %v8264
        %9359 = vmatpush.bf16.msra.mxu0 %v8252
        %9360 = vmatpush.bf16.msra.mxu0 %v8240
        %9361 = vmatpush.bf16.msra.mxu0 %v8228
        %9362 = vmatpush.bf16.msra.mxu0 %v8216
        %9363 = vmatpush.bf16.msra.mxu0 %v8204
        %9364 = vmatpush.bf16.msra.mxu0 %v8192
        %9365 = vmatpush.bf16.msra.mxu0 %v8180
        %9366 = vmatmul.bf16.gmra.mxu0 %v6981
        %v9367 = vpop.f32.mrf.mxu0
        %v9368 = vadd.f32 %v7292, %v9367
        %v9369 = vpop.f32.mrf.mxu0
        %v9370 = vadd.f32 %v7292, %v9369
        %9371 = vmatmul.bf16.gmra.mxu0 %v6984
        %v9372 = vpop.f32.mrf.mxu0
        %v9373 = vadd.f32 %v7292, %v9372
        %v9374 = vpop.f32.mrf.mxu0
        %v9375 = vadd.f32 %v7292, %v9374
        %9376 = vmatmul.bf16.gmra.mxu0 %v6987
        %v9377 = vpop.f32.mrf.mxu0
        %v9378 = vadd.f32 %v7292, %v9377
        %v9379 = vpop.f32.mrf.mxu0
        %v9380 = vadd.f32 %v7292, %v9379
        %9381 = vmatmul.bf16.gmra.mxu0 %v6990
        %v9382 = vpop.f32.mrf.mxu0
        %v9383 = vadd.f32 %v7292, %v9382
        %v9384 = vpop.f32.mrf.mxu0
        %v9385 = vadd.f32 %v7292, %v9384
        %9386 = vdwg.mxu0
        %9387 = vmatpush.bf16.msra.mxu0 %v8360
        %9388 = vmatpush.bf16.msra.mxu0 %v8348
        %9389 = vmatpush.bf16.msra.mxu0 %v8336
        %9390 = vmatpush.bf16.msra.mxu0 %v8324
        %9391 = vmatpush.bf16.msra.mxu0 %v8312
        %9392 = vmatpush.bf16.msra.mxu0 %v8300
        %9393 = vmatpush.bf16.msra.mxu0 %v8288
        %9394 = vmatpush.bf16.msra.mxu0 %v8276
        %9395 = vmatmul.bf16.gmra.mxu0 %v6982
        %v9396 = vpop.f32.mrf.mxu0
        %v9397 = vadd.f32 %v9368, %v9396
        %v9398 = vpop.f32.mrf.mxu0
        %v9399 = vadd.f32 %v9370, %v9398
        %9400 = vmatmul.bf16.gmra.mxu0 %v6985
        %v9401 = vpop.f32.mrf.mxu0
        %v9402 = vadd.f32 %v9373, %v9401
        %v9403 = vpop.f32.mrf.mxu0
        %v9404 = vadd.f32 %v9375, %v9403
        %9405 = vmatmul.bf16.gmra.mxu0 %v6988
        %v9406 = vpop.f32.mrf.mxu0
        %v9407 = vadd.f32 %v9378, %v9406
        %v9408 = vpop.f32.mrf.mxu0
        %v9409 = vadd.f32 %v9380, %v9408
        %9410 = vmatmul.bf16.gmra.mxu0 %v6991
        %v9411 = vpop.f32.mrf.mxu0
        %v9412 = vadd.f32 %v9383, %v9411
        %v9413 = vpop.f32.mrf.mxu0
        %v9414 = vadd.f32 %v9385, %v9413
        %9415 = vdwg.mxu0
        %9416 = vmatpush.bf16.msra.mxu0 %v8456
        %9417 = vmatpush.bf16.msra.mxu0 %v8444
        %9418 = vmatpush.bf16.msra.mxu0 %v8432
        %9419 = vmatpush.bf16.msra.mxu0 %v8420
        %9420 = vmatpush.bf16.msra.mxu0 %v8408
        %9421 = vmatpush.bf16.msra.mxu0 %v8396
        %9422 = vmatpush.bf16.msra.mxu0 %v8384
        %9423 = vmatpush.bf16.msra.mxu0 %v8372
        %9424 = vmatmul.bf16.gmra.mxu0 %v6983
        %v9425 = vpop.f32.mrf.mxu0
        %v9426 = vadd.f32 %v9397, %v9425
        %v9427 = vpop.f32.mrf.mxu0
        %v9428 = vadd.f32 %v9399, %v9427
        %9429 = vmatmul.bf16.gmra.mxu0 %v6986
        %v9430 = vpop.f32.mrf.mxu0
        %v9431 = vadd.f32 %v9402, %v9430
        %v9432 = vpop.f32.mrf.mxu0
        %v9433 = vadd.f32 %v9404, %v9432
        %9434 = vmatmul.bf16.gmra.mxu0 %v6989
        %v9435 = vpop.f32.mrf.mxu0
        %v9436 = vadd.f32 %v9407, %v9435
        %v9437 = vpop.f32.mrf.mxu0
        %v9438 = vadd.f32 %v9409, %v9437
        %9439 = vmatmul.bf16.gmra.mxu0 %v6992
        %v9440 = vpop.f32.mrf.mxu0
        %v9441 = vadd.f32 %v9412, %v9440
        %v9442 = vpop.f32.mrf.mxu0
        %v9443 = vadd.f32 %v9414, %v9442
        %9444 = vdwg.mxu0
        %9445 = vmatpush.bf16.msra.mxu0 %v8265
        %9446 = vmatpush.bf16.msra.mxu0 %v8253
        %9447 = vmatpush.bf16.msra.mxu0 %v8241
        %9448 = vmatpush.bf16.msra.mxu0 %v8229
        %9449 = vmatpush.bf16.msra.mxu0 %v8217
        %9450 = vmatpush.bf16.msra.mxu0 %v8205
        %9451 = vmatpush.bf16.msra.mxu0 %v8193
        %9452 = vmatpush.bf16.msra.mxu0 %v8181
        %9453 = vmatmul.bf16.gmra.mxu0 %v6981
        %v9454 = vpop.f32.mrf.mxu0
        %v9455 = vadd.f32 %v7293, %v9454
        %v9456 = vpop.f32.mrf.mxu0
        %v9457 = vadd.f32 %v7293, %v9456
        %9458 = vmatmul.bf16.gmra.mxu0 %v6984
        %v9459 = vpop.f32.mrf.mxu0
        %v9460 = vadd.f32 %v7293, %v9459
        %v9461 = vpop.f32.mrf.mxu0
        %v9462 = vadd.f32 %v7293, %v9461
        %9463 = vmatmul.bf16.gmra.mxu0 %v6987
        %v9464 = vpop.f32.mrf.mxu0
        %v9465 = vadd.f32 %v7293, %v9464
        %v9466 = vpop.f32.mrf.mxu0
        %v9467 = vadd.f32 %v7293, %v9466
        %9468 = vmatmul.bf16.gmra.mxu0 %v6990
        %v9469 = vpop.f32.mrf.mxu0
        %v9470 = vadd.f32 %v7293, %v9469
        %v9471 = vpop.f32.mrf.mxu0
        %v9472 = vadd.f32 %v7293, %v9471
        %9473 = vdwg.mxu0
        %9474 = vmatpush.bf16.msra.mxu0 %v8361
        %9475 = vmatpush.bf16.msra.mxu0 %v8349
        %9476 = vmatpush.bf16.msra.mxu0 %v8337
        %9477 = vmatpush.bf16.msra.mxu0 %v8325
        %9478 = vmatpush.bf16.msra.mxu0 %v8313
        %9479 = vmatpush.bf16.msra.mxu0 %v8301
        %9480 = vmatpush.bf16.msra.mxu0 %v8289
        %9481 = vmatpush.bf16.msra.mxu0 %v8277
        %9482 = vmatmul.bf16.gmra.mxu0 %v6982
        %v9483 = vpop.f32.mrf.mxu0
        %v9484 = vadd.f32 %v9455, %v9483
        %v9485 = vpop.f32.mrf.mxu0
        %v9486 = vadd.f32 %v9457, %v9485
        %9487 = vmatmul.bf16.gmra.mxu0 %v6985
        %v9488 = vpop.f32.mrf.mxu0
        %v9489 = vadd.f32 %v9460, %v9488
        %v9490 = vpop.f32.mrf.mxu0
        %v9491 = vadd.f32 %v9462, %v9490
        %9492 = vmatmul.bf16.gmra.mxu0 %v6988
        %v9493 = vpop.f32.mrf.mxu0
        %v9494 = vadd.f32 %v9465, %v9493
        %v9495 = vpop.f32.mrf.mxu0
        %v9496 = vadd.f32 %v9467, %v9495
        %9497 = vmatmul.bf16.gmra.mxu0 %v6991
        %v9498 = vpop.f32.mrf.mxu0
        %v9499 = vadd.f32 %v9470, %v9498
        %v9500 = vpop.f32.mrf.mxu0
        %v9501 = vadd.f32 %v9472, %v9500
        %9502 = vdwg.mxu0
        %9503 = vmatpush.bf16.msra.mxu0 %v8457
        %9504 = vmatpush.bf16.msra.mxu0 %v8445
        %9505 = vmatpush.bf16.msra.mxu0 %v8433
        %9506 = vmatpush.bf16.msra.mxu0 %v8421
        %9507 = vmatpush.bf16.msra.mxu0 %v8409
        %9508 = vmatpush.bf16.msra.mxu0 %v8397
        %9509 = vmatpush.bf16.msra.mxu0 %v8385
        %9510 = vmatpush.bf16.msra.mxu0 %v8373
        %9511 = vmatmul.bf16.gmra.mxu0 %v6983
        %v9512 = vpop.f32.mrf.mxu0
        %v9513 = vadd.f32 %v9484, %v9512
        %v9514 = vpop.f32.mrf.mxu0
        %v9515 = vadd.f32 %v9486, %v9514
        %9516 = vmatmul.bf16.gmra.mxu0 %v6986
        %v9517 = vpop.f32.mrf.mxu0
        %v9518 = vadd.f32 %v9489, %v9517
        %v9519 = vpop.f32.mrf.mxu0
        %v9520 = vadd.f32 %v9491, %v9519
        %9521 = vmatmul.bf16.gmra.mxu0 %v6989
        %v9522 = vpop.f32.mrf.mxu0
        %v9523 = vadd.f32 %v9494, %v9522
        %v9524 = vpop.f32.mrf.mxu0
        %v9525 = vadd.f32 %v9496, %v9524
        %9526 = vmatmul.bf16.gmra.mxu0 %v6992
        %v9527 = vpop.f32.mrf.mxu0
        %v9528 = vadd.f32 %v9499, %v9527
        %v9529 = vpop.f32.mrf.mxu0
        %v9530 = vadd.f32 %v9501, %v9529
        %9531 = vdwg.mxu0
        %9532 = vmatpush.bf16.msra.mxu0 %v8266
        %9533 = vmatpush.bf16.msra.mxu0 %v8254
        %9534 = vmatpush.bf16.msra.mxu0 %v8242
        %9535 = vmatpush.bf16.msra.mxu0 %v8230
        %9536 = vmatpush.bf16.msra.mxu0 %v8218
        %9537 = vmatpush.bf16.msra.mxu0 %v8206
        %9538 = vmatpush.bf16.msra.mxu0 %v8194
        %9539 = vmatpush.bf16.msra.mxu0 %v8182
        %9540 = vmatmul.bf16.gmra.mxu0 %v6981
        %v9541 = vpop.f32.mrf.mxu0
        %v9542 = vadd.f32 %v7294, %v9541
        %v9543 = vpop.f32.mrf.mxu0
        %v9544 = vadd.f32 %v7294, %v9543
        %9545 = vmatmul.bf16.gmra.mxu0 %v6984
        %v9546 = vpop.f32.mrf.mxu0
        %v9547 = vadd.f32 %v7294, %v9546
        %v9548 = vpop.f32.mrf.mxu0
        %v9549 = vadd.f32 %v7294, %v9548
        %9550 = vmatmul.bf16.gmra.mxu0 %v6987
        %v9551 = vpop.f32.mrf.mxu0
        %v9552 = vadd.f32 %v7294, %v9551
        %v9553 = vpop.f32.mrf.mxu0
        %v9554 = vadd.f32 %v7294, %v9553
        %9555 = vmatmul.bf16.gmra.mxu0 %v6990
        %v9556 = vpop.f32.mrf.mxu0
        %v9557 = vadd.f32 %v7294, %v9556
        %v9558 = vpop.f32.mrf.mxu0
        %v9559 = vadd.f32 %v7294, %v9558
        %9560 = vdwg.mxu0
        %9561 = vmatpush.bf16.msra.mxu0 %v8362
        %9562 = vmatpush.bf16.msra.mxu0 %v8350
        %9563 = vmatpush.bf16.msra.mxu0 %v8338
        %9564 = vmatpush.bf16.msra.mxu0 %v8326
        %9565 = vmatpush.bf16.msra.mxu0 %v8314
        %9566 = vmatpush.bf16.msra.mxu0 %v8302
        %9567 = vmatpush.bf16.msra.mxu0 %v8290
        %9568 = vmatpush.bf16.msra.mxu0 %v8278
        %9569 = vmatmul.bf16.gmra.mxu0 %v6982
        %v9570 = vpop.f32.mrf.mxu0
        %v9571 = vadd.f32 %v9542, %v9570
        %v9572 = vpop.f32.mrf.mxu0
        %v9573 = vadd.f32 %v9544, %v9572
        %9574 = vmatmul.bf16.gmra.mxu0 %v6985
        %v9575 = vpop.f32.mrf.mxu0
        %v9576 = vadd.f32 %v9547, %v9575
        %v9577 = vpop.f32.mrf.mxu0
        %v9578 = vadd.f32 %v9549, %v9577
        %9579 = vmatmul.bf16.gmra.mxu0 %v6988
        %v9580 = vpop.f32.mrf.mxu0
        %v9581 = vadd.f32 %v9552, %v9580
        %v9582 = vpop.f32.mrf.mxu0
        %v9583 = vadd.f32 %v9554, %v9582
        %9584 = vmatmul.bf16.gmra.mxu0 %v6991
        %v9585 = vpop.f32.mrf.mxu0
        %v9586 = vadd.f32 %v9557, %v9585
        %v9587 = vpop.f32.mrf.mxu0
        %v9588 = vadd.f32 %v9559, %v9587
        %9589 = vdwg.mxu0
        %9590 = vmatpush.bf16.msra.mxu0 %v8458
        %9591 = vmatpush.bf16.msra.mxu0 %v8446
        %9592 = vmatpush.bf16.msra.mxu0 %v8434
        %9593 = vmatpush.bf16.msra.mxu0 %v8422
        %9594 = vmatpush.bf16.msra.mxu0 %v8410
        %9595 = vmatpush.bf16.msra.mxu0 %v8398
        %9596 = vmatpush.bf16.msra.mxu0 %v8386
        %9597 = vmatpush.bf16.msra.mxu0 %v8374
        %9598 = vmatmul.bf16.gmra.mxu0 %v6983
        %v9599 = vpop.f32.mrf.mxu0
        %v9600 = vadd.f32 %v9571, %v9599
        %v9601 = vpop.f32.mrf.mxu0
        %v9602 = vadd.f32 %v9573, %v9601
        %9603 = vmatmul.bf16.gmra.mxu0 %v6986
        %v9604 = vpop.f32.mrf.mxu0
        %v9605 = vadd.f32 %v9576, %v9604
        %v9606 = vpop.f32.mrf.mxu0
        %v9607 = vadd.f32 %v9578, %v9606
        %9608 = vmatmul.bf16.gmra.mxu0 %v6989
        %v9609 = vpop.f32.mrf.mxu0
        %v9610 = vadd.f32 %v9581, %v9609
        %v9611 = vpop.f32.mrf.mxu0
        %v9612 = vadd.f32 %v9583, %v9611
        %9613 = vmatmul.bf16.gmra.mxu0 %v6992
        %v9614 = vpop.f32.mrf.mxu0
        %v9615 = vadd.f32 %v9586, %v9614
        %v9616 = vpop.f32.mrf.mxu0
        %v9617 = vadd.f32 %v9588, %v9616
        %9618 = vdwg.mxu0
        %9619 = vmatpush.bf16.msra.mxu0 %v8267
        %9620 = vmatpush.bf16.msra.mxu0 %v8255
        %9621 = vmatpush.bf16.msra.mxu0 %v8243
        %9622 = vmatpush.bf16.msra.mxu0 %v8231
        %9623 = vmatpush.bf16.msra.mxu0 %v8219
        %9624 = vmatpush.bf16.msra.mxu0 %v8207
        %9625 = vmatpush.bf16.msra.mxu0 %v8195
        %9626 = vmatpush.bf16.msra.mxu0 %v8183
        %9627 = vmatmul.bf16.gmra.mxu0 %v6981
        %v9628 = vpop.f32.mrf.mxu0
        %v9629 = vadd.f32 %v7295, %v9628
        %v9630 = vpop.f32.mrf.mxu0
        %v9631 = vadd.f32 %v7295, %v9630
        %9632 = vmatmul.bf16.gmra.mxu0 %v6984
        %v9633 = vpop.f32.mrf.mxu0
        %v9634 = vadd.f32 %v7295, %v9633
        %v9635 = vpop.f32.mrf.mxu0
        %v9636 = vadd.f32 %v7295, %v9635
        %9637 = vmatmul.bf16.gmra.mxu0 %v6987
        %v9638 = vpop.f32.mrf.mxu0
        %v9639 = vadd.f32 %v7295, %v9638
        %v9640 = vpop.f32.mrf.mxu0
        %v9641 = vadd.f32 %v7295, %v9640
        %9642 = vmatmul.bf16.gmra.mxu0 %v6990
        %v9643 = vpop.f32.mrf.mxu0
        %v9644 = vadd.f32 %v7295, %v9643
        %v9645 = vpop.f32.mrf.mxu0
        %v9646 = vadd.f32 %v7295, %v9645
        %9647 = vdwg.mxu0
        %9648 = vmatpush.bf16.msra.mxu0 %v8363
        %9649 = vmatpush.bf16.msra.mxu0 %v8351
        %9650 = vmatpush.bf16.msra.mxu0 %v8339
        %9651 = vmatpush.bf16.msra.mxu0 %v8327
        %9652 = vmatpush.bf16.msra.mxu0 %v8315
        %9653 = vmatpush.bf16.msra.mxu0 %v8303
        %9654 = vmatpush.bf16.msra.mxu0 %v8291
        %9655 = vmatpush.bf16.msra.mxu0 %v8279
        %9656 = vmatmul.bf16.gmra.mxu0 %v6982
        %v9657 = vpop.f32.mrf.mxu0
        %v9658 = vadd.f32 %v9629, %v9657
        %v9659 = vpop.f32.mrf.mxu0
        %v9660 = vadd.f32 %v9631, %v9659
        %9661 = vmatmul.bf16.gmra.mxu0 %v6985
        %v9662 = vpop.f32.mrf.mxu0
        %v9663 = vadd.f32 %v9634, %v9662
        %v9664 = vpop.f32.mrf.mxu0
        %v9665 = vadd.f32 %v9636, %v9664
        %9666 = vmatmul.bf16.gmra.mxu0 %v6988
        %v9667 = vpop.f32.mrf.mxu0
        %v9668 = vadd.f32 %v9639, %v9667
        %v9669 = vpop.f32.mrf.mxu0
        %v9670 = vadd.f32 %v9641, %v9669
        %9671 = vmatmul.bf16.gmra.mxu0 %v6991
        %v9672 = vpop.f32.mrf.mxu0
        %v9673 = vadd.f32 %v9644, %v9672
        %v9674 = vpop.f32.mrf.mxu0
        %v9675 = vadd.f32 %v9646, %v9674
        %9676 = vdwg.mxu0
        %9677 = vmatpush.bf16.msra.mxu0 %v8459
        %9678 = vmatpush.bf16.msra.mxu0 %v8447
        %9679 = vmatpush.bf16.msra.mxu0 %v8435
        %9680 = vmatpush.bf16.msra.mxu0 %v8423
        %9681 = vmatpush.bf16.msra.mxu0 %v8411
        %9682 = vmatpush.bf16.msra.mxu0 %v8399
        %9683 = vmatpush.bf16.msra.mxu0 %v8387
        %9684 = vmatpush.bf16.msra.mxu0 %v8375
        %9685 = vmatmul.bf16.gmra.mxu0 %v6983
        %v9686 = vpop.f32.mrf.mxu0
        %v9687 = vadd.f32 %v9658, %v9686
        %v9688 = vpop.f32.mrf.mxu0
        %v9689 = vadd.f32 %v9660, %v9688
        %9690 = vmatmul.bf16.gmra.mxu0 %v6986
        %v9691 = vpop.f32.mrf.mxu0
        %v9692 = vadd.f32 %v9663, %v9691
        %v9693 = vpop.f32.mrf.mxu0
        %v9694 = vadd.f32 %v9665, %v9693
        %9695 = vmatmul.bf16.gmra.mxu0 %v6989
        %v9696 = vpop.f32.mrf.mxu0
        %v9697 = vadd.f32 %v9668, %v9696
        %v9698 = vpop.f32.mrf.mxu0
        %v9699 = vadd.f32 %v9670, %v9698
        %9700 = vmatmul.bf16.gmra.mxu0 %v6992
        %v9701 = vpop.f32.mrf.mxu0
        %v9702 = vadd.f32 %v9673, %v9701
        %v9703 = vpop.f32.mrf.mxu0
        %v9704 = vadd.f32 %v9675, %v9703
        %9705 = vdwg.mxu0
        %9706 = vmatpush.bf16.msra.mxu0 %v8268
        %9707 = vmatpush.bf16.msra.mxu0 %v8256
        %9708 = vmatpush.bf16.msra.mxu0 %v8244
        %9709 = vmatpush.bf16.msra.mxu0 %v8232
        %9710 = vmatpush.bf16.msra.mxu0 %v8220
        %9711 = vmatpush.bf16.msra.mxu0 %v8208
        %9712 = vmatpush.bf16.msra.mxu0 %v8196
        %9713 = vmatpush.bf16.msra.mxu0 %v8184
        %9714 = vmatmul.bf16.gmra.mxu0 %v6981
        %v9715 = vpop.f32.mrf.mxu0
        %v9716 = vadd.f32 %v7296, %v9715
        %v9717 = vpop.f32.mrf.mxu0
        %v9718 = vadd.f32 %v7296, %v9717
        %9719 = vmatmul.bf16.gmra.mxu0 %v6984
        %v9720 = vpop.f32.mrf.mxu0
        %v9721 = vadd.f32 %v7296, %v9720
        %v9722 = vpop.f32.mrf.mxu0
        %v9723 = vadd.f32 %v7296, %v9722
        %9724 = vmatmul.bf16.gmra.mxu0 %v6987
        %v9725 = vpop.f32.mrf.mxu0
        %v9726 = vadd.f32 %v7296, %v9725
        %v9727 = vpop.f32.mrf.mxu0
        %v9728 = vadd.f32 %v7296, %v9727
        %9729 = vmatmul.bf16.gmra.mxu0 %v6990
        %v9730 = vpop.f32.mrf.mxu0
        %v9731 = vadd.f32 %v7296, %v9730
        %v9732 = vpop.f32.mrf.mxu0
        %v9733 = vadd.f32 %v7296, %v9732
        %9734 = vdwg.mxu0
        %9735 = vmatpush.bf16.msra.mxu0 %v8364
        %9736 = vmatpush.bf16.msra.mxu0 %v8352
        %9737 = vmatpush.bf16.msra.mxu0 %v8340
        %9738 = vmatpush.bf16.msra.mxu0 %v8328
        %9739 = vmatpush.bf16.msra.mxu0 %v8316
        %9740 = vmatpush.bf16.msra.mxu0 %v8304
        %9741 = vmatpush.bf16.msra.mxu0 %v8292
        %9742 = vmatpush.bf16.msra.mxu0 %v8280
        %9743 = vmatmul.bf16.gmra.mxu0 %v6982
        %v9744 = vpop.f32.mrf.mxu0
        %v9745 = vadd.f32 %v9716, %v9744
        %v9746 = vpop.f32.mrf.mxu0
        %v9747 = vadd.f32 %v9718, %v9746
        %9748 = vmatmul.bf16.gmra.mxu0 %v6985
        %v9749 = vpop.f32.mrf.mxu0
        %v9750 = vadd.f32 %v9721, %v9749
        %v9751 = vpop.f32.mrf.mxu0
        %v9752 = vadd.f32 %v9723, %v9751
        %9753 = vmatmul.bf16.gmra.mxu0 %v6988
        %v9754 = vpop.f32.mrf.mxu0
        %v9755 = vadd.f32 %v9726, %v9754
        %v9756 = vpop.f32.mrf.mxu0
        %v9757 = vadd.f32 %v9728, %v9756
        %9758 = vmatmul.bf16.gmra.mxu0 %v6991
        %v9759 = vpop.f32.mrf.mxu0
        %v9760 = vadd.f32 %v9731, %v9759
        %v9761 = vpop.f32.mrf.mxu0
        %v9762 = vadd.f32 %v9733, %v9761
        %9763 = vdwg.mxu0
        %9764 = vmatpush.bf16.msra.mxu0 %v8460
        %9765 = vmatpush.bf16.msra.mxu0 %v8448
        %9766 = vmatpush.bf16.msra.mxu0 %v8436
        %9767 = vmatpush.bf16.msra.mxu0 %v8424
        %9768 = vmatpush.bf16.msra.mxu0 %v8412
        %9769 = vmatpush.bf16.msra.mxu0 %v8400
        %9770 = vmatpush.bf16.msra.mxu0 %v8388
        %9771 = vmatpush.bf16.msra.mxu0 %v8376
        %9772 = vmatmul.bf16.gmra.mxu0 %v6983
        %v9773 = vpop.f32.mrf.mxu0
        %v9774 = vadd.f32 %v9745, %v9773
        %v9775 = vpop.f32.mrf.mxu0
        %v9776 = vadd.f32 %v9747, %v9775
        %9777 = vmatmul.bf16.gmra.mxu0 %v6986
        %v9778 = vpop.f32.mrf.mxu0
        %v9779 = vadd.f32 %v9750, %v9778
        %v9780 = vpop.f32.mrf.mxu0
        %v9781 = vadd.f32 %v9752, %v9780
        %9782 = vmatmul.bf16.gmra.mxu0 %v6989
        %v9783 = vpop.f32.mrf.mxu0
        %v9784 = vadd.f32 %v9755, %v9783
        %v9785 = vpop.f32.mrf.mxu0
        %v9786 = vadd.f32 %v9757, %v9785
        %9787 = vmatmul.bf16.gmra.mxu0 %v6992
        %v9788 = vpop.f32.mrf.mxu0
        %v9789 = vadd.f32 %v9760, %v9788
        %v9790 = vpop.f32.mrf.mxu0
        %v9791 = vadd.f32 %v9762, %v9790
        %9792 = vdwg.mxu0
        %v9793 = vmax.f32 %v8817, 0.0
        %v9794 = vmax.f32 %v8904, 0.0
        %v9795 = vmax.f32 %v8991, 0.0
        %v9796 = vmax.f32 %v9078, 0.0
        %v9797 = vmax.f32 %v9165, 0.0
        %v9798 = vmax.f32 %v9252, 0.0
        %v9799 = vmax.f32 %v9339, 0.0
        %v9800 = vmax.f32 %v9426, 0.0
        %v9801 = vmax.f32 %v9513, 0.0
        %v9802 = vmax.f32 %v9600, 0.0
        %v9803 = vmax.f32 %v9687, 0.0
        %v9804 = vmax.f32 %v9774, 0.0
        %v9805 = vmax.f32 %v8819, 0.0
        %v9806 = vmax.f32 %v8906, 0.0
        %v9807 = vmax.f32 %v8993, 0.0
        %v9808 = vmax.f32 %v9080, 0.0
        %v9809 = vmax.f32 %v9167, 0.0
        %v9810 = vmax.f32 %v9254, 0.0
        %v9811 = vmax.f32 %v9341, 0.0
        %v9812 = vmax.f32 %v9428, 0.0
        %v9813 = vmax.f32 %v9515, 0.0
        %v9814 = vmax.f32 %v9602, 0.0
        %v9815 = vmax.f32 %v9689, 0.0
        %v9816 = vmax.f32 %v9776, 0.0
        %v9817 = vmax.f32 %v8822, 0.0
        %v9818 = vmax.f32 %v8909, 0.0
        %v9819 = vmax.f32 %v8996, 0.0
        %v9820 = vmax.f32 %v9083, 0.0
        %v9821 = vmax.f32 %v9170, 0.0
        %v9822 = vmax.f32 %v9257, 0.0
        %v9823 = vmax.f32 %v9344, 0.0
        %v9824 = vmax.f32 %v9431, 0.0
        %v9825 = vmax.f32 %v9518, 0.0
        %v9826 = vmax.f32 %v9605, 0.0
        %v9827 = vmax.f32 %v9692, 0.0
        %v9828 = vmax.f32 %v9779, 0.0
        %v9829 = vmax.f32 %v8824, 0.0
        %v9830 = vmax.f32 %v8911, 0.0
        %v9831 = vmax.f32 %v8998, 0.0
        %v9832 = vmax.f32 %v9085, 0.0
        %v9833 = vmax.f32 %v9172, 0.0
        %v9834 = vmax.f32 %v9259, 0.0
        %v9835 = vmax.f32 %v9346, 0.0
        %v9836 = vmax.f32 %v9433, 0.0
        %v9837 = vmax.f32 %v9520, 0.0
        %v9838 = vmax.f32 %v9607, 0.0
        %v9839 = vmax.f32 %v9694, 0.0
        %v9840 = vmax.f32 %v9781, 0.0
        %v9841 = vmax.f32 %v8827, 0.0
        %v9842 = vmax.f32 %v8914, 0.0
        %v9843 = vmax.f32 %v9001, 0.0
        %v9844 = vmax.f32 %v9088, 0.0
        %v9845 = vmax.f32 %v9175, 0.0
        %v9846 = vmax.f32 %v9262, 0.0
        %v9847 = vmax.f32 %v9349, 0.0
        %v9848 = vmax.f32 %v9436, 0.0
        %v9849 = vmax.f32 %v9523, 0.0
        %v9850 = vmax.f32 %v9610, 0.0
        %v9851 = vmax.f32 %v9697, 0.0
        %v9852 = vmax.f32 %v9784, 0.0
        %v9853 = vmax.f32 %v8829, 0.0
        %v9854 = vmax.f32 %v8916, 0.0
        %v9855 = vmax.f32 %v9003, 0.0
        %v9856 = vmax.f32 %v9090, 0.0
        %v9857 = vmax.f32 %v9177, 0.0
        %v9858 = vmax.f32 %v9264, 0.0
        %v9859 = vmax.f32 %v9351, 0.0
        %v9860 = vmax.f32 %v9438, 0.0
        %v9861 = vmax.f32 %v9525, 0.0
        %v9862 = vmax.f32 %v9612, 0.0
        %v9863 = vmax.f32 %v9699, 0.0
        %v9864 = vmax.f32 %v9786, 0.0
        %v9865 = vmax.f32 %v8832, 0.0
        %v9866 = vmax.f32 %v8919, 0.0
        %v9867 = vmax.f32 %v9006, 0.0
        %v9868 = vmax.f32 %v9093, 0.0
        %v9869 = vmax.f32 %v9180, 0.0
        %v9870 = vmax.f32 %v9267, 0.0
        %v9871 = vmax.f32 %v9354, 0.0
        %v9872 = vmax.f32 %v9441, 0.0
        %v9873 = vmax.f32 %v9528, 0.0
        %v9874 = vmax.f32 %v9615, 0.0
        %v9875 = vmax.f32 %v9702, 0.0
        %v9876 = vmax.f32 %v9789, 0.0
        %v9877 = vmax.f32 %v8834, 0.0
        %v9878 = vmax.f32 %v8921, 0.0
        %v9879 = vmax.f32 %v9008, 0.0
        %v9880 = vmax.f32 %v9095, 0.0
        %v9881 = vmax.f32 %v9182, 0.0
        %v9882 = vmax.f32 %v9269, 0.0
        %v9883 = vmax.f32 %v9356, 0.0
        %v9884 = vmax.f32 %v9443, 0.0
        %v9885 = vmax.f32 %v9530, 0.0
        %v9886 = vmax.f32 %v9617, 0.0
        %v9887 = vmax.f32 %v9704, 0.0
        %v9888 = vmax.f32 %v9791, 0.0
        %v9889 = vpack.c.bf16 %v9805, %v9793
        %v9890 = vpack.c.bf16 %v9806, %v9794
        %v9891 = vpack.c.bf16 %v9807, %v9795
        %v9892 = vpack.c.bf16 %v9808, %v9796
        %v9893 = vpack.c.bf16 %v9809, %v9797
        %v9894 = vpack.c.bf16 %v9810, %v9798
        %v9895 = vpack.c.bf16 %v9811, %v9799
        %v9896 = vpack.c.bf16 %v9812, %v9800
        %v9897 = vpack.c.bf16 %v9813, %v9801
        %v9898 = vpack.c.bf16 %v9814, %v9802
        %v9899 = vpack.c.bf16 %v9815, %v9803
        %v9900 = vpack.c.bf16 %v9816, %v9804
        %v9901 = vpack.c.bf16 %v9829, %v9817
        %v9902 = vpack.c.bf16 %v9830, %v9818
        %v9903 = vpack.c.bf16 %v9831, %v9819
        %v9904 = vpack.c.bf16 %v9832, %v9820
        %v9905 = vpack.c.bf16 %v9833, %v9821
        %v9906 = vpack.c.bf16 %v9834, %v9822
        %v9907 = vpack.c.bf16 %v9835, %v9823
        %v9908 = vpack.c.bf16 %v9836, %v9824
        %v9909 = vpack.c.bf16 %v9837, %v9825
        %v9910 = vpack.c.bf16 %v9838, %v9826
        %v9911 = vpack.c.bf16 %v9839, %v9827
        %v9912 = vpack.c.bf16 %v9840, %v9828
        %v9913 = vpack.c.bf16 %v9853, %v9841
        %v9914 = vpack.c.bf16 %v9854, %v9842
        %v9915 = vpack.c.bf16 %v9855, %v9843
        %v9916 = vpack.c.bf16 %v9856, %v9844
        %v9917 = vpack.c.bf16 %v9857, %v9845
        %v9918 = vpack.c.bf16 %v9858, %v9846
        %v9919 = vpack.c.bf16 %v9859, %v9847
        %v9920 = vpack.c.bf16 %v9860, %v9848
        %v9921 = vpack.c.bf16 %v9861, %v9849
        %v9922 = vpack.c.bf16 %v9862, %v9850
        %v9923 = vpack.c.bf16 %v9863, %v9851
        %v9924 = vpack.c.bf16 %v9864, %v9852
        %v9925 = vpack.c.bf16 %v9877, %v9865
        %v9926 = vpack.c.bf16 %v9878, %v9866
        %v9927 = vpack.c.bf16 %v9879, %v9867
        %v9928 = vpack.c.bf16 %v9880, %v9868
        %v9929 = vpack.c.bf16 %v9881, %v9869
        %v9930 = vpack.c.bf16 %v9882, %v9870
        %v9931 = vpack.c.bf16 %v9883, %v9871
        %v9932 = vpack.c.bf16 %v9884, %v9872
        %v9933 = vpack.c.bf16 %v9885, %v9873
        %v9934 = vpack.c.bf16 %v9886, %v9874
        %v9935 = vpack.c.bf16 %v9887, %v9875
        %v9936 = vpack.c.bf16 %v9888, %v9876
        %v9937 = vld [vmem:[%s11] sm:$0xff]
        %v9938 = vld [vmem:[%s11 + $0x8] sm:$0xf]
        %v9939 = vld [vmem:[%s11 + $0xc] sm:$0xff]
        %v9940 = vld [vmem:[%s11 + $0x14] sm:$0xf]
        %v9941 = vld [vmem:[%s11 + $0x18] sm:$0xff]
        %v9942 = vld [vmem:[%s11 + $0x20] sm:$0xf]
        %v9943 = vld [vmem:[%s11 + $0x24] sm:$0xff]
        %v9944 = vld [vmem:[%s11 + $0x2c] sm:$0xf]
        %v9945 = vld [vmem:[%s11 + $0x30] sm:$0xff]
        %v9946 = vld [vmem:[%s11 + $0x38] sm:$0xf]
        %v9947 = vld [vmem:[%s11 + $0x3c] sm:$0xff]
        %v9948 = vld [vmem:[%s11 + $0x44] sm:$0xf]
        %v9949 = vld [vmem:[%s11 + $0x48] sm:$0xff]
        %v9950 = vld [vmem:[%s11 + $0x50] sm:$0xf]
        %v9951 = vld [vmem:[%s11 + $0x54] sm:$0xff]
        %v9952 = vld [vmem:[%s11 + $0x5c] sm:$0xf]
        %v9953 = vld [vmem:[%s11 + $0x60] sm:$0xff]
        %v9954 = vld [vmem:[%s11 + $0x68] sm:$0xf]
        %v9955 = vld [vmem:[%s11 + $0x6c] sm:$0xff]
        %v9956 = vld [vmem:[%s11 + $0x74] sm:$0xf]
        %v9957 = vld [vmem:[%s11 + $0x78] sm:$0xff]
        %v9958 = vld [vmem:[%s11 + $0x80] sm:$0xf]
        %v9959 = vld [vmem:[%s11 + $0x84] sm:$0xff]
        %v9960 = vld [vmem:[%s11 + $0x8c] sm:$0xf]
        %v9961 = vld [vmem:[%s11 + $0x90] sm:$0xff]
        %v9962 = vld [vmem:[%s11 + $0x98] sm:$0xf]
        %v9963 = vld [vmem:[%s11 + $0x9c] sm:$0xff]
        %v9964 = vld [vmem:[%s11 + $0xa4] sm:$0xf]
        %v9965 = vld [vmem:[%s11 + $0xa8] sm:$0xff]
        %v9966 = vld [vmem:[%s11 + $0xb0] sm:$0xf]
        %v9967 = vld [vmem:[%s11 + $0xb4] sm:$0xff]
        %v9968 = vld [vmem:[%s11 + $0xbc] sm:$0xf]
        %v9969 = vld [vmem:[%s11 + $0xc0] sm:$0xff]
        %v9970 = vld [vmem:[%s11 + $0xc8] sm:$0xf]
        %v9971 = vld [vmem:[%s11 + $0xcc] sm:$0xff]
        %v9972 = vld [vmem:[%s11 + $0xd4] sm:$0xf]
        %v9973 = vld [vmem:[%s11 + $0xd8] sm:$0xff]
        %v9974 = vld [vmem:[%s11 + $0xe0] sm:$0xf]
        %v9975 = vld [vmem:[%s11 + $0xe4] sm:$0xff]
        %v9976 = vld [vmem:[%s11 + $0xec] sm:$0xf]
        %v9977 = vld [vmem:[%s11 + $0xf0] sm:$0xff]
        %v9978 = vld [vmem:[%s11 + $0xf8] sm:$0xf]
        %v9979 = vld [vmem:[%s11 + $0xfc] sm:$0xff]
        %v9980 = vld [vmem:[%s11 + $0x104] sm:$0xf]
        %v9981 = vld [vmem:[%s11 + $0x108] sm:$0xff]
        %v9982 = vld [vmem:[%s11 + $0x110] sm:$0xf]
        %v9983 = vld [vmem:[%s11 + $0x114] sm:$0xff]
        %v9984 = vld [vmem:[%s11 + $0x11c] sm:$0xf]
        %v9985 = vld [vmem:[%s11 + $0x120] sm:$0xff]
        %v9986 = vld [vmem:[%s11 + $0x128] sm:$0xf]
        %v9987 = vld [vmem:[%s11 + $0x12c] sm:$0xff]
        %v9988 = vld [vmem:[%s11 + $0x134] sm:$0xf]
        %v9989 = vld [vmem:[%s11 + $0x138] sm:$0xff]
        %v9990 = vld [vmem:[%s11 + $0x140] sm:$0xf]
        %v9991 = vld [vmem:[%s11 + $0x144] sm:$0xff]
        %v9992 = vld [vmem:[%s11 + $0x14c] sm:$0xf]
        %v9993 = vld [vmem:[%s11 + $0x150] sm:$0xff]
        %v9994 = vld [vmem:[%s11 + $0x158] sm:$0xf]
        %v9995 = vld [vmem:[%s11 + $0x15c] sm:$0xff]
        %v9996 = vld [vmem:[%s11 + $0x164] sm:$0xf]
        %v9997 = vld [vmem:[%s11 + $0x168] sm:$0xff]
        %v9998 = vld [vmem:[%s11 + $0x170] sm:$0xf]
        %v9999 = vld [vmem:[%s11 + $0x174] sm:$0xff]
        %v10000 = vld [vmem:[%s11 + $0x17c] sm:$0xf]
        %v10001 = vld [vmem:[%s11 + $0x180] sm:$0xff]
        %v10002 = vld [vmem:[%s11 + $0x188] sm:$0xf]
        %v10003 = vld [vmem:[%s11 + $0x18c] sm:$0xff]
        %v10004 = vld [vmem:[%s11 + $0x194] sm:$0xf]
        %v10005 = vld [vmem:[%s11 + $0x198] sm:$0xff]
        %v10006 = vld [vmem:[%s11 + $0x1a0] sm:$0xf]
        %v10007 = vld [vmem:[%s11 + $0x1a4] sm:$0xff]
        %v10008 = vld [vmem:[%s11 + $0x1ac] sm:$0xf]
        %v10009 = vld [vmem:[%s11 + $0x1b0] sm:$0xff]
        %v10010 = vld [vmem:[%s11 + $0x1b8] sm:$0xf]
        %v10011 = vld [vmem:[%s11 + $0x1bc] sm:$0xff]
        %v10012 = vld [vmem:[%s11 + $0x1c4] sm:$0xf]
        %v10013 = vld [vmem:[%s11 + $0x1c8] sm:$0xff]
        %v10014 = vld [vmem:[%s11 + $0x1d0] sm:$0xf]
        %v10015 = vld [vmem:[%s11 + $0x1d4] sm:$0xff]
        %v10016 = vld [vmem:[%s11 + $0x1dc] sm:$0xf]
        %v10017 = vld [vmem:[%s11 + $0x1e0] sm:$0xff]
        %v10018 = vld [vmem:[%s11 + $0x1e8] sm:$0xf]
        %v10019 = vld [vmem:[%s11 + $0x1ec] sm:$0xff]
        %v10020 = vld [vmem:[%s11 + $0x1f4] sm:$0xf]
        %v10021 = vld [vmem:[%s11 + $0x1f8] sm:$0xff]
        %v10022 = vld [vmem:[%s11 + $0x200] sm:$0xf]
        %v10023 = vld [vmem:[%s11 + $0x204] sm:$0xff]
        %v10024 = vld [vmem:[%s11 + $0x20c] sm:$0xf]
        %v10025 = vld [vmem:[%s11 + $0x210] sm:$0xff]
        %v10026 = vld [vmem:[%s11 + $0x218] sm:$0xf]
        %v10027 = vld [vmem:[%s11 + $0x21c] sm:$0xff]
        %v10028 = vld [vmem:[%s11 + $0x224] sm:$0xf]
        %v10029 = vld [vmem:[%s11 + $0x228] sm:$0xff]
        %v10030 = vld [vmem:[%s11 + $0x230] sm:$0xf]
        %v10031 = vld [vmem:[%s11 + $0x234] sm:$0xff]
        %v10032 = vld [vmem:[%s11 + $0x23c] sm:$0xf]
        %v10033 = vld [vmem:[%s11 + $0x240] sm:$0xff]
        %v10034 = vld [vmem:[%s11 + $0x248] sm:$0xf]
        %v10035 = vld [vmem:[%s11 + $0x24c] sm:$0xff]
        %v10036 = vld [vmem:[%s11 + $0x254] sm:$0xf]
        %v10037 = vld [vmem:[%s11 + $0x258] sm:$0xff]
        %v10038 = vld [vmem:[%s11 + $0x260] sm:$0xf]
        %v10039 = vld [vmem:[%s11 + $0x264] sm:$0xff]
        %v10040 = vld [vmem:[%s11 + $0x26c] sm:$0xf]
        %v10041 = vld [vmem:[%s11 + $0x270] sm:$0xff]
        %v10042 = vld [vmem:[%s11 + $0x278] sm:$0xf]
        %v10043 = vld [vmem:[%s11 + $0x27c] sm:$0xff]
        %v10044 = vld [vmem:[%s11 + $0x284] sm:$0xf]
        %v10045 = vld [vmem:[%s11 + $0x288] sm:$0xff]
        %v10046 = vld [vmem:[%s11 + $0x290] sm:$0xf]
        %v10047 = vld [vmem:[%s11 + $0x294] sm:$0xff]
        %v10048 = vld [vmem:[%s11 + $0x29c] sm:$0xf]
        %v10049 = vld [vmem:[%s11 + $0x2a0] sm:$0xff]
        %v10050 = vld [vmem:[%s11 + $0x2a8] sm:$0xf]
        %v10051 = vld [vmem:[%s11 + $0x2ac] sm:$0xff]
        %v10052 = vld [vmem:[%s11 + $0x2b4] sm:$0xf]
        %v10053 = vld [vmem:[%s11 + $0x2b8] sm:$0xff]
        %v10054 = vld [vmem:[%s11 + $0x2c0] sm:$0xf]
        %v10055 = vld [vmem:[%s11 + $0x2c4] sm:$0xff]
        %v10056 = vld [vmem:[%s11 + $0x2cc] sm:$0xf]
        %v10057 = vld [vmem:[%s11 + $0x2d0] sm:$0xff]
        %v10058 = vld [vmem:[%s11 + $0x2d8] sm:$0xf]
        %v10059 = vld [vmem:[%s11 + $0x2dc] sm:$0xff]
        %v10060 = vld [vmem:[%s11 + $0x2e4] sm:$0xf]
        %v10061 = vld [vmem:[%s11 + $0x2e8] sm:$0xff]
        %v10062 = vld [vmem:[%s11 + $0x2f0] sm:$0xf]
        %v10063 = vld [vmem:[%s11 + $0x2f4] sm:$0xff]
        %v10064 = vld [vmem:[%s11 + $0x2fc] sm:$0xf]
        %v10065 = vld [vmem:[%s11 + $0x300] sm:$0xff]
        %v10066 = vld [vmem:[%s11 + $0x308] sm:$0xf]
        %v10067 = vld [vmem:[%s11 + $0x30c] sm:$0xff]
        %v10068 = vld [vmem:[%s11 + $0x314] sm:$0xf]
        %v10069 = vld [vmem:[%s11 + $0x318] sm:$0xff]
        %v10070 = vld [vmem:[%s11 + $0x320] sm:$0xf]
        %v10071 = vld [vmem:[%s11 + $0x324] sm:$0xff]
        %v10072 = vld [vmem:[%s11 + $0x32c] sm:$0xf]
        %v10073 = vld [vmem:[%s11 + $0x330] sm:$0xff]
        %v10074 = vld [vmem:[%s11 + $0x338] sm:$0xf]
        %v10075 = vld [vmem:[%s11 + $0x33c] sm:$0xff]
        %v10076 = vld [vmem:[%s11 + $0x344] sm:$0xf]
        %v10077 = vld [vmem:[%s11 + $0x348] sm:$0xff]
        %v10078 = vld [vmem:[%s11 + $0x350] sm:$0xf]
        %v10079 = vld [vmem:[%s11 + $0x354] sm:$0xff]
        %v10080 = vld [vmem:[%s11 + $0x35c] sm:$0xf]
        %v10081 = vld [vmem:[%s11 + $0x360] sm:$0xff]
        %v10082 = vld [vmem:[%s11 + $0x368] sm:$0xf]
        %v10083 = vld [vmem:[%s11 + $0x36c] sm:$0xff]
        %v10084 = vld [vmem:[%s11 + $0x374] sm:$0xf]
        %v10085 = vld [vmem:[%s11 + $0x378] sm:$0xff]
        %v10086 = vld [vmem:[%s11 + $0x380] sm:$0xf]
        %v10087 = vld [vmem:[%s11 + $0x384] sm:$0xff]
        %v10088 = vld [vmem:[%s11 + $0x38c] sm:$0xf]
        %v10089 = vld [vmem:[%s11 + $0x390] sm:$0xff]
        %v10090 = vld [vmem:[%s11 + $0x398] sm:$0xf]
        %v10091 = vld [vmem:[%s11 + $0x39c] sm:$0xff]
        %v10092 = vld [vmem:[%s11 + $0x3a4] sm:$0xf]
        %v10093 = vld [vmem:[%s11 + $0x3a8] sm:$0xff]
        %v10094 = vld [vmem:[%s11 + $0x3b0] sm:$0xf]
        %v10095 = vld [vmem:[%s11 + $0x3b4] sm:$0xff]
        %v10096 = vld [vmem:[%s11 + $0x3bc] sm:$0xf]
        %v10097 = vld [vmem:[%s11 + $0x3c0] sm:$0xff]
        %v10098 = vld [vmem:[%s11 + $0x3c8] sm:$0xf]
        %v10099 = vld [vmem:[%s11 + $0x3cc] sm:$0xff]
        %v10100 = vld [vmem:[%s11 + $0x3d4] sm:$0xf]
        %v10101 = vld [vmem:[%s11 + $0x3d8] sm:$0xff]
        %v10102 = vld [vmem:[%s11 + $0x3e0] sm:$0xf]
        %v10103 = vld [vmem:[%s11 + $0x3e4] sm:$0xff]
        %v10104 = vld [vmem:[%s11 + $0x3ec] sm:$0xf]
        %v10105 = vld [vmem:[%s11 + $0x3f0] sm:$0xff]
        %v10106 = vld [vmem:[%s11 + $0x3f8] sm:$0xf]
        %v10107 = vld [vmem:[%s11 + $0x3fc] sm:$0xff]
        %v10108 = vld [vmem:[%s11 + $0x404] sm:$0xf]
        %v10109 = vld [vmem:[%s11 + $0x408] sm:$0xff]
        %v10110 = vld [vmem:[%s11 + $0x410] sm:$0xf]
        %v10111 = vld [vmem:[%s11 + $0x414] sm:$0xff]
        %v10112 = vld [vmem:[%s11 + $0x41c] sm:$0xf]
        %v10113 = vld [vmem:[%s11 + $0x420] sm:$0xff]
        %v10114 = vld [vmem:[%s11 + $0x428] sm:$0xf]
        %v10115 = vld [vmem:[%s11 + $0x42c] sm:$0xff]
        %v10116 = vld [vmem:[%s11 + $0x434] sm:$0xf]
        %v10117 = vld [vmem:[%s11 + $0x438] sm:$0xff]
        %v10118 = vld [vmem:[%s11 + $0x440] sm:$0xf]
        %v10119 = vld [vmem:[%s11 + $0x444] sm:$0xff]
        %v10120 = vld [vmem:[%s11 + $0x44c] sm:$0xf]
        %v10121 = vld [vmem:[%s11 + $0x450] sm:$0xff]
        %v10122 = vld [vmem:[%s11 + $0x458] sm:$0xf]
        %v10123 = vld [vmem:[%s11 + $0x45c] sm:$0xff]
        %v10124 = vld [vmem:[%s11 + $0x464] sm:$0xf]
        %v10125 = vld [vmem:[%s11 + $0x468] sm:$0xff]
        %v10126 = vld [vmem:[%s11 + $0x470] sm:$0xf]
        %v10127 = vld [vmem:[%s11 + $0x474] sm:$0xff]
        %v10128 = vld [vmem:[%s11 + $0x47c] sm:$0xf]
        %v10129 = vld [vmem:[%s11 + $0x480] sm:$0xff]
        %v10130 = vld [vmem:[%s11 + $0x488] sm:$0xf]
        %v10131 = vld [vmem:[%s11 + $0x48c] sm:$0xff]
        %v10132 = vld [vmem:[%s11 + $0x494] sm:$0xf]
        %v10133 = vld [vmem:[%s11 + $0x498] sm:$0xff]
        %v10134 = vld [vmem:[%s11 + $0x4a0] sm:$0xf]
        %v10135 = vld [vmem:[%s11 + $0x4a4] sm:$0xff]
        %v10136 = vld [vmem:[%s11 + $0x4ac] sm:$0xf]
        %v10137 = vld [vmem:[%s11 + $0x4b0] sm:$0xff]
        %v10138 = vld [vmem:[%s11 + $0x4b8] sm:$0xf]
        %v10139 = vld [vmem:[%s11 + $0x4bc] sm:$0xff]
        %v10140 = vld [vmem:[%s11 + $0x4c4] sm:$0xf]
        %v10141 = vld [vmem:[%s11 + $0x4c8] sm:$0xff]
        %v10142 = vld [vmem:[%s11 + $0x4d0] sm:$0xf]
        %v10143 = vld [vmem:[%s11 + $0x4d4] sm:$0xff]
        %v10144 = vld [vmem:[%s11 + $0x4dc] sm:$0xf]
        %v10145 = vld [vmem:[%s11 + $0x4e0] sm:$0xff]
        %v10146 = vld [vmem:[%s11 + $0x4e8] sm:$0xf]
        %v10147 = vld [vmem:[%s11 + $0x4ec] sm:$0xff]
        %v10148 = vld [vmem:[%s11 + $0x4f4] sm:$0xf]
        %v10149 = vld [vmem:[%s11 + $0x4f8] sm:$0xff]
        %v10150 = vld [vmem:[%s11 + $0x500] sm:$0xf]
        %v10151 = vld [vmem:[%s11 + $0x504] sm:$0xff]
        %v10152 = vld [vmem:[%s11 + $0x50c] sm:$0xf]
        %v10153 = vld [vmem:[%s11 + $0x510] sm:$0xff]
        %v10154 = vld [vmem:[%s11 + $0x518] sm:$0xf]
        %v10155 = vld [vmem:[%s11 + $0x51c] sm:$0xff]
        %v10156 = vld [vmem:[%s11 + $0x524] sm:$0xf]
        %v10157 = vld [vmem:[%s11 + $0x528] sm:$0xff]
        %v10158 = vld [vmem:[%s11 + $0x530] sm:$0xf]
        %v10159 = vld [vmem:[%s11 + $0x534] sm:$0xff]
        %v10160 = vld [vmem:[%s11 + $0x53c] sm:$0xf]
        %v10161 = vld [vmem:[%s11 + $0x540] sm:$0xff]
        %v10162 = vld [vmem:[%s11 + $0x548] sm:$0xf]
        %v10163 = vld [vmem:[%s11 + $0x54c] sm:$0xff]
        %v10164 = vld [vmem:[%s11 + $0x554] sm:$0xf]
        %v10165 = vld [vmem:[%s11 + $0x558] sm:$0xff]
        %v10166 = vld [vmem:[%s11 + $0x560] sm:$0xf]
        %v10167 = vld [vmem:[%s11 + $0x564] sm:$0xff]
        %v10168 = vld [vmem:[%s11 + $0x56c] sm:$0xf]
        %v10169 = vld [vmem:[%s11 + $0x570] sm:$0xff]
        %v10170 = vld [vmem:[%s11 + $0x578] sm:$0xf]
        %v10171 = vld [vmem:[%s11 + $0x57c] sm:$0xff]
        %v10172 = vld [vmem:[%s11 + $0x584] sm:$0xf]
        %v10173 = vld [vmem:[%s11 + $0x588] sm:$0xff]
        %v10174 = vld [vmem:[%s11 + $0x590] sm:$0xf]
        %v10175 = vld [vmem:[%s11 + $0x594] sm:$0xff]
        %v10176 = vld [vmem:[%s11 + $0x59c] sm:$0xf]
        %v10177 = vld [vmem:[%s11 + $0x5a0] sm:$0xff]
        %v10178 = vld [vmem:[%s11 + $0x5a8] sm:$0xf]
        %v10179 = vld [vmem:[%s11 + $0x5ac] sm:$0xff]
        %v10180 = vld [vmem:[%s11 + $0x5b4] sm:$0xf]
        %v10181 = vld [vmem:[%s11 + $0x5b8] sm:$0xff]
        %v10182 = vld [vmem:[%s11 + $0x5c0] sm:$0xf]
        %v10183 = vld [vmem:[%s11 + $0x5c4] sm:$0xff]
        %v10184 = vld [vmem:[%s11 + $0x5cc] sm:$0xf]
        %v10185 = vld [vmem:[%s11 + $0x5d0] sm:$0xff]
        %v10186 = vld [vmem:[%s11 + $0x5d8] sm:$0xf]
        %v10187 = vld [vmem:[%s11 + $0x5dc] sm:$0xff]
        %v10188 = vld [vmem:[%s11 + $0x5e4] sm:$0xf]
        %v10189 = vld [vmem:[%s11 + $0x5e8] sm:$0xff]
        %v10190 = vld [vmem:[%s11 + $0x5f0] sm:$0xf]
        %v10191 = vld [vmem:[%s11 + $0x5f4] sm:$0xff]
        %v10192 = vld [vmem:[%s11 + $0x5fc] sm:$0xf]
        %v10193 = vld [vmem:[%s11 + $0x600] sm:$0xff]
        %v10194 = vld [vmem:[%s11 + $0x608] sm:$0xf]
        %v10195 = vld [vmem:[%s11 + $0x60c] sm:$0xff]
        %v10196 = vld [vmem:[%s11 + $0x614] sm:$0xf]
        %v10197 = vld [vmem:[%s11 + $0x618] sm:$0xff]
        %v10198 = vld [vmem:[%s11 + $0x620] sm:$0xf]
        %v10199 = vld [vmem:[%s11 + $0x624] sm:$0xff]
        %v10200 = vld [vmem:[%s11 + $0x62c] sm:$0xf]
        %v10201 = vld [vmem:[%s11 + $0x630] sm:$0xff]
        %v10202 = vld [vmem:[%s11 + $0x638] sm:$0xf]
        %v10203 = vld [vmem:[%s11 + $0x63c] sm:$0xff]
        %v10204 = vld [vmem:[%s11 + $0x644] sm:$0xf]
        %v10205 = vld [vmem:[%s11 + $0x648] sm:$0xff]
        %v10206 = vld [vmem:[%s11 + $0x650] sm:$0xf]
        %v10207 = vld [vmem:[%s11 + $0x654] sm:$0xff]
        %v10208 = vld [vmem:[%s11 + $0x65c] sm:$0xf]
        %v10209 = vld [vmem:[%s11 + $0x660] sm:$0xff]
        %v10210 = vld [vmem:[%s11 + $0x668] sm:$0xf]
        %v10211 = vld [vmem:[%s11 + $0x66c] sm:$0xff]
        %v10212 = vld [vmem:[%s11 + $0x674] sm:$0xf]
        %v10213 = vld [vmem:[%s11 + $0x678] sm:$0xff]
        %v10214 = vld [vmem:[%s11 + $0x680] sm:$0xf]
        %v10215 = vld [vmem:[%s11 + $0x684] sm:$0xff]
        %v10216 = vld [vmem:[%s11 + $0x68c] sm:$0xf]
        %v10217 = vld [vmem:[%s11 + $0x690] sm:$0xff]
        %v10218 = vld [vmem:[%s11 + $0x698] sm:$0xf]
        %v10219 = vld [vmem:[%s11 + $0x69c] sm:$0xff]
        %v10220 = vld [vmem:[%s11 + $0x6a4] sm:$0xf]
        %v10221 = vld [vmem:[%s11 + $0x6a8] sm:$0xff]
        %v10222 = vld [vmem:[%s11 + $0x6b0] sm:$0xf]
        %v10223 = vld [vmem:[%s11 + $0x6b4] sm:$0xff]
        %v10224 = vld [vmem:[%s11 + $0x6bc] sm:$0xf]
        %v10225 = vld [vmem:[%s11 + $0x6c0] sm:$0xff]
        %v10226 = vld [vmem:[%s11 + $0x6c8] sm:$0xf]
        %v10227 = vld [vmem:[%s11 + $0x6cc] sm:$0xff]
        %v10228 = vld [vmem:[%s11 + $0x6d4] sm:$0xf]
        %v10229 = vld [vmem:[%s11 + $0x6d8] sm:$0xff]
        %v10230 = vld [vmem:[%s11 + $0x6e0] sm:$0xf]
        %v10231 = vld [vmem:[%s11 + $0x6e4] sm:$0xff]
        %v10232 = vld [vmem:[%s11 + $0x6ec] sm:$0xf]
        %v10233 = vld [vmem:[%s11 + $0x6f0] sm:$0xff]
        %v10234 = vld [vmem:[%s11 + $0x6f8] sm:$0xf]
        %v10235 = vld [vmem:[%s11 + $0x6fc] sm:$0xff]
        %v10236 = vld [vmem:[%s11 + $0x704] sm:$0xf]
        %v10237 = vld [vmem:[%s11 + $0x708] sm:$0xff]
        %v10238 = vld [vmem:[%s11 + $0x710] sm:$0xf]
        %v10239 = vld [vmem:[%s11 + $0x714] sm:$0xff]
        %v10240 = vld [vmem:[%s11 + $0x71c] sm:$0xf]
        %v10241 = vld [vmem:[%s11 + $0x720] sm:$0xff]
        %v10242 = vld [vmem:[%s11 + $0x728] sm:$0xf]
        %v10243 = vld [vmem:[%s11 + $0x72c] sm:$0xff]
        %v10244 = vld [vmem:[%s11 + $0x734] sm:$0xf]
        %v10245 = vld [vmem:[%s11 + $0x738] sm:$0xff]
        %v10246 = vld [vmem:[%s11 + $0x740] sm:$0xf]
        %v10247 = vld [vmem:[%s11 + $0x744] sm:$0xff]
        %v10248 = vld [vmem:[%s11 + $0x74c] sm:$0xf]
        %v10249 = vld [vmem:[%s11 + $0x750] sm:$0xff]
        %v10250 = vld [vmem:[%s11 + $0x758] sm:$0xf]
        %v10251 = vld [vmem:[%s11 + $0x75c] sm:$0xff]
        %v10252 = vld [vmem:[%s11 + $0x764] sm:$0xf]
        %v10253 = vld [vmem:[%s11 + $0x768] sm:$0xff]
        %v10254 = vld [vmem:[%s11 + $0x770] sm:$0xf]
        %v10255 = vld [vmem:[%s11 + $0x774] sm:$0xff]
        %v10256 = vld [vmem:[%s11 + $0x77c] sm:$0xf]
        %v10257 = vld [vmem:[%s11 + $0x780] sm:$0xff]
        %v10258 = vld [vmem:[%s11 + $0x788] sm:$0xf]
        %v10259 = vld [vmem:[%s11 + $0x78c] sm:$0xff]
        %v10260 = vld [vmem:[%s11 + $0x794] sm:$0xf]
        %v10261 = vld [vmem:[%s11 + $0x798] sm:$0xff]
        %v10262 = vld [vmem:[%s11 + $0x7a0] sm:$0xf]
        %v10263 = vld [vmem:[%s11 + $0x7a4] sm:$0xff]
        %v10264 = vld [vmem:[%s11 + $0x7ac] sm:$0xf]
        %v10265 = vld [vmem:[%s11 + $0x7b0] sm:$0xff]
        %v10266 = vld [vmem:[%s11 + $0x7b8] sm:$0xf]
        %v10267 = vld [vmem:[%s11 + $0x7bc] sm:$0xff]
        %v10268 = vld [vmem:[%s11 + $0x7c4] sm:$0xf]
        %v10269 = vld [vmem:[%s11 + $0x7c8] sm:$0xff]
        %v10270 = vld [vmem:[%s11 + $0x7d0] sm:$0xf]
        %v10271 = vld [vmem:[%s11 + $0x7d4] sm:$0xff]
        %v10272 = vld [vmem:[%s11 + $0x7dc] sm:$0xf]
        %v10273 = vld [vmem:[%s11 + $0x7e0] sm:$0xff]
        %v10274 = vld [vmem:[%s11 + $0x7e8] sm:$0xf]
        %v10275 = vld [vmem:[%s11 + $0x7ec] sm:$0xff]
        %v10276 = vld [vmem:[%s11 + $0x7f4] sm:$0xf]
        %v10277 = vld [vmem:[%s11 + $0x7f8] sm:$0xff]
        %v10278 = vld [vmem:[%s11 + $0x800] sm:$0xf]
        %v10279 = vld [vmem:[%s11 + $0x804] sm:$0xff]
        %v10280 = vld [vmem:[%s11 + $0x80c] sm:$0xf]
        %v10281 = vld [vmem:[%s11 + $0x810] sm:$0xff]
        %v10282 = vld [vmem:[%s11 + $0x818] sm:$0xf]
        %v10283 = vld [vmem:[%s11 + $0x81c] sm:$0xff]
        %v10284 = vld [vmem:[%s11 + $0x824] sm:$0xf]
        %v10285 = vld [vmem:[%s11 + $0x828] sm:$0xff]
        %v10286 = vld [vmem:[%s11 + $0x830] sm:$0xf]
        %v10287 = vld [vmem:[%s11 + $0x834] sm:$0xff]
        %v10288 = vld [vmem:[%s11 + $0x83c] sm:$0xf]
        %v10289 = vld [vmem:[%s11 + $0x840] sm:$0xff]
        %v10290 = vld [vmem:[%s11 + $0x848] sm:$0xf]
        %v10291 = vld [vmem:[%s11 + $0x84c] sm:$0xff]
        %v10292 = vld [vmem:[%s11 + $0x854] sm:$0xf]
        %v10293 = vld [vmem:[%s11 + $0x858] sm:$0xff]
        %v10294 = vld [vmem:[%s11 + $0x860] sm:$0xf]
        %v10295 = vld [vmem:[%s11 + $0x864] sm:$0xff]
        %v10296 = vld [vmem:[%s11 + $0x86c] sm:$0xf]
        %v10297 = vld [vmem:[%s11 + $0x870] sm:$0xff]
        %v10298 = vld [vmem:[%s11 + $0x878] sm:$0xf]
        %v10299 = vld [vmem:[%s11 + $0x87c] sm:$0xff]
        %v10300 = vld [vmem:[%s11 + $0x884] sm:$0xf]
        %v10301 = vld [vmem:[%s11 + $0x888] sm:$0xff]
        %v10302 = vld [vmem:[%s11 + $0x890] sm:$0xf]
        %v10303 = vld [vmem:[%s11 + $0x894] sm:$0xff]
        %v10304 = vld [vmem:[%s11 + $0x89c] sm:$0xf]
        %v10305 = vld [vmem:[%s11 + $0x8a0] sm:$0xff]
        %v10306 = vld [vmem:[%s11 + $0x8a8] sm:$0xf]
        %v10307 = vld [vmem:[%s11 + $0x8ac] sm:$0xff]
        %v10308 = vld [vmem:[%s11 + $0x8b4] sm:$0xf]
        %v10309 = vld [vmem:[%s11 + $0x8b8] sm:$0xff]
        %v10310 = vld [vmem:[%s11 + $0x8c0] sm:$0xf]
        %v10311 = vld [vmem:[%s11 + $0x8c4] sm:$0xff]
        %v10312 = vld [vmem:[%s11 + $0x8cc] sm:$0xf]
        %v10313 = vld [vmem:[%s11 + $0x8d0] sm:$0xff]
        %v10314 = vld [vmem:[%s11 + $0x8d8] sm:$0xf]
        %v10315 = vld [vmem:[%s11 + $0x8dc] sm:$0xff]
        %v10316 = vld [vmem:[%s11 + $0x8e4] sm:$0xf]
        %v10317 = vld [vmem:[%s11 + $0x8e8] sm:$0xff]
        %v10318 = vld [vmem:[%s11 + $0x8f0] sm:$0xf]
        %v10319 = vld [vmem:[%s11 + $0x8f4] sm:$0xff]
        %v10320 = vld [vmem:[%s11 + $0x8fc] sm:$0xf]
        %v10321 = vld [vmem:[%s12] sm:$0x7]
        %v10323 = vperm.slane %v10321, 0
        %v10324 = vperm.slane %v10321, 1
        %v10325 = vperm.slane %v10321, 2
        %v10713 = vunpack.c.l.b16 %v9937
        %v10714 = vunpack.c.h.b16 %v9937
        %v10715 = vunpack.c.l.b16 %v9938
        %v10716 = vunpack.c.l.b16 %v9939
        %v10717 = vunpack.c.h.b16 %v9939
        %v10718 = vunpack.c.l.b16 %v9940
        %v10719 = vunpack.c.l.b16 %v9941
        %v10720 = vunpack.c.h.b16 %v9941
        %v10721 = vunpack.c.l.b16 %v9942
        %v10722 = vunpack.c.l.b16 %v9943
        %v10723 = vunpack.c.h.b16 %v9943
        %v10724 = vunpack.c.l.b16 %v9944
        %v10725 = vunpack.c.l.b16 %v9945
        %v10726 = vunpack.c.h.b16 %v9945
        %v10727 = vunpack.c.l.b16 %v9946
        %v10728 = vunpack.c.l.b16 %v9947
        %v10729 = vunpack.c.h.b16 %v9947
        %v10730 = vunpack.c.l.b16 %v9948
        %v10731 = vunpack.c.l.b16 %v9949
        %v10732 = vunpack.c.h.b16 %v9949
        %v10733 = vunpack.c.l.b16 %v9950
        %v10734 = vunpack.c.l.b16 %v9951
        %v10735 = vunpack.c.h.b16 %v9951
        %v10736 = vunpack.c.l.b16 %v9952
        %v10737 = vunpack.c.l.b16 %v9953
        %v10738 = vunpack.c.h.b16 %v9953
        %v10739 = vunpack.c.l.b16 %v9954
        %v10740 = vunpack.c.l.b16 %v9955
        %v10741 = vunpack.c.h.b16 %v9955
        %v10742 = vunpack.c.l.b16 %v9956
        %v10743 = vunpack.c.l.b16 %v9957
        %v10744 = vunpack.c.h.b16 %v9957
        %v10745 = vunpack.c.l.b16 %v9958
        %v10746 = vunpack.c.l.b16 %v9959
        %v10747 = vunpack.c.h.b16 %v9959
        %v10748 = vunpack.c.l.b16 %v9960
        %v10749 = vunpack.c.l.b16 %v9961
        %v10750 = vunpack.c.h.b16 %v9961
        %v10751 = vunpack.c.l.b16 %v9962
        %v10752 = vunpack.c.l.b16 %v9963
        %v10753 = vunpack.c.h.b16 %v9963
        %v10754 = vunpack.c.l.b16 %v9964
        %v10755 = vunpack.c.l.b16 %v9965
        %v10756 = vunpack.c.h.b16 %v9965
        %v10757 = vunpack.c.l.b16 %v9966
        %v10758 = vunpack.c.l.b16 %v9967
        %v10759 = vunpack.c.h.b16 %v9967
        %v10760 = vunpack.c.l.b16 %v9968
        %v10761 = vunpack.c.l.b16 %v9969
        %v10762 = vunpack.c.h.b16 %v9969
        %v10763 = vunpack.c.l.b16 %v9970
        %v10764 = vunpack.c.l.b16 %v9971
        %v10765 = vunpack.c.h.b16 %v9971
        %v10766 = vunpack.c.l.b16 %v9972
        %v10767 = vunpack.c.l.b16 %v9973
        %v10768 = vunpack.c.h.b16 %v9973
        %v10769 = vunpack.c.l.b16 %v9974
        %v10770 = vunpack.c.l.b16 %v9975
        %v10771 = vunpack.c.h.b16 %v9975
        %v10772 = vunpack.c.l.b16 %v9976
        %v10773 = vunpack.c.l.b16 %v9977
        %v10774 = vunpack.c.h.b16 %v9977
        %v10775 = vunpack.c.l.b16 %v9978
        %v10776 = vunpack.c.l.b16 %v9979
        %v10777 = vunpack.c.h.b16 %v9979
        %v10778 = vunpack.c.l.b16 %v9980
        %v10779 = vunpack.c.l.b16 %v9981
        %v10780 = vunpack.c.h.b16 %v9981
        %v10781 = vunpack.c.l.b16 %v9982
        %v10782 = vunpack.c.l.b16 %v9983
        %v10783 = vunpack.c.h.b16 %v9983
        %v10784 = vunpack.c.l.b16 %v9984
        %v10785 = vunpack.c.l.b16 %v9985
        %v10786 = vunpack.c.h.b16 %v9985
        %v10787 = vunpack.c.l.b16 %v9986
        %v10788 = vunpack.c.l.b16 %v9987
        %v10789 = vunpack.c.h.b16 %v9987
        %v10790 = vunpack.c.l.b16 %v9988
        %v10791 = vunpack.c.l.b16 %v9989
        %v10792 = vunpack.c.h.b16 %v9989
        %v10793 = vunpack.c.l.b16 %v9990
        %v10794 = vunpack.c.l.b16 %v9991
        %v10795 = vunpack.c.h.b16 %v9991
        %v10796 = vunpack.c.l.b16 %v9992
        %v10797 = vunpack.c.l.b16 %v9993
        %v10798 = vunpack.c.h.b16 %v9993
        %v10799 = vunpack.c.l.b16 %v9994
        %v10800 = vunpack.c.l.b16 %v9995
        %v10801 = vunpack.c.h.b16 %v9995
        %v10802 = vunpack.c.l.b16 %v9996
        %v10803 = vunpack.c.l.b16 %v9997
        %v10804 = vunpack.c.h.b16 %v9997
        %v10805 = vunpack.c.l.b16 %v9998
        %v10806 = vunpack.c.l.b16 %v9999
        %v10807 = vunpack.c.h.b16 %v9999
        %v10808 = vunpack.c.l.b16 %v10000
        %v10809 = vunpack.c.l.b16 %v10001
        %v10810 = vunpack.c.h.b16 %v10001
        %v10811 = vunpack.c.l.b16 %v10002
        %v10812 = vunpack.c.l.b16 %v10003
        %v10813 = vunpack.c.h.b16 %v10003
        %v10814 = vunpack.c.l.b16 %v10004
        %v10815 = vunpack.c.l.b16 %v10005
        %v10816 = vunpack.c.h.b16 %v10005
        %v10817 = vunpack.c.l.b16 %v10006
        %v10818 = vunpack.c.l.b16 %v10007
        %v10819 = vunpack.c.h.b16 %v10007
        %v10820 = vunpack.c.l.b16 %v10008
        %v10821 = vunpack.c.l.b16 %v10009
        %v10822 = vunpack.c.h.b16 %v10009
        %v10823 = vunpack.c.l.b16 %v10010
        %v10824 = vunpack.c.l.b16 %v10011
        %v10825 = vunpack.c.h.b16 %v10011
        %v10826 = vunpack.c.l.b16 %v10012
        %v10827 = vunpack.c.l.b16 %v10013
        %v10828 = vunpack.c.h.b16 %v10013
        %v10829 = vunpack.c.l.b16 %v10014
        %v10830 = vunpack.c.l.b16 %v10015
        %v10831 = vunpack.c.h.b16 %v10015
        %v10832 = vunpack.c.l.b16 %v10016
        %v10833 = vunpack.c.l.b16 %v10017
        %v10834 = vunpack.c.h.b16 %v10017
        %v10835 = vunpack.c.l.b16 %v10018
        %v10836 = vunpack.c.l.b16 %v10019
        %v10837 = vunpack.c.h.b16 %v10019
        %v10838 = vunpack.c.l.b16 %v10020
        %v10839 = vunpack.c.l.b16 %v10021
        %v10840 = vunpack.c.h.b16 %v10021
        %v10841 = vunpack.c.l.b16 %v10022
        %v10842 = vunpack.c.l.b16 %v10023
        %v10843 = vunpack.c.h.b16 %v10023
        %v10844 = vunpack.c.l.b16 %v10024
        %v10845 = vunpack.c.l.b16 %v10025
        %v10846 = vunpack.c.h.b16 %v10025
        %v10847 = vunpack.c.l.b16 %v10026
        %v10848 = vunpack.c.l.b16 %v10027
        %v10849 = vunpack.c.h.b16 %v10027
        %v10850 = vunpack.c.l.b16 %v10028
        %v10851 = vunpack.c.l.b16 %v10029
        %v10852 = vunpack.c.h.b16 %v10029
        %v10853 = vunpack.c.l.b16 %v10030
        %v10854 = vunpack.c.l.b16 %v10031
        %v10855 = vunpack.c.h.b16 %v10031
        %v10856 = vunpack.c.l.b16 %v10032
        %v10857 = vunpack.c.l.b16 %v10033
        %v10858 = vunpack.c.h.b16 %v10033
        %v10859 = vunpack.c.l.b16 %v10034
        %v10860 = vunpack.c.l.b16 %v10035
        %v10861 = vunpack.c.h.b16 %v10035
        %v10862 = vunpack.c.l.b16 %v10036
        %v10863 = vunpack.c.l.b16 %v10037
        %v10864 = vunpack.c.h.b16 %v10037
        %v10865 = vunpack.c.l.b16 %v10038
        %v10866 = vunpack.c.l.b16 %v10039
        %v10867 = vunpack.c.h.b16 %v10039
        %v10868 = vunpack.c.l.b16 %v10040
        %v10869 = vunpack.c.l.b16 %v10041
        %v10870 = vunpack.c.h.b16 %v10041
        %v10871 = vunpack.c.l.b16 %v10042
        %v10872 = vunpack.c.l.b16 %v10043
        %v10873 = vunpack.c.h.b16 %v10043
        %v10874 = vunpack.c.l.b16 %v10044
        %v10875 = vunpack.c.l.b16 %v10045
        %v10876 = vunpack.c.h.b16 %v10045
        %v10877 = vunpack.c.l.b16 %v10046
        %v10878 = vunpack.c.l.b16 %v10047
        %v10879 = vunpack.c.h.b16 %v10047
        %v10880 = vunpack.c.l.b16 %v10048
        %v10881 = vunpack.c.l.b16 %v10049
        %v10882 = vunpack.c.h.b16 %v10049
        %v10883 = vunpack.c.l.b16 %v10050
        %v10884 = vunpack.c.l.b16 %v10051
        %v10885 = vunpack.c.h.b16 %v10051
        %v10886 = vunpack.c.l.b16 %v10052
        %v10887 = vunpack.c.l.b16 %v10053
        %v10888 = vunpack.c.h.b16 %v10053
        %v10889 = vunpack.c.l.b16 %v10054
        %v10890 = vunpack.c.l.b16 %v10055
        %v10891 = vunpack.c.h.b16 %v10055
        %v10892 = vunpack.c.l.b16 %v10056
        %v10893 = vunpack.c.l.b16 %v10057
        %v10894 = vunpack.c.h.b16 %v10057
        %v10895 = vunpack.c.l.b16 %v10058
        %v10896 = vunpack.c.l.b16 %v10059
        %v10897 = vunpack.c.h.b16 %v10059
        %v10898 = vunpack.c.l.b16 %v10060
        %v10899 = vunpack.c.l.b16 %v10061
        %v10900 = vunpack.c.h.b16 %v10061
        %v10901 = vunpack.c.l.b16 %v10062
        %v10902 = vunpack.c.l.b16 %v10063
        %v10903 = vunpack.c.h.b16 %v10063
        %v10904 = vunpack.c.l.b16 %v10064
        %v10905 = vunpack.c.l.b16 %v10065
        %v10906 = vunpack.c.h.b16 %v10065
        %v10907 = vunpack.c.l.b16 %v10066
        %v10908 = vunpack.c.l.b16 %v10067
        %v10909 = vunpack.c.h.b16 %v10067
        %v10910 = vunpack.c.l.b16 %v10068
        %v10911 = vunpack.c.l.b16 %v10069
        %v10912 = vunpack.c.h.b16 %v10069
        %v10913 = vunpack.c.l.b16 %v10070
        %v10914 = vunpack.c.l.b16 %v10071
        %v10915 = vunpack.c.h.b16 %v10071
        %v10916 = vunpack.c.l.b16 %v10072
        %v10917 = vunpack.c.l.b16 %v10073
        %v10918 = vunpack.c.h.b16 %v10073
        %v10919 = vunpack.c.l.b16 %v10074
        %v10920 = vunpack.c.l.b16 %v10075
        %v10921 = vunpack.c.h.b16 %v10075
        %v10922 = vunpack.c.l.b16 %v10076
        %v10923 = vunpack.c.l.b16 %v10077
        %v10924 = vunpack.c.h.b16 %v10077
        %v10925 = vunpack.c.l.b16 %v10078
        %v10926 = vunpack.c.l.b16 %v10079
        %v10927 = vunpack.c.h.b16 %v10079
        %v10928 = vunpack.c.l.b16 %v10080
        %v10929 = vunpack.c.l.b16 %v10081
        %v10930 = vunpack.c.h.b16 %v10081
        %v10931 = vunpack.c.l.b16 %v10082
        %v10932 = vunpack.c.l.b16 %v10083
        %v10933 = vunpack.c.h.b16 %v10083
        %v10934 = vunpack.c.l.b16 %v10084
        %v10935 = vunpack.c.l.b16 %v10085
        %v10936 = vunpack.c.h.b16 %v10085
        %v10937 = vunpack.c.l.b16 %v10086
        %v10938 = vunpack.c.l.b16 %v10087
        %v10939 = vunpack.c.h.b16 %v10087
        %v10940 = vunpack.c.l.b16 %v10088
        %v10941 = vunpack.c.l.b16 %v10089
        %v10942 = vunpack.c.h.b16 %v10089
        %v10943 = vunpack.c.l.b16 %v10090
        %v10944 = vunpack.c.l.b16 %v10091
        %v10945 = vunpack.c.h.b16 %v10091
        %v10946 = vunpack.c.l.b16 %v10092
        %v10947 = vunpack.c.l.b16 %v10093
        %v10948 = vunpack.c.h.b16 %v10093
        %v10949 = vunpack.c.l.b16 %v10094
        %v10950 = vunpack.c.l.b16 %v10095
        %v10951 = vunpack.c.h.b16 %v10095
        %v10952 = vunpack.c.l.b16 %v10096
        %v10953 = vunpack.c.l.b16 %v10097
        %v10954 = vunpack.c.h.b16 %v10097
        %v10955 = vunpack.c.l.b16 %v10098
        %v10956 = vunpack.c.l.b16 %v10099
        %v10957 = vunpack.c.h.b16 %v10099
        %v10958 = vunpack.c.l.b16 %v10100
        %v10959 = vunpack.c.l.b16 %v10101
        %v10960 = vunpack.c.h.b16 %v10101
        %v10961 = vunpack.c.l.b16 %v10102
        %v10962 = vunpack.c.l.b16 %v10103
        %v10963 = vunpack.c.h.b16 %v10103
        %v10964 = vunpack.c.l.b16 %v10104
        %v10965 = vunpack.c.l.b16 %v10105
        %v10966 = vunpack.c.h.b16 %v10105
        %v10967 = vunpack.c.l.b16 %v10106
        %v10968 = vunpack.c.l.b16 %v10107
        %v10969 = vunpack.c.h.b16 %v10107
        %v10970 = vunpack.c.l.b16 %v10108
        %v10971 = vunpack.c.l.b16 %v10109
        %v10972 = vunpack.c.h.b16 %v10109
        %v10973 = vunpack.c.l.b16 %v10110
        %v10974 = vunpack.c.l.b16 %v10111
        %v10975 = vunpack.c.h.b16 %v10111
        %v10976 = vunpack.c.l.b16 %v10112
        %v10977 = vunpack.c.l.b16 %v10113
        %v10978 = vunpack.c.h.b16 %v10113
        %v10979 = vunpack.c.l.b16 %v10114
        %v10980 = vunpack.c.l.b16 %v10115
        %v10981 = vunpack.c.h.b16 %v10115
        %v10982 = vunpack.c.l.b16 %v10116
        %v10983 = vunpack.c.l.b16 %v10117
        %v10984 = vunpack.c.h.b16 %v10117
        %v10985 = vunpack.c.l.b16 %v10118
        %v10986 = vunpack.c.l.b16 %v10119
        %v10987 = vunpack.c.h.b16 %v10119
        %v10988 = vunpack.c.l.b16 %v10120
        %v10989 = vunpack.c.l.b16 %v10121
        %v10990 = vunpack.c.h.b16 %v10121
        %v10991 = vunpack.c.l.b16 %v10122
        %v10992 = vunpack.c.l.b16 %v10123
        %v10993 = vunpack.c.h.b16 %v10123
        %v10994 = vunpack.c.l.b16 %v10124
        %v10995 = vunpack.c.l.b16 %v10125
        %v10996 = vunpack.c.h.b16 %v10125
        %v10997 = vunpack.c.l.b16 %v10126
        %v10998 = vunpack.c.l.b16 %v10127
        %v10999 = vunpack.c.h.b16 %v10127
        %v11000 = vunpack.c.l.b16 %v10128
        %v11001 = vunpack.c.l.b16 %v10129
        %v11002 = vunpack.c.h.b16 %v10129
        %v11003 = vunpack.c.l.b16 %v10130
        %v11004 = vunpack.c.l.b16 %v10131
        %v11005 = vunpack.c.h.b16 %v10131
        %v11006 = vunpack.c.l.b16 %v10132
        %v11007 = vunpack.c.l.b16 %v10133
        %v11008 = vunpack.c.h.b16 %v10133
        %v11009 = vunpack.c.l.b16 %v10134
        %v11010 = vunpack.c.l.b16 %v10135
        %v11011 = vunpack.c.h.b16 %v10135
        %v11012 = vunpack.c.l.b16 %v10136
        %v11013 = vunpack.c.l.b16 %v10137
        %v11014 = vunpack.c.h.b16 %v10137
        %v11015 = vunpack.c.l.b16 %v10138
        %v11016 = vunpack.c.l.b16 %v10139
        %v11017 = vunpack.c.h.b16 %v10139
        %v11018 = vunpack.c.l.b16 %v10140
        %v11019 = vunpack.c.l.b16 %v10141
        %v11020 = vunpack.c.h.b16 %v10141
        %v11021 = vunpack.c.l.b16 %v10142
        %v11022 = vunpack.c.l.b16 %v10143
        %v11023 = vunpack.c.h.b16 %v10143
        %v11024 = vunpack.c.l.b16 %v10144
        %v11025 = vunpack.c.l.b16 %v10145
        %v11026 = vunpack.c.h.b16 %v10145
        %v11027 = vunpack.c.l.b16 %v10146
        %v11028 = vunpack.c.l.b16 %v10147
        %v11029 = vunpack.c.h.b16 %v10147
        %v11030 = vunpack.c.l.b16 %v10148
        %v11031 = vunpack.c.l.b16 %v10149
        %v11032 = vunpack.c.h.b16 %v10149
        %v11033 = vunpack.c.l.b16 %v10150
        %v11034 = vunpack.c.l.b16 %v10151
        %v11035 = vunpack.c.h.b16 %v10151
        %v11036 = vunpack.c.l.b16 %v10152
        %v11037 = vunpack.c.l.b16 %v10153
        %v11038 = vunpack.c.h.b16 %v10153
        %v11039 = vunpack.c.l.b16 %v10154
        %v11040 = vunpack.c.l.b16 %v10155
        %v11041 = vunpack.c.h.b16 %v10155
        %v11042 = vunpack.c.l.b16 %v10156
        %v11043 = vunpack.c.l.b16 %v10157
        %v11044 = vunpack.c.h.b16 %v10157
        %v11045 = vunpack.c.l.b16 %v10158
        %v11046 = vunpack.c.l.b16 %v10159
        %v11047 = vunpack.c.h.b16 %v10159
        %v11048 = vunpack.c.l.b16 %v10160
        %v11049 = vunpack.c.l.b16 %v10161
        %v11050 = vunpack.c.h.b16 %v10161
        %v11051 = vunpack.c.l.b16 %v10162
        %v11052 = vunpack.c.l.b16 %v10163
        %v11053 = vunpack.c.h.b16 %v10163
        %v11054 = vunpack.c.l.b16 %v10164
        %v11055 = vunpack.c.l.b16 %v10165
        %v11056 = vunpack.c.h.b16 %v10165
        %v11057 = vunpack.c.l.b16 %v10166
        %v11058 = vunpack.c.l.b16 %v10167
        %v11059 = vunpack.c.h.b16 %v10167
        %v11060 = vunpack.c.l.b16 %v10168
        %v11061 = vunpack.c.l.b16 %v10169
        %v11062 = vunpack.c.h.b16 %v10169
        %v11063 = vunpack.c.l.b16 %v10170
        %v11064 = vunpack.c.l.b16 %v10171
        %v11065 = vunpack.c.h.b16 %v10171
        %v11066 = vunpack.c.l.b16 %v10172
        %v11067 = vunpack.c.l.b16 %v10173
        %v11068 = vunpack.c.h.b16 %v10173
        %v11069 = vunpack.c.l.b16 %v10174
        %v11070 = vunpack.c.l.b16 %v10175
        %v11071 = vunpack.c.h.b16 %v10175
        %v11072 = vunpack.c.l.b16 %v10176
        %v11073 = vunpack.c.l.b16 %v10177
        %v11074 = vunpack.c.h.b16 %v10177
        %v11075 = vunpack.c.l.b16 %v10178
        %v11076 = vunpack.c.l.b16 %v10179
        %v11077 = vunpack.c.h.b16 %v10179
        %v11078 = vunpack.c.l.b16 %v10180
        %v11079 = vunpack.c.l.b16 %v10181
        %v11080 = vunpack.c.h.b16 %v10181
        %v11081 = vunpack.c.l.b16 %v10182
        %v11082 = vunpack.c.l.b16 %v10183
        %v11083 = vunpack.c.h.b16 %v10183
        %v11084 = vunpack.c.l.b16 %v10184
        %v11085 = vunpack.c.l.b16 %v10185
        %v11086 = vunpack.c.h.b16 %v10185
        %v11087 = vunpack.c.l.b16 %v10186
        %v11088 = vunpack.c.l.b16 %v10187
        %v11089 = vunpack.c.h.b16 %v10187
        %v11090 = vunpack.c.l.b16 %v10188
        %v11091 = vunpack.c.l.b16 %v10189
        %v11092 = vunpack.c.h.b16 %v10189
        %v11093 = vunpack.c.l.b16 %v10190
        %v11094 = vunpack.c.l.b16 %v10191
        %v11095 = vunpack.c.h.b16 %v10191
        %v11096 = vunpack.c.l.b16 %v10192
        %v11097 = vunpack.c.l.b16 %v10193
        %v11098 = vunpack.c.h.b16 %v10193
        %v11099 = vunpack.c.l.b16 %v10194
        %v11100 = vunpack.c.l.b16 %v10195
        %v11101 = vunpack.c.h.b16 %v10195
        %v11102 = vunpack.c.l.b16 %v10196
        %v11103 = vunpack.c.l.b16 %v10197
        %v11104 = vunpack.c.h.b16 %v10197
        %v11105 = vunpack.c.l.b16 %v10198
        %v11106 = vunpack.c.l.b16 %v10199
        %v11107 = vunpack.c.h.b16 %v10199
        %v11108 = vunpack.c.l.b16 %v10200
        %v11109 = vunpack.c.l.b16 %v10201
        %v11110 = vunpack.c.h.b16 %v10201
        %v11111 = vunpack.c.l.b16 %v10202
        %v11112 = vunpack.c.l.b16 %v10203
        %v11113 = vunpack.c.h.b16 %v10203
        %v11114 = vunpack.c.l.b16 %v10204
        %v11115 = vunpack.c.l.b16 %v10205
        %v11116 = vunpack.c.h.b16 %v10205
        %v11117 = vunpack.c.l.b16 %v10206
        %v11118 = vunpack.c.l.b16 %v10207
        %v11119 = vunpack.c.h.b16 %v10207
        %v11120 = vunpack.c.l.b16 %v10208
        %v11121 = vunpack.c.l.b16 %v10209
        %v11122 = vunpack.c.h.b16 %v10209
        %v11123 = vunpack.c.l.b16 %v10210
        %v11124 = vunpack.c.l.b16 %v10211
        %v11125 = vunpack.c.h.b16 %v10211
        %v11126 = vunpack.c.l.b16 %v10212
        %v11127 = vunpack.c.l.b16 %v10213
        %v11128 = vunpack.c.h.b16 %v10213
        %v11129 = vunpack.c.l.b16 %v10214
        %v11130 = vunpack.c.l.b16 %v10215
        %v11131 = vunpack.c.h.b16 %v10215
        %v11132 = vunpack.c.l.b16 %v10216
        %v11133 = vunpack.c.l.b16 %v10217
        %v11134 = vunpack.c.h.b16 %v10217
        %v11135 = vunpack.c.l.b16 %v10218
        %v11136 = vunpack.c.l.b16 %v10219
        %v11137 = vunpack.c.h.b16 %v10219
        %v11138 = vunpack.c.l.b16 %v10220
        %v11139 = vunpack.c.l.b16 %v10221
        %v11140 = vunpack.c.h.b16 %v10221
        %v11141 = vunpack.c.l.b16 %v10222
        %v11142 = vunpack.c.l.b16 %v10223
        %v11143 = vunpack.c.h.b16 %v10223
        %v11144 = vunpack.c.l.b16 %v10224
        %v11145 = vunpack.c.l.b16 %v10225
        %v11146 = vunpack.c.h.b16 %v10225
        %v11147 = vunpack.c.l.b16 %v10226
        %v11148 = vunpack.c.l.b16 %v10227
        %v11149 = vunpack.c.h.b16 %v10227
        %v11150 = vunpack.c.l.b16 %v10228
        %v11151 = vunpack.c.l.b16 %v10229
        %v11152 = vunpack.c.h.b16 %v10229
        %v11153 = vunpack.c.l.b16 %v10230
        %v11154 = vunpack.c.l.b16 %v10231
        %v11155 = vunpack.c.h.b16 %v10231
        %v11156 = vunpack.c.l.b16 %v10232
        %v11157 = vunpack.c.l.b16 %v10233
        %v11158 = vunpack.c.h.b16 %v10233
        %v11159 = vunpack.c.l.b16 %v10234
        %v11160 = vunpack.c.l.b16 %v10235
        %v11161 = vunpack.c.h.b16 %v10235
        %v11162 = vunpack.c.l.b16 %v10236
        %v11163 = vunpack.c.l.b16 %v10237
        %v11164 = vunpack.c.h.b16 %v10237
        %v11165 = vunpack.c.l.b16 %v10238
        %v11166 = vunpack.c.l.b16 %v10239
        %v11167 = vunpack.c.h.b16 %v10239
        %v11168 = vunpack.c.l.b16 %v10240
        %v11169 = vunpack.c.l.b16 %v10241
        %v11170 = vunpack.c.h.b16 %v10241
        %v11171 = vunpack.c.l.b16 %v10242
        %v11172 = vunpack.c.l.b16 %v10243
        %v11173 = vunpack.c.h.b16 %v10243
        %v11174 = vunpack.c.l.b16 %v10244
        %v11175 = vunpack.c.l.b16 %v10245
        %v11176 = vunpack.c.h.b16 %v10245
        %v11177 = vunpack.c.l.b16 %v10246
        %v11178 = vunpack.c.l.b16 %v10247
        %v11179 = vunpack.c.h.b16 %v10247
        %v11180 = vunpack.c.l.b16 %v10248
        %v11181 = vunpack.c.l.b16 %v10249
        %v11182 = vunpack.c.h.b16 %v10249
        %v11183 = vunpack.c.l.b16 %v10250
        %v11184 = vunpack.c.l.b16 %v10251
        %v11185 = vunpack.c.h.b16 %v10251
        %v11186 = vunpack.c.l.b16 %v10252
        %v11187 = vunpack.c.l.b16 %v10253
        %v11188 = vunpack.c.h.b16 %v10253
        %v11189 = vunpack.c.l.b16 %v10254
        %v11190 = vunpack.c.l.b16 %v10255
        %v11191 = vunpack.c.h.b16 %v10255
        %v11192 = vunpack.c.l.b16 %v10256
        %v11193 = vunpack.c.l.b16 %v10257
        %v11194 = vunpack.c.h.b16 %v10257
        %v11195 = vunpack.c.l.b16 %v10258
        %v11196 = vunpack.c.l.b16 %v10259
        %v11197 = vunpack.c.h.b16 %v10259
        %v11198 = vunpack.c.l.b16 %v10260
        %v11199 = vunpack.c.l.b16 %v10261
        %v11200 = vunpack.c.h.b16 %v10261
        %v11201 = vunpack.c.l.b16 %v10262
        %v11202 = vunpack.c.l.b16 %v10263
        %v11203 = vunpack.c.h.b16 %v10263
        %v11204 = vunpack.c.l.b16 %v10264
        %v11205 = vunpack.c.l.b16 %v10265
        %v11206 = vunpack.c.h.b16 %v10265
        %v11207 = vunpack.c.l.b16 %v10266
        %v11208 = vunpack.c.l.b16 %v10267
        %v11209 = vunpack.c.h.b16 %v10267
        %v11210 = vunpack.c.l.b16 %v10268
        %v11211 = vunpack.c.l.b16 %v10269
        %v11212 = vunpack.c.h.b16 %v10269
        %v11213 = vunpack.c.l.b16 %v10270
        %v11214 = vunpack.c.l.b16 %v10271
        %v11215 = vunpack.c.h.b16 %v10271
        %v11216 = vunpack.c.l.b16 %v10272
        %v11217 = vunpack.c.l.b16 %v10273
        %v11218 = vunpack.c.h.b16 %v10273
        %v11219 = vunpack.c.l.b16 %v10274
        %v11220 = vunpack.c.l.b16 %v10275
        %v11221 = vunpack.c.h.b16 %v10275
        %v11222 = vunpack.c.l.b16 %v10276
        %v11223 = vunpack.c.l.b16 %v10277
        %v11224 = vunpack.c.h.b16 %v10277
        %v11225 = vunpack.c.l.b16 %v10278
        %v11226 = vunpack.c.l.b16 %v10279
        %v11227 = vunpack.c.h.b16 %v10279
        %v11228 = vunpack.c.l.b16 %v10280
        %v11229 = vunpack.c.l.b16 %v10281
        %v11230 = vunpack.c.h.b16 %v10281
        %v11231 = vunpack.c.l.b16 %v10282
        %v11232 = vunpack.c.l.b16 %v10283
        %v11233 = vunpack.c.h.b16 %v10283
        %v11234 = vunpack.c.l.b16 %v10284
        %v11235 = vunpack.c.l.b16 %v10285
        %v11236 = vunpack.c.h.b16 %v10285
        %v11237 = vunpack.c.l.b16 %v10286
        %v11238 = vunpack.c.l.b16 %v10287
        %v11239 = vunpack.c.h.b16 %v10287
        %v11240 = vunpack.c.l.b16 %v10288
        %v11241 = vunpack.c.l.b16 %v10289
        %v11242 = vunpack.c.h.b16 %v10289
        %v11243 = vunpack.c.l.b16 %v10290
        %v11244 = vunpack.c.l.b16 %v10291
        %v11245 = vunpack.c.h.b16 %v10291
        %v11246 = vunpack.c.l.b16 %v10292
        %v11247 = vunpack.c.l.b16 %v10293
        %v11248 = vunpack.c.h.b16 %v10293
        %v11249 = vunpack.c.l.b16 %v10294
        %v11250 = vunpack.c.l.b16 %v10295
        %v11251 = vunpack.c.h.b16 %v10295
        %v11252 = vunpack.c.l.b16 %v10296
        %v11253 = vunpack.c.l.b16 %v10297
        %v11254 = vunpack.c.h.b16 %v10297
        %v11255 = vunpack.c.l.b16 %v10298
        %v11256 = vunpack.c.l.b16 %v10299
        %v11257 = vunpack.c.h.b16 %v10299
        %v11258 = vunpack.c.l.b16 %v10300
        %v11259 = vunpack.c.l.b16 %v10301
        %v11260 = vunpack.c.h.b16 %v10301
        %v11261 = vunpack.c.l.b16 %v10302
        %v11262 = vunpack.c.l.b16 %v10303
        %v11263 = vunpack.c.h.b16 %v10303
        %v11264 = vunpack.c.l.b16 %v10304
        %v11265 = vunpack.c.l.b16 %v10305
        %v11266 = vunpack.c.h.b16 %v10305
        %v11267 = vunpack.c.l.b16 %v10306
        %v11268 = vunpack.c.l.b16 %v10307
        %v11269 = vunpack.c.h.b16 %v10307
        %v11270 = vunpack.c.l.b16 %v10308
        %v11271 = vunpack.c.l.b16 %v10309
        %v11272 = vunpack.c.h.b16 %v10309
        %v11273 = vunpack.c.l.b16 %v10310
        %v11274 = vunpack.c.l.b16 %v10311
        %v11275 = vunpack.c.h.b16 %v10311
        %v11276 = vunpack.c.l.b16 %v10312
        %v11277 = vunpack.c.l.b16 %v10313
        %v11278 = vunpack.c.h.b16 %v10313
        %v11279 = vunpack.c.l.b16 %v10314
        %v11280 = vunpack.c.l.b16 %v10315
        %v11281 = vunpack.c.h.b16 %v10315
        %v11282 = vunpack.c.l.b16 %v10316
        %v11283 = vunpack.c.l.b16 %v10317
        %v11284 = vunpack.c.h.b16 %v10317
        %v11285 = vunpack.c.l.b16 %v10318
        %v11286 = vunpack.c.l.b16 %v10319
        %v11287 = vunpack.c.h.b16 %v10319
        %v11288 = vunpack.c.l.b16 %v10320
        %v11289 = vpack.c.b16 %v10716, %v10713
        %v11290 = vpack.c.b16 %v10717, %v10714
        %v11291 = vpack.c.b16 %v10718, %v10715
        %v11292 = vpack.c.b16 %v10722, %v10719
        %v11293 = vpack.c.b16 %v10723, %v10720
        %v11294 = vpack.c.b16 %v10724, %v10721
        %v11295 = vpack.c.b16 %v10728, %v10725
        %v11296 = vpack.c.b16 %v10729, %v10726
        %v11297 = vpack.c.b16 %v10730, %v10727
        %v11298 = vpack.c.b16 %v10734, %v10731
        %v11299 = vpack.c.b16 %v10735, %v10732
        %v11300 = vpack.c.b16 %v10736, %v10733
        %v11301 = vpack.c.b16 %v10740, %v10737
        %v11302 = vpack.c.b16 %v10741, %v10738
        %v11303 = vpack.c.b16 %v10742, %v10739
        %v11304 = vpack.c.b16 %v10746, %v10743
        %v11305 = vpack.c.b16 %v10747, %v10744
        %v11306 = vpack.c.b16 %v10748, %v10745
        %v11307 = vpack.c.b16 %v10752, %v10749
        %v11308 = vpack.c.b16 %v10753, %v10750
        %v11309 = vpack.c.b16 %v10754, %v10751
        %v11310 = vpack.c.b16 %v10758, %v10755
        %v11311 = vpack.c.b16 %v10759, %v10756
        %v11312 = vpack.c.b16 %v10760, %v10757
        %v11313 = vpack.c.b16 %v10764, %v10761
        %v11314 = vpack.c.b16 %v10765, %v10762
        %v11315 = vpack.c.b16 %v10766, %v10763
        %v11316 = vpack.c.b16 %v10770, %v10767
        %v11317 = vpack.c.b16 %v10771, %v10768
        %v11318 = vpack.c.b16 %v10772, %v10769
        %v11319 = vpack.c.b16 %v10776, %v10773
        %v11320 = vpack.c.b16 %v10777, %v10774
        %v11321 = vpack.c.b16 %v10778, %v10775
        %v11322 = vpack.c.b16 %v10782, %v10779
        %v11323 = vpack.c.b16 %v10783, %v10780
        %v11324 = vpack.c.b16 %v10784, %v10781
        %v11325 = vpack.c.b16 %v10788, %v10785
        %v11326 = vpack.c.b16 %v10789, %v10786
        %v11327 = vpack.c.b16 %v10790, %v10787
        %v11328 = vpack.c.b16 %v10794, %v10791
        %v11329 = vpack.c.b16 %v10795, %v10792
        %v11330 = vpack.c.b16 %v10796, %v10793
        %v11331 = vpack.c.b16 %v10800, %v10797
        %v11332 = vpack.c.b16 %v10801, %v10798
        %v11333 = vpack.c.b16 %v10802, %v10799
        %v11334 = vpack.c.b16 %v10806, %v10803
        %v11335 = vpack.c.b16 %v10807, %v10804
        %v11336 = vpack.c.b16 %v10808, %v10805
        %v11337 = vpack.c.b16 %v10812, %v10809
        %v11338 = vpack.c.b16 %v10813, %v10810
        %v11339 = vpack.c.b16 %v10814, %v10811
        %v11340 = vpack.c.b16 %v10818, %v10815
        %v11341 = vpack.c.b16 %v10819, %v10816
        %v11342 = vpack.c.b16 %v10820, %v10817
        %v11343 = vpack.c.b16 %v10824, %v10821
        %v11344 = vpack.c.b16 %v10825, %v10822
        %v11345 = vpack.c.b16 %v10826, %v10823
        %v11346 = vpack.c.b16 %v10830, %v10827
        %v11347 = vpack.c.b16 %v10831, %v10828
        %v11348 = vpack.c.b16 %v10832, %v10829
        %v11349 = vpack.c.b16 %v10836, %v10833
        %v11350 = vpack.c.b16 %v10837, %v10834
        %v11351 = vpack.c.b16 %v10838, %v10835
        %v11352 = vpack.c.b16 %v10842, %v10839
        %v11353 = vpack.c.b16 %v10843, %v10840
        %v11354 = vpack.c.b16 %v10844, %v10841
        %v11355 = vpack.c.b16 %v10848, %v10845
        %v11356 = vpack.c.b16 %v10849, %v10846
        %v11357 = vpack.c.b16 %v10850, %v10847
        %v11358 = vpack.c.b16 %v10854, %v10851
        %v11359 = vpack.c.b16 %v10855, %v10852
        %v11360 = vpack.c.b16 %v10856, %v10853
        %v11361 = vpack.c.b16 %v10860, %v10857
        %v11362 = vpack.c.b16 %v10861, %v10858
        %v11363 = vpack.c.b16 %v10862, %v10859
        %v11364 = vpack.c.b16 %v10866, %v10863
        %v11365 = vpack.c.b16 %v10867, %v10864
        %v11366 = vpack.c.b16 %v10868, %v10865
        %v11367 = vpack.c.b16 %v10872, %v10869
        %v11368 = vpack.c.b16 %v10873, %v10870
        %v11369 = vpack.c.b16 %v10874, %v10871
        %v11370 = vpack.c.b16 %v10878, %v10875
        %v11371 = vpack.c.b16 %v10879, %v10876
        %v11372 = vpack.c.b16 %v10880, %v10877
        %v11373 = vpack.c.b16 %v10884, %v10881
        %v11374 = vpack.c.b16 %v10885, %v10882
        %v11375 = vpack.c.b16 %v10886, %v10883
        %v11376 = vpack.c.b16 %v10890, %v10887
        %v11377 = vpack.c.b16 %v10891, %v10888
        %v11378 = vpack.c.b16 %v10892, %v10889
        %v11379 = vpack.c.b16 %v10896, %v10893
        %v11380 = vpack.c.b16 %v10897, %v10894
        %v11381 = vpack.c.b16 %v10898, %v10895
        %v11382 = vpack.c.b16 %v10902, %v10899
        %v11383 = vpack.c.b16 %v10903, %v10900
        %v11384 = vpack.c.b16 %v10904, %v10901
        %v11385 = vpack.c.b16 %v10908, %v10905
        %v11386 = vpack.c.b16 %v10909, %v10906
        %v11387 = vpack.c.b16 %v10910, %v10907
        %v11388 = vpack.c.b16 %v10914, %v10911
        %v11389 = vpack.c.b16 %v10915, %v10912
        %v11390 = vpack.c.b16 %v10916, %v10913
        %v11391 = vpack.c.b16 %v10920, %v10917
        %v11392 = vpack.c.b16 %v10921, %v10918
        %v11393 = vpack.c.b16 %v10922, %v10919
        %v11394 = vpack.c.b16 %v10926, %v10923
        %v11395 = vpack.c.b16 %v10927, %v10924
        %v11396 = vpack.c.b16 %v10928, %v10925
        %v11397 = vpack.c.b16 %v10932, %v10929
        %v11398 = vpack.c.b16 %v10933, %v10930
        %v11399 = vpack.c.b16 %v10934, %v10931
        %v11400 = vpack.c.b16 %v10938, %v10935
        %v11401 = vpack.c.b16 %v10939, %v10936
        %v11402 = vpack.c.b16 %v10940, %v10937
        %v11403 = vpack.c.b16 %v10944, %v10941
        %v11404 = vpack.c.b16 %v10945, %v10942
        %v11405 = vpack.c.b16 %v10946, %v10943
        %v11406 = vpack.c.b16 %v10950, %v10947
        %v11407 = vpack.c.b16 %v10951, %v10948
        %v11408 = vpack.c.b16 %v10952, %v10949
        %v11409 = vpack.c.b16 %v10956, %v10953
        %v11410 = vpack.c.b16 %v10957, %v10954
        %v11411 = vpack.c.b16 %v10958, %v10955
        %v11412 = vpack.c.b16 %v10962, %v10959
        %v11413 = vpack.c.b16 %v10963, %v10960
        %v11414 = vpack.c.b16 %v10964, %v10961
        %v11415 = vpack.c.b16 %v10968, %v10965
        %v11416 = vpack.c.b16 %v10969, %v10966
        %v11417 = vpack.c.b16 %v10970, %v10967
        %v11418 = vpack.c.b16 %v10974, %v10971
        %v11419 = vpack.c.b16 %v10975, %v10972
        %v11420 = vpack.c.b16 %v10976, %v10973
        %v11421 = vpack.c.b16 %v10980, %v10977
        %v11422 = vpack.c.b16 %v10981, %v10978
        %v11423 = vpack.c.b16 %v10982, %v10979
        %v11424 = vpack.c.b16 %v10986, %v10983
        %v11425 = vpack.c.b16 %v10987, %v10984
        %v11426 = vpack.c.b16 %v10988, %v10985
        %v11427 = vpack.c.b16 %v10992, %v10989
        %v11428 = vpack.c.b16 %v10993, %v10990
        %v11429 = vpack.c.b16 %v10994, %v10991
        %v11430 = vpack.c.b16 %v10998, %v10995
        %v11431 = vpack.c.b16 %v10999, %v10996
        %v11432 = vpack.c.b16 %v11000, %v10997
        %v11433 = vpack.c.b16 %v11004, %v11001
        %v11434 = vpack.c.b16 %v11005, %v11002
        %v11435 = vpack.c.b16 %v11006, %v11003
        %v11436 = vpack.c.b16 %v11010, %v11007
        %v11437 = vpack.c.b16 %v11011, %v11008
        %v11438 = vpack.c.b16 %v11012, %v11009
        %v11439 = vpack.c.b16 %v11016, %v11013
        %v11440 = vpack.c.b16 %v11017, %v11014
        %v11441 = vpack.c.b16 %v11018, %v11015
        %v11442 = vpack.c.b16 %v11022, %v11019
        %v11443 = vpack.c.b16 %v11023, %v11020
        %v11444 = vpack.c.b16 %v11024, %v11021
        %v11445 = vpack.c.b16 %v11028, %v11025
        %v11446 = vpack.c.b16 %v11029, %v11026
        %v11447 = vpack.c.b16 %v11030, %v11027
        %v11448 = vpack.c.b16 %v11034, %v11031
        %v11449 = vpack.c.b16 %v11035, %v11032
        %v11450 = vpack.c.b16 %v11036, %v11033
        %v11451 = vpack.c.b16 %v11040, %v11037
        %v11452 = vpack.c.b16 %v11041, %v11038
        %v11453 = vpack.c.b16 %v11042, %v11039
        %v11454 = vpack.c.b16 %v11046, %v11043
        %v11455 = vpack.c.b16 %v11047, %v11044
        %v11456 = vpack.c.b16 %v11048, %v11045
        %v11457 = vpack.c.b16 %v11052, %v11049
        %v11458 = vpack.c.b16 %v11053, %v11050
        %v11459 = vpack.c.b16 %v11054, %v11051
        %v11460 = vpack.c.b16 %v11058, %v11055
        %v11461 = vpack.c.b16 %v11059, %v11056
        %v11462 = vpack.c.b16 %v11060, %v11057
        %v11463 = vpack.c.b16 %v11064, %v11061
        %v11464 = vpack.c.b16 %v11065, %v11062
        %v11465 = vpack.c.b16 %v11066, %v11063
        %v11466 = vpack.c.b16 %v11070, %v11067
        %v11467 = vpack.c.b16 %v11071, %v11068
        %v11468 = vpack.c.b16 %v11072, %v11069
        %v11469 = vpack.c.b16 %v11076, %v11073
        %v11470 = vpack.c.b16 %v11077, %v11074
        %v11471 = vpack.c.b16 %v11078, %v11075
        %v11472 = vpack.c.b16 %v11082, %v11079
        %v11473 = vpack.c.b16 %v11083, %v11080
        %v11474 = vpack.c.b16 %v11084, %v11081
        %v11475 = vpack.c.b16 %v11088, %v11085
        %v11476 = vpack.c.b16 %v11089, %v11086
        %v11477 = vpack.c.b16 %v11090, %v11087
        %v11478 = vpack.c.b16 %v11094, %v11091
        %v11479 = vpack.c.b16 %v11095, %v11092
        %v11480 = vpack.c.b16 %v11096, %v11093
        %v11481 = vpack.c.b16 %v11100, %v11097
        %v11482 = vpack.c.b16 %v11101, %v11098
        %v11483 = vpack.c.b16 %v11102, %v11099
        %v11484 = vpack.c.b16 %v11106, %v11103
        %v11485 = vpack.c.b16 %v11107, %v11104
        %v11486 = vpack.c.b16 %v11108, %v11105
        %v11487 = vpack.c.b16 %v11112, %v11109
        %v11488 = vpack.c.b16 %v11113, %v11110
        %v11489 = vpack.c.b16 %v11114, %v11111
        %v11490 = vpack.c.b16 %v11118, %v11115
        %v11491 = vpack.c.b16 %v11119, %v11116
        %v11492 = vpack.c.b16 %v11120, %v11117
        %v11493 = vpack.c.b16 %v11124, %v11121
        %v11494 = vpack.c.b16 %v11125, %v11122
        %v11495 = vpack.c.b16 %v11126, %v11123
        %v11496 = vpack.c.b16 %v11130, %v11127
        %v11497 = vpack.c.b16 %v11131, %v11128
        %v11498 = vpack.c.b16 %v11132, %v11129
        %v11499 = vpack.c.b16 %v11136, %v11133
        %v11500 = vpack.c.b16 %v11137, %v11134
        %v11501 = vpack.c.b16 %v11138, %v11135
        %v11502 = vpack.c.b16 %v11142, %v11139
        %v11503 = vpack.c.b16 %v11143, %v11140
        %v11504 = vpack.c.b16 %v11144, %v11141
        %v11505 = vpack.c.b16 %v11148, %v11145
        %v11506 = vpack.c.b16 %v11149, %v11146
        %v11507 = vpack.c.b16 %v11150, %v11147
        %v11508 = vpack.c.b16 %v11154, %v11151
        %v11509 = vpack.c.b16 %v11155, %v11152
        %v11510 = vpack.c.b16 %v11156, %v11153
        %v11511 = vpack.c.b16 %v11160, %v11157
        %v11512 = vpack.c.b16 %v11161, %v11158
        %v11513 = vpack.c.b16 %v11162, %v11159
        %v11514 = vpack.c.b16 %v11166, %v11163
        %v11515 = vpack.c.b16 %v11167, %v11164
        %v11516 = vpack.c.b16 %v11168, %v11165
        %v11517 = vpack.c.b16 %v11172, %v11169
        %v11518 = vpack.c.b16 %v11173, %v11170
        %v11519 = vpack.c.b16 %v11174, %v11171
        %v11520 = vpack.c.b16 %v11178, %v11175
        %v11521 = vpack.c.b16 %v11179, %v11176
        %v11522 = vpack.c.b16 %v11180, %v11177
        %v11523 = vpack.c.b16 %v11184, %v11181
        %v11524 = vpack.c.b16 %v11185, %v11182
        %v11525 = vpack.c.b16 %v11186, %v11183
        %v11526 = vpack.c.b16 %v11190, %v11187
        %v11527 = vpack.c.b16 %v11191, %v11188
        %v11528 = vpack.c.b16 %v11192, %v11189
        %v11529 = vpack.c.b16 %v11196, %v11193
        %v11530 = vpack.c.b16 %v11197, %v11194
        %v11531 = vpack.c.b16 %v11198, %v11195
        %v11532 = vpack.c.b16 %v11202, %v11199
        %v11533 = vpack.c.b16 %v11203, %v11200
        %v11534 = vpack.c.b16 %v11204, %v11201
        %v11535 = vpack.c.b16 %v11208, %v11205
        %v11536 = vpack.c.b16 %v11209, %v11206
        %v11537 = vpack.c.b16 %v11210, %v11207
        %v11538 = vpack.c.b16 %v11214, %v11211
        %v11539 = vpack.c.b16 %v11215, %v11212
        %v11540 = vpack.c.b16 %v11216, %v11213
        %v11541 = vpack.c.b16 %v11220, %v11217
        %v11542 = vpack.c.b16 %v11221, %v11218
        %v11543 = vpack.c.b16 %v11222, %v11219
        %v11544 = vpack.c.b16 %v11226, %v11223
        %v11545 = vpack.c.b16 %v11227, %v11224
        %v11546 = vpack.c.b16 %v11228, %v11225
        %v11547 = vpack.c.b16 %v11232, %v11229
        %v11548 = vpack.c.b16 %v11233, %v11230
        %v11549 = vpack.c.b16 %v11234, %v11231
        %v11550 = vpack.c.b16 %v11238, %v11235
        %v11551 = vpack.c.b16 %v11239, %v11236
        %v11552 = vpack.c.b16 %v11240, %v11237
        %v11553 = vpack.c.b16 %v11244, %v11241
        %v11554 = vpack.c.b16 %v11245, %v11242
        %v11555 = vpack.c.b16 %v11246, %v11243
        %v11556 = vpack.c.b16 %v11250, %v11247
        %v11557 = vpack.c.b16 %v11251, %v11248
        %v11558 = vpack.c.b16 %v11252, %v11249
        %v11559 = vpack.c.b16 %v11256, %v11253
        %v11560 = vpack.c.b16 %v11257, %v11254
        %v11561 = vpack.c.b16 %v11258, %v11255
        %v11562 = vpack.c.b16 %v11262, %v11259
        %v11563 = vpack.c.b16 %v11263, %v11260
        %v11564 = vpack.c.b16 %v11264, %v11261
        %v11565 = vpack.c.b16 %v11268, %v11265
        %v11566 = vpack.c.b16 %v11269, %v11266
        %v11567 = vpack.c.b16 %v11270, %v11267
        %v11568 = vpack.c.b16 %v11274, %v11271
        %v11569 = vpack.c.b16 %v11275, %v11272
        %v11570 = vpack.c.b16 %v11276, %v11273
        %v11571 = vpack.c.b16 %v11280, %v11277
        %v11572 = vpack.c.b16 %v11281, %v11278
        %v11573 = vpack.c.b16 %v11282, %v11279
        %v11574 = vpack.c.b16 %v11286, %v11283
        %v11575 = vpack.c.b16 %v11287, %v11284
        %v11576 = vpack.c.b16 %v11288, %v11285
        %11865 = vmatpush.bf16.msra.mxu0 %v11310
        %11866 = vmatpush.bf16.msra.mxu0 %v11307
        %11867 = vmatpush.bf16.msra.mxu0 %v11304
        %11868 = vmatpush.bf16.msra.mxu0 %v11301
        %11869 = vmatpush.bf16.msra.mxu0 %v11298
        %11870 = vmatpush.bf16.msra.mxu0 %v11295
        %11871 = vmatpush.bf16.msra.mxu0 %v11292
        %11872 = vmatpush.bf16.msra.mxu0 %v11289
        %11873 = vmatmul.bf16.gmra.mxu0 %v9889
        %v11874 = vpop.f32.mrf.mxu0
        %v11875 = vadd.f32 %v10323, %v11874
        %v11876 = vpop.f32.mrf.mxu0
        %v11877 = vadd.f32 %v10323, %v11876
        %11878 = vmatmul.bf16.gmra.mxu0 %v9901
        %v11879 = vpop.f32.mrf.mxu0
        %v11880 = vadd.f32 %v10323, %v11879
        %v11881 = vpop.f32.mrf.mxu0
        %v11882 = vadd.f32 %v10323, %v11881
        %11883 = vmatmul.bf16.gmra.mxu0 %v9913
        %v11884 = vpop.f32.mrf.mxu0
        %v11885 = vadd.f32 %v10323, %v11884
        %v11886 = vpop.f32.mrf.mxu0
        %v11887 = vadd.f32 %v10323, %v11886
        %11888 = vmatmul.bf16.gmra.mxu0 %v9925
        %v11889 = vpop.f32.mrf.mxu0
        %v11890 = vadd.f32 %v10323, %v11889
        %v11891 = vpop.f32.mrf.mxu0
        %v11892 = vadd.f32 %v10323, %v11891
        %11893 = vdwg.mxu0
        %11894 = vmatpush.bf16.msra.mxu0 %v11334
        %11895 = vmatpush.bf16.msra.mxu0 %v11331
        %11896 = vmatpush.bf16.msra.mxu0 %v11328
        %11897 = vmatpush.bf16.msra.mxu0 %v11325
        %11898 = vmatpush.bf16.msra.mxu0 %v11322
        %11899 = vmatpush.bf16.msra.mxu0 %v11319
        %11900 = vmatpush.bf16.msra.mxu0 %v11316
        %11901 = vmatpush.bf16.msra.mxu0 %v11313
        %11902 = vmatmul.bf16.gmra.mxu0 %v9890
        %v11903 = vpop.f32.mrf.mxu0
        %v11904 = vadd.f32 %v11875, %v11903
        %v11905 = vpop.f32.mrf.mxu0
        %v11906 = vadd.f32 %v11877, %v11905
        %11907 = vmatmul.bf16.gmra.mxu0 %v9902
        %v11908 = vpop.f32.mrf.mxu0
        %v11909 = vadd.f32 %v11880, %v11908
        %v11910 = vpop.f32.mrf.mxu0
        %v11911 = vadd.f32 %v11882, %v11910
        %11912 = vmatmul.bf16.gmra.mxu0 %v9914
        %v11913 = vpop.f32.mrf.mxu0
        %v11914 = vadd.f32 %v11885, %v11913
        %v11915 = vpop.f32.mrf.mxu0
        %v11916 = vadd.f32 %v11887, %v11915
        %11917 = vmatmul.bf16.gmra.mxu0 %v9926
        %v11918 = vpop.f32.mrf.mxu0
        %v11919 = vadd.f32 %v11890, %v11918
        %v11920 = vpop.f32.mrf.mxu0
        %v11921 = vadd.f32 %v11892, %v11920
        %11922 = vdwg.mxu0
        %11923 = vmatpush.bf16.msra.mxu0 %v11358
        %11924 = vmatpush.bf16.msra.mxu0 %v11355
        %11925 = vmatpush.bf16.msra.mxu0 %v11352
        %11926 = vmatpush.bf16.msra.mxu0 %v11349
        %11927 = vmatpush.bf16.msra.mxu0 %v11346
        %11928 = vmatpush.bf16.msra.mxu0 %v11343
        %11929 = vmatpush.bf16.msra.mxu0 %v11340
        %11930 = vmatpush.bf16.msra.mxu0 %v11337
        %11931 = vmatmul.bf16.gmra.mxu0 %v9891
        %v11932 = vpop.f32.mrf.mxu0
        %v11933 = vadd.f32 %v11904, %v11932
        %v11934 = vpop.f32.mrf.mxu0
        %v11935 = vadd.f32 %v11906, %v11934
        %11936 = vmatmul.bf16.gmra.mxu0 %v9903
        %v11937 = vpop.f32.mrf.mxu0
        %v11938 = vadd.f32 %v11909, %v11937
        %v11939 = vpop.f32.mrf.mxu0
        %v11940 = vadd.f32 %v11911, %v11939
        %11941 = vmatmul.bf16.gmra.mxu0 %v9915
        %v11942 = vpop.f32.mrf.mxu0
        %v11943 = vadd.f32 %v11914, %v11942
        %v11944 = vpop.f32.mrf.mxu0
        %v11945 = vadd.f32 %v11916, %v11944
        %11946 = vmatmul.bf16.gmra.mxu0 %v9927
        %v11947 = vpop.f32.mrf.mxu0
        %v11948 = vadd.f32 %v11919, %v11947
        %v11949 = vpop.f32.mrf.mxu0
        %v11950 = vadd.f32 %v11921, %v11949
        %11951 = vdwg.mxu0
        %11952 = vmatpush.bf16.msra.mxu0 %v11382
        %11953 = vmatpush.bf16.msra.mxu0 %v11379
        %11954 = vmatpush.bf16.msra.mxu0 %v11376
        %11955 = vmatpush.bf16.msra.mxu0 %v11373
        %11956 = vmatpush.bf16.msra.mxu0 %v11370
        %11957 = vmatpush.bf16.msra.mxu0 %v11367
        %11958 = vmatpush.bf16.msra.mxu0 %v11364
        %11959 = vmatpush.bf16.msra.mxu0 %v11361
        %11960 = vmatmul.bf16.gmra.mxu0 %v9892
        %v11961 = vpop.f32.mrf.mxu0
        %v11962 = vadd.f32 %v11933, %v11961
        %v11963 = vpop.f32.mrf.mxu0
        %v11964 = vadd.f32 %v11935, %v11963
        %11965 = vmatmul.bf16.gmra.mxu0 %v9904
        %v11966 = vpop.f32.mrf.mxu0
        %v11967 = vadd.f32 %v11938, %v11966
        %v11968 = vpop.f32.mrf.mxu0
        %v11969 = vadd.f32 %v11940, %v11968
        %11970 = vmatmul.bf16.gmra.mxu0 %v9916
        %v11971 = vpop.f32.mrf.mxu0
        %v11972 = vadd.f32 %v11943, %v11971
        %v11973 = vpop.f32.mrf.mxu0
        %v11974 = vadd.f32 %v11945, %v11973
        %11975 = vmatmul.bf16.gmra.mxu0 %v9928
        %v11976 = vpop.f32.mrf.mxu0
        %v11977 = vadd.f32 %v11948, %v11976
        %v11978 = vpop.f32.mrf.mxu0
        %v11979 = vadd.f32 %v11950, %v11978
        %11980 = vdwg.mxu0
        %11981 = vmatpush.bf16.msra.mxu0 %v11406
        %11982 = vmatpush.bf16.msra.mxu0 %v11403
        %11983 = vmatpush.bf16.msra.mxu0 %v11400
        %11984 = vmatpush.bf16.msra.mxu0 %v11397
        %11985 = vmatpush.bf16.msra.mxu0 %v11394
        %11986 = vmatpush.bf16.msra.mxu0 %v11391
        %11987 = vmatpush.bf16.msra.mxu0 %v11388
        %11988 = vmatpush.bf16.msra.mxu0 %v11385
        %11989 = vmatmul.bf16.gmra.mxu0 %v9893
        %v11990 = vpop.f32.mrf.mxu0
        %v11991 = vadd.f32 %v11962, %v11990
        %v11992 = vpop.f32.mrf.mxu0
        %v11993 = vadd.f32 %v11964, %v11992
        %11994 = vmatmul.bf16.gmra.mxu0 %v9905
        %v11995 = vpop.f32.mrf.mxu0
        %v11996 = vadd.f32 %v11967, %v11995
        %v11997 = vpop.f32.mrf.mxu0
        %v11998 = vadd.f32 %v11969, %v11997
        %11999 = vmatmul.bf16.gmra.mxu0 %v9917
        %v12000 = vpop.f32.mrf.mxu0
        %v12001 = vadd.f32 %v11972, %v12000
        %v12002 = vpop.f32.mrf.mxu0
        %v12003 = vadd.f32 %v11974, %v12002
        %12004 = vmatmul.bf16.gmra.mxu0 %v9929
        %v12005 = vpop.f32.mrf.mxu0
        %v12006 = vadd.f32 %v11977, %v12005
        %v12007 = vpop.f32.mrf.mxu0
        %v12008 = vadd.f32 %v11979, %v12007
        %12009 = vdwg.mxu0
        %12010 = vmatpush.bf16.msra.mxu0 %v11430
        %12011 = vmatpush.bf16.msra.mxu0 %v11427
        %12012 = vmatpush.bf16.msra.mxu0 %v11424
        %12013 = vmatpush.bf16.msra.mxu0 %v11421
        %12014 = vmatpush.bf16.msra.mxu0 %v11418
        %12015 = vmatpush.bf16.msra.mxu0 %v11415
        %12016 = vmatpush.bf16.msra.mxu0 %v11412
        %12017 = vmatpush.bf16.msra.mxu0 %v11409
        %12018 = vmatmul.bf16.gmra.mxu0 %v9894
        %v12019 = vpop.f32.mrf.mxu0
        %v12020 = vadd.f32 %v11991, %v12019
        %v12021 = vpop.f32.mrf.mxu0
        %v12022 = vadd.f32 %v11993, %v12021
        %12023 = vmatmul.bf16.gmra.mxu0 %v9906
        %v12024 = vpop.f32.mrf.mxu0
        %v12025 = vadd.f32 %v11996, %v12024
        %v12026 = vpop.f32.mrf.mxu0
        %v12027 = vadd.f32 %v11998, %v12026
        %12028 = vmatmul.bf16.gmra.mxu0 %v9918
        %v12029 = vpop.f32.mrf.mxu0
        %v12030 = vadd.f32 %v12001, %v12029
        %v12031 = vpop.f32.mrf.mxu0
        %v12032 = vadd.f32 %v12003, %v12031
        %12033 = vmatmul.bf16.gmra.mxu0 %v9930
        %v12034 = vpop.f32.mrf.mxu0
        %v12035 = vadd.f32 %v12006, %v12034
        %v12036 = vpop.f32.mrf.mxu0
        %v12037 = vadd.f32 %v12008, %v12036
        %12038 = vdwg.mxu0
        %12039 = vmatpush.bf16.msra.mxu0 %v11454
        %12040 = vmatpush.bf16.msra.mxu0 %v11451
        %12041 = vmatpush.bf16.msra.mxu0 %v11448
        %12042 = vmatpush.bf16.msra.mxu0 %v11445
        %12043 = vmatpush.bf16.msra.mxu0 %v11442
        %12044 = vmatpush.bf16.msra.mxu0 %v11439
        %12045 = vmatpush.bf16.msra.mxu0 %v11436
        %12046 = vmatpush.bf16.msra.mxu0 %v11433
        %12047 = vmatmul.bf16.gmra.mxu0 %v9895
        %v12048 = vpop.f32.mrf.mxu0
        %v12049 = vadd.f32 %v12020, %v12048
        %v12050 = vpop.f32.mrf.mxu0
        %v12051 = vadd.f32 %v12022, %v12050
        %12052 = vmatmul.bf16.gmra.mxu0 %v9907
        %v12053 = vpop.f32.mrf.mxu0
        %v12054 = vadd.f32 %v12025, %v12053
        %v12055 = vpop.f32.mrf.mxu0
        %v12056 = vadd.f32 %v12027, %v12055
        %12057 = vmatmul.bf16.gmra.mxu0 %v9919
        %v12058 = vpop.f32.mrf.mxu0
        %v12059 = vadd.f32 %v12030, %v12058
        %v12060 = vpop.f32.mrf.mxu0
        %v12061 = vadd.f32 %v12032, %v12060
        %12062 = vmatmul.bf16.gmra.mxu0 %v9931
        %v12063 = vpop.f32.mrf.mxu0
        %v12064 = vadd.f32 %v12035, %v12063
        %v12065 = vpop.f32.mrf.mxu0
        %v12066 = vadd.f32 %v12037, %v12065
        %12067 = vdwg.mxu0
        %12068 = vmatpush.bf16.msra.mxu0 %v11478
        %12069 = vmatpush.bf16.msra.mxu0 %v11475
        %12070 = vmatpush.bf16.msra.mxu0 %v11472
        %12071 = vmatpush.bf16.msra.mxu0 %v11469
        %12072 = vmatpush.bf16.msra.mxu0 %v11466
        %12073 = vmatpush.bf16.msra.mxu0 %v11463
        %12074 = vmatpush.bf16.msra.mxu0 %v11460
        %12075 = vmatpush.bf16.msra.mxu0 %v11457
        %12076 = vmatmul.bf16.gmra.mxu0 %v9896
        %v12077 = vpop.f32.mrf.mxu0
        %v12078 = vadd.f32 %v12049, %v12077
        %v12079 = vpop.f32.mrf.mxu0
        %v12080 = vadd.f32 %v12051, %v12079
        %12081 = vmatmul.bf16.gmra.mxu0 %v9908
        %v12082 = vpop.f32.mrf.mxu0
        %v12083 = vadd.f32 %v12054, %v12082
        %v12084 = vpop.f32.mrf.mxu0
        %v12085 = vadd.f32 %v12056, %v12084
        %12086 = vmatmul.bf16.gmra.mxu0 %v9920
        %v12087 = vpop.f32.mrf.mxu0
        %v12088 = vadd.f32 %v12059, %v12087
        %v12089 = vpop.f32.mrf.mxu0
        %v12090 = vadd.f32 %v12061, %v12089
        %12091 = vmatmul.bf16.gmra.mxu0 %v9932
        %v12092 = vpop.f32.mrf.mxu0
        %v12093 = vadd.f32 %v12064, %v12092
        %v12094 = vpop.f32.mrf.mxu0
        %v12095 = vadd.f32 %v12066, %v12094
        %12096 = vdwg.mxu0
        %12097 = vmatpush.bf16.msra.mxu0 %v11502
        %12098 = vmatpush.bf16.msra.mxu0 %v11499
        %12099 = vmatpush.bf16.msra.mxu0 %v11496
        %12100 = vmatpush.bf16.msra.mxu0 %v11493
        %12101 = vmatpush.bf16.msra.mxu0 %v11490
        %12102 = vmatpush.bf16.msra.mxu0 %v11487
        %12103 = vmatpush.bf16.msra.mxu0 %v11484
        %12104 = vmatpush.bf16.msra.mxu0 %v11481
        %12105 = vmatmul.bf16.gmra.mxu0 %v9897
        %v12106 = vpop.f32.mrf.mxu0
        %v12107 = vadd.f32 %v12078, %v12106
        %v12108 = vpop.f32.mrf.mxu0
        %v12109 = vadd.f32 %v12080, %v12108
        %12110 = vmatmul.bf16.gmra.mxu0 %v9909
        %v12111 = vpop.f32.mrf.mxu0
        %v12112 = vadd.f32 %v12083, %v12111
        %v12113 = vpop.f32.mrf.mxu0
        %v12114 = vadd.f32 %v12085, %v12113
        %12115 = vmatmul.bf16.gmra.mxu0 %v9921
        %v12116 = vpop.f32.mrf.mxu0
        %v12117 = vadd.f32 %v12088, %v12116
        %v12118 = vpop.f32.mrf.mxu0
        %v12119 = vadd.f32 %v12090, %v12118
        %12120 = vmatmul.bf16.gmra.mxu0 %v9933
        %v12121 = vpop.f32.mrf.mxu0
        %v12122 = vadd.f32 %v12093, %v12121
        %v12123 = vpop.f32.mrf.mxu0
        %v12124 = vadd.f32 %v12095, %v12123
        %12125 = vdwg.mxu0
        %12126 = vmatpush.bf16.msra.mxu0 %v11526
        %12127 = vmatpush.bf16.msra.mxu0 %v11523
        %12128 = vmatpush.bf16.msra.mxu0 %v11520
        %12129 = vmatpush.bf16.msra.mxu0 %v11517
        %12130 = vmatpush.bf16.msra.mxu0 %v11514
        %12131 = vmatpush.bf16.msra.mxu0 %v11511
        %12132 = vmatpush.bf16.msra.mxu0 %v11508
        %12133 = vmatpush.bf16.msra.mxu0 %v11505
        %12134 = vmatmul.bf16.gmra.mxu0 %v9898
        %v12135 = vpop.f32.mrf.mxu0
        %v12136 = vadd.f32 %v12107, %v12135
        %v12137 = vpop.f32.mrf.mxu0
        %v12138 = vadd.f32 %v12109, %v12137
        %12139 = vmatmul.bf16.gmra.mxu0 %v9910
        %v12140 = vpop.f32.mrf.mxu0
        %v12141 = vadd.f32 %v12112, %v12140
        %v12142 = vpop.f32.mrf.mxu0
        %v12143 = vadd.f32 %v12114, %v12142
        %12144 = vmatmul.bf16.gmra.mxu0 %v9922
        %v12145 = vpop.f32.mrf.mxu0
        %v12146 = vadd.f32 %v12117, %v12145
        %v12147 = vpop.f32.mrf.mxu0
        %v12148 = vadd.f32 %v12119, %v12147
        %12149 = vmatmul.bf16.gmra.mxu0 %v9934
        %v12150 = vpop.f32.mrf.mxu0
        %v12151 = vadd.f32 %v12122, %v12150
        %v12152 = vpop.f32.mrf.mxu0
        %v12153 = vadd.f32 %v12124, %v12152
        %12154 = vdwg.mxu0
        %12155 = vmatpush.bf16.msra.mxu0 %v11550
        %12156 = vmatpush.bf16.msra.mxu0 %v11547
        %12157 = vmatpush.bf16.msra.mxu0 %v11544
        %12158 = vmatpush.bf16.msra.mxu0 %v11541
        %12159 = vmatpush.bf16.msra.mxu0 %v11538
        %12160 = vmatpush.bf16.msra.mxu0 %v11535
        %12161 = vmatpush.bf16.msra.mxu0 %v11532
        %12162 = vmatpush.bf16.msra.mxu0 %v11529
        %12163 = vmatmul.bf16.gmra.mxu0 %v9899
        %v12164 = vpop.f32.mrf.mxu0
        %v12165 = vadd.f32 %v12136, %v12164
        %v12166 = vpop.f32.mrf.mxu0
        %v12167 = vadd.f32 %v12138, %v12166
        %12168 = vmatmul.bf16.gmra.mxu0 %v9911
        %v12169 = vpop.f32.mrf.mxu0
        %v12170 = vadd.f32 %v12141, %v12169
        %v12171 = vpop.f32.mrf.mxu0
        %v12172 = vadd.f32 %v12143, %v12171
        %12173 = vmatmul.bf16.gmra.mxu0 %v9923
        %v12174 = vpop.f32.mrf.mxu0
        %v12175 = vadd.f32 %v12146, %v12174
        %v12176 = vpop.f32.mrf.mxu0
        %v12177 = vadd.f32 %v12148, %v12176
        %12178 = vmatmul.bf16.gmra.mxu0 %v9935
        %v12179 = vpop.f32.mrf.mxu0
        %v12180 = vadd.f32 %v12151, %v12179
        %v12181 = vpop.f32.mrf.mxu0
        %v12182 = vadd.f32 %v12153, %v12181
        %12183 = vdwg.mxu0
        %12184 = vmatpush.bf16.msra.mxu0 %v11574
        %12185 = vmatpush.bf16.msra.mxu0 %v11571
        %12186 = vmatpush.bf16.msra.mxu0 %v11568
        %12187 = vmatpush.bf16.msra.mxu0 %v11565
        %12188 = vmatpush.bf16.msra.mxu0 %v11562
        %12189 = vmatpush.bf16.msra.mxu0 %v11559
        %12190 = vmatpush.bf16.msra.mxu0 %v11556
        %12191 = vmatpush.bf16.msra.mxu0 %v11553
        %12192 = vmatmul.bf16.gmra.mxu0 %v9900
        %v12193 = vpop.f32.mrf.mxu0
        %v12194 = vadd.f32 %v12165, %v12193
        %v12195 = vpop.f32.mrf.mxu0
        %v12196 = vadd.f32 %v12167, %v12195
        %12197 = vmatmul.bf16.gmra.mxu0 %v9912
        %v12198 = vpop.f32.mrf.mxu0
        %v12199 = vadd.f32 %v12170, %v12198
        %v12200 = vpop.f32.mrf.mxu0
        %v12201 = vadd.f32 %v12172, %v12200
        %12202 = vmatmul.bf16.gmra.mxu0 %v9924
        %v12203 = vpop.f32.mrf.mxu0
        %v12204 = vadd.f32 %v12175, %v12203
        %v12205 = vpop.f32.mrf.mxu0
        %v12206 = vadd.f32 %v12177, %v12205
        %12207 = vmatmul.bf16.gmra.mxu0 %v9936
        %v12208 = vpop.f32.mrf.mxu0
        %v12209 = vadd.f32 %v12180, %v12208
        %v12210 = vpop.f32.mrf.mxu0
        %v12211 = vadd.f32 %v12182, %v12210
        %12212 = vdwg.mxu0
        %12213 = vmatpush.bf16.msra.mxu0 %v11311
        %12214 = vmatpush.bf16.msra.mxu0 %v11308
        %12215 = vmatpush.bf16.msra.mxu0 %v11305
        %12216 = vmatpush.bf16.msra.mxu0 %v11302
        %12217 = vmatpush.bf16.msra.mxu0 %v11299
        %12218 = vmatpush.bf16.msra.mxu0 %v11296
        %12219 = vmatpush.bf16.msra.mxu0 %v11293
        %12220 = vmatpush.bf16.msra.mxu0 %v11290
        %12221 = vmatmul.bf16.gmra.mxu0 %v9889
        %v12222 = vpop.f32.mrf.mxu0
        %v12223 = vadd.f32 %v10324, %v12222
        %v12224 = vpop.f32.mrf.mxu0
        %v12225 = vadd.f32 %v10324, %v12224
        %12226 = vmatmul.bf16.gmra.mxu0 %v9901
        %v12227 = vpop.f32.mrf.mxu0
        %v12228 = vadd.f32 %v10324, %v12227
        %v12229 = vpop.f32.mrf.mxu0
        %v12230 = vadd.f32 %v10324, %v12229
        %12231 = vmatmul.bf16.gmra.mxu0 %v9913
        %v12232 = vpop.f32.mrf.mxu0
        %v12233 = vadd.f32 %v10324, %v12232
        %v12234 = vpop.f32.mrf.mxu0
        %v12235 = vadd.f32 %v10324, %v12234
        %12236 = vmatmul.bf16.gmra.mxu0 %v9925
        %v12237 = vpop.f32.mrf.mxu0
        %v12238 = vadd.f32 %v10324, %v12237
        %v12239 = vpop.f32.mrf.mxu0
        %v12240 = vadd.f32 %v10324, %v12239
        %12241 = vdwg.mxu0
        %12242 = vmatpush.bf16.msra.mxu0 %v11335
        %12243 = vmatpush.bf16.msra.mxu0 %v11332
        %12244 = vmatpush.bf16.msra.mxu0 %v11329
        %12245 = vmatpush.bf16.msra.mxu0 %v11326
        %12246 = vmatpush.bf16.msra.mxu0 %v11323
        %12247 = vmatpush.bf16.msra.mxu0 %v11320
        %12248 = vmatpush.bf16.msra.mxu0 %v11317
        %12249 = vmatpush.bf16.msra.mxu0 %v11314
        %12250 = vmatmul.bf16.gmra.mxu0 %v9890
        %v12251 = vpop.f32.mrf.mxu0
        %v12252 = vadd.f32 %v12223, %v12251
        %v12253 = vpop.f32.mrf.mxu0
        %v12254 = vadd.f32 %v12225, %v12253
        %12255 = vmatmul.bf16.gmra.mxu0 %v9902
        %v12256 = vpop.f32.mrf.mxu0
        %v12257 = vadd.f32 %v12228, %v12256
        %v12258 = vpop.f32.mrf.mxu0
        %v12259 = vadd.f32 %v12230, %v12258
        %12260 = vmatmul.bf16.gmra.mxu0 %v9914
        %v12261 = vpop.f32.mrf.mxu0
        %v12262 = vadd.f32 %v12233, %v12261
        %v12263 = vpop.f32.mrf.mxu0
        %v12264 = vadd.f32 %v12235, %v12263
        %12265 = vmatmul.bf16.gmra.mxu0 %v9926
        %v12266 = vpop.f32.mrf.mxu0
        %v12267 = vadd.f32 %v12238, %v12266
        %v12268 = vpop.f32.mrf.mxu0
        %v12269 = vadd.f32 %v12240, %v12268
        %12270 = vdwg.mxu0
        %12271 = vmatpush.bf16.msra.mxu0 %v11359
        %12272 = vmatpush.bf16.msra.mxu0 %v11356
        %12273 = vmatpush.bf16.msra.mxu0 %v11353
        %12274 = vmatpush.bf16.msra.mxu0 %v11350
        %12275 = vmatpush.bf16.msra.mxu0 %v11347
        %12276 = vmatpush.bf16.msra.mxu0 %v11344
        %12277 = vmatpush.bf16.msra.mxu0 %v11341
        %12278 = vmatpush.bf16.msra.mxu0 %v11338
        %12279 = vmatmul.bf16.gmra.mxu0 %v9891
        %v12280 = vpop.f32.mrf.mxu0
        %v12281 = vadd.f32 %v12252, %v12280
        %v12282 = vpop.f32.mrf.mxu0
        %v12283 = vadd.f32 %v12254, %v12282
        %12284 = vmatmul.bf16.gmra.mxu0 %v9903
        %v12285 = vpop.f32.mrf.mxu0
        %v12286 = vadd.f32 %v12257, %v12285
        %v12287 = vpop.f32.mrf.mxu0
        %v12288 = vadd.f32 %v12259, %v12287
        %12289 = vmatmul.bf16.gmra.mxu0 %v9915
        %v12290 = vpop.f32.mrf.mxu0
        %v12291 = vadd.f32 %v12262, %v12290
        %v12292 = vpop.f32.mrf.mxu0
        %v12293 = vadd.f32 %v12264, %v12292
        %12294 = vmatmul.bf16.gmra.mxu0 %v9927
        %v12295 = vpop.f32.mrf.mxu0
        %v12296 = vadd.f32 %v12267, %v12295
        %v12297 = vpop.f32.mrf.mxu0
        %v12298 = vadd.f32 %v12269, %v12297
        %12299 = vdwg.mxu0
        %12300 = vmatpush.bf16.msra.mxu0 %v11383
        %12301 = vmatpush.bf16.msra.mxu0 %v11380
        %12302 = vmatpush.bf16.msra.mxu0 %v11377
        %12303 = vmatpush.bf16.msra.mxu0 %v11374
        %12304 = vmatpush.bf16.msra.mxu0 %v11371
        %12305 = vmatpush.bf16.msra.mxu0 %v11368
        %12306 = vmatpush.bf16.msra.mxu0 %v11365
        %12307 = vmatpush.bf16.msra.mxu0 %v11362
        %12308 = vmatmul.bf16.gmra.mxu0 %v9892
        %v12309 = vpop.f32.mrf.mxu0
        %v12310 = vadd.f32 %v12281, %v12309
        %v12311 = vpop.f32.mrf.mxu0
        %v12312 = vadd.f32 %v12283, %v12311
        %12313 = vmatmul.bf16.gmra.mxu0 %v9904
        %v12314 = vpop.f32.mrf.mxu0
        %v12315 = vadd.f32 %v12286, %v12314
        %v12316 = vpop.f32.mrf.mxu0
        %v12317 = vadd.f32 %v12288, %v12316
        %12318 = vmatmul.bf16.gmra.mxu0 %v9916
        %v12319 = vpop.f32.mrf.mxu0
        %v12320 = vadd.f32 %v12291, %v12319
        %v12321 = vpop.f32.mrf.mxu0
        %v12322 = vadd.f32 %v12293, %v12321
        %12323 = vmatmul.bf16.gmra.mxu0 %v9928
        %v12324 = vpop.f32.mrf.mxu0
        %v12325 = vadd.f32 %v12296, %v12324
        %v12326 = vpop.f32.mrf.mxu0
        %v12327 = vadd.f32 %v12298, %v12326
        %12328 = vdwg.mxu0
        %12329 = vmatpush.bf16.msra.mxu0 %v11407
        %12330 = vmatpush.bf16.msra.mxu0 %v11404
        %12331 = vmatpush.bf16.msra.mxu0 %v11401
        %12332 = vmatpush.bf16.msra.mxu0 %v11398
        %12333 = vmatpush.bf16.msra.mxu0 %v11395
        %12334 = vmatpush.bf16.msra.mxu0 %v11392
        %12335 = vmatpush.bf16.msra.mxu0 %v11389
        %12336 = vmatpush.bf16.msra.mxu0 %v11386
        %12337 = vmatmul.bf16.gmra.mxu0 %v9893
        %v12338 = vpop.f32.mrf.mxu0
        %v12339 = vadd.f32 %v12310, %v12338
        %v12340 = vpop.f32.mrf.mxu0
        %v12341 = vadd.f32 %v12312, %v12340
        %12342 = vmatmul.bf16.gmra.mxu0 %v9905
        %v12343 = vpop.f32.mrf.mxu0
        %v12344 = vadd.f32 %v12315, %v12343
        %v12345 = vpop.f32.mrf.mxu0
        %v12346 = vadd.f32 %v12317, %v12345
        %12347 = vmatmul.bf16.gmra.mxu0 %v9917
        %v12348 = vpop.f32.mrf.mxu0
        %v12349 = vadd.f32 %v12320, %v12348
        %v12350 = vpop.f32.mrf.mxu0
        %v12351 = vadd.f32 %v12322, %v12350
        %12352 = vmatmul.bf16.gmra.mxu0 %v9929
        %v12353 = vpop.f32.mrf.mxu0
        %v12354 = vadd.f32 %v12325, %v12353
        %v12355 = vpop.f32.mrf.mxu0
        %v12356 = vadd.f32 %v12327, %v12355
        %12357 = vdwg.mxu0
        %12358 = vmatpush.bf16.msra.mxu0 %v11431
        %12359 = vmatpush.bf16.msra.mxu0 %v11428
        %12360 = vmatpush.bf16.msra.mxu0 %v11425
        %12361 = vmatpush.bf16.msra.mxu0 %v11422
        %12362 = vmatpush.bf16.msra.mxu0 %v11419
        %12363 = vmatpush.bf16.msra.mxu0 %v11416
        %12364 = vmatpush.bf16.msra.mxu0 %v11413
        %12365 = vmatpush.bf16.msra.mxu0 %v11410
        %12366 = vmatmul.bf16.gmra.mxu0 %v9894
        %v12367 = vpop.f32.mrf.mxu0
        %v12368 = vadd.f32 %v12339, %v12367
        %v12369 = vpop.f32.mrf.mxu0
        %v12370 = vadd.f32 %v12341, %v12369
        %12371 = vmatmul.bf16.gmra.mxu0 %v9906
        %v12372 = vpop.f32.mrf.mxu0
        %v12373 = vadd.f32 %v12344, %v12372
        %v12374 = vpop.f32.mrf.mxu0
        %v12375 = vadd.f32 %v12346, %v12374
        %12376 = vmatmul.bf16.gmra.mxu0 %v9918
        %v12377 = vpop.f32.mrf.mxu0
        %v12378 = vadd.f32 %v12349, %v12377
        %v12379 = vpop.f32.mrf.mxu0
        %v12380 = vadd.f32 %v12351, %v12379
        %12381 = vmatmul.bf16.gmra.mxu0 %v9930
        %v12382 = vpop.f32.mrf.mxu0
        %v12383 = vadd.f32 %v12354, %v12382
        %v12384 = vpop.f32.mrf.mxu0
        %v12385 = vadd.f32 %v12356, %v12384
        %12386 = vdwg.mxu0
        %12387 = vmatpush.bf16.msra.mxu0 %v11455
        %12388 = vmatpush.bf16.msra.mxu0 %v11452
        %12389 = vmatpush.bf16.msra.mxu0 %v11449
        %12390 = vmatpush.bf16.msra.mxu0 %v11446
        %12391 = vmatpush.bf16.msra.mxu0 %v11443
        %12392 = vmatpush.bf16.msra.mxu0 %v11440
        %12393 = vmatpush.bf16.msra.mxu0 %v11437
        %12394 = vmatpush.bf16.msra.mxu0 %v11434
        %12395 = vmatmul.bf16.gmra.mxu0 %v9895
        %v12396 = vpop.f32.mrf.mxu0
        %v12397 = vadd.f32 %v12368, %v12396
        %v12398 = vpop.f32.mrf.mxu0
        %v12399 = vadd.f32 %v12370, %v12398
        %12400 = vmatmul.bf16.gmra.mxu0 %v9907
        %v12401 = vpop.f32.mrf.mxu0
        %v12402 = vadd.f32 %v12373, %v12401
        %v12403 = vpop.f32.mrf.mxu0
        %v12404 = vadd.f32 %v12375, %v12403
        %12405 = vmatmul.bf16.gmra.mxu0 %v9919
        %v12406 = vpop.f32.mrf.mxu0
        %v12407 = vadd.f32 %v12378, %v12406
        %v12408 = vpop.f32.mrf.mxu0
        %v12409 = vadd.f32 %v12380, %v12408
        %12410 = vmatmul.bf16.gmra.mxu0 %v9931
        %v12411 = vpop.f32.mrf.mxu0
        %v12412 = vadd.f32 %v12383, %v12411
        %v12413 = vpop.f32.mrf.mxu0
        %v12414 = vadd.f32 %v12385, %v12413
        %12415 = vdwg.mxu0
        %12416 = vmatpush.bf16.msra.mxu0 %v11479
        %12417 = vmatpush.bf16.msra.mxu0 %v11476
        %12418 = vmatpush.bf16.msra.mxu0 %v11473
        %12419 = vmatpush.bf16.msra.mxu0 %v11470
        %12420 = vmatpush.bf16.msra.mxu0 %v11467
        %12421 = vmatpush.bf16.msra.mxu0 %v11464
        %12422 = vmatpush.bf16.msra.mxu0 %v11461
        %12423 = vmatpush.bf16.msra.mxu0 %v11458
        %12424 = vmatmul.bf16.gmra.mxu0 %v9896
        %v12425 = vpop.f32.mrf.mxu0
        %v12426 = vadd.f32 %v12397, %v12425
        %v12427 = vpop.f32.mrf.mxu0
        %v12428 = vadd.f32 %v12399, %v12427
        %12429 = vmatmul.bf16.gmra.mxu0 %v9908
        %v12430 = vpop.f32.mrf.mxu0
        %v12431 = vadd.f32 %v12402, %v12430
        %v12432 = vpop.f32.mrf.mxu0
        %v12433 = vadd.f32 %v12404, %v12432
        %12434 = vmatmul.bf16.gmra.mxu0 %v9920
        %v12435 = vpop.f32.mrf.mxu0
        %v12436 = vadd.f32 %v12407, %v12435
        %v12437 = vpop.f32.mrf.mxu0
        %v12438 = vadd.f32 %v12409, %v12437
        %12439 = vmatmul.bf16.gmra.mxu0 %v9932
        %v12440 = vpop.f32.mrf.mxu0
        %v12441 = vadd.f32 %v12412, %v12440
        %v12442 = vpop.f32.mrf.mxu0
        %v12443 = vadd.f32 %v12414, %v12442
        %12444 = vdwg.mxu0
        %12445 = vmatpush.bf16.msra.mxu0 %v11503
        %12446 = vmatpush.bf16.msra.mxu0 %v11500
        %12447 = vmatpush.bf16.msra.mxu0 %v11497
        %12448 = vmatpush.bf16.msra.mxu0 %v11494
        %12449 = vmatpush.bf16.msra.mxu0 %v11491
        %12450 = vmatpush.bf16.msra.mxu0 %v11488
        %12451 = vmatpush.bf16.msra.mxu0 %v11485
        %12452 = vmatpush.bf16.msra.mxu0 %v11482
        %12453 = vmatmul.bf16.gmra.mxu0 %v9897
        %v12454 = vpop.f32.mrf.mxu0
        %v12455 = vadd.f32 %v12426, %v12454
        %v12456 = vpop.f32.mrf.mxu0
        %v12457 = vadd.f32 %v12428, %v12456
        %12458 = vmatmul.bf16.gmra.mxu0 %v9909
        %v12459 = vpop.f32.mrf.mxu0
        %v12460 = vadd.f32 %v12431, %v12459
        %v12461 = vpop.f32.mrf.mxu0
        %v12462 = vadd.f32 %v12433, %v12461
        %12463 = vmatmul.bf16.gmra.mxu0 %v9921
        %v12464 = vpop.f32.mrf.mxu0
        %v12465 = vadd.f32 %v12436, %v12464
        %v12466 = vpop.f32.mrf.mxu0
        %v12467 = vadd.f32 %v12438, %v12466
        %12468 = vmatmul.bf16.gmra.mxu0 %v9933
        %v12469 = vpop.f32.mrf.mxu0
        %v12470 = vadd.f32 %v12441, %v12469
        %v12471 = vpop.f32.mrf.mxu0
        %v12472 = vadd.f32 %v12443, %v12471
        %12473 = vdwg.mxu0
        %12474 = vmatpush.bf16.msra.mxu0 %v11527
        %12475 = vmatpush.bf16.msra.mxu0 %v11524
        %12476 = vmatpush.bf16.msra.mxu0 %v11521
        %12477 = vmatpush.bf16.msra.mxu0 %v11518
        %12478 = vmatpush.bf16.msra.mxu0 %v11515
        %12479 = vmatpush.bf16.msra.mxu0 %v11512
        %12480 = vmatpush.bf16.msra.mxu0 %v11509
        %12481 = vmatpush.bf16.msra.mxu0 %v11506
        %12482 = vmatmul.bf16.gmra.mxu0 %v9898
        %v12483 = vpop.f32.mrf.mxu0
        %v12484 = vadd.f32 %v12455, %v12483
        %v12485 = vpop.f32.mrf.mxu0
        %v12486 = vadd.f32 %v12457, %v12485
        %12487 = vmatmul.bf16.gmra.mxu0 %v9910
        %v12488 = vpop.f32.mrf.mxu0
        %v12489 = vadd.f32 %v12460, %v12488
        %v12490 = vpop.f32.mrf.mxu0
        %v12491 = vadd.f32 %v12462, %v12490
        %12492 = vmatmul.bf16.gmra.mxu0 %v9922
        %v12493 = vpop.f32.mrf.mxu0
        %v12494 = vadd.f32 %v12465, %v12493
        %v12495 = vpop.f32.mrf.mxu0
        %v12496 = vadd.f32 %v12467, %v12495
        %12497 = vmatmul.bf16.gmra.mxu0 %v9934
        %v12498 = vpop.f32.mrf.mxu0
        %v12499 = vadd.f32 %v12470, %v12498
        %v12500 = vpop.f32.mrf.mxu0
        %v12501 = vadd.f32 %v12472, %v12500
        %12502 = vdwg.mxu0
        %12503 = vmatpush.bf16.msra.mxu0 %v11551
        %12504 = vmatpush.bf16.msra.mxu0 %v11548
        %12505 = vmatpush.bf16.msra.mxu0 %v11545
        %12506 = vmatpush.bf16.msra.mxu0 %v11542
        %12507 = vmatpush.bf16.msra.mxu0 %v11539
        %12508 = vmatpush.bf16.msra.mxu0 %v11536
        %12509 = vmatpush.bf16.msra.mxu0 %v11533
        %12510 = vmatpush.bf16.msra.mxu0 %v11530
        %12511 = vmatmul.bf16.gmra.mxu0 %v9899
        %v12512 = vpop.f32.mrf.mxu0
        %v12513 = vadd.f32 %v12484, %v12512
        %v12514 = vpop.f32.mrf.mxu0
        %v12515 = vadd.f32 %v12486, %v12514
        %12516 = vmatmul.bf16.gmra.mxu0 %v9911
        %v12517 = vpop.f32.mrf.mxu0
        %v12518 = vadd.f32 %v12489, %v12517
        %v12519 = vpop.f32.mrf.mxu0
        %v12520 = vadd.f32 %v12491, %v12519
        %12521 = vmatmul.bf16.gmra.mxu0 %v9923
        %v12522 = vpop.f32.mrf.mxu0
        %v12523 = vadd.f32 %v12494, %v12522
        %v12524 = vpop.f32.mrf.mxu0
        %v12525 = vadd.f32 %v12496, %v12524
        %12526 = vmatmul.bf16.gmra.mxu0 %v9935
        %v12527 = vpop.f32.mrf.mxu0
        %v12528 = vadd.f32 %v12499, %v12527
        %v12529 = vpop.f32.mrf.mxu0
        %v12530 = vadd.f32 %v12501, %v12529
        %12531 = vdwg.mxu0
        %12532 = vmatpush.bf16.msra.mxu0 %v11575
        %12533 = vmatpush.bf16.msra.mxu0 %v11572
        %12534 = vmatpush.bf16.msra.mxu0 %v11569
        %12535 = vmatpush.bf16.msra.mxu0 %v11566
        %12536 = vmatpush.bf16.msra.mxu0 %v11563
        %12537 = vmatpush.bf16.msra.mxu0 %v11560
        %12538 = vmatpush.bf16.msra.mxu0 %v11557
        %12539 = vmatpush.bf16.msra.mxu0 %v11554
        %12540 = vmatmul.bf16.gmra.mxu0 %v9900
        %v12541 = vpop.f32.mrf.mxu0
        %v12542 = vadd.f32 %v12513, %v12541
        %v12543 = vpop.f32.mrf.mxu0
        %v12544 = vadd.f32 %v12515, %v12543
        %12545 = vmatmul.bf16.gmra.mxu0 %v9912
        %v12546 = vpop.f32.mrf.mxu0
        %v12547 = vadd.f32 %v12518, %v12546
        %v12548 = vpop.f32.mrf.mxu0
        %v12549 = vadd.f32 %v12520, %v12548
        %12550 = vmatmul.bf16.gmra.mxu0 %v9924
        %v12551 = vpop.f32.mrf.mxu0
        %v12552 = vadd.f32 %v12523, %v12551
        %v12553 = vpop.f32.mrf.mxu0
        %v12554 = vadd.f32 %v12525, %v12553
        %12555 = vmatmul.bf16.gmra.mxu0 %v9936
        %v12556 = vpop.f32.mrf.mxu0
        %v12557 = vadd.f32 %v12528, %v12556
        %v12558 = vpop.f32.mrf.mxu0
        %v12559 = vadd.f32 %v12530, %v12558
        %12560 = vdwg.mxu0
        %12561 = vmatpush.bf16.msra.mxu0 %v11312
        %12562 = vmatpush.bf16.msra.mxu0 %v11309
        %12563 = vmatpush.bf16.msra.mxu0 %v11306
        %12564 = vmatpush.bf16.msra.mxu0 %v11303
        %12565 = vmatpush.bf16.msra.mxu0 %v11300
        %12566 = vmatpush.bf16.msra.mxu0 %v11297
        %12567 = vmatpush.bf16.msra.mxu0 %v11294
        %12568 = vmatpush.bf16.msra.mxu0 %v11291
        %12569 = vmatmul.bf16.gmra.mxu0 %v9889
        %v12570 = vpop.f32.mrf.mxu0
        %v12571 = vadd.f32 %v10325, %v12570
        %v12572 = vpop.f32.mrf.mxu0
        %v12573 = vadd.f32 %v10325, %v12572
        %12574 = vmatmul.bf16.gmra.mxu0 %v9901
        %v12575 = vpop.f32.mrf.mxu0
        %v12576 = vadd.f32 %v10325, %v12575
        %v12577 = vpop.f32.mrf.mxu0
        %v12578 = vadd.f32 %v10325, %v12577
        %12579 = vmatmul.bf16.gmra.mxu0 %v9913
        %v12580 = vpop.f32.mrf.mxu0
        %v12581 = vadd.f32 %v10325, %v12580
        %v12582 = vpop.f32.mrf.mxu0
        %v12583 = vadd.f32 %v10325, %v12582
        %12584 = vmatmul.bf16.gmra.mxu0 %v9925
        %v12585 = vpop.f32.mrf.mxu0
        %v12586 = vadd.f32 %v10325, %v12585
        %v12587 = vpop.f32.mrf.mxu0
        %v12588 = vadd.f32 %v10325, %v12587
        %12589 = vdwg.mxu0
        %12590 = vmatpush.bf16.msra.mxu0 %v11336
        %12591 = vmatpush.bf16.msra.mxu0 %v11333
        %12592 = vmatpush.bf16.msra.mxu0 %v11330
        %12593 = vmatpush.bf16.msra.mxu0 %v11327
        %12594 = vmatpush.bf16.msra.mxu0 %v11324
        %12595 = vmatpush.bf16.msra.mxu0 %v11321
        %12596 = vmatpush.bf16.msra.mxu0 %v11318
        %12597 = vmatpush.bf16.msra.mxu0 %v11315
        %12598 = vmatmul.bf16.gmra.mxu0 %v9890
        %v12599 = vpop.f32.mrf.mxu0
        %v12600 = vadd.f32 %v12571, %v12599
        %v12601 = vpop.f32.mrf.mxu0
        %v12602 = vadd.f32 %v12573, %v12601
        %12603 = vmatmul.bf16.gmra.mxu0 %v9902
        %v12604 = vpop.f32.mrf.mxu0
        %v12605 = vadd.f32 %v12576, %v12604
        %v12606 = vpop.f32.mrf.mxu0
        %v12607 = vadd.f32 %v12578, %v12606
        %12608 = vmatmul.bf16.gmra.mxu0 %v9914
        %v12609 = vpop.f32.mrf.mxu0
        %v12610 = vadd.f32 %v12581, %v12609
        %v12611 = vpop.f32.mrf.mxu0
        %v12612 = vadd.f32 %v12583, %v12611
        %12613 = vmatmul.bf16.gmra.mxu0 %v9926
        %v12614 = vpop.f32.mrf.mxu0
        %v12615 = vadd.f32 %v12586, %v12614
        %v12616 = vpop.f32.mrf.mxu0
        %v12617 = vadd.f32 %v12588, %v12616
        %12618 = vdwg.mxu0
        %12619 = vmatpush.bf16.msra.mxu0 %v11360
        %12620 = vmatpush.bf16.msra.mxu0 %v11357
        %12621 = vmatpush.bf16.msra.mxu0 %v11354
        %12622 = vmatpush.bf16.msra.mxu0 %v11351
        %12623 = vmatpush.bf16.msra.mxu0 %v11348
        %12624 = vmatpush.bf16.msra.mxu0 %v11345
        %12625 = vmatpush.bf16.msra.mxu0 %v11342
        %12626 = vmatpush.bf16.msra.mxu0 %v11339
        %12627 = vmatmul.bf16.gmra.mxu0 %v9891
        %v12628 = vpop.f32.mrf.mxu0
        %v12629 = vadd.f32 %v12600, %v12628
        %v12630 = vpop.f32.mrf.mxu0
        %v12631 = vadd.f32 %v12602, %v12630
        %12632 = vmatmul.bf16.gmra.mxu0 %v9903
        %v12633 = vpop.f32.mrf.mxu0
        %v12634 = vadd.f32 %v12605, %v12633
        %v12635 = vpop.f32.mrf.mxu0
        %v12636 = vadd.f32 %v12607, %v12635
        %12637 = vmatmul.bf16.gmra.mxu0 %v9915
        %v12638 = vpop.f32.mrf.mxu0
        %v12639 = vadd.f32 %v12610, %v12638
        %v12640 = vpop.f32.mrf.mxu0
        %v12641 = vadd.f32 %v12612, %v12640
        %12642 = vmatmul.bf16.gmra.mxu0 %v9927
        %v12643 = vpop.f32.mrf.mxu0
        %v12644 = vadd.f32 %v12615, %v12643
        %v12645 = vpop.f32.mrf.mxu0
        %v12646 = vadd.f32 %v12617, %v12645
        %12647 = vdwg.mxu0
        %12648 = vmatpush.bf16.msra.mxu0 %v11384
        %12649 = vmatpush.bf16.msra.mxu0 %v11381
        %12650 = vmatpush.bf16.msra.mxu0 %v11378
        %12651 = vmatpush.bf16.msra.mxu0 %v11375
        %12652 = vmatpush.bf16.msra.mxu0 %v11372
        %12653 = vmatpush.bf16.msra.mxu0 %v11369
        %12654 = vmatpush.bf16.msra.mxu0 %v11366
        %12655 = vmatpush.bf16.msra.mxu0 %v11363
        %12656 = vmatmul.bf16.gmra.mxu0 %v9892
        %v12657 = vpop.f32.mrf.mxu0
        %v12658 = vadd.f32 %v12629, %v12657
        %v12659 = vpop.f32.mrf.mxu0
        %v12660 = vadd.f32 %v12631, %v12659
        %12661 = vmatmul.bf16.gmra.mxu0 %v9904
        %v12662 = vpop.f32.mrf.mxu0
        %v12663 = vadd.f32 %v12634, %v12662
        %v12664 = vpop.f32.mrf.mxu0
        %v12665 = vadd.f32 %v12636, %v12664
        %12666 = vmatmul.bf16.gmra.mxu0 %v9916
        %v12667 = vpop.f32.mrf.mxu0
        %v12668 = vadd.f32 %v12639, %v12667
        %v12669 = vpop.f32.mrf.mxu0
        %v12670 = vadd.f32 %v12641, %v12669
        %12671 = vmatmul.bf16.gmra.mxu0 %v9928
        %v12672 = vpop.f32.mrf.mxu0
        %v12673 = vadd.f32 %v12644, %v12672
        %v12674 = vpop.f32.mrf.mxu0
        %v12675 = vadd.f32 %v12646, %v12674
        %12676 = vdwg.mxu0
        %12677 = vmatpush.bf16.msra.mxu0 %v11408
        %12678 = vmatpush.bf16.msra.mxu0 %v11405
        %12679 = vmatpush.bf16.msra.mxu0 %v11402
        %12680 = vmatpush.bf16.msra.mxu0 %v11399
        %12681 = vmatpush.bf16.msra.mxu0 %v11396
        %12682 = vmatpush.bf16.msra.mxu0 %v11393
        %12683 = vmatpush.bf16.msra.mxu0 %v11390
        %12684 = vmatpush.bf16.msra.mxu0 %v11387
        %12685 = vmatmul.bf16.gmra.mxu0 %v9893
        %v12686 = vpop.f32.mrf.mxu0
        %v12687 = vadd.f32 %v12658, %v12686
        %v12688 = vpop.f32.mrf.mxu0
        %v12689 = vadd.f32 %v12660, %v12688
        %12690 = vmatmul.bf16.gmra.mxu0 %v9905
        %v12691 = vpop.f32.mrf.mxu0
        %v12692 = vadd.f32 %v12663, %v12691
        %v12693 = vpop.f32.mrf.mxu0
        %v12694 = vadd.f32 %v12665, %v12693
        %12695 = vmatmul.bf16.gmra.mxu0 %v9917
        %v12696 = vpop.f32.mrf.mxu0
        %v12697 = vadd.f32 %v12668, %v12696
        %v12698 = vpop.f32.mrf.mxu0
        %v12699 = vadd.f32 %v12670, %v12698
        %12700 = vmatmul.bf16.gmra.mxu0 %v9929
        %v12701 = vpop.f32.mrf.mxu0
        %v12702 = vadd.f32 %v12673, %v12701
        %v12703 = vpop.f32.mrf.mxu0
        %v12704 = vadd.f32 %v12675, %v12703
        %12705 = vdwg.mxu0
        %12706 = vmatpush.bf16.msra.mxu0 %v11432
        %12707 = vmatpush.bf16.msra.mxu0 %v11429
        %12708 = vmatpush.bf16.msra.mxu0 %v11426
        %12709 = vmatpush.bf16.msra.mxu0 %v11423
        %12710 = vmatpush.bf16.msra.mxu0 %v11420
        %12711 = vmatpush.bf16.msra.mxu0 %v11417
        %12712 = vmatpush.bf16.msra.mxu0 %v11414
        %12713 = vmatpush.bf16.msra.mxu0 %v11411
        %12714 = vmatmul.bf16.gmra.mxu0 %v9894
        %v12715 = vpop.f32.mrf.mxu0
        %v12716 = vadd.f32 %v12687, %v12715
        %v12717 = vpop.f32.mrf.mxu0
        %v12718 = vadd.f32 %v12689, %v12717
        %12719 = vmatmul.bf16.gmra.mxu0 %v9906
        %v12720 = vpop.f32.mrf.mxu0
        %v12721 = vadd.f32 %v12692, %v12720
        %v12722 = vpop.f32.mrf.mxu0
        %v12723 = vadd.f32 %v12694, %v12722
        %12724 = vmatmul.bf16.gmra.mxu0 %v9918
        %v12725 = vpop.f32.mrf.mxu0
        %v12726 = vadd.f32 %v12697, %v12725
        %v12727 = vpop.f32.mrf.mxu0
        %v12728 = vadd.f32 %v12699, %v12727
        %12729 = vmatmul.bf16.gmra.mxu0 %v9930
        %v12730 = vpop.f32.mrf.mxu0
        %v12731 = vadd.f32 %v12702, %v12730
        %v12732 = vpop.f32.mrf.mxu0
        %v12733 = vadd.f32 %v12704, %v12732
        %12734 = vdwg.mxu0
        %12735 = vmatpush.bf16.msra.mxu0 %v11456
        %12736 = vmatpush.bf16.msra.mxu0 %v11453
        %12737 = vmatpush.bf16.msra.mxu0 %v11450
        %12738 = vmatpush.bf16.msra.mxu0 %v11447
        %12739 = vmatpush.bf16.msra.mxu0 %v11444
        %12740 = vmatpush.bf16.msra.mxu0 %v11441
        %12741 = vmatpush.bf16.msra.mxu0 %v11438
        %12742 = vmatpush.bf16.msra.mxu0 %v11435
        %12743 = vmatmul.bf16.gmra.mxu0 %v9895
        %v12744 = vpop.f32.mrf.mxu0
        %v12745 = vadd.f32 %v12716, %v12744
        %v12746 = vpop.f32.mrf.mxu0
        %v12747 = vadd.f32 %v12718, %v12746
        %12748 = vmatmul.bf16.gmra.mxu0 %v9907
        %v12749 = vpop.f32.mrf.mxu0
        %v12750 = vadd.f32 %v12721, %v12749
        %v12751 = vpop.f32.mrf.mxu0
        %v12752 = vadd.f32 %v12723, %v12751
        %12753 = vmatmul.bf16.gmra.mxu0 %v9919
        %v12754 = vpop.f32.mrf.mxu0
        %v12755 = vadd.f32 %v12726, %v12754
        %v12756 = vpop.f32.mrf.mxu0
        %v12757 = vadd.f32 %v12728, %v12756
        %12758 = vmatmul.bf16.gmra.mxu0 %v9931
        %v12759 = vpop.f32.mrf.mxu0
        %v12760 = vadd.f32 %v12731, %v12759
        %v12761 = vpop.f32.mrf.mxu0
        %v12762 = vadd.f32 %v12733, %v12761
        %12763 = vdwg.mxu0
        %12764 = vmatpush.bf16.msra.mxu0 %v11480
        %12765 = vmatpush.bf16.msra.mxu0 %v11477
        %12766 = vmatpush.bf16.msra.mxu0 %v11474
        %12767 = vmatpush.bf16.msra.mxu0 %v11471
        %12768 = vmatpush.bf16.msra.mxu0 %v11468
        %12769 = vmatpush.bf16.msra.mxu0 %v11465
        %12770 = vmatpush.bf16.msra.mxu0 %v11462
        %12771 = vmatpush.bf16.msra.mxu0 %v11459
        %12772 = vmatmul.bf16.gmra.mxu0 %v9896
        %v12773 = vpop.f32.mrf.mxu0
        %v12774 = vadd.f32 %v12745, %v12773
        %v12775 = vpop.f32.mrf.mxu0
        %v12776 = vadd.f32 %v12747, %v12775
        %12777 = vmatmul.bf16.gmra.mxu0 %v9908
        %v12778 = vpop.f32.mrf.mxu0
        %v12779 = vadd.f32 %v12750, %v12778
        %v12780 = vpop.f32.mrf.mxu0
        %v12781 = vadd.f32 %v12752, %v12780
        %12782 = vmatmul.bf16.gmra.mxu0 %v9920
        %v12783 = vpop.f32.mrf.mxu0
        %v12784 = vadd.f32 %v12755, %v12783
        %v12785 = vpop.f32.mrf.mxu0
        %v12786 = vadd.f32 %v12757, %v12785
        %12787 = vmatmul.bf16.gmra.mxu0 %v9932
        %v12788 = vpop.f32.mrf.mxu0
        %v12789 = vadd.f32 %v12760, %v12788
        %v12790 = vpop.f32.mrf.mxu0
        %v12791 = vadd.f32 %v12762, %v12790
        %12792 = vdwg.mxu0
        %12793 = vmatpush.bf16.msra.mxu0 %v11504
        %12794 = vmatpush.bf16.msra.mxu0 %v11501
        %12795 = vmatpush.bf16.msra.mxu0 %v11498
        %12796 = vmatpush.bf16.msra.mxu0 %v11495
        %12797 = vmatpush.bf16.msra.mxu0 %v11492
        %12798 = vmatpush.bf16.msra.mxu0 %v11489
        %12799 = vmatpush.bf16.msra.mxu0 %v11486
        %12800 = vmatpush.bf16.msra.mxu0 %v11483
        %12801 = vmatmul.bf16.gmra.mxu0 %v9897
        %v12802 = vpop.f32.mrf.mxu0
        %v12803 = vadd.f32 %v12774, %v12802
        %v12804 = vpop.f32.mrf.mxu0
        %v12805 = vadd.f32 %v12776, %v12804
        %12806 = vmatmul.bf16.gmra.mxu0 %v9909
        %v12807 = vpop.f32.mrf.mxu0
        %v12808 = vadd.f32 %v12779, %v12807
        %v12809 = vpop.f32.mrf.mxu0
        %v12810 = vadd.f32 %v12781, %v12809
        %12811 = vmatmul.bf16.gmra.mxu0 %v9921
        %v12812 = vpop.f32.mrf.mxu0
        %v12813 = vadd.f32 %v12784, %v12812
        %v12814 = vpop.f32.mrf.mxu0
        %v12815 = vadd.f32 %v12786, %v12814
        %12816 = vmatmul.bf16.gmra.mxu0 %v9933
        %v12817 = vpop.f32.mrf.mxu0
        %v12818 = vadd.f32 %v12789, %v12817
        %v12819 = vpop.f32.mrf.mxu0
        %v12820 = vadd.f32 %v12791, %v12819
        %12821 = vdwg.mxu0
        %12822 = vmatpush.bf16.msra.mxu0 %v11528
        %12823 = vmatpush.bf16.msra.mxu0 %v11525
        %12824 = vmatpush.bf16.msra.mxu0 %v11522
        %12825 = vmatpush.bf16.msra.mxu0 %v11519
        %12826 = vmatpush.bf16.msra.mxu0 %v11516
        %12827 = vmatpush.bf16.msra.mxu0 %v11513
        %12828 = vmatpush.bf16.msra.mxu0 %v11510
        %12829 = vmatpush.bf16.msra.mxu0 %v11507
        %12830 = vmatmul.bf16.gmra.mxu0 %v9898
        %v12831 = vpop.f32.mrf.mxu0
        %v12832 = vadd.f32 %v12803, %v12831
        %v12833 = vpop.f32.mrf.mxu0
        %v12834 = vadd.f32 %v12805, %v12833
        %12835 = vmatmul.bf16.gmra.mxu0 %v9910
        %v12836 = vpop.f32.mrf.mxu0
        %v12837 = vadd.f32 %v12808, %v12836
        %v12838 = vpop.f32.mrf.mxu0
        %v12839 = vadd.f32 %v12810, %v12838
        %12840 = vmatmul.bf16.gmra.mxu0 %v9922
        %v12841 = vpop.f32.mrf.mxu0
        %v12842 = vadd.f32 %v12813, %v12841
        %v12843 = vpop.f32.mrf.mxu0
        %v12844 = vadd.f32 %v12815, %v12843
        %12845 = vmatmul.bf16.gmra.mxu0 %v9934
        %v12846 = vpop.f32.mrf.mxu0
        %v12847 = vadd.f32 %v12818, %v12846
        %v12848 = vpop.f32.mrf.mxu0
        %v12849 = vadd.f32 %v12820, %v12848
        %12850 = vdwg.mxu0
        %12851 = vmatpush.bf16.msra.mxu0 %v11552
        %12852 = vmatpush.bf16.msra.mxu0 %v11549
        %12853 = vmatpush.bf16.msra.mxu0 %v11546
        %12854 = vmatpush.bf16.msra.mxu0 %v11543
        %12855 = vmatpush.bf16.msra.mxu0 %v11540
        %12856 = vmatpush.bf16.msra.mxu0 %v11537
        %12857 = vmatpush.bf16.msra.mxu0 %v11534
        %12858 = vmatpush.bf16.msra.mxu0 %v11531
        %12859 = vmatmul.bf16.gmra.mxu0 %v9899
        %v12860 = vpop.f32.mrf.mxu0
        %v12861 = vadd.f32 %v12832, %v12860
        %v12862 = vpop.f32.mrf.mxu0
        %v12863 = vadd.f32 %v12834, %v12862
        %12864 = vmatmul.bf16.gmra.mxu0 %v9911
        %v12865 = vpop.f32.mrf.mxu0
        %v12866 = vadd.f32 %v12837, %v12865
        %v12867 = vpop.f32.mrf.mxu0
        %v12868 = vadd.f32 %v12839, %v12867
        %12869 = vmatmul.bf16.gmra.mxu0 %v9923
        %v12870 = vpop.f32.mrf.mxu0
        %v12871 = vadd.f32 %v12842, %v12870
        %v12872 = vpop.f32.mrf.mxu0
        %v12873 = vadd.f32 %v12844, %v12872
        %12874 = vmatmul.bf16.gmra.mxu0 %v9935
        %v12875 = vpop.f32.mrf.mxu0
        %v12876 = vadd.f32 %v12847, %v12875
        %v12877 = vpop.f32.mrf.mxu0
        %v12878 = vadd.f32 %v12849, %v12877
        %12879 = vdwg.mxu0
        %12880 = vmatpush.bf16.msra.mxu0 %v11576
        %12881 = vmatpush.bf16.msra.mxu0 %v11573
        %12882 = vmatpush.bf16.msra.mxu0 %v11570
        %12883 = vmatpush.bf16.msra.mxu0 %v11567
        %12884 = vmatpush.bf16.msra.mxu0 %v11564
        %12885 = vmatpush.bf16.msra.mxu0 %v11561
        %12886 = vmatpush.bf16.msra.mxu0 %v11558
        %12887 = vmatpush.bf16.msra.mxu0 %v11555
        %12888 = vmatmul.bf16.gmra.mxu0 %v9900
        %v12889 = vpop.f32.mrf.mxu0
        %v12890 = vadd.f32 %v12861, %v12889
        %v12891 = vpop.f32.mrf.mxu0
        %v12892 = vadd.f32 %v12863, %v12891
        %12893 = vmatmul.bf16.gmra.mxu0 %v9912
        %v12894 = vpop.f32.mrf.mxu0
        %v12895 = vadd.f32 %v12866, %v12894
        %v12896 = vpop.f32.mrf.mxu0
        %v12897 = vadd.f32 %v12868, %v12896
        %12898 = vmatmul.bf16.gmra.mxu0 %v9924
        %v12899 = vpop.f32.mrf.mxu0
        %v12900 = vadd.f32 %v12871, %v12899
        %v12901 = vpop.f32.mrf.mxu0
        %v12902 = vadd.f32 %v12873, %v12901
        %12903 = vmatmul.bf16.gmra.mxu0 %v9936
        %v12904 = vpop.f32.mrf.mxu0
        %v12905 = vadd.f32 %v12876, %v12904
        %v12906 = vpop.f32.mrf.mxu0
        %v12907 = vadd.f32 %v12878, %v12906
        %12908 = vdwg.mxu0
        %v12909 = vadd.f32 %v6653, %v12194
        %v12910 = vadd.f32 %v6654, %v12542
        %v12911 = vadd.f32 %v6655, %v12890
        %v12912 = vadd.f32 %v6656, %v12196
        %v12913 = vadd.f32 %v6657, %v12544
        %v12914 = vadd.f32 %v6658, %v12892
        %v12915 = vadd.f32 %v6659, %v12199
        %v12916 = vadd.f32 %v6660, %v12547
        %v12917 = vadd.f32 %v6661, %v12895
        %v12918 = vadd.f32 %v6662, %v12201
        %v12919 = vadd.f32 %v6663, %v12549
        %v12920 = vadd.f32 %v6664, %v12897
        %v12921 = vadd.f32 %v6665, %v12204
        %v12922 = vadd.f32 %v6666, %v12552
        %v12923 = vadd.f32 %v6667, %v12900
        %v12924 = vadd.f32 %v6668, %v12206
        %v12925 = vadd.f32 %v6669, %v12554
        %v12926 = vadd.f32 %v6670, %v12902
        %v12927 = vadd.f32 %v6671, %v12209
        %v12928 = vadd.f32 %v6672, %v12557
        %v12929 = vadd.f32 %v6673, %v12905
        %v12930 = vadd.f32 %v6674, %v12211
        %v12931 = vadd.f32 %v6675, %v12559
        %v12932 = vadd.f32 %v6676, %v12907
        %12933 = vst [vmem:[%s433] sm:$0xff] %v12909
        %12934 = vst [vmem:[%s433 + $0x8] sm:$0xff] %v12910
        %12935 = vst [vmem:[%s433 + $0x10] sm:$0xff] %v12911
        %12936 = vst [vmem:[%s433 + $0x18] sm:$0xff] %v12912
        %12937 = vst [vmem:[%s433 + $0x20] sm:$0xff] %v12913
        %12938 = vst [vmem:[%s433 + $0x28] sm:$0xff] %v12914
        %12939 = vst [vmem:[%s433 + $0x30] sm:$0xff] %v12915
        %12940 = vst [vmem:[%s433 + $0x38] sm:$0xff] %v12916
        %12941 = vst [vmem:[%s433 + $0x40] sm:$0xff] %v12917
        %12942 = vst [vmem:[%s433 + $0x48] sm:$0xff] %v12918
        %12943 = vst [vmem:[%s433 + $0x50] sm:$0xff] %v12919
        %12944 = vst [vmem:[%s433 + $0x58] sm:$0xff] %v12920
        %12945 = vst [vmem:[%s433 + $0x60] sm:$0xff] %v12921
        %12946 = vst [vmem:[%s433 + $0x68] sm:$0xff] %v12922
        %12947 = vst [vmem:[%s433 + $0x70] sm:$0xff] %v12923
        %12948 = vst [vmem:[%s433 + $0x78] sm:$0xff] %v12924
        %12949 = vst [vmem:[%s433 + $0x80] sm:$0xff] %v12925
        %12950 = vst [vmem:[%s433 + $0x88] sm:$0xff] %v12926
        %12951 = vst [vmem:[%s433 + $0x90] sm:$0xff] %v12927
        %12952 = vst [vmem:[%s433 + $0x98] sm:$0xff] %v12928
        %12953 = vst [vmem:[%s433 + $0xa0] sm:$0xff] %v12929
        %12954 = vst [vmem:[%s433 + $0xa8] sm:$0xff] %v12930
        %12955 = vst [vmem:[%s433 + $0xb0] sm:$0xff] %v12931
        %12956 = vst [vmem:[%s433 + $0xb8] sm:$0xff] %v12932
        %s12957 = sand.u32 %s313, 1
        %s12958 = scalar_lea.sflag [#allocation3], %s12957
        %s12959 = sand.u32 %s313, 1
        %s12960 = smul.addr %s12959, 192
        %s12961 = scalar_lea.vmem [#allocation2], %s12960
        // Predicated region
        $region73: #{block_forward.1} parent=71 // pred_check
          %p12962 = pneg %p323
        $region74: #{block_forward.1} parent=71 // pred_check_branch
          %12964 = sbr.rel (%p12962) target = $region76
        $region75: #{block_forward.1} parent=71 // pred_region
          %12966 = vsyncadd %s12958, 0
          %s12967 = smul.addr %s27, 24
          %s12968 = smul.addr %s12967, 8
          %s12969 = scalar_lea.hbm %s13, %s12968
          %s12970 = sshll.u32 %s12961, 4
          %s12971 = int_to_ptr.vmem [resolvable:$true] %s12970
          %s12972 = sshll.u32 %s12969, 4
          %s12973 = int_to_ptr.hbm [resolvable:$true] %s12972
          %12978 = dma.vmem_to_hbm [thread:$0]  %s12971, 3072, %s12973, %s12958, 384, 384, 24
        $region76: #{block_forward.1} parent=71 // pred_fallthru
          _
      $region72: #{block_forward.1} parent=5 // pred_fallthru
        _
      %p12979 = scmp.le.s32.totalorder 2, %s22
      // Predicated region
      $region77: #{block_forward.1} parent=5 // pred_check
        %p12980 = pneg %p12979
      $region78: #{block_forward.1} parent=5 // pred_check_branch
        %12982 = sbr.rel (%p12980) target = $region80
      $region79: #{block_forward.1} parent=5 // pred_region
        %s12983 = ssub.s32 %s22, 2
        // Predicated region
        $region81: #{block_forward.1} parent=79 // pred_check
          %p12984 = pneg %p329
        $region82: #{block_forward.1} parent=79 // pred_check_branch
          %12986 = sbr.rel (%p12984) target = $region84
        $region83: #{block_forward.1} parent=79 // pred_region
          %s12987 = sand.u32 %s314, 1
          %s12988 = scalar_lea.sflag [#allocation3], %s12987
          %s12989 = sand.u32 %s314, 1
          %s12990 = smul.addr %s12989, 192
          %s12991 = scalar_lea.vmem [#allocation2], %s12990
          %12993 = dma.done %s12988, 3072
        $region84: #{block_forward.1} parent=79 // pred_fallthru
          _
      $region80: #{block_forward.1} parent=5 // pred_fallthru
        _
    $region6: #{block_forward.1} parent=1 // loop_footer
      %s26 = sadd.s32 1, %s22
    $region7: #{block_forward.1} parent=1 // loop_footer_branch
      %21 = sbr.rel target = $region3
    $region8: #{block_forward.1} parent=1 // loop_exit
      _
    %12994 = vsyncpa [#allocation3], 1
    %s12995 = scalar_lea.sflag [#allocation3], 1
    %12996 = vsyncpa %s12995, 1

</llo_original>
